<compile_context>
chip_gen: v7x
topology: tpu7x:2x2x1
jax: 0.10.0
libtpu: 0.0.40
codegen_flags: <defaults>
</compile_context>

<pallas_src>
import functools

import jax
import jax.numpy as jnp
from jax import lax
from jax.experimental import pallas as pl
from jax.experimental.pallas import tpu as pltpu


_LANE = 128
_NEG_INF = -1e30


def _round_up(x, m):
    return (x + m - 1) // m * m


def _pick_vmem_limit():
    # Generation-aware scoped VMEM: ~half of physical (v7x 64MiB -> 32MiB, v5e/v6e 128MiB -> 64MiB).
    try:
        cap = int(pltpu.get_tpu_info().vmem_capacity_bytes)
    except Exception:
        return 32 * 1024 * 1024
    return max(16 * 1024 * 1024, min(cap // 2, 96 * 1024 * 1024))


_VMEM_LIMIT = _pick_vmem_limit()
_ROW_CAP = 1024 if _VMEM_LIMIT >= 48 * 1024 * 1024 else 512


def _row_tile(m, cap=None):
    """Row tile (sublane axis): full block when tiny, else >=2 blocks (v7x has 2 TCs), mult of 8."""
    cap = cap or _ROW_CAP
    if m < 64:
        return m
    return min(cap, _round_up(-(-m // 2), 8))


def _cls_tile(m):
    """Classifier row tile: rows also tile a lane axis, so must be a multiple of 128 or == m."""
    if m < 256:
        return m
    return min(1024, _round_up(-(-m // 2), _LANE))


def _lstm_batch_tile(B, S, Hp):
    """Batch tile for the recurrence: min(B,128) subject to the resident VMEM block budget."""
    budget = (3 * _VMEM_LIMIT) // 4
    bytes_per_row = S * 10 * Hp * 2 * 2          # bf16 xp(8Hp)+ho(2Hp) blocks, double-buffered
    cap = max(1, budget // max(bytes_per_row, 1))
    tb = min(B, 128, cap)
    if tb >= B:
        return B
    # TODO(synk): when cap < 8 at very long S, stream the S axis (emit_pipeline) instead of
    #             shrinking the batch tile.
    return max(8, (tb // 8) * 8)


# ----------------------------- Pallas kernels -------------------------------

def _linear_kernel(x_ref, w_ref, b_ref, o_ref):
    o_ref[...] = (jnp.dot(x_ref[...], w_ref[...], preferred_element_type=jnp.float32)
                  + b_ref[...]).astype(o_ref.dtype)


def linear_pallas(x, w_p, b_p, out_dtype=jnp.float32):
    """x: [M, K] @ prepared w_p: [K, Np] bf16 + b_p: [1, Np] f32 -> [M, Np] (lane-dense Np)."""
    M, K = x.shape
    Np = w_p.shape[1]
    tm = _row_tile(M)
    return pl.pallas_call(
        _linear_kernel,
        out_shape=jax.ShapeDtypeStruct((M, Np), out_dtype),
        grid=(pl.cdiv(M, tm),),
        in_specs=[
            pl.BlockSpec((tm, K), lambda i: (i, 0)),
            pl.BlockSpec((K, Np), lambda i: (0, 0)),
            pl.BlockSpec((1, Np), lambda i: (0, 0)),
        ],
        out_specs=pl.BlockSpec((tm, Np), lambda i: (i, 0)),
        compiler_params=pltpu.CompilerParams(
            dimension_semantics=("parallel",), vmem_limit_bytes=_VMEM_LIMIT),
    )(x.astype(jnp.bfloat16), w_p, b_p)


def _conv_maxpool_kernel(xf_ref, w_ref, b_ref, o_ref, *, lw, wop):
    # ONE aligned matmul against the block-Toeplitz weight; max over the LW aligned lane groups.
    y = jnp.dot(xf_ref[...], w_ref[...], preferred_element_type=jnp.float32)   # [tn, LW*WOp]
    m = y[:, 0:wop]
    for l in range(1, lw):                                                      # LW is tiny/static
        m = jnp.maximum(m, y[:, l * wop:(l + 1) * wop])
    o_ref[...] = m + b_ref[...]                                                 # bias commutes w/max


def conv_maxpool_pallas(xf, w_big, b_p, lw, wo):
    """Fused Conv1d(kernel=3, padding=1) + max-pool-over-time.
    xf: [N, (LW+2)*WE] flattened zero-padded words; w_big: block-Toeplitz [(LW+2)*WE, LW*WOp]."""
    N, Kf = xf.shape
    wop = w_big.shape[1] // lw
    tn = _row_tile(N)
    out = pl.pallas_call(
        functools.partial(_conv_maxpool_kernel, lw=lw, wop=wop),
        out_shape=jax.ShapeDtypeStruct((N, wop), jnp.float32),
        grid=(pl.cdiv(N, tn),),
        in_specs=[
            pl.BlockSpec((tn, Kf), lambda i: (i, 0)),
            pl.BlockSpec((Kf, lw * wop), lambda i: (0, 0)),
            pl.BlockSpec((1, wop), lambda i: (0, 0)),
        ],
        out_specs=pl.BlockSpec((tn, wop), lambda i: (i, 0)),
        compiler_params=pltpu.CompilerParams(
            dimension_semantics=("parallel",), vmem_limit_bytes=_VMEM_LIMIT),
    )(xf.astype(jnp.bfloat16), w_big, b_p)
    return out[:, :wo]


def _cls_ce_kernel(rep_ref, w_ref, b_ref, lab_ref, m_ref, pred_ref, ce_ref, *, n_valid):
    # logits^T: [Tp, tm] = w_t [Tp, Hrep] contracted with rep [tm, Hrep] over Hrep.
    logits = lax.dot_general(w_ref[...], rep_ref[...],
                             dimension_numbers=(((1,), (1,)), ((), ())),
                             preferred_element_type=jnp.float32) + b_ref[...]
    row = lax.broadcasted_iota(jnp.int32, logits.shape, 0)        # tag index on the sublane axis
    logits = jnp.where(row < n_valid, logits, _NEG_INF)
    mx = jnp.max(logits, axis=0, keepdims=True)                   # [1, tm]  (lane-dense)
    # argmax (first max) = min tag index attaining the max
    pred_ref[...] = jnp.min(jnp.where(logits >= mx, row, n_valid), axis=0, keepdims=True)
    lse = mx + jnp.log(jnp.sum(jnp.exp(logits - mx), axis=0, keepdims=True))
    # Rows whose label >= n_valid pick a finite sentinel; they are only ever used mask==0.
    picked = jnp.sum(jnp.where(row == lab_ref[...], logits, 0.0), axis=0, keepdims=True)
    ce_ref[...] = m_ref[...] * (lse - picked)


def classifier_ce_pallas(rep, w_t, b_t, labels, mask, num_labels):
    """Fused classifier matmul + masked per-position CE + argmax.
    rep: [M, 2Hp] (bf16); w_t: [Tp, 2Hp]; labels/mask: [M]. Returns (pred [M] i32, ce [M] f32)."""
    M, Hrep = rep.shape
    Tp = w_t.shape[0]
    tm = _cls_tile(M)
    lab = labels.reshape(1, M).astype(jnp.int32)
    msk = mask.reshape(1, M).astype(jnp.float32)
    pred, ce = pl.pallas_call(
        functools.partial(_cls_ce_kernel, n_valid=num_labels),
        out_shape=(jax.ShapeDtypeStruct((1, M), jnp.int32),
                   jax.ShapeDtypeStruct((1, M), jnp.float32)),
        grid=(pl.cdiv(M, tm),),
        in_specs=[
            pl.BlockSpec((tm, Hrep), lambda i: (i, 0)),
            pl.BlockSpec((Tp, Hrep), lambda i: (0, 0)),
            pl.BlockSpec((Tp, 1), lambda i: (0, 0)),
            pl.BlockSpec((1, tm), lambda i: (0, i)),
            pl.BlockSpec((1, tm), lambda i: (0, i)),
        ],
        out_specs=(pl.BlockSpec((1, tm), lambda i: (0, i)),
                   pl.BlockSpec((1, tm), lambda i: (0, i))),
        compiler_params=pltpu.CompilerParams(
            dimension_semantics=("parallel",), vmem_limit_bytes=_VMEM_LIMIT),
    )(rep.astype(jnp.bfloat16), w_t, b_t, lab, msk)
    return pred[0], ce[0]


def _bilstm_rec_kernel(xp_ref, wf_ref, wb_ref, ho_ref,
                       hf_sc, cf_sc, hb_sc, cb_sc, *, hp, unroll):
    # xp_ref: [S, tb, 8*Hp] bf16 gate pre-activations (bias included), fwd gates in lanes
    # [0,4Hp), bwd gates in [4Hp,8Hp). Each gate occupies an aligned Hp-lane slot.
    # ho_ref: [S, tb, 2*Hp] bf16: fwd hidden in lanes [0,Hp), bwd (un-reversed) in [Hp,2Hp).
    seq = xp_ref.shape[0]
    hf_sc[...] = jnp.zeros_like(hf_sc)
    cf_sc[...] = jnp.zeros_like(cf_sc)
    hb_sc[...] = jnp.zeros_like(hb_sc)
    cb_sc[...] = jnp.zeros_like(cb_sc)

    def cell(xg, h, c, w_ref):
        gates = xg.astype(jnp.float32) + jnp.dot(
            h.astype(jnp.bfloat16), w_ref[...], preferred_element_type=jnp.float32)
        i_g = jax.nn.sigmoid(gates[:, 0 * hp:1 * hp])
        f_g = jax.nn.sigmoid(gates[:, 1 * hp:2 * hp])
        g_g = jnp.tanh(gates[:, 2 * hp:3 * hp])
        o_g = jax.nn.sigmoid(gates[:, 3 * hp:4 * hp])
        c_new = f_g * c + i_g * g_g
        h_new = o_g * jnp.tanh(c_new)
        return h_new, c_new

    def step(t, carry):
        tr = seq - 1 - t                              # backward direction time index (folded-in)
        hf, cf = cell(xp_ref[t, :, 0:4 * hp], hf_sc[...], cf_sc[...], wf_ref)
        hb, cb = cell(xp_ref[tr, :, 4 * hp:8 * hp], hb_sc[...], cb_sc[...], wb_ref)
        hf_sc[...] = hf
        cf_sc[...] = cf
        hb_sc[...] = hb
        cb_sc[...] = cb
        ho_ref[t, :, 0:hp] = hf.astype(ho_ref.dtype)
        ho_ref[tr, :, hp:2 * hp] = hb.astype(ho_ref.dtype)
        return carry

    lax.fori_loop(0, seq, step, 0, unroll=unroll)     # partial unroll: bounded vreg live ranges


def lstm_recurrence_pallas(xp, whh_f, whh_b):
    """xp: [S, B, 8*Hp] bf16; whh_*: [Hp, 4*Hp] bf16 -> hidden states [S, B, 2*Hp] bf16."""
    S, B, _ = xp.shape
    Hp = whh_f.shape[0]
    tb = _lstm_batch_tile(B, S, Hp)
    unroll = S if S <= 8 else 8
    return pl.pallas_call(
        functools.partial(_bilstm_rec_kernel, hp=Hp, unroll=unroll),
        out_shape=jax.ShapeDtypeStruct((S, B, 2 * Hp), jnp.bfloat16),
        grid=(pl.cdiv(B, tb),),
        in_specs=[
            pl.BlockSpec((S, tb, 8 * Hp), lambda i: (0, i, 0)),
            pl.BlockSpec((Hp, 4 * Hp), lambda i: (0, 0)),
            pl.BlockSpec((Hp, 4 * Hp), lambda i: (0, 0)),
        ],
        out_specs=pl.BlockSpec((S, tb, 2 * Hp), lambda i: (0, i, 0)),
        scratch_shapes=[pltpu.VMEM((tb, Hp), jnp.float32)] * 4,
        compiler_params=pltpu.CompilerParams(
            dimension_semantics=("parallel",), vmem_limit_bytes=_VMEM_LIMIT),
    )(xp, whh_f, whh_b)


# ------------------------------ LSTM / BiLSTM --------------------------------

def bilstm_tm(x_tm, lp):
    """Time-major bidirectional LSTM. x_tm: [S, B, I] -> rep [S, B, 2*Hp] bf16 (padded layout)."""
    S, B, I = x_tm.shape
    Hp = lp['whh_f'].shape[0]
    # Time-parallel input projection for BOTH directions (weights pre-laid-out/padded at prep).
    xp = linear_pallas(x_tm.reshape(S * B, I), lp['w_in'], lp['b_in'], out_dtype=jnp.bfloat16)
    xp = xp.reshape(S, B, 8 * Hp)
    return lstm_recurrence_pallas(xp, lp['whh_f'], lp['whh_b'])


# -------------------------- Module_auxiliary / Module_main -------------------

def auxiliary_forward(prep_aux, x_tm, labels_tm, masks_tm, num_labels):
    S, B, _ = x_tm.shape
    rep = bilstm_tm(x_tm, prep_aux['lstm'])                       # [S, B, 2Hp] bf16
    M = S * B
    pred, ce = classifier_ce_pallas(rep.reshape(M, rep.shape[-1]),
                                    prep_aux['cls']['w_t'], prep_aux['cls']['b'],
                                    labels_tm.reshape(M), masks_tm.reshape(M), num_labels)
    den = jnp.sum(masks_tm.astype(jnp.float32))
    loss = jnp.where(den > 0, jnp.sum(ce) / den, 0.0)             # masked mean, /0 guarded
    return loss, pred.reshape(S, B)


def main_get_feats(prep_main, embeddings_tm, label_emb_tm, num_labels):
    x = jnp.concatenate([label_emb_tm, embeddings_tm], axis=-1)   # (label_emb, emb) order
    S, B, _ = x.shape
    rep = bilstm_tm(x, prep_main['lstm'])
    feats = linear_pallas(rep.reshape(S * B, rep.shape[-1]),
                          prep_main['h2t']['w'], prep_main['h2t']['b'], out_dtype=jnp.float32)
    return feats[:, :num_labels].reshape(S, B, num_labels)


# ----------------------------------- CRF --------------------------------------
# TODO(synk): CRF forward algorithm and Viterbi decode are sequential scans over tiny [B,T,T]
# tensors — kept in JAX (emissions already come from Pallas matmuls). Time-major layout.

def crf_log_likelihood(em, tags, mask, start, end, trans):
    S, B, T = em.shape
    barange = jnp.arange(B)

    # numerator (score of the gold path)
    score = start[tags[0]] + em[0, barange, tags[0]]

    def num_body(i, s):
        return s + (trans[tags[i - 1], tags[i]] + em[i, barange, tags[i]]) * mask[i]

    score = lax.fori_loop(1, S, num_body, score)
    seq_ends = jnp.sum(mask, axis=0).astype(jnp.int32) - 1
    last_tags = tags[seq_ends, barange]
    numerator = score + end[last_tags]

    # denominator (log partition, forward algorithm)
    alpha = start[None, :] + em[0]

    def den_body(i, a):
        nxt = jax.nn.logsumexp(a[:, :, None] + trans[None, :, :] + em[i][:, None, :], axis=1)
        m = mask[i][:, None]
        return m * nxt + (1.0 - m) * a

    alpha = lax.fori_loop(1, S, den_body, alpha)
    denominator = jax.nn.logsumexp(alpha + end[None, :], axis=1)
    return jnp.sum(numerator - denominator)


def crf_viterbi_decode(em, start, end, trans):
    S, B, T = em.shape
    score0 = start[None, :] + em[0]

    def step(score, emt):
        cand = score[:, :, None] + trans[None, :, :]              # [B, T_prev, T_cur]
        best = jnp.max(cand, axis=1)
        idx = jnp.argmax(cand, axis=1)
        return best + emt, idx

    score, history = lax.scan(step, score0, em[1:])
    score = score + end[None, :]
    last = jnp.argmax(score, axis=1)                              # [B]

    def back(tag, hist):
        prev = jnp.take_along_axis(hist, tag[:, None], axis=1)[:, 0]
        return prev, prev

    _, prevs = lax.scan(back, last, history, reverse=True)        # [S-1, B]
    return jnp.concatenate([prevs, last[None, :]], axis=0)        # [S, B] time-major


# --------------------------------- encoder ------------------------------------

def encoder(prep, cfg, input_ids, wubi_ids):
    # Time-major [S, B, ...]: only tiny int arrays get transposed; big tensors are produced
    # directly in the layout the recurrence/classifier consume.
    WE, WO = cfg['wubi_embedding_dim'], cfg['wubi_out_dim']
    ids_t = input_ids.T                                           # [S, B]
    emb = prep['emb'][ids_t]                                      # [S, B, CE]; dropout eval=identity
    wubi_t = jnp.transpose(wubi_ids, (1, 0, 2))                   # [S, B, LW]
    S, B, LW = wubi_t.shape
    we_mat = prep['wubi_emb'][wubi_t.reshape(S * B, LW)]          # [S*B, LW, WE]
    xpad = jnp.pad(we_mat, ((0, 0), (1, 1), (0, 0)))              # Conv1d padding=1
    xf = xpad.reshape(S * B, (LW + 2) * WE)
    wubi_out = conv_maxpool_pallas(xf, prep['cnn']['w'], prep['cnn']['b'], LW, WO)
    return jnp.concatenate([emb, wubi_out.reshape(S, B, WO)], axis=-1)


# -------------------------------- full forward ---------------------------------

def model_forward(prep, cfg, input_ids, wubi_ids, true_labels, masks, word_lengths=None):
    T = cfg['num_labels']
    labels_tm = true_labels.T                                     # [S, B]
    masks_tm = masks.T
    maskf_tm = masks_tm.astype(jnp.float32)
    embeddings = encoder(prep, cfg, input_ids, wubi_ids)          # [S, B, CE+WO]

    loss_aux, pred = auxiliary_forward(prep['aux1'], embeddings, labels_tm, masks_tm, T)
    whole_aux_loss = loss_aux
    label_emb = prep['label_emb'][pred]                           # [S, B, LD]

    for i in range(cfg['auxiliary_num'] - 1):
        whole = jnp.concatenate([embeddings, label_emb], axis=-1)
        loss_aux, pred = auxiliary_forward(prep['aux{}'.format(i + 2)], whole,
                                           labels_tm, masks_tm, T)
        whole_aux_loss = whole_aux_loss + loss_aux
        label_emb = prep['label_emb'][pred]

    feats = main_get_feats(prep['main'], embeddings, label_emb, T)
    for _ in range(cfg['refactor_num']):
        pred = crf_viterbi_decode(feats, prep['main']['crf_start'],
                                  prep['main']['crf_end'], prep['main']['crf_trans'])
        label_emb = prep['label_emb'][pred]
        feats = main_get_feats(prep['main'], embeddings, label_emb, T)

    llh = crf_log_likelihood(feats, labels_tm, maskf_tm,
                             prep['main']['crf_start'], prep['main']['crf_end'],
                             prep['main']['crf_trans'])
    loss_main = -llh                                              # CRF NLL, reduction='sum'
    return loss_main + cfg['loss_lambda'] * whole_aux_loss


# ------------------ one-time parameter preparation (layout/padding) ------------

def _prep_lstm(lp, H, Hp):
    I = lp['w_ih_f'].shape[1]

    def in_cols(w_ih):                       # [4H, I] -> [I, 4Hp], per-gate 128-aligned slots
        out = jnp.zeros((I, 4 * Hp), jnp.float32)
        for g in range(4):
            out = out.at[:, g * Hp:g * Hp + H].set(w_ih[g * H:(g + 1) * H, :].T)
        return out

    def bias_cols(b):                        # [4H] -> [4Hp]
        out = jnp.zeros((4 * Hp,), jnp.float32)
        for g in range(4):
            out = out.at[g * Hp:g * Hp + H].set(b[g * H:(g + 1) * H])
        return out

    def hh_mat(w_hh):                        # [4H, H] -> [Hp, 4Hp]
        out = jnp.zeros((Hp, 4 * Hp), jnp.float32)
        for g in range(4):
            out = out.at[:H, g * Hp:g * Hp + H].set(w_hh[g * H:(g + 1) * H, :].T)
        return out

    w_in = jnp.concatenate([in_cols(lp['w_ih_f']), in_cols(lp['w_ih_b'])], axis=1)   # [I, 8Hp]
    b_in = jnp.concatenate([bias_cols(lp['b_ih_f'] + lp['b_hh_f']),
                            bias_cols(lp['b_ih_b'] + lp['b_hh_b'])]).reshape(1, 8 * Hp)
    return {'w_in': w_in.astype(jnp.bfloat16), 'b_in': b_in,
            'whh_f': hh_mat(lp['w_hh_f']).astype(jnp.bfloat16),
            'whh_b': hh_mat(lp['w_hh_b']).astype(jnp.bfloat16)}


def _prep_cls(w, b, H, Hp, Tp):              # w: [T, 2H] -> transposed/padded [Tp, 2Hp]
    T = w.shape[0]
    wt = jnp.zeros((Tp, 2 * Hp), jnp.float32)
    wt = wt.at[:T, 0:H].set(w[:, 0:H])
    wt = wt.at[:T, Hp:Hp + H].set(w[:, H:2 * H])
    bp = jnp.zeros((Tp, 1), jnp.float32).at[:T, 0].set(b)
    return {'w_t': wt.astype(jnp.bfloat16), 'b': bp}


def _prep_h2t(w, b, H, Hp, Tp):              # w: [T, 2H] -> [2Hp, Tp]
    T = w.shape[0]
    wk = jnp.zeros((2 * Hp, Tp), jnp.float32)
    wk = wk.at[0:H, :T].set(w[:, 0:H].T)
    wk = wk.at[Hp:Hp + H, :T].set(w[:, H:2 * H].T)
    bp = jnp.zeros((1, Tp), jnp.float32).at[0, :T].set(b)
    return {'w': wk.astype(jnp.bfloat16), 'b': bp}


def _prep_cnn(cnn_w, cnn_b, lw):             # [WO, WE, 3] -> block-Toeplitz [(LW+2)*WE, LW*WOp]
    WO, WE, K = cnn_w.shape
    WOp = _round_up(WO, _LANE)
    base = jnp.transpose(cnn_w, (2, 1, 0)).reshape(K * WE, WO)    # row k*WE+i <-> w[o,i,k]
    big = jnp.zeros(((lw + 2) * WE, lw * WOp), jnp.float32)
    for l in range(lw):
        big = big.at[l * WE:(l + K) * WE, l * WOp:l * WOp + WO].set(base)
    bp = jnp.zeros((1, WOp), jnp.float32).at[0, :WO].set(cnn_b)
    return {'w': big.astype(jnp.bfloat16), 'b': bp}


def prepare_params(params, cfg):
    """One-time weight layout: transposes, per-gate 128-lane padding, bf16 casts (outside jit)."""
    T = cfg['num_labels']
    Tp = _round_up(T, _LANE)
    H = cfg['hidden_dim'] // 2
    Hp = _round_up(H, _LANE)
    prep = {
        'emb': params['emb'],
        'label_emb': params['label_emb'],
        'wubi_emb': params['wubi_emb'],
        'cnn': _prep_cnn(params['cnn_w'], params['cnn_b'], cfg['max_word_len']),
    }

    def prep_aux(ap):
        return {'lstm': _prep_lstm(ap['lstm'], H, Hp),
                'cls': _prep_cls(ap['cls_w'], ap['cls_b'], H, Hp, Tp)}

    prep['aux1'] = prep_aux(params['aux1'])
    for i in range(cfg['auxiliary_num'] - 1):
        k = 'aux{}'.format(i + 2)
        prep[k] = prep_aux(params[k])
    mp = params['main']
    prep['main'] = {'lstm': _prep_lstm(mp['lstm'], H, Hp),
                    'h2t': _prep_h2t(mp['h2t_w'], mp['h2t_b'], H, Hp, Tp),
                    'crf_start': mp['crf_start'], 'crf_end': mp['crf_end'],
                    'crf_trans': mp['crf_trans']}
    return prep


# --------------------------- deterministic parameter init ----------------------

def random_embedding(key, vocab_num, dim):
    scale = jnp.sqrt(3.0 / dim)
    return jax.random.uniform(key, (vocab_num, dim), jnp.float32, -scale, scale)


def init_lstm(key, input_size, hidden):
    ks = jax.random.split(key, 8)
    s = 1.0 / jnp.sqrt(float(hidden))

    def u(k, shape):
        return jax.random.uniform(k, shape, jnp.float32, -s, s)

    return {
        'w_ih_f': u(ks[0], (4 * hidden, input_size)),
        'w_hh_f': u(ks[1], (4 * hidden, hidden)),
        'b_ih_f': u(ks[2], (4 * hidden,)),
        'b_hh_f': u(ks[3], (4 * hidden,)),
        'w_ih_b': u(ks[4], (4 * hidden, input_size)),
        'w_hh_b': u(ks[5], (4 * hidden, hidden)),
        'b_ih_b': u(ks[6], (4 * hidden,)),
        'b_hh_b': u(ks[7], (4 * hidden,)),
    }


def init_params(key, cfg):
    ks = jax.random.split(key, 8)
    CE, WE, WO = cfg['char_embedding_dim'], cfg['wubi_embedding_dim'], cfg['wubi_out_dim']
    LD, T, HD = cfg['label_embedding_dim'], cfg['num_labels'], cfg['hidden_dim']

    params = {}
    params['emb'] = random_embedding(ks[0], cfg['vocab_size'], CE)       # pretrained lookup stub
    params['label_emb'] = random_embedding(ks[1], T, LD)
    wubi = random_embedding(ks[2], cfg['alphabet_size'], WE)
    params['wubi_emb'] = wubi.at[0].set(0.0)                             # row 0 zeroed as in __init__
    cscale = 1.0 / jnp.sqrt(WE * 3.0)
    params['cnn_w'] = jax.random.uniform(ks[3], (WO, WE, 3), jnp.float32, -cscale, cscale)
    params['cnn_b'] = jax.random.uniform(ks[4], (WO,), jnp.float32, -cscale, cscale)

    # Note: the original PyTorch config assumes wubi_out_dim == wubi_embedding_dim; the actual
    # encoder output width is CE + WO, which we use here.
    aux_in1 = CE + WO
    aux_in2 = aux_in1 + LD
    main_in = CE + WO + LD

    def make_aux(k, in_size):
        k1, k2, k3 = jax.random.split(k, 3)
        s = 1.0 / jnp.sqrt(float(HD))
        return {'lstm': init_lstm(k1, in_size, HD // 2),
                'cls_w': jax.random.uniform(k2, (T, HD), jnp.float32, -s, s),
                'cls_b': jax.random.uniform(k3, (T,), jnp.float32, -s, s)}

    params['aux1'] = make_aux(ks[5], aux_in1)
    for i in range(cfg['auxiliary_num'] - 1):
        params['aux{}'.format(i + 2)] = make_aux(jax.random.fold_in(ks[6], i), aux_in2)

    k1, k2, k3, k4 = jax.random.split(ks[7], 4)
    s = 1.0 / jnp.sqrt(float(HD))
    params['main'] = {
        'lstm': init_lstm(k1, main_in, HD // 2),
        'h2t_w': jax.random.uniform(k2, (T, HD), jnp.float32, -s, s),
        'h2t_b': jax.random.uniform(k3, (T,), jnp.float32, -s, s),
        'crf_start': jax.random.uniform(jax.random.fold_in(k4, 0), (T,), jnp.float32, -0.1, 0.1),
        'crf_end': jax.random.uniform(jax.random.fold_in(k4, 1), (T,), jnp.float32, -0.1, 0.1),
        'crf_trans': jax.random.uniform(jax.random.fold_in(k4, 2), (T, T), jnp.float32, -0.1, 0.1),
    }
    return params


# ------------------------------------ main -------------------------------------

if __name__ == "__main__":
    cfg = dict(num_labels=5, label_embedding_dim=6, wubi_embedding_dim=8, wubi_out_dim=8,
               loss_lambda=0.5, auxiliary_num=2, refactor_num=1,
               char_embedding_dim=16, hidden_dim=16,
               vocab_size=20, alphabet_size=12,
               batch=2, seq=8, max_word_len=4)

    key = jax.random.PRNGKey(0)
    params = init_params(key, cfg)
    prep = prepare_params(params, cfg)        # one-time layout/padding/bf16 prep (outside jit)

    kk = jax.random.split(jax.random.PRNGKey(0), 4)
    B, S, LW = cfg['batch'], cfg['seq'], cfg['max_word_len']
    input_ids = jax.random.randint(kk[0], (B, S), 0, cfg['vocab_size'], dtype=jnp.int32)
    wubi_ids = jax.random.randint(kk[1], (B, S, LW), 0, cfg['alphabet_size'], dtype=jnp.int32)
    true_labels = jax.random.randint(kk[2], (B, S), 0, cfg['num_labels'], dtype=jnp.int32)
    lengths = jnp.array([S, S - 3], dtype=jnp.int32)
    masks = (jnp.arange(S)[None, :] < lengths[:, None]).astype(jnp.int32)   # mask[:,0]==1 (CRF req.)
    word_lengths = jnp.full((B, S), LW, jnp.int32)   # unused in wubi_mode='CNN'

    fwd = jax.jit(lambda p, a, b, c, d, e: model_forward(p, cfg, a, b, c, d, e))
    loss = fwd(prep, input_ids, wubi_ids, true_labels, masks, word_lengths)
    jax.block_until_ready(loss)
    assert loss.shape == () and bool(jnp.isfinite(loss))
    print("KERNEL_OK")
</pallas_src>

<mosaic_0001>
module attributes {stable_mosaic.version = 11 : i64} {
  func.func @_conv_maxpool_kernel(%arg0: i32, %arg1: memref<16x48xbf16, #tpu.memory_space<vmem>>, %arg2: memref<48x512xbf16, #tpu.memory_space<vmem>>, %arg3: memref<1x128xf32, #tpu.memory_space<vmem>>, %arg4: memref<16x128xf32, #tpu.memory_space<vmem>>) attributes {dimension_semantics = [#tpu.dimension_semantics<parallel>], iteration_bounds = array<i64: 1>, scalar_prefetch = 0 : i64, scratch_operands = 0 : i64, tpu.core_type = #tpu.core_type<tc>, window_params = [{transform_indices = @transform_0, window_bounds = array<i64: 16, 48>}, {pipeline_mode = #tpu.pipeline_mode<synchronous>, transform_indices = @transform_1, window_bounds = array<i64: 48, 512>}, {pipeline_mode = #tpu.pipeline_mode<synchronous>, transform_indices = @transform_2, window_bounds = array<i64: 1, 128>}, {transform_indices = @transform_3, window_bounds = array<i64: 16, 128>}]} {
    %c0 = arith.constant 0 : index
    %c0_0 = arith.constant 0 : index
    %0 = vector.load %arg1[%c0, %c0_0] : memref<16x48xbf16, #tpu.memory_space<vmem>>, vector<16x48xbf16>
    %c0_1 = arith.constant 0 : index
    %c0_2 = arith.constant 0 : index
    %1 = vector.load %arg2[%c0_1, %c0_2] : memref<48x512xbf16, #tpu.memory_space<vmem>>, vector<48x512xbf16>
    %cst = arith.constant dense<0.000000e+00> : vector<16x512xf32>
    %2 = tpu.matmul %0, %1, %cst {dimension_numbers = #tpu.dot_dimension_numbers<[1], [0], [0], [1], [0, 0, 1, 1], [], []>} : vector<16x48xbf16>, vector<48x512xbf16>, vector<16x512xf32> -> vector<16x512xf32>
    %3 = vector.extract_strided_slice %2 {offsets = [0, 0], sizes = [16, 128], strides = [1, 1]} : vector<16x512xf32> to vector<16x128xf32>
    %4 = vector.extract_strided_slice %2 {offsets = [0, 128], sizes = [16, 128], strides = [1, 1]} : vector<16x512xf32> to vector<16x128xf32>
    %5 = arith.maximumf %3, %4 : vector<16x128xf32>
    %6 = vector.extract_strided_slice %2 {offsets = [0, 256], sizes = [16, 128], strides = [1, 1]} : vector<16x512xf32> to vector<16x128xf32>
    %7 = arith.maximumf %5, %6 : vector<16x128xf32>
    %8 = vector.extract_strided_slice %2 {offsets = [0, 384], sizes = [16, 128], strides = [1, 1]} : vector<16x512xf32> to vector<16x128xf32>
    %9 = arith.maximumf %7, %8 : vector<16x128xf32>
    %c0_3 = arith.constant 0 : index
    %c0_4 = arith.constant 0 : index
    %10 = vector.load %arg3[%c0_3, %c0_4] : memref<1x128xf32, #tpu.memory_space<vmem>>, vector<1x128xf32>
    %11 = vector.broadcast %10 : vector<1x128xf32> to vector<16x128xf32>
    %12 = arith.addf %9, %11 : vector<16x128xf32>
    %c0_5 = arith.constant 0 : index
    %c0_6 = arith.constant 0 : index
    %13 = vector.load %arg4[%c0_5, %c0_6] : memref<16x128xf32, #tpu.memory_space<vmem>>, vector<16x128xf32>
    tpu.vector_store %arg4[%c0_5, %c0_6], %12 {strides = array<i32>} : memref<16x128xf32, #tpu.memory_space<vmem>>, vector<16x128xf32>,
    return
  }
  func.func @transform_0(%arg0: i32) -> (i32, i32) {
    %c0_i32 = arith.constant 0 : i32
    %c0_i32_0 = arith.constant 0 : i32
    return %arg0, %c0_i32 : i32, i32
  }
  func.func @transform_1(%arg0: i32) -> (i32, i32) {
    %c0_i32 = arith.constant 0 : i32
    %c0_i32_0 = arith.constant 0 : i32
    %c0_i32_1 = arith.constant 0 : i32
    return %c0_i32, %c0_i32_0 : i32, i32
  }
  func.func @transform_2(%arg0: i32) -> (i32, i32) {
    %c0_i32 = arith.constant 0 : i32
    %c0_i32_0 = arith.constant 0 : i32
    %c0_i32_1 = arith.constant 0 : i32
    return %c0_i32, %c0_i32_0 : i32, i32
  }
  func.func @transform_3(%arg0: i32) -> (i32, i32) {
    %c0_i32 = arith.constant 0 : i32
    %c0_i32_0 = arith.constant 0 : i32
    return %arg0, %c0_i32 : i32, i32
  }
}

module attributes {stable_mosaic.version = 11 : i64} {
  func.func @_linear_kernel(%arg0: i32, %arg1: memref<16x24xbf16, #tpu.memory_space<vmem>>, %arg2: memref<24x1024xbf16, #tpu.memory_space<vmem>>, %arg3: memref<1x1024xf32, #tpu.memory_space<vmem>>, %arg4: memref<16x1024xbf16, #tpu.memory_space<vmem>>) attributes {dimension_semantics = [#tpu.dimension_semantics<parallel>], iteration_bounds = array<i64: 1>, scalar_prefetch = 0 : i64, scratch_operands = 0 : i64, tpu.core_type = #tpu.core_type<tc>, window_params = [{transform_indices = @transform_0, window_bounds = array<i64: 16, 24>}, {pipeline_mode = #tpu.pipeline_mode<synchronous>, transform_indices = @transform_1, window_bounds = array<i64: 24, 1024>}, {pipeline_mode = #tpu.pipeline_mode<synchronous>, transform_indices = @transform_2, window_bounds = array<i64: 1, 1024>}, {transform_indices = @transform_3, window_bounds = array<i64: 16, 1024>}]} {
    %c0 = arith.constant 0 : index
    %c0_0 = arith.constant 0 : index
    %0 = vector.load %arg1[%c0, %c0_0] : memref<16x24xbf16, #tpu.memory_space<vmem>>, vector<16x24xbf16>
    %c0_1 = arith.constant 0 : index
    %c0_2 = arith.constant 0 : index
    %1 = vector.load %arg2[%c0_1, %c0_2] : memref<24x1024xbf16, #tpu.memory_space<vmem>>, vector<24x1024xbf16>
    %cst = arith.constant dense<0.000000e+00> : vector<16x1024xf32>
    %2 = tpu.matmul %0, %1, %cst {dimension_numbers = #tpu.dot_dimension_numbers<[1], [0], [0], [1], [0, 0, 1, 1], [], []>} : vector<16x24xbf16>, vector<24x1024xbf16>, vector<16x1024xf32> -> vector<16x1024xf32>
    %c0_3 = arith.constant 0 : index
    %c0_4 = arith.constant 0 : index
    %3 = vector.load %arg3[%c0_3, %c0_4] : memref<1x1024xf32, #tpu.memory_space<vmem>>, vector<1x1024xf32>
    %4 = vector.broadcast %3 : vector<1x1024xf32> to vector<16x1024xf32>
    %5 = arith.addf %2, %4 : vector<16x1024xf32>
    %6 = arith.truncf %5 : vector<16x1024xf32> to vector<16x1024xbf16>
    %c0_5 = arith.constant 0 : index
    %c0_6 = arith.constant 0 : index
    %7 = vector.load %arg4[%c0_5, %c0_6] : memref<16x1024xbf16, #tpu.memory_space<vmem>>, vector<16x1024xbf16>
    tpu.vector_store %arg4[%c0_5, %c0_6], %6 {strides = array<i32>} : memref<16x1024xbf16, #tpu.memory_space<vmem>>, vector<16x1024xbf16>,
    return
  }
  func.func @transform_0(%arg0: i32) -> (i32, i32) {
    %c0_i32 = arith.constant 0 : i32
    %c0_i32_0 = arith.constant 0 : i32
    return %arg0, %c0_i32 : i32, i32
  }
  func.func @transform_1(%arg0: i32) -> (i32, i32) {
    %c0_i32 = arith.constant 0 : i32
    %c0_i32_0 = arith.constant 0 : i32
    %c0_i32_1 = arith.constant 0 : i32
    return %c0_i32, %c0_i32_0 : i32, i32
  }
  func.func @transform_2(%arg0: i32) -> (i32, i32) {
    %c0_i32 = arith.constant 0 : i32
    %c0_i32_0 = arith.constant 0 : i32
    %c0_i32_1 = arith.constant 0 : i32
    return %c0_i32, %c0_i32_0 : i32, i32
  }
  func.func @transform_3(%arg0: i32) -> (i32, i32) {
    %c0_i32 = arith.constant 0 : i32
    %c0_i32_0 = arith.constant 0 : i32
    return %arg0, %c0_i32 : i32, i32
  }
}

module attributes {stable_mosaic.version = 11 : i64} {
  func.func @_bilstm_rec_kernel(%arg0: i32, %arg1: memref<8x2x1024xbf16, #tpu.memory_space<vmem>>, %arg2: memref<128x512xbf16, #tpu.memory_space<vmem>>, %arg3: memref<128x512xbf16, #tpu.memory_space<vmem>>, %arg4: memref<8x2x256xbf16, #tpu.memory_space<vmem>>, %arg5: memref<2x128xf32, #tpu.memory_space<vmem>>, %arg6: memref<2x128xf32, #tpu.memory_space<vmem>>, %arg7: memref<2x128xf32, #tpu.memory_space<vmem>>, %arg8: memref<2x128xf32, #tpu.memory_space<vmem>>) attributes {dimension_semantics = [#tpu.dimension_semantics<parallel>], iteration_bounds = array<i64: 1>, scalar_prefetch = 0 : i64, scratch_operands = 4 : i64, tpu.core_type = #tpu.core_type<tc>, window_params = [{transform_indices = @transform_0, window_bounds = array<i64: 8, 2, 1024>}, {pipeline_mode = #tpu.pipeline_mode<synchronous>, transform_indices = @transform_1, window_bounds = array<i64: 128, 512>}, {pipeline_mode = #tpu.pipeline_mode<synchronous>, transform_indices = @transform_2, window_bounds = array<i64: 128, 512>}, {transform_indices = @transform_3, window_bounds = array<i64: 8, 2, 256>}]} {
    %cst = arith.constant 0.000000e+00 : f32
    %0 = vector.broadcast %cst : f32 to vector<2x128xf32>
    %c0 = arith.constant 0 : index
    %c0_0 = arith.constant 0 : index
    %1 = vector.load %arg5[%c0, %c0_0] : memref<2x128xf32, #tpu.memory_space<vmem>>, vector<2x128xf32>
    tpu.vector_store %arg5[%c0, %c0_0], %0 {strides = array<i32>} : memref<2x128xf32, #tpu.memory_space<vmem>>, vector<2x128xf32>,
    %cst_1 = arith.constant 0.000000e+00 : f32
    %2 = vector.broadcast %cst_1 : f32 to vector<2x128xf32>
    %c0_2 = arith.constant 0 : index
    %c0_3 = arith.constant 0 : index
    %3 = vector.load %arg6[%c0_2, %c0_3] : memref<2x128xf32, #tpu.memory_space<vmem>>, vector<2x128xf32>
    tpu.vector_store %arg6[%c0_2, %c0_3], %2 {strides = array<i32>} : memref<2x128xf32, #tpu.memory_space<vmem>>, vector<2x128xf32>,
    %cst_4 = arith.constant 0.000000e+00 : f32
    %4 = vector.broadcast %cst_4 : f32 to vector<2x128xf32>
    %c0_5 = arith.constant 0 : index
    %c0_6 = arith.constant 0 : index
    %5 = vector.load %arg7[%c0_5, %c0_6] : memref<2x128xf32, #tpu.memory_space<vmem>>, vector<2x128xf32>
    tpu.vector_store %arg7[%c0_5, %c0_6], %4 {strides = array<i32>} : memref<2x128xf32, #tpu.memory_space<vmem>>, vector<2x128xf32>,
    %cst_7 = arith.constant 0.000000e+00 : f32
    %6 = vector.broadcast %cst_7 : f32 to vector<2x128xf32>
    %c0_8 = arith.constant 0 : index
    %c0_9 = arith.constant 0 : index
    %7 = vector.load %arg8[%c0_8, %c0_9] : memref<2x128xf32, #tpu.memory_space<vmem>>, vector<2x128xf32>
    tpu.vector_store %arg8[%c0_8, %c0_9], %6 {strides = array<i32>} : memref<2x128xf32, #tpu.memory_space<vmem>>, vector<2x128xf32>,
    %c0_i32 = arith.constant 0 : i32
    %c7_i32 = arith.constant 7 : i32
    %8 = arith.subi %c7_i32, %c0_i32 : i32
    %9 = arith.index_cast %c0_i32 : i32 to index
    %c0_10 = arith.constant 0 : index
    %c0_11 = arith.constant 0 : index
    %10 = vector.load %arg1[%9, %c0_10, %c0_11] : memref<8x2x1024xbf16, #tpu.memory_space<vmem>>, vector<1x2x512xbf16>
    %11 = vector.shape_cast %10 : vector<1x2x512xbf16> to vector<2x512xbf16>
    %c0_12 = arith.constant 0 : index
    %c0_13 = arith.constant 0 : index
    %12 = vector.load %arg5[%c0_12, %c0_13] : memref<2x128xf32, #tpu.memory_space<vmem>>, vector<2x128xf32>
    %c0_14 = arith.constant 0 : index
    %c0_15 = arith.constant 0 : index
    %13 = vector.load %arg6[%c0_14, %c0_15] : memref<2x128xf32, #tpu.memory_space<vmem>>, vector<2x128xf32>
    %14 = arith.extf %11 : vector<2x512xbf16> to vector<2x512xf32>
    %15 = arith.truncf %12 : vector<2x128xf32> to vector<2x128xbf16>
    %c0_16 = arith.constant 0 : index
    %c0_17 = arith.constant 0 : index
    %16 = vector.load %arg2[%c0_16, %c0_17] : memref<128x512xbf16, #tpu.memory_space<vmem>>, vector<128x512xbf16>
    %cst_18 = arith.constant dense<0.000000e+00> : vector<2x512xf32>
    %17 = tpu.matmul %15, %16, %cst_18 {dimension_numbers = #tpu.dot_dimension_numbers<[1], [0], [0], [1], [0, 0, 1, 1], [], []>} : vector<2x128xbf16>, vector<128x512xbf16>, vector<2x512xf32> -> vector<2x512xf32>
    %18 = arith.addf %14, %17 : vector<2x512xf32>
    %19 = vector.extract_strided_slice %18 {offsets = [0, 0], sizes = [2, 128], strides = [1, 1]} : vector<2x512xf32> to vector<2x128xf32>
    %20 = arith.negf %19 : vector<2x128xf32>
    %21 = math.exp %20 : vector<2x128xf32>
    %cst_19 = arith.constant 1.000000e+00 : f32
    %22 = vector.broadcast %cst_19 : f32 to vector<2x128xf32>
    %23 = arith.addf %22, %21 : vector<2x128xf32>
    %24 = arith.divf %22, %23 : vector<2x128xf32>
    %25 = vector.extract_strided_slice %18 {offsets = [0, 128], sizes = [2, 128], strides = [1, 1]} : vector<2x512xf32> to vector<2x128xf32>
    %26 = arith.negf %25 : vector<2x128xf32>
    %27 = math.exp %26 : vector<2x128xf32>
    %cst_20 = arith.constant 1.000000e+00 : f32
    %28 = vector.broadcast %cst_20 : f32 to vector<2x128xf32>
    %29 = arith.addf %28, %27 : vector<2x128xf32>
    %30 = arith.divf %28, %29 : vector<2x128xf32>
    %31 = vector.extract_strided_slice %18 {offsets = [0, 256], sizes = [2, 128], strides = [1, 1]} : vector<2x512xf32> to vector<2x128xf32>
    %32 = math.tanh %31 : vector<2x128xf32>
    %33 = vector.extract_strided_slice %18 {offsets = [0, 384], sizes = [2, 128], strides = [1, 1]} : vector<2x512xf32> to vector<2x128xf32>
    %34 = arith.negf %33 : vector<2x128xf32>
    %35 = math.exp %34 : vector<2x128xf32>
    %cst_21 = arith.constant 1.000000e+00 : f32
    %36 = vector.broadcast %cst_21 : f32 to vector<2x128xf32>
    %37 = arith.addf %36, %35 : vector<2x128xf32>
    %38 = arith.divf %36, %37 : vector<2x128xf32>
    %39 = arith.mulf %30, %13 : vector<2x128xf32>
    %40 = arith.mulf %24, %32 : vector<2x128xf32>
    %41 = arith.addf %39, %40 : vector<2x128xf32>
    %42 = math.tanh %41 : vector<2x128xf32>
    %43 = arith.mulf %38, %42 : vector<2x128xf32>
    %44 = arith.index_cast %8 : i32 to index
    %c0_22 = arith.constant 0 : index
    %c512 = arith.constant 512 : index
    %45 = vector.load %arg1[%44, %c0_22, %c512] : memref<8x2x1024xbf16, #tpu.memory_space<vmem>>, vector<1x2x512xbf16>
    %46 = vector.shape_cast %45 : vector<1x2x512xbf16> to vector<2x512xbf16>
    %c0_23 = arith.constant 0 : index
    %c0_24 = arith.constant 0 : index
    %47 = vector.load %arg7[%c0_23, %c0_24] : memref<2x128xf32, #tpu.memory_space<vmem>>, vector<2x128xf32>
    %c0_25 = arith.constant 0 : index
    %c0_26 = arith.constant 0 : index
    %48 = vector.load %arg8[%c0_25, %c0_26] : memref<2x128xf32, #tpu.memory_space<vmem>>, vector<2x128xf32>
    %49 = arith.extf %46 : vector<2x512xbf16> to vector<2x512xf32>
    %50 = arith.truncf %47 : vector<2x128xf32> to vector<2x128xbf16>
    %c0_27 = arith.constant 0 : index
    %c0_28 = arith.constant 0 : index
    %51 = vector.load %arg3[%c0_27, %c0_28] : memref<128x512xbf16, #tpu.memory_space<vmem>>, vector<128x512xbf16>
    %cst_29 = arith.constant dense<0.000000e+00> : vector<2x512xf32>
    %52 = tpu.matmul %50, %51, %cst_29 {dimension_numbers = #tpu.dot_dimension_numbers<[1], [0], [0], [1], [0, 0, 1, 1], [], []>} : vector<2x128xbf16>, vector<128x512xbf16>, vector<2x512xf32> -> vector<2x512xf32>
    %53 = arith.addf %49, %52 : vector<2x512xf32>
    %54 = vector.extract_strided_slice %53 {offsets = [0, 0], sizes = [2, 128], strides = [1, 1]} : vector<2x512xf32> to vector<2x128xf32>
    %55 = arith.negf %54 : vector<2x128xf32>
    %56 = math.exp %55 : vector<2x128xf32>
    %cst_30 = arith.constant 1.000000e+00 : f32
    %57 = vector.broadcast %cst_30 : f32 to vector<2x128xf32>
    %58 = arith.addf %57, %56 : vector<2x128xf32>
    %59 = arith.divf %57, %58 : vector<2x128xf32>
    %60 = vector.extract_strided_slice %53 {offsets = [0, 128], sizes = [2, 128], strides = [1, 1]} : vector<2x512xf32> to vector<2x128xf32>
    %61 = arith.negf %60 : vector<2x128xf32>
    %62 = math.exp %61 : vector<2x128xf32>
    %cst_31 = arith.constant 1.000000e+00 : f32
    %63 = vector.broadcast %cst_31 : f32 to vector<2x128xf32>
    %64 = arith.addf %63, %62 : vector<2x128xf32>
    %65 = arith.divf %63, %64 : vector<2x128xf32>
    %66 = vector.extract_strided_slice %53 {offsets = [0, 256], sizes = [2, 128], strides = [1, 1]} : vector<2x512xf32> to vector<2x128xf32>
    %67 = math.tanh %66 : vector<2x128xf32>
    %68 = vector.extract_strided_slice %53 {offsets = [0, 384], sizes = [2, 128], strides = [1, 1]} : vector<2x512xf32> to vector<2x128xf32>
    %69 = arith.negf %68 : vector<2x128xf32>
    %70 = math.exp %69 : vector<2x128xf32>
    %cst_32 = arith.constant 1.000000e+00 : f32
    %71 = vector.broadcast %cst_32 : f32 to vector<2x128xf32>
    %72 = arith.addf %71, %70 : vector<2x128xf32>
    %73 = arith.divf %71, %72 : vector<2x128xf32>
    %74 = arith.mulf %65, %48 : vector<2x128xf32>
    %75 = arith.mulf %59, %67 : vector<2x128xf32>
    %76 = arith.addf %74, %75 : vector<2x128xf32>
    %77 = math.tanh %76 : vector<2x128xf32>
    %78 = arith.mulf %73, %77 : vector<2x128xf32>
    %c0_33 = arith.constant 0 : index
    %c0_34 = arith.constant 0 : index
    %79 = vector.load %arg5[%c0_33, %c0_34] : memref<2x128xf32, #tpu.memory_space<vmem>>, vector<2x128xf32>
    tpu.vector_store %arg5[%c0_33, %c0_34], %43 {strides = array<i32>} : memref<2x128xf32, #tpu.memory_space<vmem>>, vector<2x128xf32>,
    %c0_35 = arith.constant 0 : index
    %c0_36 = arith.constant 0 : index
    %80 = vector.load %arg6[%c0_35, %c0_36] : memref<2x128xf32, #tpu.memory_space<vmem>>, vector<2x128xf32>
    tpu.vector_store %arg6[%c0_35, %c0_36], %41 {strides = array<i32>} : memref<2x128xf32, #tpu.memory_space<vmem>>, vector<2x128xf32>,
    %c0_37 = arith.constant 0 : index
    %c0_38 = arith.constant 0 : index
    %81 = vector.load %arg7[%c0_37, %c0_38] : memref<2x128xf32, #tpu.memory_space<vmem>>, vector<2x128xf32>
    tpu.vector_store %arg7[%c0_37, %c0_38], %78 {strides = array<i32>} : memref<2x128xf32, #tpu.memory_space<vmem>>, vector<2x128xf32>,
    %c0_39 = arith.constant 0 : index
    %c0_40 = arith.constant 0 : index
    %82 = vector.load %arg8[%c0_39, %c0_40] : memref<2x128xf32, #tpu.memory_space<vmem>>, vector<2x128xf32>
    tpu.vector_store %arg8[%c0_39, %c0_40], %76 {strides = array<i32>} : memref<2x128xf32, #tpu.memory_space<vmem>>, vector<2x128xf32>,
    %83 = arith.truncf %43 : vector<2x128xf32> to vector<2x128xbf16>
    %84 = arith.index_cast %c0_i32 : i32 to index
    %c0_41 = arith.constant 0 : index
    %c0_42 = arith.constant 0 : index
    %85 = vector.load %arg4[%84, %c0_41, %c0_42] : memref<8x2x256xbf16, #tpu.memory_space<vmem>>, vector<1x2x128xbf16>
    %86 = vector.shape_cast %85 : vector<1x2x128xbf16> to vector<2x128xbf16>
    %87 = vector.shape_cast %83 : vector<2x128xbf16> to vector<1x2x128xbf16>
    tpu.vector_store %arg4[%84, %c0_41, %c0_42], %87 {strides = array<i32>} : memref<8x2x256xbf16, #tpu.memory_space<vmem>>, vector<1x2x128xbf16>,
    %88 = arith.truncf %78 : vector<2x128xf32> to vector<2x128xbf16>
    %89 = arith.index_cast %8 : i32 to index
    %c0_43 = arith.constant 0 : index
    %c128 = arith.constant 128 : index
    %90 = vector.load %arg4[%89, %c0_43, %c128] : memref<8x2x256xbf16, #tpu.memory_space<vmem>>, vector<1x2x128xbf16>
    %91 = vector.shape_cast %90 : vector<1x2x128xbf16> to vector<2x128xbf16>
    %92 = vector.shape_cast %88 : vector<2x128xbf16> to vector<1x2x128xbf16>
    tpu.vector_store %arg4[%89, %c0_43, %c128], %92 {strides = array<i32>} : memref<8x2x256xbf16, #tpu.memory_space<vmem>>, vector<1x2x128xbf16>,
    %c1_i32 = arith.constant 1 : i32
    %c7_i32_44 = arith.constant 7 : i32
    %93 = arith.subi %c7_i32_44, %c1_i32 : i32
    %94 = arith.index_cast %c1_i32 : i32 to index
    %c0_45 = arith.constant 0 : index
    %c0_46 = arith.constant 0 : index
    %95 = vector.load %arg1[%94, %c0_45, %c0_46] : memref<8x2x1024xbf16, #tpu.memory_space<vmem>>, vector<1x2x512xbf16>
    %96 = vector.shape_cast %95 : vector<1x2x512xbf16> to vector<2x512xbf16>
    %c0_47 = arith.constant 0 : index
    %c0_48 = arith.constant 0 : index
    %97 = vector.load %arg5[%c0_47, %c0_48] : memref<2x128xf32, #tpu.memory_space<vmem>>, vector<2x128xf32>
    %c0_49 = arith.constant 0 : index
    %c0_50 = arith.constant 0 : index
    %98 = vector.load %arg6[%c0_49, %c0_50] : memref<2x128xf32, #tpu.memory_space<vmem>>, vector<2x128xf32>
    %99 = arith.extf %96 : vector<2x512xbf16> to vector<2x512xf32>
    %100 = arith.truncf %97 : vector<2x128xf32> to vector<2x128xbf16>
    %c0_51 = arith.constant 0 : index
    %c0_52 = arith.constant 0 : index
    %101 = vector.load %arg2[%c0_51, %c0_52] : memref<128x512xbf16, #tpu.memory_space<vmem>>, vector<128x512xbf16>
    %cst_53 = arith.constant dense<0.000000e+00> : vector<2x512xf32>
    %102 = tpu.matmul %100, %101, %cst_53 {dimension_numbers = #tpu.dot_dimension_numbers<[1], [0], [0], [1], [0, 0, 1, 1], [], []>} : vector<2x128xbf16>, vector<128x512xbf16>, vector<2x512xf32> -> vector<2x512xf32>
    %103 = arith.addf %99, %102 : vector<2x512xf32>
    %104 = vector.extract_strided_slice %103 {offsets = [0, 0], sizes = [2, 128], strides = [1, 1]} : vector<2x512xf32> to vector<2x128xf32>
    %105 = arith.negf %104 : vector<2x128xf32>
    %106 = math.exp %105 : vector<2x128xf32>
    %cst_54 = arith.constant 1.000000e+00 : f32
    %107 = vector.broadcast %cst_54 : f32 to vector<2x128xf32>
    %108 = arith.addf %107, %106 : vector<2x128xf32>
    %109 = arith.divf %107, %108 : vector<2x128xf32>
    %110 = vector.extract_strided_slice %103 {offsets = [0, 128], sizes = [2, 128], strides = [1, 1]} : vector<2x512xf32> to vector<2x128xf32>
    %111 = arith.negf %110 : vector<2x128xf32>
    %112 = math.exp %111 : vector<2x128xf32>
    %cst_55 = arith.constant 1.000000e+00 : f32
    %113 = vector.broadcast %cst_55 : f32 to vector<2x128xf32>
    %114 = arith.addf %113, %112 : vector<2x128xf32>
    %115 = arith.divf %113, %114 : vector<2x128xf32>
    %116 = vector.extract_strided_slice %103 {offsets = [0, 256], sizes = [2, 128], strides = [1, 1]} : vector<2x512xf32> to vector<2x128xf32>
    %117 = math.tanh %116 : vector<2x128xf32>
    %118 = vector.extract_strided_slice %103 {offsets = [0, 384], sizes = [2, 128], strides = [1, 1]} : vector<2x512xf32> to vector<2x128xf32>
    %119 = arith.negf %118 : vector<2x128xf32>
    %120 = math.exp %119 : vector<2x128xf32>
    %cst_56 = arith.constant 1.000000e+00 : f32
    %121 = vector.broadcast %cst_56 : f32 to vector<2x128xf32>
    %122 = arith.addf %121, %120 : vector<2x128xf32>
    %123 = arith.divf %121, %122 : vector<2x128xf32>
    %124 = arith.mulf %115, %98 : vector<2x128xf32>
    %125 = arith.mulf %109, %117 : vector<2x128xf32>
    %126 = arith.addf %124, %125 : vector<2x128xf32>
    %127 = math.tanh %126 : vector<2x128xf32>
    %128 = arith.mulf %123, %127 : vector<2x128xf32>
    %129 = arith.index_cast %93 : i32 to index
    %c0_57 = arith.constant 0 : index
    %c512_58 = arith.constant 512 : index
    %130 = vector.load %arg1[%129, %c0_57, %c512_58] : memref<8x2x1024xbf16, #tpu.memory_space<vmem>>, vector<1x2x512xbf16>
    %131 = vector.shape_cast %130 : vector<1x2x512xbf16> to vector<2x512xbf16>
    %c0_59 = arith.constant 0 : index
    %c0_60 = arith.constant 0 : index
    %132 = vector.load %arg7[%c0_59, %c0_60] : memref<2x128xf32, #tpu.memory_space<vmem>>, vector<2x128xf32>
    %c0_61 = arith.constant 0 : index
    %c0_62 = arith.constant 0 : index
    %133 = vector.load %arg8[%c0_61, %c0_62] : memref<2x128xf32, #tpu.memory_space<vmem>>, vector<2x128xf32>
    %134 = arith.extf %131 : vector<2x512xbf16> to vector<2x512xf32>
    %135 = arith.truncf %132 : vector<2x128xf32> to vector<2x128xbf16>
    %c0_63 = arith.constant 0 : index
    %c0_64 = arith.constant 0 : index
    %136 = vector.load %arg3[%c0_63, %c0_64] : memref<128x512xbf16, #tpu.memory_space<vmem>>, vector<128x512xbf16>
    %cst_65 = arith.constant dense<0.000000e+00> : vector<2x512xf32>
    %137 = tpu.matmul %135, %136, %cst_65 {dimension_numbers = #tpu.dot_dimension_numbers<[1], [0], [0], [1], [0, 0, 1, 1], [], []>} : vector<2x128xbf16>, vector<128x512xbf16>, vector<2x512xf32> -> vector<2x512xf32>
    %138 = arith.addf %134, %137 : vector<2x512xf32>
    %139 = vector.extract_strided_slice %138 {offsets = [0, 0], sizes = [2, 128], strides = [1, 1]} : vector<2x512xf32> to vector<2x128xf32>
    %140 = arith.negf %139 : vector<2x128xf32>
    %141 = math.exp %140 : vector<2x128xf32>
    %cst_66 = arith.constant 1.000000e+00 : f32
    %142 = vector.broadcast %cst_66 : f32 to vector<2x128xf32>
    %143 = arith.addf %142, %141 : vector<2x128xf32>
    %144 = arith.divf %142, %143 : vector<2x128xf32>
    %145 = vector.extract_strided_slice %138 {offsets = [0, 128], sizes = [2, 128], strides = [1, 1]} : vector<2x512xf32> to vector<2x128xf32>
    %146 = arith.negf %145 : vector<2x128xf32>
    %147 = math.exp %146 : vector<2x128xf32>
    %cst_67 = arith.constant 1.000000e+00 : f32
    %148 = vector.broadcast %cst_67 : f32 to vector<2x128xf32>
    %149 = arith.addf %148, %147 : vector<2x128xf32>
    %150 = arith.divf %148, %149 : vector<2x128xf32>
    %151 = vector.extract_strided_slice %138 {offsets = [0, 256], sizes = [2, 128], strides = [1, 1]} : vector<2x512xf32> to vector<2x128xf32>
    %152 = math.tanh %151 : vector<2x128xf32>
    %153 = vector.extract_strided_slice %138 {offsets = [0, 384], sizes = [2, 128], strides = [1, 1]} : vector<2x512xf32> to vector<2x128xf32>
    %154 = arith.negf %153 : vector<2x128xf32>
    %155 = math.exp %154 : vector<2x128xf32>
    %cst_68 = arith.constant 1.000000e+00 : f32
    %156 = vector.broadcast %cst_68 : f32 to vector<2x128xf32>
    %157 = arith.addf %156, %155 : vector<2x128xf32>
    %158 = arith.divf %156, %157 : vector<2x128xf32>
    %159 = arith.mulf %150, %133 : vector<2x128xf32>
    %160 = arith.mulf %144, %152 : vector<2x128xf32>
    %161 = arith.addf %159, %160 : vector<2x128xf32>
    %162 = math.tanh %161 : vector<2x128xf32>
    %163 = arith.mulf %158, %162 : vector<2x128xf32>
    %c0_69 = arith.constant 0 : index
    %c0_70 = arith.constant 0 : index
    %164 = vector.load %arg5[%c0_69, %c0_70] : memref<2x128xf32, #tpu.memory_space<vmem>>, vector<2x128xf32>
    tpu.vector_store %arg5[%c0_69, %c0_70], %128 {strides = array<i32>} : memref<2x128xf32, #tpu.memory_space<vmem>>, vector<2x128xf32>,
    %c0_71 = arith.constant 0 : index
    %c0_72 = arith.constant 0 : index
    %165 = vector.load %arg6[%c0_71, %c0_72] : memref<2x128xf32, #tpu.memory_space<vmem>>, vector<2x128xf32>
    tpu.vector_store %arg6[%c0_71, %c0_72], %126 {strides = array<i32>} : memref<2x128xf32, #tpu.memory_space<vmem>>, vector<2x128xf32>,
    %c0_73 = arith.constant 0 : index
    %c0_74 = arith.constant 0 : index
    %166 = vector.load %arg7[%c0_73, %c0_74] : memref<2x128xf32, #tpu.memory_space<vmem>>, vector<2x128xf32>
    tpu.vector_store %arg7[%c0_73, %c0_74], %163 {strides = array<i32>} : memref<2x128xf32, #tpu.memory_space<vmem>>, vector<2x128xf32>,
    %c0_75 = arith.constant 0 : index
    %c0_76 = arith.constant 0 : index
    %167 = vector.load %arg8[%c0_75, %c0_76] : memref<2x128xf32, #tpu.memory_space<vmem>>, vector<2x128xf32>
    tpu.vector_store %arg8[%c0_75, %c0_76], %161 {strides = array<i32>} : memref<2x128xf32, #tpu.memory_space<vmem>>, vector<2x128xf32>,
    %168 = arith.truncf %128 : vector<2x128xf32> to vector<2x128xbf16>
    %169 = arith.index_cast %c1_i32 : i32 to index
    %c0_77 = arith.constant 0 : index
    %c0_78 = arith.constant 0 : index
    %170 = vector.load %arg4[%169, %c0_77, %c0_78] : memref<8x2x256xbf16, #tpu.memory_space<vmem>>, vector<1x2x128xbf16>
    %171 = vector.shape_cast %170 : vector<1x2x128xbf16> to vector<2x128xbf16>
    %172 = vector.shape_cast %168 : vector<2x128xbf16> to vector<1x2x128xbf16>
    tpu.vector_store %arg4[%169, %c0_77, %c0_78], %172 {strides = array<i32>} : memref<8x2x256xbf16, #tpu.memory_space<vmem>>, vector<1x2x128xbf16>,
    %173 = arith.truncf %163 : vector<2x128xf32> to vector<2x128xbf16>
    %174 = arith.index_cast %93 : i32 to index
    %c0_79 = arith.constant 0 : index
    %c128_80 = arith.constant 128 : index
    %175 = vector.load %arg4[%174, %c0_79, %c128_80] : memref<8x2x256xbf16, #tpu.memory_space<vmem>>, vector<1x2x128xbf16>
    %176 = vector.shape_cast %175 : vector<1x2x128xbf16> to vector<2x128xbf16>
    %177 = vector.shape_cast %173 : vector<2x128xbf16> to vector<1x2x128xbf16>
    tpu.vector_store %arg4[%174, %c0_79, %c128_80], %177 {strides = array<i32>} : memref<8x2x256xbf16, #tpu.memory_space<vmem>>, vector<1x2x128xbf16>,
    %c2_i32 = arith.constant 2 : i32
    %c7_i32_81 = arith.constant 7 : i32
    %178 = arith.subi %c7_i32_81, %c2_i32 : i32
    %179 = arith.index_cast %c2_i32 : i32 to index
    %c0_82 = arith.constant 0 : index
    %c0_83 = arith.constant 0 : index
    %180 = vector.load %arg1[%179, %c0_82, %c0_83] : memref<8x2x1024xbf16, #tpu.memory_space<vmem>>, vector<1x2x512xbf16>
    %181 = vector.shape_cast %180 : vector<1x2x512xbf16> to vector<2x512xbf16>
    %c0_84 = arith.constant 0 : index
    %c0_85 = arith.constant 0 : index
    %182 = vector.load %arg5[%c0_84, %c0_85] : memref<2x128xf32, #tpu.memory_space<vmem>>, vector<2x128xf32>
    %c0_86 = arith.constant 0 : index
    %c0_87 = arith.constant 0 : index
    %183 = vector.load %arg6[%c0_86, %c0_87] : memref<2x128xf32, #tpu.memory_space<vmem>>, vector<2x128xf32>
    %184 = arith.extf %181 : vector<2x512xbf16> to vector<2x512xf32>
    %185 = arith.truncf %182 : vector<2x128xf32> to vector<2x128xbf16>
    %c0_88 = arith.constant 0 : index
    %c0_89 = arith.constant 0 : index
    %186 = vector.load %arg2[%c0_88, %c0_89] : memref<128x512xbf16, #tpu.memory_space<vmem>>, vector<128x512xbf16>
    %cst_90 = arith.constant dense<0.000000e+00> : vector<2x512xf32>
    %187 = tpu.matmul %185, %186, %cst_90 {dimension_numbers = #tpu.dot_dimension_numbers<[1], [0], [0], [1], [0, 0, 1, 1], [], []>} : vector<2x128xbf16>, vector<128x512xbf16>, vector<2x512xf32> -> vector<2x512xf32>
    %188 = arith.addf %184, %187 : vector<2x512xf32>
    %189 = vector.extract_strided_slice %188 {offsets = [0, 0], sizes = [2, 128], strides = [1, 1]} : vector<2x512xf32> to vector<2x128xf32>
    %190 = arith.negf %189 : vector<2x128xf32>
    %191 = math.exp %190 : vector<2x128xf32>
    %cst_91 = arith.constant 1.000000e+00 : f32
    %192 = vector.broadcast %cst_91 : f32 to vector<2x128xf32>
    %193 = arith.addf %192, %191 : vector<2x128xf32>
    %194 = arith.divf %192, %193 : vector<2x128xf32>
    %195 = vector.extract_strided_slice %188 {offsets = [0, 128], sizes = [2, 128], strides = [1, 1]} : vector<2x512xf32> to vector<2x128xf32>
    %196 = arith.negf %195 : vector<2x128xf32>
    %197 = math.exp %196 : vector<2x128xf32>
    %cst_92 = arith.constant 1.000000e+00 : f32
    %198 = vector.broadcast %cst_92 : f32 to vector<2x128xf32>
    %199 = arith.addf %198, %197 : vector<2x128xf32>
    %200 = arith.divf %198, %199 : vector<2x128xf32>
    %201 = vector.extract_strided_slice %188 {offsets = [0, 256], sizes = [2, 128], strides = [1, 1]} : vector<2x512xf32> to vector<2x128xf32>
    %202 = math.tanh %201 : vector<2x128xf32>
    %203 = vector.extract_strided_slice %188 {offsets = [0, 384], sizes = [2, 128], strides = [1, 1]} : vector<2x512xf32> to vector<2x128xf32>
    %204 = arith.negf %203 : vector<2x128xf32>
    %205 = math.exp %204 : vector<2x128xf32>
    %cst_93 = arith.constant 1.000000e+00 : f32
    %206 = vector.broadcast %cst_93 : f32 to vector<2x128xf32>
    %207 = arith.addf %206, %205 : vector<2x128xf32>
    %208 = arith.divf %206, %207 : vector<2x128xf32>
    %209 = arith.mulf %200, %183 : vector<2x128xf32>
    %210 = arith.mulf %194, %202 : vector<2x128xf32>
    %211 = arith.addf %209, %210 : vector<2x128xf32>
    %212 = math.tanh %211 : vector<2x128xf32>
    %213 = arith.mulf %208, %212 : vector<2x128xf32>
    %214 = arith.index_cast %178 : i32 to index
    %c0_94 = arith.constant 0 : index
    %c512_95 = arith.constant 512 : index
    %215 = vector.load %arg1[%214, %c0_94, %c512_95] : memref<8x2x1024xbf16, #tpu.memory_space<vmem>>, vector<1x2x512xbf16>
    %216 = vector.shape_cast %215 : vector<1x2x512xbf16> to vector<2x512xbf16>
    %c0_96 = arith.constant 0 : index
    %c0_97 = arith.constant 0 : index
    %217 = vector.load %arg7[%c0_96, %c0_97] : memref<2x128xf32, #tpu.memory_space<vmem>>, vector<2x128xf32>
    %c0_98 = arith.constant 0 : index
    %c0_99 = arith.constant 0 : index
    %218 = vector.load %arg8[%c0_98, %c0_99] : memref<2x128xf32, #tpu.memory_space<vmem>>, vector<2x128xf32>
    %219 = arith.extf %216 : vector<2x512xbf16> to vector<2x512xf32>
    %220 = arith.truncf %217 : vector<2x128xf32> to vector<2x128xbf16>
    %c0_100 = arith.constant 0 : index
    %c0_101 = arith.constant 0 : index
    %221 = vector.load %arg3[%c0_100, %c0_101] : memref<128x512xbf16, #tpu.memory_space<vmem>>, vector<128x512xbf16>
    %cst_102 = arith.constant dense<0.000000e+00> : vector<2x512xf32>
    %222 = tpu.matmul %220, %221, %cst_102 {dimension_numbers = #tpu.dot_dimension_numbers<[1], [0], [0], [1], [0, 0, 1, 1], [], []>} : vector<2x128xbf16>, vector<128x512xbf16>, vector<2x512xf32> -> vector<2x512xf32>
    %223 = arith.addf %219, %222 : vector<2x512xf32>
    %224 = vector.extract_strided_slice %223 {offsets = [0, 0], sizes = [2, 128], strides = [1, 1]} : vector<2x512xf32> to vector<2x128xf32>
    %225 = arith.negf %224 : vector<2x128xf32>
    %226 = math.exp %225 : vector<2x128xf32>
    %cst_103 = arith.constant 1.000000e+00 : f32
    %227 = vector.broadcast %cst_103 : f32 to vector<2x128xf32>
    %228 = arith.addf %227, %226 : vector<2x128xf32>
    %229 = arith.divf %227, %228 : vector<2x128xf32>
    %230 = vector.extract_strided_slice %223 {offsets = [0, 128], sizes = [2, 128], strides = [1, 1]} : vector<2x512xf32> to vector<2x128xf32>
    %231 = arith.negf %230 : vector<2x128xf32>
    %232 = math.exp %231 : vector<2x128xf32>
    %cst_104 = arith.constant 1.000000e+00 : f32
    %233 = vector.broadcast %cst_104 : f32 to vector<2x128xf32>
    %234 = arith.addf %233, %232 : vector<2x128xf32>
    %235 = arith.divf %233, %234 : vector<2x128xf32>
    %236 = vector.extract_strided_slice %223 {offsets = [0, 256], sizes = [2, 128], strides = [1, 1]} : vector<2x512xf32> to vector<2x128xf32>
    %237 = math.tanh %236 : vector<2x128xf32>
    %238 = vector.extract_strided_slice %223 {offsets = [0, 384], sizes = [2, 128], strides = [1, 1]} : vector<2x512xf32> to vector<2x128xf32>
    %239 = arith.negf %238 : vector<2x128xf32>
    %240 = math.exp %239 : vector<2x128xf32>
    %cst_105 = arith.constant 1.000000e+00 : f32
    %241 = vector.broadcast %cst_105 : f32 to vector<2x128xf32>
    %242 = arith.addf %241, %240 : vector<2x128xf32>
    %243 = arith.divf %241, %242 : vector<2x128xf32>
    %244 = arith.mulf %235, %218 : vector<2x128xf32>
    %245 = arith.mulf %229, %237 : vector<2x128xf32>
    %246 = arith.addf %244, %245 : vector<2x128xf32>
    %247 = math.tanh %246 : vector<2x128xf32>
    %248 = arith.mulf %243, %247 : vector<2x128xf32>
    %c0_106 = arith.constant 0 : index
    %c0_107 = arith.constant 0 : index
    %249 = vector.load %arg5[%c0_106, %c0_107] : memref<2x128xf32, #tpu.memory_space<vmem>>, vector<2x128xf32>
    tpu.vector_store %arg5[%c0_106, %c0_107], %213 {strides = array<i32>} : memref<2x128xf32, #tpu.memory_space<vmem>>, vector<2x128xf32>,
    %c0_108 = arith.constant 0 : index
    %c0_109 = arith.constant 0 : index
    %250 = vector.load %arg6[%c0_108, %c0_109] : memref<2x128xf32, #tpu.memory_space<vmem>>, vector<2x128xf32>
    tpu.vector_store %arg6[%c0_108, %c0_109], %211 {strides = array<i32>} : memref<2x128xf32, #tpu.memory_space<vmem>>, vector<2x128xf32>,
    %c0_110 = arith.constant 0 : index
    %c0_111 = arith.constant 0 : index
    %251 = vector.load %arg7[%c0_110, %c0_111] : memref<2x128xf32, #tpu.memory_space<vmem>>, vector<2x128xf32>
    tpu.vector_store %arg7[%c0_110, %c0_111], %248 {strides = array<i32>} : memref<2x128xf32, #tpu.memory_space<vmem>>, vector<2x128xf32>,
    %c0_112 = arith.constant 0 : index
    %c0_113 = arith.constant 0 : index
    %252 = vector.load %arg8[%c0_112, %c0_113] : memref<2x128xf32, #tpu.memory_space<vmem>>, vector<2x128xf32>
    tpu.vector_store %arg8[%c0_112, %c0_113], %246 {strides = array<i32>} : memref<2x128xf32, #tpu.memory_space<vmem>>, vector<2x128xf32>,
    %253 = arith.truncf %213 : vector<2x128xf32> to vector<2x128xbf16>
    %254 = arith.index_cast %c2_i32 : i32 to index
    %c0_114 = arith.constant 0 : index
    %c0_115 = arith.constant 0 : index
    %255 = vector.load %arg4[%254, %c0_114, %c0_115] : memref<8x2x256xbf16, #tpu.memory_space<vmem>>, vector<1x2x128xbf16>
    %256 = vector.shape_cast %255 : vector<1x2x128xbf16> to vector<2x128xbf16>
    %257 = vector.shape_cast %253 : vector<2x128xbf16> to vector<1x2x128xbf16>
    tpu.vector_store %arg4[%254, %c0_114, %c0_115], %257 {strides = array<i32>} : memref<8x2x256xbf16, #tpu.memory_space<vmem>>, vector<1x2x128xbf16>,
    %258 = arith.truncf %248 : vector<2x128xf32> to vector<2x128xbf16>
    %259 = arith.index_cast %178 : i32 to index
    %c0_116 = arith.constant 0 : index
    %c128_117 = arith.constant 128 : index
    %260 = vector.load %arg4[%259, %c0_116, %c128_117] : memref<8x2x256xbf16, #tpu.memory_space<vmem>>, vector<1x2x128xbf16>
    %261 = vector.shape_cast %260 : vector<1x2x128xbf16> to vector<2x128xbf16>
    %262 = vector.shape_cast %258 : vector<2x128xbf16> to vector<1x2x128xbf16>
    tpu.vector_store %arg4[%259, %c0_116, %c128_117], %262 {strides = array<i32>} : memref<8x2x256xbf16, #tpu.memory_space<vmem>>, vector<1x2x128xbf16>,
    %c3_i32 = arith.constant 3 : i32
    %c7_i32_118 = arith.constant 7 : i32
    %263 = arith.subi %c7_i32_118, %c3_i32 : i32
    %264 = arith.index_cast %c3_i32 : i32 to index
    %c0_119 = arith.constant 0 : index
    %c0_120 = arith.constant 0 : index
    %265 = vector.load %arg1[%264, %c0_119, %c0_120] : memref<8x2x1024xbf16, #tpu.memory_space<vmem>>, vector<1x2x512xbf16>
    %266 = vector.shape_cast %265 : vector<1x2x512xbf16> to vector<2x512xbf16>
    %c0_121 = arith.constant 0 : index
    %c0_122 = arith.constant 0 : index
    %267 = vector.load %arg5[%c0_121, %c0_122] : memref<2x128xf32, #tpu.memory_space<vmem>>, vector<2x128xf32>
    %c0_123 = arith.constant 0 : index
    %c0_124 = arith.constant 0 : index
    %268 = vector.load %arg6[%c0_123, %c0_124] : memref<2x128xf32, #tpu.memory_space<vmem>>, vector<2x128xf32>
    %269 = arith.extf %266 : vector<2x512xbf16> to vector<2x512xf32>
    %270 = arith.truncf %267 : vector<2x128xf32> to vector<2x128xbf16>
    %c0_125 = arith.constant 0 : index
    %c0_126 = arith.constant 0 : index
    %271 = vector.load %arg2[%c0_125, %c0_126] : memref<128x512xbf16, #tpu.memory_space<vmem>>, vector<128x512xbf16>
    %cst_127 = arith.constant dense<0.000000e+00> : vector<2x512xf32>
    %272 = tpu.matmul %270, %271, %cst_127 {dimension_numbers = #tpu.dot_dimension_numbers<[1], [0], [0], [1], [0, 0, 1, 1], [], []>} : vector<2x128xbf16>, vector<128x512xbf16>, vector<2x512xf32> -> vector<2x512xf32>
    %273 = arith.addf %269, %272 : vector<2x512xf32>
    %274 = vector.extract_strided_slice %273 {offsets = [0, 0], sizes = [2, 128], strides = [1, 1]} : vector<2x512xf32> to vector<2x128xf32>
    %275 = arith.negf %274 : vector<2x128xf32>
    %276 = math.exp %275 : vector<2x128xf32>
    %cst_128 = arith.constant 1.000000e+00 : f32
    %277 = vector.broadcast %cst_128 : f32 to vector<2x128xf32>
    %278 = arith.addf %277, %276 : vector<2x128xf32>
    %279 = arith.divf %277, %278 : vector<2x128xf32>
    %280 = vector.extract_strided_slice %273 {offsets = [0, 128], sizes = [2, 128], strides = [1, 1]} : vector<2x512xf32> to vector<2x128xf32>
    %281 = arith.negf %280 : vector<2x128xf32>
    %282 = math.exp %281 : vector<2x128xf32>
    %cst_129 = arith.constant 1.000000e+00 : f32
    %283 = vector.broadcast %cst_129 : f32 to vector<2x128xf32>
    %284 = arith.addf %283, %282 : vector<2x128xf32>
    %285 = arith.divf %283, %284 : vector<2x128xf32>
    %286 = vector.extract_strided_slice %273 {offsets = [0, 256], sizes = [2, 128], strides = [1, 1]} : vector<2x512xf32> to vector<2x128xf32>
    %287 = math.tanh %286 : vector<2x128xf32>
    %288 = vector.extract_strided_slice %273 {offsets = [0, 384], sizes = [2, 128], strides = [1, 1]} : vector<2x512xf32> to vector<2x128xf32>
    %289 = arith.negf %288 : vector<2x128xf32>
    %290 = math.exp %289 : vector<2x128xf32>
    %cst_130 = arith.constant 1.000000e+00 : f32
    %291 = vector.broadcast %cst_130 : f32 to vector<2x128xf32>
    %292 = arith.addf %291, %290 : vector<2x128xf32>
    %293 = arith.divf %291, %292 : vector<2x128xf32>
    %294 = arith.mulf %285, %268 : vector<2x128xf32>
    %295 = arith.mulf %279, %287 : vector<2x128xf32>
    %296 = arith.addf %294, %295 : vector<2x128xf32>
    %297 = math.tanh %296 : vector<2x128xf32>
    %298 = arith.mulf %293, %297 : vector<2x128xf32>
    %299 = arith.index_cast %263 : i32 to index
    %c0_131 = arith.constant 0 : index
    %c512_132 = arith.constant 512 : index
    %300 = vector.load %arg1[%299, %c0_131, %c512_132] : memref<8x2x1024xbf16, #tpu.memory_space<vmem>>, vector<1x2x512xbf16>
    %301 = vector.shape_cast %300 : vector<1x2x512xbf16> to vector<2x512xbf16>
    %c0_133 = arith.constant 0 : index
    %c0_134 = arith.constant 0 : index
    %302 = vector.load %arg7[%c0_133, %c0_134] : memref<2x128xf32, #tpu.memory_space<vmem>>, vector<2x128xf32>
    %c0_135 = arith.constant 0 : index
    %c0_136 = arith.constant 0 : index
    %303 = vector.load %arg8[%c0_135, %c0_136] : memref<2x128xf32, #tpu.memory_space<vmem>>, vector<2x128xf32>
    %304 = arith.extf %301 : vector<2x512xbf16> to vector<2x512xf32>
    %305 = arith.truncf %302 : vector<2x128xf32> to vector<2x128xbf16>
    %c0_137 = arith.constant 0 : index
    %c0_138 = arith.constant 0 : index
    %306 = vector.load %arg3[%c0_137, %c0_138] : memref<128x512xbf16, #tpu.memory_space<vmem>>, vector<128x512xbf16>
    %cst_139 = arith.constant dense<0.000000e+00> : vector<2x512xf32>
    %307 = tpu.matmul %305, %306, %cst_139 {dimension_numbers = #tpu.dot_dimension_numbers<[1], [0], [0], [1], [0, 0, 1, 1], [], []>} : vector<2x128xbf16>, vector<128x512xbf16>, vector<2x512xf32> -> vector<2x512xf32>
    %308 = arith.addf %304, %307 : vector<2x512xf32>
    %309 = vector.extract_strided_slice %308 {offsets = [0, 0], sizes = [2, 128], strides = [1, 1]} : vector<2x512xf32> to vector<2x128xf32>
    %310 = arith.negf %309 : vector<2x128xf32>
    %311 = math.exp %310 : vector<2x128xf32>
    %cst_140 = arith.constant 1.000000e+00 : f32
    %312 = vector.broadcast %cst_140 : f32 to vector<2x128xf32>
    %313 = arith.addf %312, %311 : vector<2x128xf32>
    %314 = arith.divf %312, %313 : vector<2x128xf32>
    %315 = vector.extract_strided_slice %308 {offsets = [0, 128], sizes = [2, 128], strides = [1, 1]} : vector<2x512xf32> to vector<2x128xf32>
    %316 = arith.negf %315 : vector<2x128xf32>
    %317 = math.exp %316 : vector<2x128xf32>
    %cst_141 = arith.constant 1.000000e+00 : f32
    %318 = vector.broadcast %cst_141 : f32 to vector<2x128xf32>
    %319 = arith.addf %318, %317 : vector<2x128xf32>
    %320 = arith.divf %318, %319 : vector<2x128xf32>
    %321 = vector.extract_strided_slice %308 {offsets = [0, 256], sizes = [2, 128], strides = [1, 1]} : vector<2x512xf32> to vector<2x128xf32>
    %322 = math.tanh %321 : vector<2x128xf32>
    %323 = vector.extract_strided_slice %308 {offsets = [0, 384], sizes = [2, 128], strides = [1, 1]} : vector<2x512xf32> to vector<2x128xf32>
    %324 = arith.negf %323 : vector<2x128xf32>
    %325 = math.exp %324 : vector<2x128xf32>
    %cst_142 = arith.constant 1.000000e+00 : f32
    %326 = vector.broadcast %cst_142 : f32 to vector<2x128xf32>
    %327 = arith.addf %326, %325 : vector<2x128xf32>
    %328 = arith.divf %326, %327 : vector<2x128xf32>
    %329 = arith.mulf %320, %303 : vector<2x128xf32>
    %330 = arith.mulf %314, %322 : vector<2x128xf32>
    %331 = arith.addf %329, %330 : vector<2x128xf32>
    %332 = math.tanh %331 : vector<2x128xf32>
    %333 = arith.mulf %328, %332 : vector<2x128xf32>
    %c0_143 = arith.constant 0 : index
    %c0_144 = arith.constant 0 : index
    %334 = vector.load %arg5[%c0_143, %c0_144] : memref<2x128xf32, #tpu.memory_space<vmem>>, vector<2x128xf32>
    tpu.vector_store %arg5[%c0_143, %c0_144], %298 {strides = array<i32>} : memref<2x128xf32, #tpu.memory_space<vmem>>, vector<2x128xf32>,
    %c0_145 = arith.constant 0 : index
    %c0_146 = arith.constant 0 : index
    %335 = vector.load %arg6[%c0_145, %c0_146] : memref<2x128xf32, #tpu.memory_space<vmem>>, vector<2x128xf32>
    tpu.vector_store %arg6[%c0_145, %c0_146], %296 {strides = array<i32>} : memref<2x128xf32, #tpu.memory_space<vmem>>, vector<2x128xf32>,
    %c0_147 = arith.constant 0 : index
    %c0_148 = arith.constant 0 : index
    %336 = vector.load %arg7[%c0_147, %c0_148] : memref<2x128xf32, #tpu.memory_space<vmem>>, vector<2x128xf32>
    tpu.vector_store %arg7[%c0_147, %c0_148], %333 {strides = array<i32>} : memref<2x128xf32, #tpu.memory_space<vmem>>, vector<2x128xf32>,
    %c0_149 = arith.constant 0 : index
    %c0_150 = arith.constant 0 : index
    %337 = vector.load %arg8[%c0_149, %c0_150] : memref<2x128xf32, #tpu.memory_space<vmem>>, vector<2x128xf32>
    tpu.vector_store %arg8[%c0_149, %c0_150], %331 {strides = array<i32>} : memref<2x128xf32, #tpu.memory_space<vmem>>, vector<2x128xf32>,
    %338 = arith.truncf %298 : vector<2x128xf32> to vector<2x128xbf16>
    %339 = arith.index_cast %c3_i32 : i32 to index
    %c0_151 = arith.constant 0 : index
    %c0_152 = arith.constant 0 : index
    %340 = vector.load %arg4[%339, %c0_151, %c0_152] : memref<8x2x256xbf16, #tpu.memory_space<vmem>>, vector<1x2x128xbf16>
    %341 = vector.shape_cast %340 : vector<1x2x128xbf16> to vector<2x128xbf16>
    %342 = vector.shape_cast %338 : vector<2x128xbf16> to vector<1x2x128xbf16>
    tpu.vector_store %arg4[%339, %c0_151, %c0_152], %342 {strides = array<i32>} : memref<8x2x256xbf16, #tpu.memory_space<vmem>>, vector<1x2x128xbf16>,
    %343 = arith.truncf %333 : vector<2x128xf32> to vector<2x128xbf16>
    %344 = arith.index_cast %263 : i32 to index
    %c0_153 = arith.constant 0 : index
    %c128_154 = arith.constant 128 : index
    %345 = vector.load %arg4[%344, %c0_153, %c128_154] : memref<8x2x256xbf16, #tpu.memory_space<vmem>>, vector<1x2x128xbf16>
    %346 = vector.shape_cast %345 : vector<1x2x128xbf16> to vector<2x128xbf16>
    %347 = vector.shape_cast %343 : vector<2x128xbf16> to vector<1x2x128xbf16>
    tpu.vector_store %arg4[%344, %c0_153, %c128_154], %347 {strides = array<i32>} : memref<8x2x256xbf16, #tpu.memory_space<vmem>>, vector<1x2x128xbf16>,
    %c4_i32 = arith.constant 4 : i32
    %c7_i32_155 = arith.constant 7 : i32
    %348 = arith.subi %c7_i32_155, %c4_i32 : i32
    %349 = arith.index_cast %c4_i32 : i32 to index
    %c0_156 = arith.constant 0 : index
    %c0_157 = arith.constant 0 : index
    %350 = vector.load %arg1[%349, %c0_156, %c0_157] : memref<8x2x1024xbf16, #tpu.memory_space<vmem>>, vector<1x2x512xbf16>
    %351 = vector.shape_cast %350 : vector<1x2x512xbf16> to vector<2x512xbf16>
    %c0_158 = arith.constant 0 : index
    %c0_159 = arith.constant 0 : index
    %352 = vector.load %arg5[%c0_158, %c0_159] : memref<2x128xf32, #tpu.memory_space<vmem>>, vector<2x128xf32>
    %c0_160 = arith.constant 0 : index
    %c0_161 = arith.constant 0 : index
    %353 = vector.load %arg6[%c0_160, %c0_161] : memref<2x128xf32, #tpu.memory_space<vmem>>, vector<2x128xf32>
    %354 = arith.extf %351 : vector<2x512xbf16> to vector<2x512xf32>
    %355 = arith.truncf %352 : vector<2x128xf32> to vector<2x128xbf16>
    %c0_162 = arith.constant 0 : index
    %c0_163 = arith.constant 0 : index
    %356 = vector.load %arg2[%c0_162, %c0_163] : memref<128x512xbf16, #tpu.memory_space<vmem>>, vector<128x512xbf16>
    %cst_164 = arith.constant dense<0.000000e+00> : vector<2x512xf32>
    %357 = tpu.matmul %355, %356, %cst_164 {dimension_numbers = #tpu.dot_dimension_numbers<[1], [0], [0], [1], [0, 0, 1, 1], [], []>} : vector<2x128xbf16>, vector<128x512xbf16>, vector<2x512xf32> -> vector<2x512xf32>
    %358 = arith.addf %354, %357 : vector<2x512xf32>
    %359 = vector.extract_strided_slice %358 {offsets = [0, 0], sizes = [2, 128], strides = [1, 1]} : vector<2x512xf32> to vector<2x128xf32>
    %360 = arith.negf %359 : vector<2x128xf32>
    %361 = math.exp %360 : vector<2x128xf32>
    %cst_165 = arith.constant 1.000000e+00 : f32
    %362 = vector.broadcast %cst_165 : f32 to vector<2x128xf32>
    %363 = arith.addf %362, %361 : vector<2x128xf32>
    %364 = arith.divf %362, %363 : vector<2x128xf32>
    %365 = vector.extract_strided_slice %358 {offsets = [0, 128], sizes = [2, 128], strides = [1, 1]} : vector<2x512xf32> to vector<2x128xf32>
    %366 = arith.negf %365 : vector<2x128xf32>
    %367 = math.exp %366 : vector<2x128xf32>
    %cst_166 = arith.constant 1.000000e+00 : f32
    %368 = vector.broadcast %cst_166 : f32 to vector<2x128xf32>
    %369 = arith.addf %368, %367 : vector<2x128xf32>
    %370 = arith.divf %368, %369 : vector<2x128xf32>
    %371 = vector.extract_strided_slice %358 {offsets = [0, 256], sizes = [2, 128], strides = [1, 1]} : vector<2x512xf32> to vector<2x128xf32>
    %372 = math.tanh %371 : vector<2x128xf32>
    %373 = vector.extract_strided_slice %358 {offsets = [0, 384], sizes = [2, 128], strides = [1, 1]} : vector<2x512xf32> to vector<2x128xf32>
    %374 = arith.negf %373 : vector<2x128xf32>
    %375 = math.exp %374 : vector<2x128xf32>
    %cst_167 = arith.constant 1.000000e+00 : f32
    %376 = vector.broadcast %cst_167 : f32 to vector<2x128xf32>
    %377 = arith.addf %376, %375 : vector<2x128xf32>
    %378 = arith.divf %376, %377 : vector<2x128xf32>
    %379 = arith.mulf %370, %353 : vector<2x128xf32>
    %380 = arith.mulf %364, %372 : vector<2x128xf32>
    %381 = arith.addf %379, %380 : vector<2x128xf32>
    %382 = math.tanh %381 : vector<2x128xf32>
    %383 = arith.mulf %378, %382 : vector<2x128xf32>
    %384 = arith.index_cast %348 : i32 to index
    %c0_168 = arith.constant 0 : index
    %c512_169 = arith.constant 512 : index
    %385 = vector.load %arg1[%384, %c0_168, %c512_169] : memref<8x2x1024xbf16, #tpu.memory_space<vmem>>, vector<1x2x512xbf16>
    %386 = vector.shape_cast %385 : vector<1x2x512xbf16> to vector<2x512xbf16>
    %c0_170 = arith.constant 0 : index
    %c0_171 = arith.constant 0 : index
    %387 = vector.load %arg7[%c0_170, %c0_171] : memref<2x128xf32, #tpu.memory_space<vmem>>, vector<2x128xf32>
    %c0_172 = arith.constant 0 : index
    %c0_173 = arith.constant 0 : index
    %388 = vector.load %arg8[%c0_172, %c0_173] : memref<2x128xf32, #tpu.memory_space<vmem>>, vector<2x128xf32>
    %389 = arith.extf %386 : vector<2x512xbf16> to vector<2x512xf32>
    %390 = arith.truncf %387 : vector<2x128xf32> to vector<2x128xbf16>
    %c0_174 = arith.constant 0 : index
    %c0_175 = arith.constant 0 : index
    %391 = vector.load %arg3[%c0_174, %c0_175] : memref<128x512xbf16, #tpu.memory_space<vmem>>, vector<128x512xbf16>
    %cst_176 = arith.constant dense<0.000000e+00> : vector<2x512xf32>
    %392 = tpu.matmul %390, %391, %cst_176 {dimension_numbers = #tpu.dot_dimension_numbers<[1], [0], [0], [1], [0, 0, 1, 1], [], []>} : vector<2x128xbf16>, vector<128x512xbf16>, vector<2x512xf32> -> vector<2x512xf32>
    %393 = arith.addf %389, %392 : vector<2x512xf32>
    %394 = vector.extract_strided_slice %393 {offsets = [0, 0], sizes = [2, 128], strides = [1, 1]} : vector<2x512xf32> to vector<2x128xf32>
    %395 = arith.negf %394 : vector<2x128xf32>
    %396 = math.exp %395 : vector<2x128xf32>
    %cst_177 = arith.constant 1.000000e+00 : f32
    %397 = vector.broadcast %cst_177 : f32 to vector<2x128xf32>
    %398 = arith.addf %397, %396 : vector<2x128xf32>
    %399 = arith.divf %397, %398 : vector<2x128xf32>
    %400 = vector.extract_strided_slice %393 {offsets = [0, 128], sizes = [2, 128], strides = [1, 1]} : vector<2x512xf32> to vector<2x128xf32>
    %401 = arith.negf %400 : vector<2x128xf32>
    %402 = math.exp %401 : vector<2x128xf32>
    %cst_178 = arith.constant 1.000000e+00 : f32
    %403 = vector.broadcast %cst_178 : f32 to vector<2x128xf32>
    %404 = arith.addf %403, %402 : vector<2x128xf32>
    %405 = arith.divf %403, %404 : vector<2x128xf32>
    %406 = vector.extract_strided_slice %393 {offsets = [0, 256], sizes = [2, 128], strides = [1, 1]} : vector<2x512xf32> to vector<2x128xf32>
    %407 = math.tanh %406 : vector<2x128xf32>
    %408 = vector.extract_strided_slice %393 {offsets = [0, 384], sizes = [2, 128], strides = [1, 1]} : vector<2x512xf32> to vector<2x128xf32>
    %409 = arith.negf %408 : vector<2x128xf32>
    %410 = math.exp %409 : vector<2x128xf32>
    %cst_179 = arith.constant 1.000000e+00 : f32
    %411 = vector.broadcast %cst_179 : f32 to vector<2x128xf32>
    %412 = arith.addf %411, %410 : vector<2x128xf32>
    %413 = arith.divf %411, %412 : vector<2x128xf32>
    %414 = arith.mulf %405, %388 : vector<2x128xf32>
    %415 = arith.mulf %399, %407 : vector<2x128xf32>
    %416 = arith.addf %414, %415 : vector<2x128xf32>
    %417 = math.tanh %416 : vector<2x128xf32>
    %418 = arith.mulf %413, %417 : vector<2x128xf32>
    %c0_180 = arith.constant 0 : index
    %c0_181 = arith.constant 0 : index
    %419 = vector.load %arg5[%c0_180, %c0_181] : memref<2x128xf32, #tpu.memory_space<vmem>>, vector<2x128xf32>
    tpu.vector_store %arg5[%c0_180, %c0_181], %383 {strides = array<i32>} : memref<2x128xf32, #tpu.memory_space<vmem>>, vector<2x128xf32>,
    %c0_182 = arith.constant 0 : index
    %c0_183 = arith.constant 0 : index
    %420 = vector.load %arg6[%c0_182, %c0_183] : memref<2x128xf32, #tpu.memory_space<vmem>>, vector<2x128xf32>
    tpu.vector_store %arg6[%c0_182, %c0_183], %381 {strides = array<i32>} : memref<2x128xf32, #tpu.memory_space<vmem>>, vector<2x128xf32>,
    %c0_184 = arith.constant 0 : index
    %c0_185 = arith.constant 0 : index
    %421 = vector.load %arg7[%c0_184, %c0_185] : memref<2x128xf32, #tpu.memory_space<vmem>>, vector<2x128xf32>
    tpu.vector_store %arg7[%c0_184, %c0_185], %418 {strides = array<i32>} : memref<2x128xf32, #tpu.memory_space<vmem>>, vector<2x128xf32>,
    %c0_186 = arith.constant 0 : index
    %c0_187 = arith.constant 0 : index
    %422 = vector.load %arg8[%c0_186, %c0_187] : memref<2x128xf32, #tpu.memory_space<vmem>>, vector<2x128xf32>
    tpu.vector_store %arg8[%c0_186, %c0_187], %416 {strides = array<i32>} : memref<2x128xf32, #tpu.memory_space<vmem>>, vector<2x128xf32>,
    %423 = arith.truncf %383 : vector<2x128xf32> to vector<2x128xbf16>
    %424 = arith.index_cast %c4_i32 : i32 to index
    %c0_188 = arith.constant 0 : index
    %c0_189 = arith.constant 0 : index
    %425 = vector.load %arg4[%424, %c0_188, %c0_189] : memref<8x2x256xbf16, #tpu.memory_space<vmem>>, vector<1x2x128xbf16>
    %426 = vector.shape_cast %425 : vector<1x2x128xbf16> to vector<2x128xbf16>
    %427 = vector.shape_cast %423 : vector<2x128xbf16> to vector<1x2x128xbf16>
    tpu.vector_store %arg4[%424, %c0_188, %c0_189], %427 {strides = array<i32>} : memref<8x2x256xbf16, #tpu.memory_space<vmem>>, vector<1x2x128xbf16>,
    %428 = arith.truncf %418 : vector<2x128xf32> to vector<2x128xbf16>
    %429 = arith.index_cast %348 : i32 to index
    %c0_190 = arith.constant 0 : index
    %c128_191 = arith.constant 128 : index
    %430 = vector.load %arg4[%429, %c0_190, %c128_191] : memref<8x2x256xbf16, #tpu.memory_space<vmem>>, vector<1x2x128xbf16>
    %431 = vector.shape_cast %430 : vector<1x2x128xbf16> to vector<2x128xbf16>
    %432 = vector.shape_cast %428 : vector<2x128xbf16> to vector<1x2x128xbf16>
    tpu.vector_store %arg4[%429, %c0_190, %c128_191], %432 {strides = array<i32>} : memref<8x2x256xbf16, #tpu.memory_space<vmem>>, vector<1x2x128xbf16>,
    %c5_i32 = arith.constant 5 : i32
    %c7_i32_192 = arith.constant 7 : i32
    %433 = arith.subi %c7_i32_192, %c5_i32 : i32
    %434 = arith.index_cast %c5_i32 : i32 to index
    %c0_193 = arith.constant 0 : index
    %c0_194 = arith.constant 0 : index
    %435 = vector.load %arg1[%434, %c0_193, %c0_194] : memref<8x2x1024xbf16, #tpu.memory_space<vmem>>, vector<1x2x512xbf16>
    %436 = vector.shape_cast %435 : vector<1x2x512xbf16> to vector<2x512xbf16>
    %c0_195 = arith.constant 0 : index
    %c0_196 = arith.constant 0 : index
    %437 = vector.load %arg5[%c0_195, %c0_196] : memref<2x128xf32, #tpu.memory_space<vmem>>, vector<2x128xf32>
    %c0_197 = arith.constant 0 : index
    %c0_198 = arith.constant 0 : index
    %438 = vector.load %arg6[%c0_197, %c0_198] : memref<2x128xf32, #tpu.memory_space<vmem>>, vector<2x128xf32>
    %439 = arith.extf %436 : vector<2x512xbf16> to vector<2x512xf32>
    %440 = arith.truncf %437 : vector<2x128xf32> to vector<2x128xbf16>
    %c0_199 = arith.constant 0 : index
    %c0_200 = arith.constant 0 : index
    %441 = vector.load %arg2[%c0_199, %c0_200] : memref<128x512xbf16, #tpu.memory_space<vmem>>, vector<128x512xbf16>
    %cst_201 = arith.constant dense<0.000000e+00> : vector<2x512xf32>
    %442 = tpu.matmul %440, %441, %cst_201 {dimension_numbers = #tpu.dot_dimension_numbers<[1], [0], [0], [1], [0, 0, 1, 1], [], []>} : vector<2x128xbf16>, vector<128x512xbf16>, vector<2x512xf32> -> vector<2x512xf32>
    %443 = arith.addf %439, %442 : vector<2x512xf32>
    %444 = vector.extract_strided_slice %443 {offsets = [0, 0], sizes = [2, 128], strides = [1, 1]} : vector<2x512xf32> to vector<2x128xf32>
    %445 = arith.negf %444 : vector<2x128xf32>
    %446 = math.exp %445 : vector<2x128xf32>
    %cst_202 = arith.constant 1.000000e+00 : f32
    %447 = vector.broadcast %cst_202 : f32 to vector<2x128xf32>
    %448 = arith.addf %447, %446 : vector<2x128xf32>
    %449 = arith.divf %447, %448 : vector<2x128xf32>
    %450 = vector.extract_strided_slice %443 {offsets = [0, 128], sizes = [2, 128], strides = [1, 1]} : vector<2x512xf32> to vector<2x128xf32>
    %451 = arith.negf %450 : vector<2x128xf32>
    %452 = math.exp %451 : vector<2x128xf32>
    %cst_203 = arith.constant 1.000000e+00 : f32
    %453 = vector.broadcast %cst_203 : f32 to vector<2x128xf32>
    %454 = arith.addf %453, %452 : vector<2x128xf32>
    %455 = arith.divf %453, %454 : vector<2x128xf32>
    %456 = vector.extract_strided_slice %443 {offsets = [0, 256], sizes = [2, 128], strides = [1, 1]} : vector<2x512xf32> to vector<2x128xf32>
    %457 = math.tanh %456 : vector<2x128xf32>
    %458 = vector.extract_strided_slice %443 {offsets = [0, 384], sizes = [2, 128], strides = [1, 1]} : vector<2x512xf32> to vector<2x128xf32>
    %459 = arith.negf %458 : vector<2x128xf32>
    %460 = math.exp %459 : vector<2x128xf32>
    %cst_204 = arith.constant 1.000000e+00 : f32
    %461 = vector.broadcast %cst_204 : f32 to vector<2x128xf32>
    %462 = arith.addf %461, %460 : vector<2x128xf32>
    %463 = arith.divf %461, %462 : vector<2x128xf32>
    %464 = arith.mulf %455, %438 : vector<2x128xf32>
    %465 = arith.mulf %449, %457 : vector<2x128xf32>
    %466 = arith.addf %464, %465 : vector<2x128xf32>
    %467 = math.tanh %466 : vector<2x128xf32>
    %468 = arith.mulf %463, %467 : vector<2x128xf32>
    %469 = arith.index_cast %433 : i32 to index
    %c0_205 = arith.constant 0 : index
    %c512_206 = arith.constant 512 : index
    %470 = vector.load %arg1[%469, %c0_205, %c512_206] : memref<8x2x1024xbf16, #tpu.memory_space<vmem>>, vector<1x2x512xbf16>
    %471 = vector.shape_cast %470 : vector<1x2x512xbf16> to vector<2x512xbf16>
    %c0_207 = arith.constant 0 : index
    %c0_208 = arith.constant 0 : index
    %472 = vector.load %arg7[%c0_207, %c0_208] : memref<2x128xf32, #tpu.memory_space<vmem>>, vector<2x128xf32>
    %c0_209 = arith.constant 0 : index
    %c0_210 = arith.constant 0 : index
    %473 = vector.load %arg8[%c0_209, %c0_210] : memref<2x128xf32, #tpu.memory_space<vmem>>, vector<2x128xf32>
    %474 = arith.extf %471 : vector<2x512xbf16> to vector<2x512xf32>
    %475 = arith.truncf %472 : vector<2x128xf32> to vector<2x128xbf16>
    %c0_211 = arith.constant 0 : index
    %c0_212 = arith.constant 0 : index
    %476 = vector.load %arg3[%c0_211, %c0_212] : memref<128x512xbf16, #tpu.memory_space<vmem>>, vector<128x512xbf16>
    %cst_213 = arith.constant dense<0.000000e+00> : vector<2x512xf32>
    %477 = tpu.matmul %475, %476, %cst_213 {dimension_numbers = #tpu.dot_dimension_numbers<[1], [0], [0], [1], [0, 0, 1, 1], [], []>} : vector<2x128xbf16>, vector<128x512xbf16>, vector<2x512xf32> -> vector<2x512xf32>
    %478 = arith.addf %474, %477 : vector<2x512xf32>
    %479 = vector.extract_strided_slice %478 {offsets = [0, 0], sizes = [2, 128], strides = [1, 1]} : vector<2x512xf32> to vector<2x128xf32>
    %480 = arith.negf %479 : vector<2x128xf32>
    %481 = math.exp %480 : vector<2x128xf32>
    %cst_214 = arith.constant 1.000000e+00 : f32
    %482 = vector.broadcast %cst_214 : f32 to vector<2x128xf32>
    %483 = arith.addf %482, %481 : vector<2x128xf32>
    %484 = arith.divf %482, %483 : vector<2x128xf32>
    %485 = vector.extract_strided_slice %478 {offsets = [0, 128], sizes = [2, 128], strides = [1, 1]} : vector<2x512xf32> to vector<2x128xf32>
    %486 = arith.negf %485 : vector<2x128xf32>
    %487 = math.exp %486 : vector<2x128xf32>
    %cst_215 = arith.constant 1.000000e+00 : f32
    %488 = vector.broadcast %cst_215 : f32 to vector<2x128xf32>
    %489 = arith.addf %488, %487 : vector<2x128xf32>
    %490 = arith.divf %488, %489 : vector<2x128xf32>
    %491 = vector.extract_strided_slice %478 {offsets = [0, 256], sizes = [2, 128], strides = [1, 1]} : vector<2x512xf32> to vector<2x128xf32>
    %492 = math.tanh %491 : vector<2x128xf32>
    %493 = vector.extract_strided_slice %478 {offsets = [0, 384], sizes = [2, 128], strides = [1, 1]} : vector<2x512xf32> to vector<2x128xf32>
    %494 = arith.negf %493 : vector<2x128xf32>
    %495 = math.exp %494 : vector<2x128xf32>
    %cst_216 = arith.constant 1.000000e+00 : f32
    %496 = vector.broadcast %cst_216 : f32 to vector<2x128xf32>
    %497 = arith.addf %496, %495 : vector<2x128xf32>
    %498 = arith.divf %496, %497 : vector<2x128xf32>
    %499 = arith.mulf %490, %473 : vector<2x128xf32>
    %500 = arith.mulf %484, %492 : vector<2x128xf32>
    %501 = arith.addf %499, %500 : vector<2x128xf32>
    %502 = math.tanh %501 : vector<2x128xf32>
    %503 = arith.mulf %498, %502 : vector<2x128xf32>
    %c0_217 = arith.constant 0 : index
    %c0_218 = arith.constant 0 : index
    %504 = vector.load %arg5[%c0_217, %c0_218] : memref<2x128xf32, #tpu.memory_space<vmem>>, vector<2x128xf32>
    tpu.vector_store %arg5[%c0_217, %c0_218], %468 {strides = array<i32>} : memref<2x128xf32, #tpu.memory_space<vmem>>, vector<2x128xf32>,
    %c0_219 = arith.constant 0 : index
    %c0_220 = arith.constant 0 : index
    %505 = vector.load %arg6[%c0_219, %c0_220] : memref<2x128xf32, #tpu.memory_space<vmem>>, vector<2x128xf32>
    tpu.vector_store %arg6[%c0_219, %c0_220], %466 {strides = array<i32>} : memref<2x128xf32, #tpu.memory_space<vmem>>, vector<2x128xf32>,
    %c0_221 = arith.constant 0 : index
    %c0_222 = arith.constant 0 : index
    %506 = vector.load %arg7[%c0_221, %c0_222] : memref<2x128xf32, #tpu.memory_space<vmem>>, vector<2x128xf32>
    tpu.vector_store %arg7[%c0_221, %c0_222], %503 {strides = array<i32>} : memref<2x128xf32, #tpu.memory_space<vmem>>, vector<2x128xf32>,
    %c0_223 = arith.constant 0 : index
    %c0_224 = arith.constant 0 : index
    %507 = vector.load %arg8[%c0_223, %c0_224] : memref<2x128xf32, #tpu.memory_space<vmem>>, vector<2x128xf32>
    tpu.vector_store %arg8[%c0_223, %c0_224], %501 {strides = array<i32>} : memref<2x128xf32, #tpu.memory_space<vmem>>, vector<2x128xf32>,
    %508 = arith.truncf %468 : vector<2x128xf32> to vector<2x128xbf16>
    %509 = arith.index_cast %c5_i32 : i32 to index
    %c0_225 = arith.constant 0 : index
    %c0_226 = arith.constant 0 : index
    %510 = vector.load %arg4[%509, %c0_225, %c0_226] : memref<8x2x256xbf16, #tpu.memory_space<vmem>>, vector<1x2x128xbf16>
    %511 = vector.shape_cast %510 : vector<1x2x128xbf16> to vector<2x128xbf16>
    %512 = vector.shape_cast %508 : vector<2x128xbf16> to vector<1x2x128xbf16>
    tpu.vector_store %arg4[%509, %c0_225, %c0_226], %512 {strides = array<i32>} : memref<8x2x256xbf16, #tpu.memory_space<vmem>>, vector<1x2x128xbf16>,
    %513 = arith.truncf %503 : vector<2x128xf32> to vector<2x128xbf16>
    %514 = arith.index_cast %433 : i32 to index
    %c0_227 = arith.constant 0 : index
    %c128_228 = arith.constant 128 : index
    %515 = vector.load %arg4[%514, %c0_227, %c128_228] : memref<8x2x256xbf16, #tpu.memory_space<vmem>>, vector<1x2x128xbf16>
    %516 = vector.shape_cast %515 : vector<1x2x128xbf16> to vector<2x128xbf16>
    %517 = vector.shape_cast %513 : vector<2x128xbf16> to vector<1x2x128xbf16>
    tpu.vector_store %arg4[%514, %c0_227, %c128_228], %517 {strides = array<i32>} : memref<8x2x256xbf16, #tpu.memory_space<vmem>>, vector<1x2x128xbf16>,
    %c6_i32 = arith.constant 6 : i32
    %c7_i32_229 = arith.constant 7 : i32
    %518 = arith.subi %c7_i32_229, %c6_i32 : i32
    %519 = arith.index_cast %c6_i32 : i32 to index
    %c0_230 = arith.constant 0 : index
    %c0_231 = arith.constant 0 : index
    %520 = vector.load %arg1[%519, %c0_230, %c0_231] : memref<8x2x1024xbf16, #tpu.memory_space<vmem>>, vector<1x2x512xbf16>
    %521 = vector.shape_cast %520 : vector<1x2x512xbf16> to vector<2x512xbf16>
    %c0_232 = arith.constant 0 : index
    %c0_233 = arith.constant 0 : index
    %522 = vector.load %arg5[%c0_232, %c0_233] : memref<2x128xf32, #tpu.memory_space<vmem>>, vector<2x128xf32>
    %c0_234 = arith.constant 0 : index
    %c0_235 = arith.constant 0 : index
    %523 = vector.load %arg6[%c0_234, %c0_235] : memref<2x128xf32, #tpu.memory_space<vmem>>, vector<2x128xf32>
    %524 = arith.extf %521 : vector<2x512xbf16> to vector<2x512xf32>
    %525 = arith.truncf %522 : vector<2x128xf32> to vector<2x128xbf16>
    %c0_236 = arith.constant 0 : index
    %c0_237 = arith.constant 0 : index
    %526 = vector.load %arg2[%c0_236, %c0_237] : memref<128x512xbf16, #tpu.memory_space<vmem>>, vector<128x512xbf16>
    %cst_238 = arith.constant dense<0.000000e+00> : vector<2x512xf32>
    %527 = tpu.matmul %525, %526, %cst_238 {dimension_numbers = #tpu.dot_dimension_numbers<[1], [0], [0], [1], [0, 0, 1, 1], [], []>} : vector<2x128xbf16>, vector<128x512xbf16>, vector<2x512xf32> -> vector<2x512xf32>
    %528 = arith.addf %524, %527 : vector<2x512xf32>
    %529 = vector.extract_strided_slice %528 {offsets = [0, 0], sizes = [2, 128], strides = [1, 1]} : vector<2x512xf32> to vector<2x128xf32>
    %530 = arith.negf %529 : vector<2x128xf32>
    %531 = math.exp %530 : vector<2x128xf32>
    %cst_239 = arith.constant 1.000000e+00 : f32
    %532 = vector.broadcast %cst_239 : f32 to vector<2x128xf32>
    %533 = arith.addf %532, %531 : vector<2x128xf32>
    %534 = arith.divf %532, %533 : vector<2x128xf32>
    %535 = vector.extract_strided_slice %528 {offsets = [0, 128], sizes = [2, 128], strides = [1, 1]} : vector<2x512xf32> to vector<2x128xf32>
    %536 = arith.negf %535 : vector<2x128xf32>
    %537 = math.exp %536 : vector<2x128xf32>
    %cst_240 = arith.constant 1.000000e+00 : f32
    %538 = vector.broadcast %cst_240 : f32 to vector<2x128xf32>
    %539 = arith.addf %538, %537 : vector<2x128xf32>
    %540 = arith.divf %538, %539 : vector<2x128xf32>
    %541 = vector.extract_strided_slice %528 {offsets = [0, 256], sizes = [2, 128], strides = [1, 1]} : vector<2x512xf32> to vector<2x128xf32>
    %542 = math.tanh %541 : vector<2x128xf32>
    %543 = vector.extract_strided_slice %528 {offsets = [0, 384], sizes = [2, 128], strides = [1, 1]} : vector<2x512xf32> to vector<2x128xf32>
    %544 = arith.negf %543 : vector<2x128xf32>
    %545 = math.exp %544 : vector<2x128xf32>
    %cst_241 = arith.constant 1.000000e+00 : f32
    %546 = vector.broadcast %cst_241 : f32 to vector<2x128xf32>
    %547 = arith.addf %546, %545 : vector<2x128xf32>
    %548 = arith.divf %546, %547 : vector<2x128xf32>
    %549 = arith.mulf %540, %523 : vector<2x128xf32>
    %550 = arith.mulf %534, %542 : vector<2x128xf32>
    %551 = arith.addf %549, %550 : vector<2x128xf32>
    %552 = math.tanh %551 : vector<2x128xf32>
    %553 = arith.mulf %548, %552 : vector<2x128xf32>
    %554 = arith.index_cast %518 : i32 to index
    %c0_242 = arith.constant 0 : index
    %c512_243 = arith.constant 512 : index
    %555 = vector.load %arg1[%554, %c0_242, %c512_243] : memref<8x2x1024xbf16, #tpu.memory_space<vmem>>, vector<1x2x512xbf16>
    %556 = vector.shape_cast %555 : vector<1x2x512xbf16> to vector<2x512xbf16>
    %c0_244 = arith.constant 0 : index
    %c0_245 = arith.constant 0 : index
    %557 = vector.load %arg7[%c0_244, %c0_245] : memref<2x128xf32, #tpu.memory_space<vmem>>, vector<2x128xf32>
    %c0_246 = arith.constant 0 : index
    %c0_247 = arith.constant 0 : index
    %558 = vector.load %arg8[%c0_246, %c0_247] : memref<2x128xf32, #tpu.memory_space<vmem>>, vector<2x128xf32>
    %559 = arith.extf %556 : vector<2x512xbf16> to vector<2x512xf32>
    %560 = arith.truncf %557 : vector<2x128xf32> to vector<2x128xbf16>
    %c0_248 = arith.constant 0 : index
    %c0_249 = arith.constant 0 : index
    %561 = vector.load %arg3[%c0_248, %c0_249] : memref<128x512xbf16, #tpu.memory_space<vmem>>, vector<128x512xbf16>
    %cst_250 = arith.constant dense<0.000000e+00> : vector<2x512xf32>
    %562 = tpu.matmul %560, %561, %cst_250 {dimension_numbers = #tpu.dot_dimension_numbers<[1], [0], [0], [1], [0, 0, 1, 1], [], []>} : vector<2x128xbf16>, vector<128x512xbf16>, vector<2x512xf32> -> vector<2x512xf32>
    %563 = arith.addf %559, %562 : vector<2x512xf32>
    %564 = vector.extract_strided_slice %563 {offsets = [0, 0], sizes = [2, 128], strides = [1, 1]} : vector<2x512xf32> to vector<2x128xf32>
    %565 = arith.negf %564 : vector<2x128xf32>
    %566 = math.exp %565 : vector<2x128xf32>
    %cst_251 = arith.constant 1.000000e+00 : f32
    %567 = vector.broadcast %cst_251 : f32 to vector<2x128xf32>
    %568 = arith.addf %567, %566 : vector<2x128xf32>
    %569 = arith.divf %567, %568 : vector<2x128xf32>
    %570 = vector.extract_strided_slice %563 {offsets = [0, 128], sizes = [2, 128], strides = [1, 1]} : vector<2x512xf32> to vector<2x128xf32>
    %571 = arith.negf %570 : vector<2x128xf32>
    %572 = math.exp %571 : vector<2x128xf32>
    %cst_252 = arith.constant 1.000000e+00 : f32
    %573 = vector.broadcast %cst_252 : f32 to vector<2x128xf32>
    %574 = arith.addf %573, %572 : vector<2x128xf32>
    %575 = arith.divf %573, %574 : vector<2x128xf32>
    %576 = vector.extract_strided_slice %563 {offsets = [0, 256], sizes = [2, 128], strides = [1, 1]} : vector<2x512xf32> to vector<2x128xf32>
    %577 = math.tanh %576 : vector<2x128xf32>
    %578 = vector.extract_strided_slice %563 {offsets = [0, 384], sizes = [2, 128], strides = [1, 1]} : vector<2x512xf32> to vector<2x128xf32>
    %579 = arith.negf %578 : vector<2x128xf32>
    %580 = math.exp %579 : vector<2x128xf32>
    %cst_253 = arith.constant 1.000000e+00 : f32
    %581 = vector.broadcast %cst_253 : f32 to vector<2x128xf32>
    %582 = arith.addf %581, %580 : vector<2x128xf32>
    %583 = arith.divf %581, %582 : vector<2x128xf32>
    %584 = arith.mulf %575, %558 : vector<2x128xf32>
    %585 = arith.mulf %569, %577 : vector<2x128xf32>
    %586 = arith.addf %584, %585 : vector<2x128xf32>
    %587 = math.tanh %586 : vector<2x128xf32>
    %588 = arith.mulf %583, %587 : vector<2x128xf32>
    %c0_254 = arith.constant 0 : index
    %c0_255 = arith.constant 0 : index
    %589 = vector.load %arg5[%c0_254, %c0_255] : memref<2x128xf32, #tpu.memory_space<vmem>>, vector<2x128xf32>
    tpu.vector_store %arg5[%c0_254, %c0_255], %553 {strides = array<i32>} : memref<2x128xf32, #tpu.memory_space<vmem>>, vector<2x128xf32>,
    %c0_256 = arith.constant 0 : index
    %c0_257 = arith.constant 0 : index
    %590 = vector.load %arg6[%c0_256, %c0_257] : memref<2x128xf32, #tpu.memory_space<vmem>>, vector<2x128xf32>
    tpu.vector_store %arg6[%c0_256, %c0_257], %551 {strides = array<i32>} : memref<2x128xf32, #tpu.memory_space<vmem>>, vector<2x128xf32>,
    %c0_258 = arith.constant 0 : index
    %c0_259 = arith.constant 0 : index
    %591 = vector.load %arg7[%c0_258, %c0_259] : memref<2x128xf32, #tpu.memory_space<vmem>>, vector<2x128xf32>
    tpu.vector_store %arg7[%c0_258, %c0_259], %588 {strides = array<i32>} : memref<2x128xf32, #tpu.memory_space<vmem>>, vector<2x128xf32>,
    %c0_260 = arith.constant 0 : index
    %c0_261 = arith.constant 0 : index
    %592 = vector.load %arg8[%c0_260, %c0_261] : memref<2x128xf32, #tpu.memory_space<vmem>>, vector<2x128xf32>
    tpu.vector_store %arg8[%c0_260, %c0_261], %586 {strides = array<i32>} : memref<2x128xf32, #tpu.memory_space<vmem>>, vector<2x128xf32>,
    %593 = arith.truncf %553 : vector<2x128xf32> to vector<2x128xbf16>
    %594 = arith.index_cast %c6_i32 : i32 to index
    %c0_262 = arith.constant 0 : index
    %c0_263 = arith.constant 0 : index
    %595 = vector.load %arg4[%594, %c0_262, %c0_263] : memref<8x2x256xbf16, #tpu.memory_space<vmem>>, vector<1x2x128xbf16>
    %596 = vector.shape_cast %595 : vector<1x2x128xbf16> to vector<2x128xbf16>
    %597 = vector.shape_cast %593 : vector<2x128xbf16> to vector<1x2x128xbf16>
    tpu.vector_store %arg4[%594, %c0_262, %c0_263], %597 {strides = array<i32>} : memref<8x2x256xbf16, #tpu.memory_space<vmem>>, vector<1x2x128xbf16>,
    %598 = arith.truncf %588 : vector<2x128xf32> to vector<2x128xbf16>
    %599 = arith.index_cast %518 : i32 to index
    %c0_264 = arith.constant 0 : index
    %c128_265 = arith.constant 128 : index
    %600 = vector.load %arg4[%599, %c0_264, %c128_265] : memref<8x2x256xbf16, #tpu.memory_space<vmem>>, vector<1x2x128xbf16>
    %601 = vector.shape_cast %600 : vector<1x2x128xbf16> to vector<2x128xbf16>
    %602 = vector.shape_cast %598 : vector<2x128xbf16> to vector<1x2x128xbf16>
    tpu.vector_store %arg4[%599, %c0_264, %c128_265], %602 {strides = array<i32>} : memref<8x2x256xbf16, #tpu.memory_space<vmem>>, vector<1x2x128xbf16>,
    %c7_i32_266 = arith.constant 7 : i32
    %c7_i32_267 = arith.constant 7 : i32
    %603 = arith.subi %c7_i32_267, %c7_i32_266 : i32
    %604 = arith.index_cast %c7_i32_266 : i32 to index
    %c0_268 = arith.constant 0 : index
    %c0_269 = arith.constant 0 : index
    %605 = vector.load %arg1[%604, %c0_268, %c0_269] : memref<8x2x1024xbf16, #tpu.memory_space<vmem>>, vector<1x2x512xbf16>
    %606 = vector.shape_cast %605 : vector<1x2x512xbf16> to vector<2x512xbf16>
    %c0_270 = arith.constant 0 : index
    %c0_271 = arith.constant 0 : index
    %607 = vector.load %arg5[%c0_270, %c0_271] : memref<2x128xf32, #tpu.memory_space<vmem>>, vector<2x128xf32>
    %c0_272 = arith.constant 0 : index
    %c0_273 = arith.constant 0 : index
    %608 = vector.load %arg6[%c0_272, %c0_273] : memref<2x128xf32, #tpu.memory_space<vmem>>, vector<2x128xf32>
    %609 = arith.extf %606 : vector<2x512xbf16> to vector<2x512xf32>
    %610 = arith.truncf %607 : vector<2x128xf32> to vector<2x128xbf16>
    %c0_274 = arith.constant 0 : index
    %c0_275 = arith.constant 0 : index
    %611 = vector.load %arg2[%c0_274, %c0_275] : memref<128x512xbf16, #tpu.memory_space<vmem>>, vector<128x512xbf16>
    %cst_276 = arith.constant dense<0.000000e+00> : vector<2x512xf32>
    %612 = tpu.matmul %610, %611, %cst_276 {dimension_numbers = #tpu.dot_dimension_numbers<[1], [0], [0], [1], [0, 0, 1, 1], [], []>} : vector<2x128xbf16>, vector<128x512xbf16>, vector<2x512xf32> -> vector<2x512xf32>
    %613 = arith.addf %609, %612 : vector<2x512xf32>
    %614 = vector.extract_strided_slice %613 {offsets = [0, 0], sizes = [2, 128], strides = [1, 1]} : vector<2x512xf32> to vector<2x128xf32>
    %615 = arith.negf %614 : vector<2x128xf32>
    %616 = math.exp %615 : vector<2x128xf32>
    %cst_277 = arith.constant 1.000000e+00 : f32
    %617 = vector.broadcast %cst_277 : f32 to vector<2x128xf32>
    %618 = arith.addf %617, %616 : vector<2x128xf32>
    %619 = arith.divf %617, %618 : vector<2x128xf32>
    %620 = vector.extract_strided_slice %613 {offsets = [0, 128], sizes = [2, 128], strides = [1, 1]} : vector<2x512xf32> to vector<2x128xf32>
    %621 = arith.negf %620 : vector<2x128xf32>
    %622 = math.exp %621 : vector<2x128xf32>
    %cst_278 = arith.constant 1.000000e+00 : f32
    %623 = vector.broadcast %cst_278 : f32 to vector<2x128xf32>
    %624 = arith.addf %623, %622 : vector<2x128xf32>
    %625 = arith.divf %623, %624 : vector<2x128xf32>
    %626 = vector.extract_strided_slice %613 {offsets = [0, 256], sizes = [2, 128], strides = [1, 1]} : vector<2x512xf32> to vector<2x128xf32>
    %627 = math.tanh %626 : vector<2x128xf32>
    %628 = vector.extract_strided_slice %613 {offsets = [0, 384], sizes = [2, 128], strides = [1, 1]} : vector<2x512xf32> to vector<2x128xf32>
    %629 = arith.negf %628 : vector<2x128xf32>
    %630 = math.exp %629 : vector<2x128xf32>
    %cst_279 = arith.constant 1.000000e+00 : f32
    %631 = vector.broadcast %cst_279 : f32 to vector<2x128xf32>
    %632 = arith.addf %631, %630 : vector<2x128xf32>
    %633 = arith.divf %631, %632 : vector<2x128xf32>
    %634 = arith.mulf %625, %608 : vector<2x128xf32>
    %635 = arith.mulf %619, %627 : vector<2x128xf32>
    %636 = arith.addf %634, %635 : vector<2x128xf32>
    %637 = math.tanh %636 : vector<2x128xf32>
    %638 = arith.mulf %633, %637 : vector<2x128xf32>
    %639 = arith.index_cast %603 : i32 to index
    %c0_280 = arith.constant 0 : index
    %c512_281 = arith.constant 512 : index
    %640 = vector.load %arg1[%639, %c0_280, %c512_281] : memref<8x2x1024xbf16, #tpu.memory_space<vmem>>, vector<1x2x512xbf16>
    %641 = vector.shape_cast %640 : vector<1x2x512xbf16> to vector<2x512xbf16>
    %c0_282 = arith.constant 0 : index
    %c0_283 = arith.constant 0 : index
    %642 = vector.load %arg7[%c0_282, %c0_283] : memref<2x128xf32, #tpu.memory_space<vmem>>, vector<2x128xf32>
    %c0_284 = arith.constant 0 : index
    %c0_285 = arith.constant 0 : index
    %643 = vector.load %arg8[%c0_284, %c0_285] : memref<2x128xf32, #tpu.memory_space<vmem>>, vector<2x128xf32>
    %644 = arith.extf %641 : vector<2x512xbf16> to vector<2x512xf32>
    %645 = arith.truncf %642 : vector<2x128xf32> to vector<2x128xbf16>
    %c0_286 = arith.constant 0 : index
    %c0_287 = arith.constant 0 : index
    %646 = vector.load %arg3[%c0_286, %c0_287] : memref<128x512xbf16, #tpu.memory_space<vmem>>, vector<128x512xbf16>
    %cst_288 = arith.constant dense<0.000000e+00> : vector<2x512xf32>
    %647 = tpu.matmul %645, %646, %cst_288 {dimension_numbers = #tpu.dot_dimension_numbers<[1], [0], [0], [1], [0, 0, 1, 1], [], []>} : vector<2x128xbf16>, vector<128x512xbf16>, vector<2x512xf32> -> vector<2x512xf32>
    %648 = arith.addf %644, %647 : vector<2x512xf32>
    %649 = vector.extract_strided_slice %648 {offsets = [0, 0], sizes = [2, 128], strides = [1, 1]} : vector<2x512xf32> to vector<2x128xf32>
    %650 = arith.negf %649 : vector<2x128xf32>
    %651 = math.exp %650 : vector<2x128xf32>
    %cst_289 = arith.constant 1.000000e+00 : f32
    %652 = vector.broadcast %cst_289 : f32 to vector<2x128xf32>
    %653 = arith.addf %652, %651 : vector<2x128xf32>
    %654 = arith.divf %652, %653 : vector<2x128xf32>
    %655 = vector.extract_strided_slice %648 {offsets = [0, 128], sizes = [2, 128], strides = [1, 1]} : vector<2x512xf32> to vector<2x128xf32>
    %656 = arith.negf %655 : vector<2x128xf32>
    %657 = math.exp %656 : vector<2x128xf32>
    %cst_290 = arith.constant 1.000000e+00 : f32
    %658 = vector.broadcast %cst_290 : f32 to vector<2x128xf32>
    %659 = arith.addf %658, %657 : vector<2x128xf32>
    %660 = arith.divf %658, %659 : vector<2x128xf32>
    %661 = vector.extract_strided_slice %648 {offsets = [0, 256], sizes = [2, 128], strides = [1, 1]} : vector<2x512xf32> to vector<2x128xf32>
    %662 = math.tanh %661 : vector<2x128xf32>
    %663 = vector.extract_strided_slice %648 {offsets = [0, 384], sizes = [2, 128], strides = [1, 1]} : vector<2x512xf32> to vector<2x128xf32>
    %664 = arith.negf %663 : vector<2x128xf32>
    %665 = math.exp %664 : vector<2x128xf32>
    %cst_291 = arith.constant 1.000000e+00 : f32
    %666 = vector.broadcast %cst_291 : f32 to vector<2x128xf32>
    %667 = arith.addf %666, %665 : vector<2x128xf32>
    %668 = arith.divf %666, %667 : vector<2x128xf32>
    %669 = arith.mulf %660, %643 : vector<2x128xf32>
    %670 = arith.mulf %654, %662 : vector<2x128xf32>
    %671 = arith.addf %669, %670 : vector<2x128xf32>
    %672 = math.tanh %671 : vector<2x128xf32>
    %673 = arith.mulf %668, %672 : vector<2x128xf32>
    %c0_292 = arith.constant 0 : index
    %c0_293 = arith.constant 0 : index
    %674 = vector.load %arg5[%c0_292, %c0_293] : memref<2x128xf32, #tpu.memory_space<vmem>>, vector<2x128xf32>
    tpu.vector_store %arg5[%c0_292, %c0_293], %638 {strides = array<i32>} : memref<2x128xf32, #tpu.memory_space<vmem>>, vector<2x128xf32>,
    %c0_294 = arith.constant 0 : index
    %c0_295 = arith.constant 0 : index
    %675 = vector.load %arg6[%c0_294, %c0_295] : memref<2x128xf32, #tpu.memory_space<vmem>>, vector<2x128xf32>
    tpu.vector_store %arg6[%c0_294, %c0_295], %636 {strides = array<i32>} : memref<2x128xf32, #tpu.memory_space<vmem>>, vector<2x128xf32>,
    %c0_296 = arith.constant 0 : index
    %c0_297 = arith.constant 0 : index
    %676 = vector.load %arg7[%c0_296, %c0_297] : memref<2x128xf32, #tpu.memory_space<vmem>>, vector<2x128xf32>
    tpu.vector_store %arg7[%c0_296, %c0_297], %673 {strides = array<i32>} : memref<2x128xf32, #tpu.memory_space<vmem>>, vector<2x128xf32>,
    %c0_298 = arith.constant 0 : index
    %c0_299 = arith.constant 0 : index
    %677 = vector.load %arg8[%c0_298, %c0_299] : memref<2x128xf32, #tpu.memory_space<vmem>>, vector<2x128xf32>
    tpu.vector_store %arg8[%c0_298, %c0_299], %671 {strides = array<i32>} : memref<2x128xf32, #tpu.memory_space<vmem>>, vector<2x128xf32>,
    %678 = arith.truncf %638 : vector<2x128xf32> to vector<2x128xbf16>
    %679 = arith.index_cast %c7_i32_266 : i32 to index
    %c0_300 = arith.constant 0 : index
    %c0_301 = arith.constant 0 : index
    %680 = vector.load %arg4[%679, %c0_300, %c0_301] : memref<8x2x256xbf16, #tpu.memory_space<vmem>>, vector<1x2x128xbf16>
    %681 = vector.shape_cast %680 : vector<1x2x128xbf16> to vector<2x128xbf16>
    %682 = vector.shape_cast %678 : vector<2x128xbf16> to vector<1x2x128xbf16>
    tpu.vector_store %arg4[%679, %c0_300, %c0_301], %682 {strides = array<i32>} : memref<8x2x256xbf16, #tpu.memory_space<vmem>>, vector<1x2x128xbf16>,
    %683 = arith.truncf %673 : vector<2x128xf32> to vector<2x128xbf16>
    %684 = arith.index_cast %603 : i32 to index
    %c0_302 = arith.constant 0 : index
    %c128_303 = arith.constant 128 : index
    %685 = vector.load %arg4[%684, %c0_302, %c128_303] : memref<8x2x256xbf16, #tpu.memory_space<vmem>>, vector<1x2x128xbf16>
    %686 = vector.shape_cast %685 : vector<1x2x128xbf16> to vector<2x128xbf16>
    %687 = vector.shape_cast %683 : vector<2x128xbf16> to vector<1x2x128xbf16>
    tpu.vector_store %arg4[%684, %c0_302, %c128_303], %687 {strides = array<i32>} : memref<8x2x256xbf16, #tpu.memory_space<vmem>>, vector<1x2x128xbf16>,
    %c8_i32 = arith.constant 8 : i32
    return
  }
  func.func @transform_0(%arg0: i32) -> (i32, i32, i32) {
    %c0_i32 = arith.constant 0 : i32
    %c0_i32_0 = arith.constant 0 : i32
    %c0_i32_1 = arith.constant 0 : i32
    return %c0_i32, %arg0, %c0_i32_0 : i32, i32, i32
  }
  func.func @transform_1(%arg0: i32) -> (i32, i32) {
    %c0_i32 = arith.constant 0 : i32
    %c0_i32_0 = arith.constant 0 : i32
    %c0_i32_1 = arith.constant 0 : i32
    return %c0_i32, %c0_i32_0 : i32, i32
  }
  func.func @transform_2(%arg0: i32) -> (i32, i32) {
    %c0_i32 = arith.constant 0 : i32
    %c0_i32_0 = arith.constant 0 : i32
    %c0_i32_1 = arith.constant 0 : i32
    return %c0_i32, %c0_i32_0 : i32, i32
  }
  func.func @transform_3(%arg0: i32) -> (i32, i32, i32) {
    %c0_i32 = arith.constant 0 : i32
    %c0_i32_0 = arith.constant 0 : i32
    %c0_i32_1 = arith.constant 0 : i32
    return %c0_i32, %arg0, %c0_i32_0 : i32, i32, i32
  }
}

module attributes {stable_mosaic.version = 11 : i64} {
  func.func @_cls_ce_kernel(%arg0: i32, %arg1: memref<16x256xbf16, #tpu.memory_space<vmem>>, %arg2: memref<128x256xbf16, #tpu.memory_space<vmem>>, %arg3: memref<128x1xf32, #tpu.memory_space<vmem>>, %arg4: memref<1x16xi32, #tpu.memory_space<vmem>>, %arg5: memref<1x16xf32, #tpu.memory_space<vmem>>, %arg6: memref<1x16xi32, #tpu.memory_space<vmem>>, %arg7: memref<1x16xf32, #tpu.memory_space<vmem>>) attributes {dimension_semantics = [#tpu.dimension_semantics<parallel>], iteration_bounds = array<i64: 1>, scalar_prefetch = 0 : i64, scratch_operands = 0 : i64, tpu.core_type = #tpu.core_type<tc>, window_params = [{transform_indices = @transform_0, window_bounds = array<i64: 16, 256>}, {pipeline_mode = #tpu.pipeline_mode<synchronous>, transform_indices = @transform_1, window_bounds = array<i64: 128, 256>}, {pipeline_mode = #tpu.pipeline_mode<synchronous>, transform_indices = @transform_2, window_bounds = array<i64: 128, 1>}, {transform_indices = @transform_3, window_bounds = array<i64: 1, 16>}, {transform_indices = @transform_4, window_bounds = array<i64: 1, 16>}, {transform_indices = @transform_5, window_bounds = array<i64: 1, 16>}, {transform_indices = @transform_6, window_bounds = array<i64: 1, 16>}]} {
    %c0 = arith.constant 0 : index
    %c0_0 = arith.constant 0 : index
    %0 = vector.load %arg2[%c0, %c0_0] : memref<128x256xbf16, #tpu.memory_space<vmem>>, vector<128x256xbf16>
    %c0_1 = arith.constant 0 : index
    %c0_2 = arith.constant 0 : index
    %1 = vector.load %arg1[%c0_1, %c0_2] : memref<16x256xbf16, #tpu.memory_space<vmem>>, vector<16x256xbf16>
    %cst = arith.constant dense<0.000000e+00> : vector<128x16xf32>
    %2 = tpu.matmul %0, %1, %cst {dimension_numbers = #tpu.dot_dimension_numbers<[1], [1], [0], [0], [0, 0, 1, 0], [], []>} : vector<128x256xbf16>, vector<16x256xbf16>, vector<128x16xf32> -> vector<128x16xf32>
    %c0_3 = arith.constant 0 : index
    %c0_4 = arith.constant 0 : index
    %3 = vector.load %arg3[%c0_3, %c0_4] : memref<128x1xf32, #tpu.memory_space<vmem>>, vector<128x1xf32>
    %4 = vector.broadcast %3 : vector<128x1xf32> to vector<128x16xf32>
    %5 = arith.addf %2, %4 : vector<128x16xf32>
    %6 = tpu.iota {dimensions = array<i32: 0>} : vector<128x16xi32>
    %c5_i32 = arith.constant 5 : i32
    %7 = vector.broadcast %c5_i32 : i32 to vector<128x16xi32>
    %8 = arith.cmpi slt, %6, %7 : vector<128x16xi32>
    %cst_5 = arith.constant -1.000000e+30 : f32
    %9 = vector.broadcast %cst_5 : f32 to vector<128x16xf32>
    %10 = arith.select %8, %5, %9 : vector<128x16xi1>, vector<128x16xf32>
    %cst_6 = arith.constant dense<0xFF800000> : vector<16xf32>
    %11 = vector.multi_reduction <maximumf>, %10, %cst_6 [0] : vector<128x16xf32> to vector<16xf32>
    %12 = vector.shape_cast %11 : vector<16xf32> to vector<1x16xf32>
    %13 = vector.broadcast %12 : vector<1x16xf32> to vector<128x16xf32>
    %14 = arith.cmpf oge, %10, %13 : vector<128x16xf32>
    %c5_i32_7 = arith.constant 5 : i32
    %15 = vector.broadcast %c5_i32_7 : i32 to vector<128x16xi32>
    %16 = arith.select %14, %6, %15 : vector<128x16xi1>, vector<128x16xi32>
    %cst_8 = arith.constant dense<2147483647> : vector<16xi32>
    %17 = vector.multi_reduction <minsi>, %16, %cst_8 [0] : vector<128x16xi32> to vector<16xi32>
    %18 = vector.shape_cast %17 : vector<16xi32> to vector<1x16xi32>
    %c0_9 = arith.constant 0 : index
    %c0_10 = arith.constant 0 : index
    %19 = vector.load %arg6[%c0_9, %c0_10] : memref<1x16xi32, #tpu.memory_space<vmem>>, vector<1x16xi32>
    tpu.vector_store %arg6[%c0_9, %c0_10], %18 {strides = array<i32>} : memref<1x16xi32, #tpu.memory_space<vmem>>, vector<1x16xi32>,
    %20 = vector.broadcast %12 : vector<1x16xf32> to vector<128x16xf32>
    %21 = arith.subf %10, %20 : vector<128x16xf32>
    %22 = math.exp %21 : vector<128x16xf32>
    %cst_11 = arith.constant dense<0.000000e+00> : vector<16xf32>
    %23 = vector.multi_reduction <add>, %22, %cst_11 [0] : vector<128x16xf32> to vector<16xf32>
    %24 = vector.shape_cast %23 : vector<16xf32> to vector<1x16xf32>
    %25 = math.log %24 : vector<1x16xf32>
    %26 = arith.addf %12, %25 : vector<1x16xf32>
    %c0_12 = arith.constant 0 : index
    %c0_13 = arith.constant 0 : index
    %27 = vector.load %arg4[%c0_12, %c0_13] : memref<1x16xi32, #tpu.memory_space<vmem>>, vector<1x16xi32>
    %28 = vector.broadcast %27 : vector<1x16xi32> to vector<128x16xi32>
    %29 = arith.cmpi eq, %6, %28 : vector<128x16xi32>
    %cst_14 = arith.constant 0.000000e+00 : f32
    %30 = vector.broadcast %cst_14 : f32 to vector<128x16xf32>
    %31 = arith.select %29, %10, %30 : vector<128x16xi1>, vector<128x16xf32>
    %cst_15 = arith.constant dense<0.000000e+00> : vector<16xf32>
    %32 = vector.multi_reduction <add>, %31, %cst_15 [0] : vector<128x16xf32> to vector<16xf32>
    %33 = vector.shape_cast %32 : vector<16xf32> to vector<1x16xf32>
    %c0_16 = arith.constant 0 : index
    %c0_17 = arith.constant 0 : index
    %34 = vector.load %arg5[%c0_16, %c0_17] : memref<1x16xf32, #tpu.memory_space<vmem>>, vector<1x16xf32>
    %35 = arith.subf %26, %33 : vector<1x16xf32>
    %36 = arith.mulf %34, %35 : vector<1x16xf32>
    %c0_18 = arith.constant 0 : index
    %c0_19 = arith.constant 0 : index
    %37 = vector.load %arg7[%c0_18, %c0_19] : memref<1x16xf32, #tpu.memory_space<vmem>>, vector<1x16xf32>
    tpu.vector_store %arg7[%c0_18, %c0_19], %36 {strides = array<i32>} : memref<1x16xf32, #tpu.memory_space<vmem>>, vector<1x16xf32>,
    return
  }
  func.func @transform_0(%arg0: i32) -> (i32, i32) {
    %c0_i32 = arith.constant 0 : i32
    %c0_i32_0 = arith.constant 0 : i32
    return %arg0, %c0_i32 : i32, i32
  }
  func.func @transform_1(%arg0: i32) -> (i32, i32) {
    %c0_i32 = arith.constant 0 : i32
    %c0_i32_0 = arith.constant 0 : i32
    %c0_i32_1 = arith.constant 0 : i32
    return %c0_i32, %c0_i32_0 : i32, i32
  }
  func.func @transform_2(%arg0: i32) -> (i32, i32) {
    %c0_i32 = arith.constant 0 : i32
    %c0_i32_0 = arith.constant 0 : i32
    %c0_i32_1 = arith.constant 0 : i32
    return %c0_i32, %c0_i32_0 : i32, i32
  }
  func.func @transform_3(%arg0: i32) -> (i32, i32) {
    %c0_i32 = arith.constant 0 : i32
    %c0_i32_0 = arith.constant 0 : i32
    return %c0_i32, %arg0 : i32, i32
  }
  func.func @transform_4(%arg0: i32) -> (i32, i32) {
    %c0_i32 = arith.constant 0 : i32
    %c0_i32_0 = arith.constant 0 : i32
    return %c0_i32, %arg0 : i32, i32
  }
  func.func @transform_5(%arg0: i32) -> (i32, i32) {
    %c0_i32 = arith.constant 0 : i32
    %c0_i32_0 = arith.constant 0 : i32
    return %c0_i32, %arg0 : i32, i32
  }
  func.func @transform_6(%arg0: i32) -> (i32, i32) {
    %c0_i32 = arith.constant 0 : i32
    %c0_i32_0 = arith.constant 0 : i32
    return %c0_i32, %arg0 : i32, i32
  }
}

module attributes {stable_mosaic.version = 11 : i64} {
  func.func @_linear_kernel(%arg0: i32, %arg1: memref<16x30xbf16, #tpu.memory_space<vmem>>, %arg2: memref<30x1024xbf16, #tpu.memory_space<vmem>>, %arg3: memref<1x1024xf32, #tpu.memory_space<vmem>>, %arg4: memref<16x1024xbf16, #tpu.memory_space<vmem>>) attributes {dimension_semantics = [#tpu.dimension_semantics<parallel>], iteration_bounds = array<i64: 1>, scalar_prefetch = 0 : i64, scratch_operands = 0 : i64, tpu.core_type = #tpu.core_type<tc>, window_params = [{transform_indices = @transform_0, window_bounds = array<i64: 16, 30>}, {pipeline_mode = #tpu.pipeline_mode<synchronous>, transform_indices = @transform_1, window_bounds = array<i64: 30, 1024>}, {pipeline_mode = #tpu.pipeline_mode<synchronous>, transform_indices = @transform_2, window_bounds = array<i64: 1, 1024>}, {transform_indices = @transform_3, window_bounds = array<i64: 16, 1024>}]} {
    %c0 = arith.constant 0 : index
    %c0_0 = arith.constant 0 : index
    %0 = vector.load %arg1[%c0, %c0_0] : memref<16x30xbf16, #tpu.memory_space<vmem>>, vector<16x30xbf16>
    %c0_1 = arith.constant 0 : index
    %c0_2 = arith.constant 0 : index
    %1 = vector.load %arg2[%c0_1, %c0_2] : memref<30x1024xbf16, #tpu.memory_space<vmem>>, vector<30x1024xbf16>
    %cst = arith.constant dense<0.000000e+00> : vector<16x1024xf32>
    %2 = tpu.matmul %0, %1, %cst {dimension_numbers = #tpu.dot_dimension_numbers<[1], [0], [0], [1], [0, 0, 1, 1], [], []>} : vector<16x30xbf16>, vector<30x1024xbf16>, vector<16x1024xf32> -> vector<16x1024xf32>
    %c0_3 = arith.constant 0 : index
    %c0_4 = arith.constant 0 : index
    %3 = vector.load %arg3[%c0_3, %c0_4] : memref<1x1024xf32, #tpu.memory_space<vmem>>, vector<1x1024xf32>
    %4 = vector.broadcast %3 : vector<1x1024xf32> to vector<16x1024xf32>
    %5 = arith.addf %2, %4 : vector<16x1024xf32>
    %6 = arith.truncf %5 : vector<16x1024xf32> to vector<16x1024xbf16>
    %c0_5 = arith.constant 0 : index
    %c0_6 = arith.constant 0 : index
    %7 = vector.load %arg4[%c0_5, %c0_6] : memref<16x1024xbf16, #tpu.memory_space<vmem>>, vector<16x1024xbf16>
    tpu.vector_store %arg4[%c0_5, %c0_6], %6 {strides = array<i32>} : memref<16x1024xbf16, #tpu.memory_space<vmem>>, vector<16x1024xbf16>,
    return
  }
  func.func @transform_0(%arg0: i32) -> (i32, i32) {
    %c0_i32 = arith.constant 0 : i32
    %c0_i32_0 = arith.constant 0 : i32
    return %arg0, %c0_i32 : i32, i32
  }
  func.func @transform_1(%arg0: i32) -> (i32, i32) {
    %c0_i32 = arith.constant 0 : i32
    %c0_i32_0 = arith.constant 0 : i32
    %c0_i32_1 = arith.constant 0 : i32
    return %c0_i32, %c0_i32_0 : i32, i32
  }
  func.func @transform_2(%arg0: i32) -> (i32, i32) {
    %c0_i32 = arith.constant 0 : i32
    %c0_i32_0 = arith.constant 0 : i32
    %c0_i32_1 = arith.constant 0 : i32
    return %c0_i32, %c0_i32_0 : i32, i32
  }
  func.func @transform_3(%arg0: i32) -> (i32, i32) {
    %c0_i32 = arith.constant 0 : i32
    %c0_i32_0 = arith.constant 0 : i32
    return %arg0, %c0_i32 : i32, i32
  }
}

module attributes {stable_mosaic.version = 11 : i64} {
  func.func @_linear_kernel(%arg0: i32, %arg1: memref<16x256xbf16, #tpu.memory_space<vmem>>, %arg2: memref<256x128xbf16, #tpu.memory_space<vmem>>, %arg3: memref<1x128xf32, #tpu.memory_space<vmem>>, %arg4: memref<16x128xf32, #tpu.memory_space<vmem>>) attributes {dimension_semantics = [#tpu.dimension_semantics<parallel>], iteration_bounds = array<i64: 1>, scalar_prefetch = 0 : i64, scratch_operands = 0 : i64, tpu.core_type = #tpu.core_type<tc>, window_params = [{transform_indices = @transform_0, window_bounds = array<i64: 16, 256>}, {pipeline_mode = #tpu.pipeline_mode<synchronous>, transform_indices = @transform_1, window_bounds = array<i64: 256, 128>}, {pipeline_mode = #tpu.pipeline_mode<synchronous>, transform_indices = @transform_2, window_bounds = array<i64: 1, 128>}, {transform_indices = @transform_3, window_bounds = array<i64: 16, 128>}]} {
    %c0 = arith.constant 0 : index
    %c0_0 = arith.constant 0 : index
    %0 = vector.load %arg1[%c0, %c0_0] : memref<16x256xbf16, #tpu.memory_space<vmem>>, vector<16x256xbf16>
    %c0_1 = arith.constant 0 : index
    %c0_2 = arith.constant 0 : index
    %1 = vector.load %arg2[%c0_1, %c0_2] : memref<256x128xbf16, #tpu.memory_space<vmem>>, vector<256x128xbf16>
    %cst = arith.constant dense<0.000000e+00> : vector<16x128xf32>
    %2 = tpu.matmul %0, %1, %cst {dimension_numbers = #tpu.dot_dimension_numbers<[1], [0], [0], [1], [0, 0, 1, 1], [], []>} : vector<16x256xbf16>, vector<256x128xbf16>, vector<16x128xf32> -> vector<16x128xf32>
    %c0_3 = arith.constant 0 : index
    %c0_4 = arith.constant 0 : index
    %3 = vector.load %arg3[%c0_3, %c0_4] : memref<1x128xf32, #tpu.memory_space<vmem>>, vector<1x128xf32>
    %4 = vector.broadcast %3 : vector<1x128xf32> to vector<16x128xf32>
    %5 = arith.addf %2, %4 : vector<16x128xf32>
    %c0_5 = arith.constant 0 : index
    %c0_6 = arith.constant 0 : index
    %6 = vector.load %arg4[%c0_5, %c0_6] : memref<16x128xf32, #tpu.memory_space<vmem>>, vector<16x128xf32>
    tpu.vector_store %arg4[%c0_5, %c0_6], %5 {strides = array<i32>} : memref<16x128xf32, #tpu.memory_space<vmem>>, vector<16x128xf32>,
    return
  }
  func.func @transform_0(%arg0: i32) -> (i32, i32) {
    %c0_i32 = arith.constant 0 : i32
    %c0_i32_0 = arith.constant 0 : i32
    return %arg0, %c0_i32 : i32, i32
  }
  func.func @transform_1(%arg0: i32) -> (i32, i32) {
    %c0_i32 = arith.constant 0 : i32
    %c0_i32_0 = arith.constant 0 : i32
    %c0_i32_1 = arith.constant 0 : i32
    return %c0_i32, %c0_i32_0 : i32, i32
  }
  func.func @transform_2(%arg0: i32) -> (i32, i32) {
    %c0_i32 = arith.constant 0 : i32
    %c0_i32_0 = arith.constant 0 : i32
    %c0_i32_1 = arith.constant 0 : i32
    return %c0_i32, %c0_i32_0 : i32, i32
  }
  func.func @transform_3(%arg0: i32) -> (i32, i32) {
    %c0_i32 = arith.constant 0 : i32
    %c0_i32_0 = arith.constant 0 : i32
    return %arg0, %c0_i32 : i32, i32
  }
}

</mosaic_0001>

<llo_original>
// kernel: _lambda_.13
$region0: #{_lambda_.13}
  #allocation0 [shape = 'u32[]', space=smem, size = 0x4, offset = 0x4, fixed_abs, tag = 'smem constant byte address 0x4 - core index']
  #allocation1 [shape = 'u32[144,128]{1,0:T(1,128)}', space=vmem, size = 0x12000, scoped, tag = 'internal scratch']
  %s0 = inlined_call_operand.vmem [shape: bf16[16,48], index: 0, kind: input, shape index: {}]
  %s1 = inlined_call_operand.vmem [shape: bf16[48,512], index: 1, kind: input, shape index: {}]
  %s2 = inlined_call_operand.vmem [shape: f32[1,128], index: 2, kind: input, shape index: {}]
  %s3 = inlined_call_operand.vmem [shape: f32[16,128], index: 3, kind: output, shape index: {}]
  %s4 = sld [smem:[#allocation0]]
  $region22: #{_lambda_.13} parent=0
    _
  %s6 = ssub.s32 1, %s4
  %s7 = scalar_select 0, %s6, %s4
  // Predicated region
  $region2: #{_lambda_.13} parent=0 // pred_check
    _
  $region3: #{_lambda_.13} parent=0 // pred_check_branch
    %9 = sbr.rel (0) target = $region5
  $region4: #{_lambda_.13} parent=0 // pred_region
    _
  $region5: #{_lambda_.13} parent=0 // pred_fallthru
    _
  // Predicated region
  $region6: #{_lambda_.13} parent=0 // pred_check
    _
  $region7: #{_lambda_.13} parent=0 // pred_check_branch
    %11 = sbr.rel (0) target = $region9
  $region8: #{_lambda_.13} parent=0 // pred_region
    _
  $region9: #{_lambda_.13} parent=0 // pred_fallthru
    _
  // Predicated region
  $region10: #{_lambda_.13} parent=0 // pred_check
    _
  $region11: #{_lambda_.13} parent=0 // pred_check_branch
    %13 = sbr.rel (0) target = $region13
  $region12: #{_lambda_.13} parent=0 // pred_region
    _
  $region13: #{_lambda_.13} parent=0 // pred_fallthru
    _
  %v15 = vld [vmem:[%s0] sm:$0xf]
  %v16 = vld [vmem:[%s0 + $0x4] sm:$0xf]
  %v17 = vld [vmem:[%s1] sm:$0xff]
  %v18 = vld [vmem:[%s1 + $0x8] sm:$0xff]
  %v19 = vld [vmem:[%s1 + $0x10] sm:$0xff]
  %v20 = vld [vmem:[%s1 + $0x18] sm:$0xff]
  %v21 = vld [vmem:[%s1 + $0x20] sm:$0xff]
  %v22 = vld [vmem:[%s1 + $0x28] sm:$0xff]
  %v23 = vld [vmem:[%s1 + $0x30] sm:$0xff]
  %v24 = vld [vmem:[%s1 + $0x38] sm:$0xff]
  %v25 = vld [vmem:[%s1 + $0x40] sm:$0xff]
  %v26 = vld [vmem:[%s1 + $0x48] sm:$0xff]
  %v27 = vld [vmem:[%s1 + $0x50] sm:$0xff]
  %v28 = vld [vmem:[%s1 + $0x58] sm:$0xff]
  %v31 = vunpack.c.l.b16 %v15
  %v32 = vunpack.c.l.b16 %v16
  %v33 = vpack.c.b16 %v32, %v31
  %v46 = vunpack.c.l.b16 %v17
  %v47 = vunpack.c.h.b16 %v17
  %v48 = vunpack.c.l.b16 %v18
  %v49 = vunpack.c.h.b16 %v18
  %v50 = vunpack.c.l.b16 %v19
  %v51 = vunpack.c.h.b16 %v19
  %v52 = vunpack.c.l.b16 %v20
  %v53 = vunpack.c.h.b16 %v20
  %v54 = vunpack.c.l.b16 %v21
  %v55 = vunpack.c.h.b16 %v21
  %v56 = vunpack.c.l.b16 %v22
  %v57 = vunpack.c.h.b16 %v22
  %v58 = vunpack.c.l.b16 %v23
  %v59 = vunpack.c.h.b16 %v23
  %v60 = vunpack.c.l.b16 %v24
  %v61 = vunpack.c.h.b16 %v24
  %v62 = vunpack.c.l.b16 %v25
  %v63 = vunpack.c.h.b16 %v25
  %v64 = vunpack.c.l.b16 %v26
  %v65 = vunpack.c.h.b16 %v26
  %v66 = vunpack.c.l.b16 %v27
  %v67 = vunpack.c.h.b16 %v27
  %v68 = vunpack.c.l.b16 %v28
  %v69 = vunpack.c.h.b16 %v28
  %v70 = vpack.c.b16 %v50, %v46
  %v71 = vpack.c.b16 %v51, %v47
  %v72 = vpack.c.b16 %v52, %v48
  %v73 = vpack.c.b16 %v53, %v49
  %v74 = vpack.c.b16 %v58, %v54
  %v75 = vpack.c.b16 %v59, %v55
  %v76 = vpack.c.b16 %v60, %v56
  %v77 = vpack.c.b16 %v61, %v57
  %v78 = vpack.c.b16 %v66, %v62
  %v79 = vpack.c.b16 %v67, %v63
  %v80 = vpack.c.b16 %v68, %v64
  %v81 = vpack.c.b16 %v69, %v65
  %vm94 = vcmask 392192
  %v96 = vsel %vm94, %v33, 0
  %98 = vmatprep.subr.bf16.mxu0 %v71
  %99 = vmatpush1.bf16.msra.mxu0 %v70
  %100 = vmatprep.subr.bf16.mxu0 %v75
  %101 = vmatpush1.bf16.msra.mxu0 %v74
  %102 = vmatprep.subr.bf16.mxu0 %v79
  %103 = vmatpush1.bf16.msra.mxu0 %v78
  %104 = vmatprep.subr.bf16.mxu0 0
  %105 = vmatpush1.bf16.msra.mxu0 0
  %106 = vmatprep.subr.bf16.mxu0 0
  %107 = vmatpush1.bf16.msra.mxu0 0
  %108 = vmatprep.subr.bf16.mxu0 0
  %109 = vmatpush1.bf16.msra.mxu0 0
  %110 = vmatprep.subr.bf16.mxu0 0
  %111 = vmatpush1.bf16.msra.mxu0 0
  %112 = vmatprep.subr.bf16.mxu0 0
  %113 = vmatpush1.bf16.msra.mxu0 0
  %114 = vmatprep.subr.bf16.mxu0 0
  %115 = vmatpush1.bf16.msra.mxu0 0
  %116 = vmatprep.subr.bf16.mxu0 0
  %117 = vmatpush1.bf16.msra.mxu0 0
  %118 = vmatprep.subr.bf16.mxu0 0
  %119 = vmatpush1.bf16.msra.mxu0 0
  %120 = vmatprep.subr.bf16.mxu0 0
  %121 = vmatpush1.bf16.msra.mxu0 0
  %122 = vmatprep.subr.bf16.mxu0 0
  %123 = vmatpush1.bf16.msra.mxu0 0
  %124 = vmatprep.subr.bf16.mxu0 0
  %125 = vmatpush1.bf16.msra.mxu0 0
  %126 = vmatprep.subr.bf16.mxu0 0
  %127 = vmatpush1.bf16.msra.mxu0 0
  %128 = vmatprep.subr.bf16.mxu0 0
  %129 = vmatpush1.bf16.msra.mxu0 0
  %130 = vmatprep.mubr.bf16.mxu0 0
  %131 = vmatmul.mubr.bf16.gmra.mrb[0].mxu0 %v96
  %v132 = vpop.f32.mrb[0].mxu0
  %v133 = vadd.f32 0.0, %v132
  %v134 = vpop.f32.mrb[0].mxu0
  %v135 = vadd.f32 0.0, %v134
  %v136 = vpop.f32.mrb[0].mxu0
  %v137 = vadd.f32 0.0, %v136
  %v138 = vpop.f32.mrb[0].mxu0
  %v139 = vadd.f32 0.0, %v138
  %140 = vdwg.mxu0
  %141 = vmatprep.subr.bf16.mxu0 %v73
  %142 = vmatpush1.bf16.msra.mxu0 %v72
  %143 = vmatprep.subr.bf16.mxu0 %v77
  %144 = vmatpush1.bf16.msra.mxu0 %v76
  %145 = vmatprep.subr.bf16.mxu0 %v81
  %146 = vmatpush1.bf16.msra.mxu0 %v80
  %147 = vmatprep.subr.bf16.mxu0 0
  %148 = vmatpush1.bf16.msra.mxu0 0
  %149 = vmatprep.subr.bf16.mxu0 0
  %150 = vmatpush1.bf16.msra.mxu0 0
  %151 = vmatprep.subr.bf16.mxu0 0
  %152 = vmatpush1.bf16.msra.mxu0 0
  %153 = vmatprep.subr.bf16.mxu0 0
  %154 = vmatpush1.bf16.msra.mxu0 0
  %155 = vmatprep.subr.bf16.mxu0 0
  %156 = vmatpush1.bf16.msra.mxu0 0
  %157 = vmatprep.subr.bf16.mxu0 0
  %158 = vmatpush1.bf16.msra.mxu0 0
  %159 = vmatprep.subr.bf16.mxu0 0
  %160 = vmatpush1.bf16.msra.mxu0 0
  %161 = vmatprep.subr.bf16.mxu0 0
  %162 = vmatpush1.bf16.msra.mxu0 0
  %163 = vmatprep.subr.bf16.mxu0 0
  %164 = vmatpush1.bf16.msra.mxu0 0
  %165 = vmatprep.subr.bf16.mxu0 0
  %166 = vmatpush1.bf16.msra.mxu0 0
  %167 = vmatprep.subr.bf16.mxu0 0
  %168 = vmatpush1.bf16.msra.mxu0 0
  %169 = vmatprep.subr.bf16.mxu0 0
  %170 = vmatpush1.bf16.msra.mxu0 0
  %171 = vmatprep.subr.bf16.mxu0 0
  %172 = vmatpush1.bf16.msra.mxu0 0
  %173 = vmatprep.mubr.bf16.mxu0 0
  %174 = vmatmul.mubr.bf16.gmra.mrb[0].mxu0 %v96
  %v175 = vpop.f32.mrb[0].mxu0
  %v176 = vadd.f32 0.0, %v175
  %v177 = vpop.f32.mrb[0].mxu0
  %v178 = vadd.f32 0.0, %v177
  %v179 = vpop.f32.mrb[0].mxu0
  %v180 = vadd.f32 0.0, %v179
  %v181 = vpop.f32.mrb[0].mxu0
  %v182 = vadd.f32 0.0, %v181
  %183 = vdwg.mxu0
  %v184 = vmax.f32 %v133, %v135
  %v185 = vmax.f32 %v137, %v139
  %v186 = vmax.f32 %v184, %v176
  %v187 = vmax.f32 %v185, %v180
  %v188 = vmax.f32 %v186, %v178
  %v189 = vmax.f32 %v187, %v182
  %v190 = vld [vmem:[%s2] sm:$0x1]
  %v192 = vlaneseq
  %v193 = vshrl.u32 %v192, 7
  %v194 = vsub.s32 0, %v193
  %v195 = vrot.slane %v190, %v194
  %v197 = vadd.f32 %v188, %v195
  %v198 = vadd.f32 %v189, %v195
  %199 = vst [vmem:[%s3] sm:$0xff] %v197
  %200 = vst [vmem:[%s3 + $0x8] sm:$0xff] %v198
  // Predicated region
  $region14: #{_lambda_.13} parent=0 // pred_check
    _
  $region15: #{_lambda_.13} parent=0 // pred_check_branch
    %202 = sbr.rel (0) target = $region17
  $region16: #{_lambda_.13} parent=0 // pred_region
    _
  $region17: #{_lambda_.13} parent=0 // pred_fallthru
    _
  // Predicated region
  $region18: #{_lambda_.13} parent=0 // pred_check
    _
  $region19: #{_lambda_.13} parent=0 // pred_check_branch
    %204 = sbr.rel (0) target = $region21
  $region20: #{_lambda_.13} parent=0 // pred_region
    _
  $region21: #{_lambda_.13} parent=0 // pred_fallthru
    _

// kernel: _lambda_.14
$region0: #{_lambda_.14}
  #allocation0 [shape = 'u32[]', space=smem, size = 0x4, offset = 0x4, fixed_abs, tag = 'smem constant byte address 0x4 - core index']
  #allocation1 [shape = 'u32[144,128]{1,0:T(1,128)}', space=vmem, size = 0x12000, scoped, tag = 'internal scratch']
  %s0 = inlined_call_operand.vmem [shape: bf16[16,24], index: 0, kind: input, shape index: {}]
  %s1 = inlined_call_operand.vmem [shape: bf16[24,1024], index: 1, kind: input, shape index: {}]
  %s2 = inlined_call_operand.vmem [shape: f32[1,1024], index: 2, kind: input, shape index: {}]
  %s3 = inlined_call_operand.vmem [shape: bf16[16,1024], index: 3, kind: output, shape index: {}]
  %s4 = sld [smem:[#allocation0]]
  $region22: #{_lambda_.14} parent=0
    _
  %s6 = ssub.s32 1, %s4
  %s7 = scalar_select 0, %s6, %s4
  // Predicated region
  $region2: #{_lambda_.14} parent=0 // pred_check
    _
  $region3: #{_lambda_.14} parent=0 // pred_check_branch
    %9 = sbr.rel (0) target = $region5
  $region4: #{_lambda_.14} parent=0 // pred_region
    _
  $region5: #{_lambda_.14} parent=0 // pred_fallthru
    _
  // Predicated region
  $region6: #{_lambda_.14} parent=0 // pred_check
    _
  $region7: #{_lambda_.14} parent=0 // pred_check_branch
    %11 = sbr.rel (0) target = $region9
  $region8: #{_lambda_.14} parent=0 // pred_region
    _
  $region9: #{_lambda_.14} parent=0 // pred_fallthru
    _
  // Predicated region
  $region10: #{_lambda_.14} parent=0 // pred_check
    _
  $region11: #{_lambda_.14} parent=0 // pred_check_branch
    %13 = sbr.rel (0) target = $region13
  $region12: #{_lambda_.14} parent=0 // pred_region
    _
  $region13: #{_lambda_.14} parent=0 // pred_fallthru
    _
  %v15 = vld [vmem:[%s0] sm:$0xf]
  %v16 = vld [vmem:[%s0 + $0x4] sm:$0xf]
  %v17 = vld [vmem:[%s1] sm:$0xff]
  %v18 = vld [vmem:[%s1 + $0x8] sm:$0xff]
  %v19 = vld [vmem:[%s1 + $0x10] sm:$0xff]
  %v20 = vld [vmem:[%s1 + $0x18] sm:$0xff]
  %v21 = vld [vmem:[%s1 + $0x20] sm:$0xff]
  %v22 = vld [vmem:[%s1 + $0x28] sm:$0xff]
  %v23 = vld [vmem:[%s1 + $0x30] sm:$0xff]
  %v24 = vld [vmem:[%s1 + $0x38] sm:$0xff]
  %v25 = vld [vmem:[%s1 + $0x40] sm:$0xff]
  %v26 = vld [vmem:[%s1 + $0x48] sm:$0xff]
  %v27 = vld [vmem:[%s1 + $0x50] sm:$0xff]
  %v28 = vld [vmem:[%s1 + $0x58] sm:$0xff]
  %v29 = vld [vmem:[%s2] sm:$0xff]
  %v31 = vlaneseq
  %v32 = vshrl.u32 %v31, 7
  %v33 = vsub.s32 0, %v32
  %v34 = vrot.slane %v29, %v33
  %v35 = vlaneseq
  %v36 = vshrl.u32 %v35, 7
  %v37 = vsub.s32 1, %v36
  %v38 = vrot.slane %v29, %v37
  %v39 = vlaneseq
  %v40 = vshrl.u32 %v39, 7
  %v41 = vsub.s32 2, %v40
  %v42 = vrot.slane %v29, %v41
  %v43 = vlaneseq
  %v44 = vshrl.u32 %v43, 7
  %v45 = vsub.s32 3, %v44
  %v46 = vrot.slane %v29, %v45
  %v47 = vlaneseq
  %v48 = vshrl.u32 %v47, 7
  %v49 = vsub.s32 4, %v48
  %v50 = vrot.slane %v29, %v49
  %v51 = vlaneseq
  %v52 = vshrl.u32 %v51, 7
  %v53 = vsub.s32 5, %v52
  %v54 = vrot.slane %v29, %v53
  %v55 = vlaneseq
  %v56 = vshrl.u32 %v55, 7
  %v57 = vsub.s32 6, %v56
  %v58 = vrot.slane %v29, %v57
  %v59 = vlaneseq
  %v60 = vshrl.u32 %v59, 7
  %v61 = vsub.s32 7, %v60
  %v62 = vrot.slane %v29, %v61
  %v73 = vunpack.c.l.b16 %v15
  %v74 = vunpack.c.l.b16 %v16
  %v75 = vpack.c.b16 %v74, %v73
  %v88 = vunpack.c.l.b16 %v17
  %v89 = vunpack.c.h.b16 %v17
  %v90 = vunpack.c.l.b16 %v18
  %v91 = vunpack.c.h.b16 %v18
  %v92 = vunpack.c.l.b16 %v19
  %v93 = vunpack.c.h.b16 %v19
  %v94 = vunpack.c.l.b16 %v20
  %v95 = vunpack.c.h.b16 %v20
  %v96 = vunpack.c.l.b16 %v21
  %v97 = vunpack.c.h.b16 %v21
  %v98 = vunpack.c.l.b16 %v22
  %v99 = vunpack.c.h.b16 %v22
  %v100 = vunpack.c.l.b16 %v23
  %v101 = vunpack.c.h.b16 %v23
  %v102 = vunpack.c.l.b16 %v24
  %v103 = vunpack.c.h.b16 %v24
  %v104 = vunpack.c.l.b16 %v25
  %v105 = vunpack.c.h.b16 %v25
  %v106 = vunpack.c.l.b16 %v26
  %v107 = vunpack.c.h.b16 %v26
  %v108 = vunpack.c.l.b16 %v27
  %v109 = vunpack.c.h.b16 %v27
  %v110 = vunpack.c.l.b16 %v28
  %v111 = vunpack.c.h.b16 %v28
  %v112 = vpack.c.b16 %v96, %v88
  %v113 = vpack.c.b16 %v97, %v89
  %v114 = vpack.c.b16 %v98, %v90
  %v115 = vpack.c.b16 %v99, %v91
  %v116 = vpack.c.b16 %v100, %v92
  %v117 = vpack.c.b16 %v101, %v93
  %v118 = vpack.c.b16 %v102, %v94
  %v119 = vpack.c.b16 %v103, %v95
  %v120 = vpack.c.b16 %v104, %v104
  %v121 = vpack.c.b16 %v105, %v105
  %v122 = vpack.c.b16 %v106, %v106
  %v123 = vpack.c.b16 %v107, %v107
  %v124 = vpack.c.b16 %v108, %v108
  %v125 = vpack.c.b16 %v109, %v109
  %v126 = vpack.c.b16 %v110, %v110
  %v127 = vpack.c.b16 %v111, %v111
  %vm136 = vcmask 195584
  %v138 = vsel %vm136, %v75, 0
  %vm140 = vcmask 1043456
  %v142 = vsel %vm140, %v120, 0
  %v145 = vsel %vm140, %v121, 0
  %v148 = vsel %vm140, %v122, 0
  %v151 = vsel %vm140, %v123, 0
  %v154 = vsel %vm140, %v124, 0
  %v157 = vsel %vm140, %v125, 0
  %v160 = vsel %vm140, %v126, 0
  %v163 = vsel %vm140, %v127, 0
  %165 = vmatprep.subr.bf16.mxu0 %v113
  %166 = vmatpush1.bf16.msra.mxu0 %v112
  %167 = vmatprep.subr.bf16.mxu0 %v145
  %168 = vmatpush1.bf16.msra.mxu0 %v142
  %169 = vmatprep.subr.bf16.mxu0 0
  %170 = vmatpush1.bf16.msra.mxu0 0
  %171 = vmatprep.subr.bf16.mxu0 0
  %172 = vmatpush1.bf16.msra.mxu0 0
  %173 = vmatprep.subr.bf16.mxu0 0
  %174 = vmatpush1.bf16.msra.mxu0 0
  %175 = vmatprep.subr.bf16.mxu0 0
  %176 = vmatpush1.bf16.msra.mxu0 0
  %177 = vmatprep.subr.bf16.mxu0 0
  %178 = vmatpush1.bf16.msra.mxu0 0
  %179 = vmatprep.subr.bf16.mxu0 0
  %180 = vmatpush1.bf16.msra.mxu0 0
  %181 = vmatprep.subr.bf16.mxu0 0
  %182 = vmatpush1.bf16.msra.mxu0 0
  %183 = vmatprep.subr.bf16.mxu0 0
  %184 = vmatpush1.bf16.msra.mxu0 0
  %185 = vmatprep.subr.bf16.mxu0 0
  %186 = vmatpush1.bf16.msra.mxu0 0
  %187 = vmatprep.subr.bf16.mxu0 0
  %188 = vmatpush1.bf16.msra.mxu0 0
  %189 = vmatprep.subr.bf16.mxu0 0
  %190 = vmatpush1.bf16.msra.mxu0 0
  %191 = vmatprep.subr.bf16.mxu0 0
  %192 = vmatpush1.bf16.msra.mxu0 0
  %193 = vmatprep.subr.bf16.mxu0 0
  %194 = vmatpush1.bf16.msra.mxu0 0
  %195 = vmatprep.subr.bf16.mxu0 0
  %196 = vmatpush1.bf16.msra.mxu0 0
  %197 = vmatprep.mubr.bf16.mxu0 0
  %198 = vmatmul.mubr.bf16.gmra.mrb[0].mxu0 %v138
  %v199 = vpop.f32.mrb[0].mxu0
  %v200 = vadd.f32 %v34, %v199
  %v201 = vpop.f32.mrb[0].mxu0
  %v202 = vadd.f32 %v38, %v201
  %v203 = vpop.f32.mrb[0].mxu0
  %v204 = vadd.f32 %v34, %v203
  %v205 = vpop.f32.mrb[0].mxu0
  %v206 = vadd.f32 %v38, %v205
  %207 = vdwg.mxu0
  %208 = vmatprep.subr.bf16.mxu0 %v115
  %209 = vmatpush1.bf16.msra.mxu0 %v114
  %210 = vmatprep.subr.bf16.mxu0 %v151
  %211 = vmatpush1.bf16.msra.mxu0 %v148
  %212 = vmatprep.subr.bf16.mxu0 0
  %213 = vmatpush1.bf16.msra.mxu0 0
  %214 = vmatprep.subr.bf16.mxu0 0
  %215 = vmatpush1.bf16.msra.mxu0 0
  %216 = vmatprep.subr.bf16.mxu0 0
  %217 = vmatpush1.bf16.msra.mxu0 0
  %218 = vmatprep.subr.bf16.mxu0 0
  %219 = vmatpush1.bf16.msra.mxu0 0
  %220 = vmatprep.subr.bf16.mxu0 0
  %221 = vmatpush1.bf16.msra.mxu0 0
  %222 = vmatprep.subr.bf16.mxu0 0
  %223 = vmatpush1.bf16.msra.mxu0 0
  %224 = vmatprep.subr.bf16.mxu0 0
  %225 = vmatpush1.bf16.msra.mxu0 0
  %226 = vmatprep.subr.bf16.mxu0 0
  %227 = vmatpush1.bf16.msra.mxu0 0
  %228 = vmatprep.subr.bf16.mxu0 0
  %229 = vmatpush1.bf16.msra.mxu0 0
  %230 = vmatprep.subr.bf16.mxu0 0
  %231 = vmatpush1.bf16.msra.mxu0 0
  %232 = vmatprep.subr.bf16.mxu0 0
  %233 = vmatpush1.bf16.msra.mxu0 0
  %234 = vmatprep.subr.bf16.mxu0 0
  %235 = vmatpush1.bf16.msra.mxu0 0
  %236 = vmatprep.subr.bf16.mxu0 0
  %237 = vmatpush1.bf16.msra.mxu0 0
  %238 = vmatprep.subr.bf16.mxu0 0
  %239 = vmatpush1.bf16.msra.mxu0 0
  %240 = vmatprep.mubr.bf16.mxu0 0
  %241 = vmatmul.mubr.bf16.gmra.mrb[0].mxu0 %v138
  %v242 = vpop.f32.mrb[0].mxu0
  %v243 = vadd.f32 %v42, %v242
  %v244 = vpop.f32.mrb[0].mxu0
  %v245 = vadd.f32 %v46, %v244
  %v246 = vpop.f32.mrb[0].mxu0
  %v247 = vadd.f32 %v42, %v246
  %v248 = vpop.f32.mrb[0].mxu0
  %v249 = vadd.f32 %v46, %v248
  %250 = vdwg.mxu0
  %251 = vmatprep.subr.bf16.mxu0 %v117
  %252 = vmatpush1.bf16.msra.mxu0 %v116
  %253 = vmatprep.subr.bf16.mxu0 %v157
  %254 = vmatpush1.bf16.msra.mxu0 %v154
  %255 = vmatprep.subr.bf16.mxu0 0
  %256 = vmatpush1.bf16.msra.mxu0 0
  %257 = vmatprep.subr.bf16.mxu0 0
  %258 = vmatpush1.bf16.msra.mxu0 0
  %259 = vmatprep.subr.bf16.mxu0 0
  %260 = vmatpush1.bf16.msra.mxu0 0
  %261 = vmatprep.subr.bf16.mxu0 0
  %262 = vmatpush1.bf16.msra.mxu0 0
  %263 = vmatprep.subr.bf16.mxu0 0
  %264 = vmatpush1.bf16.msra.mxu0 0
  %265 = vmatprep.subr.bf16.mxu0 0
  %266 = vmatpush1.bf16.msra.mxu0 0
  %267 = vmatprep.subr.bf16.mxu0 0
  %268 = vmatpush1.bf16.msra.mxu0 0
  %269 = vmatprep.subr.bf16.mxu0 0
  %270 = vmatpush1.bf16.msra.mxu0 0
  %271 = vmatprep.subr.bf16.mxu0 0
  %272 = vmatpush1.bf16.msra.mxu0 0
  %273 = vmatprep.subr.bf16.mxu0 0
  %274 = vmatpush1.bf16.msra.mxu0 0
  %275 = vmatprep.subr.bf16.mxu0 0
  %276 = vmatpush1.bf16.msra.mxu0 0
  %277 = vmatprep.subr.bf16.mxu0 0
  %278 = vmatpush1.bf16.msra.mxu0 0
  %279 = vmatprep.subr.bf16.mxu0 0
  %280 = vmatpush1.bf16.msra.mxu0 0
  %281 = vmatprep.subr.bf16.mxu0 0
  %282 = vmatpush1.bf16.msra.mxu0 0
  %283 = vmatprep.mubr.bf16.mxu0 0
  %284 = vmatmul.mubr.bf16.gmra.mrb[0].mxu0 %v138
  %v285 = vpop.f32.mrb[0].mxu0
  %v286 = vadd.f32 %v50, %v285
  %v287 = vpop.f32.mrb[0].mxu0
  %v288 = vadd.f32 %v54, %v287
  %v289 = vpop.f32.mrb[0].mxu0
  %v290 = vadd.f32 %v50, %v289
  %v291 = vpop.f32.mrb[0].mxu0
  %v292 = vadd.f32 %v54, %v291
  %293 = vdwg.mxu0
  %294 = vmatprep.subr.bf16.mxu0 %v119
  %295 = vmatpush1.bf16.msra.mxu0 %v118
  %296 = vmatprep.subr.bf16.mxu0 %v163
  %297 = vmatpush1.bf16.msra.mxu0 %v160
  %298 = vmatprep.subr.bf16.mxu0 0
  %299 = vmatpush1.bf16.msra.mxu0 0
  %300 = vmatprep.subr.bf16.mxu0 0
  %301 = vmatpush1.bf16.msra.mxu0 0
  %302 = vmatprep.subr.bf16.mxu0 0
  %303 = vmatpush1.bf16.msra.mxu0 0
  %304 = vmatprep.subr.bf16.mxu0 0
  %305 = vmatpush1.bf16.msra.mxu0 0
  %306 = vmatprep.subr.bf16.mxu0 0
  %307 = vmatpush1.bf16.msra.mxu0 0
  %308 = vmatprep.subr.bf16.mxu0 0
  %309 = vmatpush1.bf16.msra.mxu0 0
  %310 = vmatprep.subr.bf16.mxu0 0
  %311 = vmatpush1.bf16.msra.mxu0 0
  %312 = vmatprep.subr.bf16.mxu0 0
  %313 = vmatpush1.bf16.msra.mxu0 0
  %314 = vmatprep.subr.bf16.mxu0 0
  %315 = vmatpush1.bf16.msra.mxu0 0
  %316 = vmatprep.subr.bf16.mxu0 0
  %317 = vmatpush1.bf16.msra.mxu0 0
  %318 = vmatprep.subr.bf16.mxu0 0
  %319 = vmatpush1.bf16.msra.mxu0 0
  %320 = vmatprep.subr.bf16.mxu0 0
  %321 = vmatpush1.bf16.msra.mxu0 0
  %322 = vmatprep.subr.bf16.mxu0 0
  %323 = vmatpush1.bf16.msra.mxu0 0
  %324 = vmatprep.subr.bf16.mxu0 0
  %325 = vmatpush1.bf16.msra.mxu0 0
  %326 = vmatprep.mubr.bf16.mxu0 0
  %327 = vmatmul.mubr.bf16.gmra.mrb[0].mxu0 %v138
  %v328 = vpop.f32.mrb[0].mxu0
  %v329 = vadd.f32 %v58, %v328
  %v330 = vpop.f32.mrb[0].mxu0
  %v331 = vadd.f32 %v62, %v330
  %v332 = vpop.f32.mrb[0].mxu0
  %v333 = vadd.f32 %v58, %v332
  %v334 = vpop.f32.mrb[0].mxu0
  %v335 = vadd.f32 %v62, %v334
  %336 = vdwg.mxu0
  %v337 = vpack.c.bf16 %v204, %v200
  %v338 = vpack.c.bf16 %v206, %v202
  %v339 = vpack.c.bf16 %v247, %v243
  %v340 = vpack.c.bf16 %v249, %v245
  %v341 = vpack.c.bf16 %v290, %v286
  %v342 = vpack.c.bf16 %v292, %v288
  %v343 = vpack.c.bf16 %v333, %v329
  %v344 = vpack.c.bf16 %v335, %v331
  %v353 = vunpack.c.l.b16 %v337
  %v354 = vunpack.c.l.b16 %v338
  %v355 = vunpack.c.l.b16 %v339
  %v356 = vunpack.c.l.b16 %v340
  %v357 = vunpack.c.l.b16 %v341
  %v358 = vunpack.c.l.b16 %v342
  %v359 = vunpack.c.l.b16 %v343
  %v360 = vunpack.c.l.b16 %v344
  %v361 = vunpack.c.h.b16 %v337
  %v362 = vunpack.c.h.b16 %v338
  %v363 = vunpack.c.h.b16 %v339
  %v364 = vunpack.c.h.b16 %v340
  %v365 = vunpack.c.h.b16 %v341
  %v366 = vunpack.c.h.b16 %v342
  %v367 = vunpack.c.h.b16 %v343
  %v368 = vunpack.c.h.b16 %v344
  %v369 = vpack.c.b16 %v354, %v353
  %v370 = vpack.c.b16 %v356, %v355
  %v371 = vpack.c.b16 %v358, %v357
  %v372 = vpack.c.b16 %v360, %v359
  %v373 = vpack.c.b16 %v362, %v361
  %v374 = vpack.c.b16 %v364, %v363
  %v375 = vpack.c.b16 %v366, %v365
  %v376 = vpack.c.b16 %v368, %v367
  %385 = vst [vmem:[%s3] sm:$0xff] %v369
  %386 = vst [vmem:[%s3 + $0x8] sm:$0xff] %v370
  %387 = vst [vmem:[%s3 + $0x10] sm:$0xff] %v371
  %388 = vst [vmem:[%s3 + $0x18] sm:$0xff] %v372
  %389 = vst [vmem:[%s3 + $0x20] sm:$0xff] %v373
  %390 = vst [vmem:[%s3 + $0x28] sm:$0xff] %v374
  %391 = vst [vmem:[%s3 + $0x30] sm:$0xff] %v375
  %392 = vst [vmem:[%s3 + $0x38] sm:$0xff] %v376
  // Predicated region
  $region14: #{_lambda_.14} parent=0 // pred_check
    _
  $region15: #{_lambda_.14} parent=0 // pred_check_branch
    %394 = sbr.rel (0) target = $region17
  $region16: #{_lambda_.14} parent=0 // pred_region
    _
  $region17: #{_lambda_.14} parent=0 // pred_fallthru
    _
  // Predicated region
  $region18: #{_lambda_.14} parent=0 // pred_check
    _
  $region19: #{_lambda_.14} parent=0 // pred_check_branch
    %396 = sbr.rel (0) target = $region21
  $region20: #{_lambda_.14} parent=0 // pred_region
    _
  $region21: #{_lambda_.14} parent=0 // pred_fallthru
    _

// kernel: _lambda_.16
$region0: #{_lambda_.16}
  #allocation0 [shape = 'u32[]', space=smem, size = 0x4, offset = 0x4, fixed_abs, tag = 'smem constant byte address 0x4 - core index']
  #allocation1 [shape = 'u32[144,128]{1,0:T(1,128)}', space=vmem, size = 0x12000, scoped, tag = 'internal scratch']
  %s0 = inlined_call_operand.vmem [shape: bf16[16,256], index: 0, kind: input, shape index: {}]
  %s1 = inlined_call_operand.vmem [shape: bf16[128,256], index: 1, kind: input, shape index: {}]
  %s2 = inlined_call_operand.vmem [shape: f32[128,1], index: 2, kind: input, shape index: {}]
  %s3 = inlined_call_operand.vmem [shape: s32[1,16], index: 3, kind: input, shape index: {}]
  %s4 = inlined_call_operand.vmem [shape: f32[1,16], index: 4, kind: input, shape index: {}]
  %s5 = inlined_call_operand.vmem [shape: s32[1,16], index: 5, kind: output, shape index: {0}]
  %s6 = inlined_call_operand.vmem [shape: f32[1,16], index: 6, kind: output, shape index: {1}]
  %7 = xla_tuple %s5, %s6
  %s8 = sld [smem:[#allocation0]]
  $region38: #{_lambda_.16} parent=0
    _
  %s10 = ssub.s32 1, %s8
  %s11 = scalar_select 0, %s10, %s8
  // Predicated region
  $region2: #{_lambda_.16} parent=0 // pred_check
    _
  $region3: #{_lambda_.16} parent=0 // pred_check_branch
    %13 = sbr.rel (0) target = $region5
  $region4: #{_lambda_.16} parent=0 // pred_region
    _
  $region5: #{_lambda_.16} parent=0 // pred_fallthru
    _
  // Predicated region
  $region6: #{_lambda_.16} parent=0 // pred_check
    _
  $region7: #{_lambda_.16} parent=0 // pred_check_branch
    %15 = sbr.rel (0) target = $region9
  $region8: #{_lambda_.16} parent=0 // pred_region
    _
  $region9: #{_lambda_.16} parent=0 // pred_fallthru
    _
  // Predicated region
  $region10: #{_lambda_.16} parent=0 // pred_check
    _
  $region11: #{_lambda_.16} parent=0 // pred_check_branch
    %17 = sbr.rel (0) target = $region13
  $region12: #{_lambda_.16} parent=0 // pred_region
    _
  $region13: #{_lambda_.16} parent=0 // pred_fallthru
    _
  // Predicated region
  $region14: #{_lambda_.16} parent=0 // pred_check
    _
  $region15: #{_lambda_.16} parent=0 // pred_check_branch
    %19 = sbr.rel (0) target = $region17
  $region16: #{_lambda_.16} parent=0 // pred_region
    _
  $region17: #{_lambda_.16} parent=0 // pred_fallthru
    _
  // Predicated region
  $region18: #{_lambda_.16} parent=0 // pred_check
    _
  $region19: #{_lambda_.16} parent=0 // pred_check_branch
    %21 = sbr.rel (0) target = $region21
  $region20: #{_lambda_.16} parent=0 // pred_region
    _
  $region21: #{_lambda_.16} parent=0 // pred_fallthru
    _
  %v23 = vld [vmem:[%s1] sm:$0xff]
  %v24 = vld [vmem:[%s1 + $0x8] sm:$0xff]
  %v25 = vld [vmem:[%s1 + $0x10] sm:$0xff]
  %v26 = vld [vmem:[%s1 + $0x18] sm:$0xff]
  %v27 = vld [vmem:[%s1 + $0x20] sm:$0xff]
  %v28 = vld [vmem:[%s1 + $0x28] sm:$0xff]
  %v29 = vld [vmem:[%s1 + $0x30] sm:$0xff]
  %v30 = vld [vmem:[%s1 + $0x38] sm:$0xff]
  %v31 = vld [vmem:[%s1 + $0x40] sm:$0xff]
  %v32 = vld [vmem:[%s1 + $0x48] sm:$0xff]
  %v33 = vld [vmem:[%s1 + $0x50] sm:$0xff]
  %v34 = vld [vmem:[%s1 + $0x58] sm:$0xff]
  %v35 = vld [vmem:[%s1 + $0x60] sm:$0xff]
  %v36 = vld [vmem:[%s1 + $0x68] sm:$0xff]
  %v37 = vld [vmem:[%s1 + $0x70] sm:$0xff]
  %v38 = vld [vmem:[%s1 + $0x78] sm:$0xff]
  %v39 = vld [vmem:[%s0] sm:$0xff]
  %v40 = vld [vmem:[%s0 + $0x8] sm:$0xff]
  %v41 = vld [vmem:[%s2] sm:$0xff]
  %v42 = vld [vmem:[%s2 + $0x8] sm:$0xff]
  %v43 = vld [vmem:[%s2 + $0x10] sm:$0xff]
  %v44 = vld [vmem:[%s2 + $0x18] sm:$0xff]
  %v45 = vld [vmem:[%s2 + $0x20] sm:$0xff]
  %v46 = vld [vmem:[%s2 + $0x28] sm:$0xff]
  %v47 = vld [vmem:[%s2 + $0x30] sm:$0xff]
  %v48 = vld [vmem:[%s2 + $0x38] sm:$0xff]
  %v49 = vld [vmem:[%s2 + $0x40] sm:$0xff]
  %v50 = vld [vmem:[%s2 + $0x48] sm:$0xff]
  %v51 = vld [vmem:[%s2 + $0x50] sm:$0xff]
  %v52 = vld [vmem:[%s2 + $0x58] sm:$0xff]
  %v53 = vld [vmem:[%s2 + $0x60] sm:$0xff]
  %v54 = vld [vmem:[%s2 + $0x68] sm:$0xff]
  %v55 = vld [vmem:[%s2 + $0x70] sm:$0xff]
  %v56 = vld [vmem:[%s2 + $0x78] sm:$0xff]
  %58 = vset.pattern.permute.xlu0 0
  %59 = vperm.xlu0 %58, %v41
  %v60 = vpop.permute.xlu0 %59
  %63 = vset.pattern.permute.xlu0 0
  %64 = vperm.xlu0 %63, %v42
  %v65 = vpop.permute.xlu0 %64
  %68 = vset.pattern.permute.xlu0 0
  %69 = vperm.xlu0 %68, %v43
  %v70 = vpop.permute.xlu0 %69
  %73 = vset.pattern.permute.xlu0 0
  %74 = vperm.xlu0 %73, %v44
  %v75 = vpop.permute.xlu0 %74
  %78 = vset.pattern.permute.xlu0 0
  %79 = vperm.xlu0 %78, %v45
  %v80 = vpop.permute.xlu0 %79
  %83 = vset.pattern.permute.xlu0 0
  %84 = vperm.xlu0 %83, %v46
  %v85 = vpop.permute.xlu0 %84
  %88 = vset.pattern.permute.xlu0 0
  %89 = vperm.xlu0 %88, %v47
  %v90 = vpop.permute.xlu0 %89
  %93 = vset.pattern.permute.xlu0 0
  %94 = vperm.xlu0 %93, %v48
  %v95 = vpop.permute.xlu0 %94
  %98 = vset.pattern.permute.xlu0 0
  %99 = vperm.xlu0 %98, %v49
  %v100 = vpop.permute.xlu0 %99
  %103 = vset.pattern.permute.xlu0 0
  %104 = vperm.xlu0 %103, %v50
  %v105 = vpop.permute.xlu0 %104
  %108 = vset.pattern.permute.xlu0 0
  %109 = vperm.xlu0 %108, %v51
  %v110 = vpop.permute.xlu0 %109
  %113 = vset.pattern.permute.xlu0 0
  %114 = vperm.xlu0 %113, %v52
  %v115 = vpop.permute.xlu0 %114
  %118 = vset.pattern.permute.xlu0 0
  %119 = vperm.xlu0 %118, %v53
  %v120 = vpop.permute.xlu0 %119
  %123 = vset.pattern.permute.xlu0 0
  %124 = vperm.xlu0 %123, %v54
  %v125 = vpop.permute.xlu0 %124
  %128 = vset.pattern.permute.xlu0 0
  %129 = vperm.xlu0 %128, %v55
  %v130 = vpop.permute.xlu0 %129
  %133 = vset.pattern.permute.xlu0 0
  %134 = vperm.xlu0 %133, %v56
  %v135 = vpop.permute.xlu0 %134
  %v153 = vunpack.c.l.b16 %v23
  %v154 = vunpack.c.h.b16 %v23
  %v155 = vunpack.c.l.b16 %v24
  %v156 = vunpack.c.h.b16 %v24
  %v157 = vunpack.c.l.b16 %v25
  %v158 = vunpack.c.h.b16 %v25
  %v159 = vunpack.c.l.b16 %v26
  %v160 = vunpack.c.h.b16 %v26
  %v161 = vunpack.c.l.b16 %v27
  %v162 = vunpack.c.h.b16 %v27
  %v163 = vunpack.c.l.b16 %v28
  %v164 = vunpack.c.h.b16 %v28
  %v165 = vunpack.c.l.b16 %v29
  %v166 = vunpack.c.h.b16 %v29
  %v167 = vunpack.c.l.b16 %v30
  %v168 = vunpack.c.h.b16 %v30
  %v169 = vunpack.c.l.b16 %v31
  %v170 = vunpack.c.h.b16 %v31
  %v171 = vunpack.c.l.b16 %v32
  %v172 = vunpack.c.h.b16 %v32
  %v173 = vunpack.c.l.b16 %v33
  %v174 = vunpack.c.h.b16 %v33
  %v175 = vunpack.c.l.b16 %v34
  %v176 = vunpack.c.h.b16 %v34
  %v177 = vunpack.c.l.b16 %v35
  %v178 = vunpack.c.h.b16 %v35
  %v179 = vunpack.c.l.b16 %v36
  %v180 = vunpack.c.h.b16 %v36
  %v181 = vunpack.c.l.b16 %v37
  %v182 = vunpack.c.h.b16 %v37
  %v183 = vunpack.c.l.b16 %v38
  %v184 = vunpack.c.h.b16 %v38
  %v185 = vpack.c.b16 %v155, %v153
  %v186 = vpack.c.b16 %v156, %v154
  %v187 = vpack.c.b16 %v159, %v157
  %v188 = vpack.c.b16 %v160, %v158
  %v189 = vpack.c.b16 %v163, %v161
  %v190 = vpack.c.b16 %v164, %v162
  %v191 = vpack.c.b16 %v167, %v165
  %v192 = vpack.c.b16 %v168, %v166
  %v193 = vpack.c.b16 %v171, %v169
  %v194 = vpack.c.b16 %v172, %v170
  %v195 = vpack.c.b16 %v175, %v173
  %v196 = vpack.c.b16 %v176, %v174
  %v197 = vpack.c.b16 %v179, %v177
  %v198 = vpack.c.b16 %v180, %v178
  %v199 = vpack.c.b16 %v183, %v181
  %v200 = vpack.c.b16 %v184, %v182
  %v219 = vunpack.c.l.b16 %v39
  %v220 = vunpack.c.h.b16 %v39
  %v221 = vunpack.c.l.b16 %v40
  %v222 = vunpack.c.h.b16 %v40
  %v223 = vpack.c.b16 %v221, %v219
  %v224 = vpack.c.b16 %v222, %v220
  %227 = vmatprep.subr.bf16.mxu0 %v224
  %228 = vmatpush1.bf16.xpose.msra.mxu0 %v223
  %229 = vmatprep.subr.bf16.mxu0 0
  %230 = vmatpush1.bf16.xpose.msra.mxu0 0
  %231 = vmatprep.subr.bf16.mxu0 0
  %232 = vmatpush1.bf16.xpose.msra.mxu0 0
  %233 = vmatprep.subr.bf16.mxu0 0
  %234 = vmatpush1.bf16.xpose.msra.mxu0 0
  %235 = vmatprep.subr.bf16.mxu0 0
  %236 = vmatpush1.bf16.xpose.msra.mxu0 0
  %237 = vmatprep.subr.bf16.mxu0 0
  %238 = vmatpush1.bf16.xpose.msra.mxu0 0
  %239 = vmatprep.subr.bf16.mxu0 0
  %240 = vmatpush1.bf16.xpose.msra.mxu0 0
  %241 = vmatprep.subr.bf16.mxu0 0
  %242 = vmatpush1.bf16.xpose.msra.mxu0 0
  %243 = vmatprep.subr.bf16.mxu0 0
  %244 = vmatpush1.bf16.xpose.msra.mxu0 0
  %245 = vmatprep.subr.bf16.mxu0 0
  %246 = vmatpush1.bf16.xpose.msra.mxu0 0
  %247 = vmatprep.subr.bf16.mxu0 0
  %248 = vmatpush1.bf16.xpose.msra.mxu0 0
  %249 = vmatprep.subr.bf16.mxu0 0
  %250 = vmatpush1.bf16.xpose.msra.mxu0 0
  %251 = vmatprep.subr.bf16.mxu0 0
  %252 = vmatpush1.bf16.xpose.msra.mxu0 0
  %253 = vmatprep.subr.bf16.mxu0 0
  %254 = vmatpush1.bf16.xpose.msra.mxu0 0
  %255 = vmatprep.subr.bf16.mxu0 0
  %256 = vmatpush1.bf16.xpose.msra.mxu0 0
  %257 = vmatprep.subr.bf16.mxu0 0
  %258 = vmatpush1.bf16.xpose.msra.mxu0 0
  %259 = vmatprep.mubr.bf16.mxu0 %v186
  %260 = vmatmul.mubr.bf16.gmra.mrb[0].mxu0 %v185
  %v261 = vpop.f32.mrb[0].mxu0
  %v262 = vadd.f32 %v60, %v261
  %v263 = vpop.f32.mrb[0].mxu0
  %v264 = vpop.f32.mrb[0].mxu0
  %v265 = vadd.f32 %v65, %v264
  %v266 = vpop.f32.mrb[0].mxu0
  %267 = vmatprep.mubr.bf16.mxu0 %v188
  %268 = vmatmul.mubr.bf16.gmra.mrb[0].mxu0 %v187
  %v269 = vpop.f32.mrb[0].mxu0
  %v270 = vadd.f32 %v70, %v269
  %v271 = vpop.f32.mrb[0].mxu0
  %v272 = vpop.f32.mrb[0].mxu0
  %v273 = vadd.f32 %v75, %v272
  %v274 = vpop.f32.mrb[0].mxu0
  %275 = vmatprep.mubr.bf16.mxu0 %v190
  %276 = vmatmul.mubr.bf16.gmra.mrb[0].mxu0 %v189
  %v277 = vpop.f32.mrb[0].mxu0
  %v278 = vadd.f32 %v80, %v277
  %v279 = vpop.f32.mrb[0].mxu0
  %v280 = vpop.f32.mrb[0].mxu0
  %v281 = vadd.f32 %v85, %v280
  %v282 = vpop.f32.mrb[0].mxu0
  %283 = vmatprep.mubr.bf16.mxu0 %v192
  %284 = vmatmul.mubr.bf16.gmra.mrb[0].mxu0 %v191
  %v285 = vpop.f32.mrb[0].mxu0
  %v286 = vadd.f32 %v90, %v285
  %v287 = vpop.f32.mrb[0].mxu0
  %v288 = vpop.f32.mrb[0].mxu0
  %v289 = vadd.f32 %v95, %v288
  %v290 = vpop.f32.mrb[0].mxu0
  %291 = vmatprep.mubr.bf16.mxu0 %v194
  %292 = vmatmul.mubr.bf16.gmra.mrb[0].mxu0 %v193
  %v293 = vpop.f32.mrb[0].mxu0
  %v294 = vadd.f32 %v100, %v293
  %v295 = vpop.f32.mrb[0].mxu0
  %v296 = vpop.f32.mrb[0].mxu0
  %v297 = vadd.f32 %v105, %v296
  %v298 = vpop.f32.mrb[0].mxu0
  %299 = vmatprep.mubr.bf16.mxu0 %v196
  %300 = vmatmul.mubr.bf16.gmra.mrb[0].mxu0 %v195
  %v301 = vpop.f32.mrb[0].mxu0
  %v302 = vadd.f32 %v110, %v301
  %v303 = vpop.f32.mrb[0].mxu0
  %v304 = vpop.f32.mrb[0].mxu0
  %v305 = vadd.f32 %v115, %v304
  %v306 = vpop.f32.mrb[0].mxu0
  %307 = vmatprep.mubr.bf16.mxu0 %v198
  %308 = vmatmul.mubr.bf16.gmra.mrb[0].mxu0 %v197
  %v309 = vpop.f32.mrb[0].mxu0
  %v310 = vadd.f32 %v120, %v309
  %v311 = vpop.f32.mrb[0].mxu0
  %v312 = vpop.f32.mrb[0].mxu0
  %v313 = vadd.f32 %v125, %v312
  %v314 = vpop.f32.mrb[0].mxu0
  %315 = vmatprep.mubr.bf16.mxu0 %v200
  %316 = vmatmul.mubr.bf16.gmra.mrb[0].mxu0 %v199
  %v317 = vpop.f32.mrb[0].mxu0
  %v318 = vadd.f32 %v130, %v317
  %v319 = vpop.f32.mrb[0].mxu0
  %v320 = vpop.f32.mrb[0].mxu0
  %v321 = vadd.f32 %v135, %v320
  %v322 = vpop.f32.mrb[0].mxu0
  %323 = vdwg.mxu0
  %v324 = vlaneseq
  %v325 = vshrl.u32 %v324, 7
  %v326 = vadd.s32 %v325, 8
  %v327 = vadd.s32 %v325, 16
  %v328 = vadd.s32 %v325, 24
  %v329 = vadd.s32 %v325, 32
  %v330 = vadd.s32 %v325, 40
  %v331 = vadd.s32 %v325, 48
  %v332 = vadd.s32 %v325, 56
  %v333 = vadd.s32 %v325, 64
  %v334 = vadd.s32 %v325, 72
  %v335 = vadd.s32 %v325, 80
  %v336 = vadd.s32 %v325, 88
  %v337 = vadd.s32 %v325, 96
  %v338 = vadd.s32 %v325, 104
  %v339 = vadd.s32 %v325, 112
  %v340 = vadd.s32 %v325, 120
  %vm341 = vcmp.lt.s32.totalorder %v325, 5
  %vm342 = vcmp.lt.s32.totalorder %v326, 5
  %vm343 = vcmp.lt.s32.totalorder %v327, 5
  %vm344 = vcmp.lt.s32.totalorder %v328, 5
  %vm345 = vcmp.lt.s32.totalorder %v329, 5
  %vm346 = vcmp.lt.s32.totalorder %v330, 5
  %vm347 = vcmp.lt.s32.totalorder %v331, 5
  %vm348 = vcmp.lt.s32.totalorder %v332, 5
  %vm349 = vcmp.lt.s32.totalorder %v333, 5
  %vm350 = vcmp.lt.s32.totalorder %v334, 5
  %vm351 = vcmp.lt.s32.totalorder %v335, 5
  %vm352 = vcmp.lt.s32.totalorder %v336, 5
  %vm353 = vcmp.lt.s32.totalorder %v337, 5
  %vm354 = vcmp.lt.s32.totalorder %v338, 5
  %vm355 = vcmp.lt.s32.totalorder %v339, 5
  %vm356 = vcmp.lt.s32.totalorder %v340, 5
  %v357 = vsel %vm341, %v262, -1e+30
  %v358 = vsel %vm342, %v265, -1e+30
  %v359 = vsel %vm343, %v270, -1e+30
  %v360 = vsel %vm344, %v273, -1e+30
  %v361 = vsel %vm345, %v278, -1e+30
  %v362 = vsel %vm346, %v281, -1e+30
  %v363 = vsel %vm347, %v286, -1e+30
  %v364 = vsel %vm348, %v289, -1e+30
  %v365 = vsel %vm349, %v294, -1e+30
  %v366 = vsel %vm350, %v297, -1e+30
  %v367 = vsel %vm351, %v302, -1e+30
  %v368 = vsel %vm352, %v305, -1e+30
  %v369 = vsel %vm353, %v310, -1e+30
  %v370 = vsel %vm354, %v313, -1e+30
  %v371 = vsel %vm355, %v318, -1e+30
  %v372 = vsel %vm356, %v321, -1e+30
  %vm373 = vcmask 130048
  %v374 = vsel %vm373, %v357, -inf
  %v375 = vsel %vm373, %v358, -inf
  %v376 = vsel %vm373, %v359, -inf
  %v377 = vsel %vm373, %v360, -inf
  %v378 = vsel %vm373, %v361, -inf
  %v379 = vmax.f32 %v374, %v378
  %v380 = vsel %vm373, %v362, -inf
  %v381 = vmax.f32 %v375, %v380
  %v382 = vsel %vm373, %v363, -inf
  %v383 = vmax.f32 %v376, %v382
  %v384 = vsel %vm373, %v364, -inf
  %v385 = vmax.f32 %v377, %v384
  %v386 = vsel %vm373, %v365, -inf
  %v387 = vmax.f32 %v379, %v386
  %v388 = vsel %vm373, %v366, -inf
  %v389 = vmax.f32 %v381, %v388
  %v390 = vsel %vm373, %v367, -inf
  %v391 = vmax.f32 %v383, %v390
  %v392 = vsel %vm373, %v368, -inf
  %v393 = vmax.f32 %v385, %v392
  %v394 = vsel %vm373, %v369, -inf
  %v395 = vmax.f32 %v387, %v394
  %v396 = vsel %vm373, %v370, -inf
  %v397 = vmax.f32 %v389, %v396
  %v398 = vsel %vm373, %v371, -inf
  %v399 = vmax.f32 %v391, %v398
  %v400 = vsel %vm373, %v372, -inf
  %v401 = vmax.f32 %v393, %v400
  %v402 = vmax.f32 %v395, %v397
  %v403 = vmax.f32 %v399, %v401
  %v404 = vmax.f32 %v402, %v403
  %v405 = vrot.slane %v404, 4
  %v406 = vmax.f32 %v404, %v405
  %v407 = vrot.slane %v406, 2
  %v408 = vmax.f32 %v406, %v407
  %v409 = vrot.slane %v408, 1
  %v410 = vmax.f32 %v408, %v409
  %vm411 = vcmp.ge.f32.partialorder %v357, %v410
  %vm412 = vcmp.ge.f32.partialorder %v358, %v410
  %vm413 = vcmp.ge.f32.partialorder %v359, %v410
  %vm414 = vcmp.ge.f32.partialorder %v360, %v410
  %vm415 = vcmp.ge.f32.partialorder %v361, %v410
  %vm416 = vcmp.ge.f32.partialorder %v362, %v410
  %vm417 = vcmp.ge.f32.partialorder %v363, %v410
  %vm418 = vcmp.ge.f32.partialorder %v364, %v410
  %vm419 = vcmp.ge.f32.partialorder %v365, %v410
  %vm420 = vcmp.ge.f32.partialorder %v366, %v410
  %vm421 = vcmp.ge.f32.partialorder %v367, %v410
  %vm422 = vcmp.ge.f32.partialorder %v368, %v410
  %vm423 = vcmp.ge.f32.partialorder %v369, %v410
  %vm424 = vcmp.ge.f32.partialorder %v370, %v410
  %vm425 = vcmp.ge.f32.partialorder %v371, %v410
  %vm426 = vcmp.ge.f32.partialorder %v372, %v410
  %v427 = vsel %vm411, %v325, 5
  %v428 = vsel %vm412, %v326, 5
  %v429 = vsel %vm413, %v327, 5
  %v430 = vsel %vm414, %v328, 5
  %v431 = vsel %vm415, %v329, 5
  %v432 = vsel %vm416, %v330, 5
  %v433 = vsel %vm417, %v331, 5
  %v434 = vsel %vm418, %v332, 5
  %v435 = vsel %vm419, %v333, 5
  %v436 = vsel %vm420, %v334, 5
  %v437 = vsel %vm421, %v335, 5
  %v438 = vsel %vm422, %v336, 5
  %v439 = vsel %vm423, %v337, 5
  %v440 = vsel %vm424, %v338, 5
  %v441 = vsel %vm425, %v339, 5
  %v442 = vsel %vm426, %v340, 5
  %v443 = vsel %vm373, %v427, 2147483647
  %v444 = vsel %vm373, %v428, 2147483647
  %v445 = vsel %vm373, %v429, 2147483647
  %v446 = vsel %vm373, %v430, 2147483647
  %v447 = vsel %vm373, %v431, 2147483647
  %vm448 = vcmp.lt.s32.totalorder %v443, %v447
  %v449 = vsel %vm448, %v443, %v447
  %v450 = vsel %vm373, %v432, 2147483647
  %vm451 = vcmp.lt.s32.totalorder %v444, %v450
  %v452 = vsel %vm451, %v444, %v450
  %v453 = vsel %vm373, %v433, 2147483647
  %vm454 = vcmp.lt.s32.totalorder %v445, %v453
  %v455 = vsel %vm454, %v445, %v453
  %v456 = vsel %vm373, %v434, 2147483647
  %vm457 = vcmp.lt.s32.totalorder %v446, %v456
  %v458 = vsel %vm457, %v446, %v456
  %v459 = vsel %vm373, %v435, 2147483647
  %vm460 = vcmp.lt.s32.totalorder %v449, %v459
  %v461 = vsel %vm460, %v449, %v459
  %v462 = vsel %vm373, %v436, 2147483647
  %vm463 = vcmp.lt.s32.totalorder %v452, %v462
  %v464 = vsel %vm463, %v452, %v462
  %v465 = vsel %vm373, %v437, 2147483647
  %vm466 = vcmp.lt.s32.totalorder %v455, %v465
  %v467 = vsel %vm466, %v455, %v465
  %v468 = vsel %vm373, %v438, 2147483647
  %vm469 = vcmp.lt.s32.totalorder %v458, %v468
  %v470 = vsel %vm469, %v458, %v468
  %v471 = vsel %vm373, %v439, 2147483647
  %vm472 = vcmp.lt.s32.totalorder %v461, %v471
  %v473 = vsel %vm472, %v461, %v471
  %v474 = vsel %vm373, %v440, 2147483647
  %vm475 = vcmp.lt.s32.totalorder %v464, %v474
  %v476 = vsel %vm475, %v464, %v474
  %v477 = vsel %vm373, %v441, 2147483647
  %vm478 = vcmp.lt.s32.totalorder %v467, %v477
  %v479 = vsel %vm478, %v467, %v477
  %v480 = vsel %vm373, %v442, 2147483647
  %vm481 = vcmp.lt.s32.totalorder %v470, %v480
  %v482 = vsel %vm481, %v470, %v480
  %vm483 = vcmp.lt.s32.totalorder %v473, %v476
  %v484 = vsel %vm483, %v473, %v476
  %vm485 = vcmp.lt.s32.totalorder %v479, %v482
  %v486 = vsel %vm485, %v479, %v482
  %vm487 = vcmp.lt.s32.totalorder %v484, %v486
  %v488 = vsel %vm487, %v484, %v486
  %v489 = vrot.slane %v488, 4
  %vm490 = vcmp.lt.s32.totalorder %v488, %v489
  %v491 = vsel %vm490, %v488, %v489
  %v492 = vrot.slane %v491, 2
  %vm493 = vcmp.lt.s32.totalorder %v491, %v492
  %v494 = vsel %vm493, %v491, %v492
  %v495 = vrot.slane %v494, 1
  %vm496 = vcmp.lt.s32.totalorder %v494, %v495
  %v497 = vsel %vm496, %v494, %v495
  %vm498 = vcmask 122880
  %499 = vst.msk [vmem:[%s5] sm:$0x1] %vm498, %v497
  %v500 = vsub.f32 %v357, %v410
  %v501 = vsub.f32 %v358, %v410
  %v502 = vsub.f32 %v359, %v410
  %v503 = vsub.f32 %v360, %v410
  %v504 = vsub.f32 %v361, %v410
  %v505 = vsub.f32 %v362, %v410
  %v506 = vsub.f32 %v363, %v410
  %v507 = vsub.f32 %v364, %v410
  %v508 = vsub.f32 %v365, %v410
  %v509 = vsub.f32 %v366, %v410
  %v510 = vsub.f32 %v367, %v410
  %v511 = vsub.f32 %v368, %v410
  %v512 = vsub.f32 %v369, %v410
  %v513 = vsub.f32 %v370, %v410
  %v514 = vsub.f32 %v371, %v410
  %v515 = vsub.f32 %v372, %v410
  %v516 = vmul.f32 %v500, 1.442695
  %v517 = vpow.pop %v516
  %v518 = vmul.f32 %v501, 1.442695
  %v519 = vpow.pop %v518
  %v520 = vmul.f32 %v502, 1.442695
  %v521 = vpow.pop %v520
  %v522 = vmul.f32 %v503, 1.442695
  %v523 = vpow.pop %v522
  %v524 = vmul.f32 %v504, 1.442695
  %v525 = vpow.pop %v524
  %v526 = vmul.f32 %v505, 1.442695
  %v527 = vpow.pop %v526
  %v528 = vmul.f32 %v506, 1.442695
  %v529 = vpow.pop %v528
  %v530 = vmul.f32 %v507, 1.442695
  %v531 = vpow.pop %v530
  %v532 = vmul.f32 %v508, 1.442695
  %v533 = vpow.pop %v532
  %v534 = vmul.f32 %v509, 1.442695
  %v535 = vpow.pop %v534
  %v536 = vmul.f32 %v510, 1.442695
  %v537 = vpow.pop %v536
  %v538 = vmul.f32 %v511, 1.442695
  %v539 = vpow.pop %v538
  %v540 = vmul.f32 %v512, 1.442695
  %v541 = vpow.pop %v540
  %v542 = vmul.f32 %v513, 1.442695
  %v543 = vpow.pop %v542
  %v544 = vmul.f32 %v514, 1.442695
  %v545 = vpow.pop %v544
  %v546 = vmul.f32 %v515, 1.442695
  %v547 = vpow.pop %v546
  %v548 = vsel %vm373, %v517, 0.0
  %v549 = vsel %vm373, %v519, 0.0
  %v550 = vadd.f32 %v548, %v549
  %v551 = vsel %vm373, %v521, 0.0
  %v552 = vadd.f32 %v550, %v551
  %v553 = vsel %vm373, %v523, 0.0
  %v554 = vadd.f32 %v552, %v553
  %v555 = vsel %vm373, %v525, 0.0
  %v556 = vadd.f32 %v554, %v555
  %v557 = vsel %vm373, %v527, 0.0
  %v558 = vadd.f32 %v556, %v557
  %v559 = vsel %vm373, %v529, 0.0
  %v560 = vadd.f32 %v558, %v559
  %v561 = vsel %vm373, %v531, 0.0
  %v562 = vadd.f32 %v560, %v561
  %v563 = vsel %vm373, %v533, 0.0
  %v564 = vadd.f32 %v562, %v563
  %v565 = vsel %vm373, %v535, 0.0
  %v566 = vadd.f32 %v564, %v565
  %v567 = vsel %vm373, %v537, 0.0
  %v568 = vadd.f32 %v566, %v567
  %v569 = vsel %vm373, %v539, 0.0
  %v570 = vadd.f32 %v568, %v569
  %v571 = vsel %vm373, %v541, 0.0
  %v572 = vadd.f32 %v570, %v571
  %v573 = vsel %vm373, %v543, 0.0
  %v574 = vadd.f32 %v572, %v573
  %v575 = vsel %vm373, %v545, 0.0
  %v576 = vadd.f32 %v574, %v575
  %v577 = vsel %vm373, %v547, 0.0
  %v578 = vadd.f32 %v576, %v577
  %v579 = vrot.slane %v578, 4
  %v580 = vadd.f32 %v578, %v579
  %v581 = vrot.slane %v580, 2
  %v582 = vadd.f32 %v580, %v581
  %v583 = vrot.slane %v582, 1
  %v584 = vadd.f32 %v582, %v583
  %v585 = vlog2.pop %v584
  %v586 = vmul.f32 %v585, 0.6931472
  %v587 = vadd.f32 %v410, %v586
  %v588 = vld [vmem:[%s3] sm:$0x1]
  %v589 = vlaneseq
  %v590 = vshrl.u32 %v589, 7
  %v591 = vsub.s32 0, %v590
  %v592 = vrot.slane %v588, %v591
  %vm593 = vcmp.eq.s32.totalorder %v325, %v592
  %vm594 = vcmp.eq.s32.totalorder %v326, %v592
  %vm595 = vcmp.eq.s32.totalorder %v327, %v592
  %vm596 = vcmp.eq.s32.totalorder %v328, %v592
  %vm597 = vcmp.eq.s32.totalorder %v329, %v592
  %vm598 = vcmp.eq.s32.totalorder %v330, %v592
  %vm599 = vcmp.eq.s32.totalorder %v331, %v592
  %vm600 = vcmp.eq.s32.totalorder %v332, %v592
  %vm601 = vcmp.eq.s32.totalorder %v333, %v592
  %vm602 = vcmp.eq.s32.totalorder %v334, %v592
  %vm603 = vcmp.eq.s32.totalorder %v335, %v592
  %vm604 = vcmp.eq.s32.totalorder %v336, %v592
  %vm605 = vcmp.eq.s32.totalorder %v337, %v592
  %vm606 = vcmp.eq.s32.totalorder %v338, %v592
  %vm607 = vcmp.eq.s32.totalorder %v339, %v592
  %vm608 = vcmp.eq.s32.totalorder %v340, %v592
  %v609 = vsel %vm593, %v357, 0.0
  %v610 = vsel %vm594, %v358, 0.0
  %v611 = vsel %vm595, %v359, 0.0
  %v612 = vsel %vm596, %v360, 0.0
  %v613 = vsel %vm597, %v361, 0.0
  %v614 = vsel %vm598, %v362, 0.0
  %v615 = vsel %vm599, %v363, 0.0
  %v616 = vsel %vm600, %v364, 0.0
  %v617 = vsel %vm601, %v365, 0.0
  %v618 = vsel %vm602, %v366, 0.0
  %v619 = vsel %vm603, %v367, 0.0
  %v620 = vsel %vm604, %v368, 0.0
  %v621 = vsel %vm605, %v369, 0.0
  %v622 = vsel %vm606, %v370, 0.0
  %v623 = vsel %vm607, %v371, 0.0
  %v624 = vsel %vm608, %v372, 0.0
  %v625 = vsel %vm373, %v609, 0.0
  %v626 = vsel %vm373, %v610, 0.0
  %v627 = vadd.f32 %v625, %v626
  %v628 = vsel %vm373, %v611, 0.0
  %v629 = vadd.f32 %v627, %v628
  %v630 = vsel %vm373, %v612, 0.0
  %v631 = vadd.f32 %v629, %v630
  %v632 = vsel %vm373, %v613, 0.0
  %v633 = vadd.f32 %v631, %v632
  %v634 = vsel %vm373, %v614, 0.0
  %v635 = vadd.f32 %v633, %v634
  %v636 = vsel %vm373, %v615, 0.0
  %v637 = vadd.f32 %v635, %v636
  %v638 = vsel %vm373, %v616, 0.0
  %v639 = vadd.f32 %v637, %v638
  %v640 = vsel %vm373, %v617, 0.0
  %v641 = vadd.f32 %v639, %v640
  %v642 = vsel %vm373, %v618, 0.0
  %v643 = vadd.f32 %v641, %v642
  %v644 = vsel %vm373, %v619, 0.0
  %v645 = vadd.f32 %v643, %v644
  %v646 = vsel %vm373, %v620, 0.0
  %v647 = vadd.f32 %v645, %v646
  %v648 = vsel %vm373, %v621, 0.0
  %v649 = vadd.f32 %v647, %v648
  %v650 = vsel %vm373, %v622, 0.0
  %v651 = vadd.f32 %v649, %v650
  %v652 = vsel %vm373, %v623, 0.0
  %v653 = vadd.f32 %v651, %v652
  %v654 = vsel %vm373, %v624, 0.0
  %v655 = vadd.f32 %v653, %v654
  %v656 = vrot.slane %v655, 4
  %v657 = vadd.f32 %v655, %v656
  %v658 = vrot.slane %v657, 2
  %v659 = vadd.f32 %v657, %v658
  %v660 = vrot.slane %v659, 1
  %v661 = vadd.f32 %v659, %v660
  %v662 = vld [vmem:[%s4] sm:$0x1]
  %v663 = vsub.f32 %v587, %v661
  %v664 = vmul.f32 %v662, %v663
  %665 = vst.msk [vmem:[%s6] sm:$0x1] %vm498, %v664
  // Predicated region
  $region22: #{_lambda_.16} parent=0 // pred_check
    _
  $region23: #{_lambda_.16} parent=0 // pred_check_branch
    %667 = sbr.rel (0) target = $region25
  $region24: #{_lambda_.16} parent=0 // pred_region
    _
  $region25: #{_lambda_.16} parent=0 // pred_fallthru
    _
  // Predicated region
  $region26: #{_lambda_.16} parent=0 // pred_check
    _
  $region27: #{_lambda_.16} parent=0 // pred_check_branch
    %669 = sbr.rel (0) target = $region29
  $region28: #{_lambda_.16} parent=0 // pred_region
    _
  $region29: #{_lambda_.16} parent=0 // pred_fallthru
    _
  // Predicated region
  $region30: #{_lambda_.16} parent=0 // pred_check
    _
  $region31: #{_lambda_.16} parent=0 // pred_check_branch
    %671 = sbr.rel (0) target = $region33
  $region32: #{_lambda_.16} parent=0 // pred_region
    _
  $region33: #{_lambda_.16} parent=0 // pred_fallthru
    _
  // Predicated region
  $region34: #{_lambda_.16} parent=0 // pred_check
    _
  $region35: #{_lambda_.16} parent=0 // pred_check_branch
    %673 = sbr.rel (0) target = $region37
  $region36: #{_lambda_.16} parent=0 // pred_region
    _
  $region37: #{_lambda_.16} parent=0 // pred_fallthru
    _

// kernel: _lambda_.22
$region0: #{_lambda_.22}
  #allocation0 [shape = 'u32[]', space=smem, size = 0x4, offset = 0x4, fixed_abs, tag = 'smem constant byte address 0x4 - core index']
  #allocation1 [shape = 'u32[144,128]{1,0:T(1,128)}', space=vmem, size = 0x12000, scoped, tag = 'internal scratch']
  %s0 = inlined_call_operand.vmem [shape: bf16[16,256], index: 0, kind: input, shape index: {}]
  %s1 = inlined_call_operand.vmem [shape: bf16[256,128], index: 1, kind: input, shape index: {}]
  %s2 = inlined_call_operand.vmem [shape: f32[1,128], index: 2, kind: input, shape index: {}]
  %s3 = inlined_call_operand.vmem [shape: f32[16,128], index: 3, kind: output, shape index: {}]
  %s4 = sld [smem:[#allocation0]]
  $region22: #{_lambda_.22} parent=0
    _
  %s6 = ssub.s32 1, %s4
  %s7 = scalar_select 0, %s6, %s4
  // Predicated region
  $region2: #{_lambda_.22} parent=0 // pred_check
    _
  $region3: #{_lambda_.22} parent=0 // pred_check_branch
    %9 = sbr.rel (0) target = $region5
  $region4: #{_lambda_.22} parent=0 // pred_region
    _
  $region5: #{_lambda_.22} parent=0 // pred_fallthru
    _
  // Predicated region
  $region6: #{_lambda_.22} parent=0 // pred_check
    _
  $region7: #{_lambda_.22} parent=0 // pred_check_branch
    %11 = sbr.rel (0) target = $region9
  $region8: #{_lambda_.22} parent=0 // pred_region
    _
  $region9: #{_lambda_.22} parent=0 // pred_fallthru
    _
  // Predicated region
  $region10: #{_lambda_.22} parent=0 // pred_check
    _
  $region11: #{_lambda_.22} parent=0 // pred_check_branch
    %13 = sbr.rel (0) target = $region13
  $region12: #{_lambda_.22} parent=0 // pred_region
    _
  $region13: #{_lambda_.22} parent=0 // pred_fallthru
    _
  %v15 = vld [vmem:[%s0] sm:$0xff]
  %v16 = vld [vmem:[%s0 + $0x8] sm:$0xff]
  %v17 = vld [vmem:[%s1] sm:$0xf]
  %v18 = vld [vmem:[%s1 + $0x4] sm:$0xf]
  %v19 = vld [vmem:[%s1 + $0x8] sm:$0xf]
  %v20 = vld [vmem:[%s1 + $0xc] sm:$0xf]
  %v21 = vld [vmem:[%s1 + $0x10] sm:$0xf]
  %v22 = vld [vmem:[%s1 + $0x14] sm:$0xf]
  %v23 = vld [vmem:[%s1 + $0x18] sm:$0xf]
  %v24 = vld [vmem:[%s1 + $0x1c] sm:$0xf]
  %v25 = vld [vmem:[%s1 + $0x20] sm:$0xf]
  %v26 = vld [vmem:[%s1 + $0x24] sm:$0xf]
  %v27 = vld [vmem:[%s1 + $0x28] sm:$0xf]
  %v28 = vld [vmem:[%s1 + $0x2c] sm:$0xf]
  %v29 = vld [vmem:[%s1 + $0x30] sm:$0xf]
  %v30 = vld [vmem:[%s1 + $0x34] sm:$0xf]
  %v31 = vld [vmem:[%s1 + $0x38] sm:$0xf]
  %v32 = vld [vmem:[%s1 + $0x3c] sm:$0xf]
  %v33 = vld [vmem:[%s1 + $0x40] sm:$0xf]
  %v34 = vld [vmem:[%s1 + $0x44] sm:$0xf]
  %v35 = vld [vmem:[%s1 + $0x48] sm:$0xf]
  %v36 = vld [vmem:[%s1 + $0x4c] sm:$0xf]
  %v37 = vld [vmem:[%s1 + $0x50] sm:$0xf]
  %v38 = vld [vmem:[%s1 + $0x54] sm:$0xf]
  %v39 = vld [vmem:[%s1 + $0x58] sm:$0xf]
  %v40 = vld [vmem:[%s1 + $0x5c] sm:$0xf]
  %v41 = vld [vmem:[%s1 + $0x60] sm:$0xf]
  %v42 = vld [vmem:[%s1 + $0x64] sm:$0xf]
  %v43 = vld [vmem:[%s1 + $0x68] sm:$0xf]
  %v44 = vld [vmem:[%s1 + $0x6c] sm:$0xf]
  %v45 = vld [vmem:[%s1 + $0x70] sm:$0xf]
  %v46 = vld [vmem:[%s1 + $0x74] sm:$0xf]
  %v47 = vld [vmem:[%s1 + $0x78] sm:$0xf]
  %v48 = vld [vmem:[%s1 + $0x7c] sm:$0xf]
  %v49 = vld [vmem:[%s2] sm:$0x1]
  %v51 = vlaneseq
  %v52 = vshrl.u32 %v51, 7
  %v53 = vsub.s32 0, %v52
  %v54 = vrot.slane %v49, %v53
  %v58 = vunpack.c.l.b16 %v15
  %v59 = vunpack.c.h.b16 %v15
  %v60 = vunpack.c.l.b16 %v16
  %v61 = vunpack.c.h.b16 %v16
  %v62 = vpack.c.b16 %v60, %v58
  %v63 = vpack.c.b16 %v61, %v59
  %v98 = vunpack.c.l.b16 %v17
  %v99 = vunpack.c.l.b16 %v18
  %v100 = vunpack.c.l.b16 %v19
  %v101 = vunpack.c.l.b16 %v20
  %v102 = vunpack.c.l.b16 %v21
  %v103 = vunpack.c.l.b16 %v22
  %v104 = vunpack.c.l.b16 %v23
  %v105 = vunpack.c.l.b16 %v24
  %v106 = vunpack.c.l.b16 %v25
  %v107 = vunpack.c.l.b16 %v26
  %v108 = vunpack.c.l.b16 %v27
  %v109 = vunpack.c.l.b16 %v28
  %v110 = vunpack.c.l.b16 %v29
  %v111 = vunpack.c.l.b16 %v30
  %v112 = vunpack.c.l.b16 %v31
  %v113 = vunpack.c.l.b16 %v32
  %v114 = vunpack.c.l.b16 %v33
  %v115 = vunpack.c.l.b16 %v34
  %v116 = vunpack.c.l.b16 %v35
  %v117 = vunpack.c.l.b16 %v36
  %v118 = vunpack.c.l.b16 %v37
  %v119 = vunpack.c.l.b16 %v38
  %v120 = vunpack.c.l.b16 %v39
  %v121 = vunpack.c.l.b16 %v40
  %v122 = vunpack.c.l.b16 %v41
  %v123 = vunpack.c.l.b16 %v42
  %v124 = vunpack.c.l.b16 %v43
  %v125 = vunpack.c.l.b16 %v44
  %v126 = vunpack.c.l.b16 %v45
  %v127 = vunpack.c.l.b16 %v46
  %v128 = vunpack.c.l.b16 %v47
  %v129 = vunpack.c.l.b16 %v48
  %v130 = vpack.c.b16 %v99, %v98
  %v131 = vpack.c.b16 %v101, %v100
  %v132 = vpack.c.b16 %v103, %v102
  %v133 = vpack.c.b16 %v105, %v104
  %v134 = vpack.c.b16 %v107, %v106
  %v135 = vpack.c.b16 %v109, %v108
  %v136 = vpack.c.b16 %v111, %v110
  %v137 = vpack.c.b16 %v113, %v112
  %v138 = vpack.c.b16 %v115, %v114
  %v139 = vpack.c.b16 %v117, %v116
  %v140 = vpack.c.b16 %v119, %v118
  %v141 = vpack.c.b16 %v121, %v120
  %v142 = vpack.c.b16 %v123, %v122
  %v143 = vpack.c.b16 %v125, %v124
  %v144 = vpack.c.b16 %v127, %v126
  %v145 = vpack.c.b16 %v129, %v128
  %162 = vmatprep.subr.bf16.mxu0 0
  %163 = vmatpush1.bf16.msra.mxu0 %v130
  %164 = vmatprep.subr.bf16.mxu0 0
  %165 = vmatpush1.bf16.msra.mxu0 %v131
  %166 = vmatprep.subr.bf16.mxu0 0
  %167 = vmatpush1.bf16.msra.mxu0 %v132
  %168 = vmatprep.subr.bf16.mxu0 0
  %169 = vmatpush1.bf16.msra.mxu0 %v133
  %170 = vmatprep.subr.bf16.mxu0 0
  %171 = vmatpush1.bf16.msra.mxu0 %v134
  %172 = vmatprep.subr.bf16.mxu0 0
  %173 = vmatpush1.bf16.msra.mxu0 %v135
  %174 = vmatprep.subr.bf16.mxu0 0
  %175 = vmatpush1.bf16.msra.mxu0 %v136
  %176 = vmatprep.subr.bf16.mxu0 0
  %177 = vmatpush1.bf16.msra.mxu0 %v137
  %178 = vmatprep.subr.bf16.mxu0 0
  %179 = vmatpush1.bf16.msra.mxu0 %v138
  %180 = vmatprep.subr.bf16.mxu0 0
  %181 = vmatpush1.bf16.msra.mxu0 %v139
  %182 = vmatprep.subr.bf16.mxu0 0
  %183 = vmatpush1.bf16.msra.mxu0 %v140
  %184 = vmatprep.subr.bf16.mxu0 0
  %185 = vmatpush1.bf16.msra.mxu0 %v141
  %186 = vmatprep.subr.bf16.mxu0 0
  %187 = vmatpush1.bf16.msra.mxu0 %v142
  %188 = vmatprep.subr.bf16.mxu0 0
  %189 = vmatpush1.bf16.msra.mxu0 %v143
  %190 = vmatprep.subr.bf16.mxu0 0
  %191 = vmatpush1.bf16.msra.mxu0 %v144
  %192 = vmatprep.subr.bf16.mxu0 0
  %193 = vmatpush1.bf16.msra.mxu0 %v145
  %194 = vmatprep.mubr.bf16.mxu0 %v63
  %195 = vmatmul.mubr.bf16.gmra.mrb[0].mxu0 %v62
  %v196 = vpop.f32.mrb[0].mxu0
  %v197 = vadd.f32 %v54, %v196
  %v198 = vpop.f32.mrb[0].mxu0
  %v199 = vpop.f32.mrb[0].mxu0
  %v200 = vadd.f32 %v54, %v199
  %v201 = vpop.f32.mrb[0].mxu0
  %202 = vdwg.mxu0
  %203 = vst [vmem:[%s3] sm:$0xff] %v197
  %204 = vst [vmem:[%s3 + $0x8] sm:$0xff] %v200
  // Predicated region
  $region14: #{_lambda_.22} parent=0 // pred_check
    _
  $region15: #{_lambda_.22} parent=0 // pred_check_branch
    %206 = sbr.rel (0) target = $region17
  $region16: #{_lambda_.22} parent=0 // pred_region
    _
  $region17: #{_lambda_.22} parent=0 // pred_fallthru
    _
  // Predicated region
  $region18: #{_lambda_.22} parent=0 // pred_check
    _
  $region19: #{_lambda_.22} parent=0 // pred_check_branch
    %208 = sbr.rel (0) target = $region21
  $region20: #{_lambda_.22} parent=0 // pred_region
    _
  $region21: #{_lambda_.22} parent=0 // pred_fallthru
    _

// kernel: _lambda_.17
$region0: #{_lambda_.17}
  #allocation0 [shape = 'u32[]', space=smem, size = 0x4, offset = 0x4, fixed_abs, tag = 'smem constant byte address 0x4 - core index']
  #allocation1 [shape = 'u32[144,128]{1,0:T(1,128)}', space=vmem, size = 0x12000, scoped, tag = 'internal scratch']
  %s0 = inlined_call_operand.vmem [shape: bf16[16,30], index: 0, kind: input, shape index: {}]
  %s1 = inlined_call_operand.vmem [shape: bf16[30,1024], index: 1, kind: input, shape index: {}]
  %s2 = inlined_call_operand.vmem [shape: f32[1,1024], index: 2, kind: input, shape index: {}]
  %s3 = inlined_call_operand.vmem [shape: bf16[16,1024], index: 3, kind: output, shape index: {}]
  %s4 = sld [smem:[#allocation0]]
  $region22: #{_lambda_.17} parent=0
    _
  %s6 = ssub.s32 1, %s4
  %s7 = scalar_select 0, %s6, %s4
  // Predicated region
  $region2: #{_lambda_.17} parent=0 // pred_check
    _
  $region3: #{_lambda_.17} parent=0 // pred_check_branch
    %9 = sbr.rel (0) target = $region5
  $region4: #{_lambda_.17} parent=0 // pred_region
    _
  $region5: #{_lambda_.17} parent=0 // pred_fallthru
    _
  // Predicated region
  $region6: #{_lambda_.17} parent=0 // pred_check
    _
  $region7: #{_lambda_.17} parent=0 // pred_check_branch
    %11 = sbr.rel (0) target = $region9
  $region8: #{_lambda_.17} parent=0 // pred_region
    _
  $region9: #{_lambda_.17} parent=0 // pred_fallthru
    _
  // Predicated region
  $region10: #{_lambda_.17} parent=0 // pred_check
    _
  $region11: #{_lambda_.17} parent=0 // pred_check_branch
    %13 = sbr.rel (0) target = $region13
  $region12: #{_lambda_.17} parent=0 // pred_region
    _
  $region13: #{_lambda_.17} parent=0 // pred_fallthru
    _
  %v15 = vld [vmem:[%s0] sm:$0xf]
  %v16 = vld [vmem:[%s0 + $0x4] sm:$0xf]
  %v17 = vld [vmem:[%s1] sm:$0xff]
  %v18 = vld [vmem:[%s1 + $0x8] sm:$0xff]
  %v19 = vld [vmem:[%s1 + $0x10] sm:$0xff]
  %v20 = vld [vmem:[%s1 + $0x18] sm:$0xff]
  %v21 = vld [vmem:[%s1 + $0x20] sm:$0xff]
  %v22 = vld [vmem:[%s1 + $0x28] sm:$0xff]
  %v23 = vld [vmem:[%s1 + $0x30] sm:$0xff]
  %v24 = vld [vmem:[%s1 + $0x38] sm:$0xff]
  %v25 = vld [vmem:[%s1 + $0x40] sm:$0xff]
  %v26 = vld [vmem:[%s1 + $0x48] sm:$0xff]
  %v27 = vld [vmem:[%s1 + $0x50] sm:$0xff]
  %v28 = vld [vmem:[%s1 + $0x58] sm:$0xff]
  %v29 = vld [vmem:[%s1 + $0x60] sm:$0x77]
  %v30 = vld [vmem:[%s1 + $0x68] sm:$0x77]
  %v31 = vld [vmem:[%s1 + $0x70] sm:$0x77]
  %v32 = vld [vmem:[%s1 + $0x78] sm:$0x77]
  %v33 = vld [vmem:[%s2] sm:$0xff]
  %v35 = vlaneseq
  %v36 = vshrl.u32 %v35, 7
  %v37 = vsub.s32 0, %v36
  %v38 = vrot.slane %v33, %v37
  %v39 = vlaneseq
  %v40 = vshrl.u32 %v39, 7
  %v41 = vsub.s32 1, %v40
  %v42 = vrot.slane %v33, %v41
  %v43 = vlaneseq
  %v44 = vshrl.u32 %v43, 7
  %v45 = vsub.s32 2, %v44
  %v46 = vrot.slane %v33, %v45
  %v47 = vlaneseq
  %v48 = vshrl.u32 %v47, 7
  %v49 = vsub.s32 3, %v48
  %v50 = vrot.slane %v33, %v49
  %v51 = vlaneseq
  %v52 = vshrl.u32 %v51, 7
  %v53 = vsub.s32 4, %v52
  %v54 = vrot.slane %v33, %v53
  %v55 = vlaneseq
  %v56 = vshrl.u32 %v55, 7
  %v57 = vsub.s32 5, %v56
  %v58 = vrot.slane %v33, %v57
  %v59 = vlaneseq
  %v60 = vshrl.u32 %v59, 7
  %v61 = vsub.s32 6, %v60
  %v62 = vrot.slane %v33, %v61
  %v63 = vlaneseq
  %v64 = vshrl.u32 %v63, 7
  %v65 = vsub.s32 7, %v64
  %v66 = vrot.slane %v33, %v65
  %v77 = vunpack.c.l.b16 %v15
  %v78 = vunpack.c.l.b16 %v16
  %v79 = vpack.c.b16 %v78, %v77
  %v96 = vunpack.c.l.b16 %v17
  %v97 = vunpack.c.h.b16 %v17
  %v98 = vunpack.c.l.b16 %v18
  %v99 = vunpack.c.h.b16 %v18
  %v100 = vunpack.c.l.b16 %v19
  %v101 = vunpack.c.h.b16 %v19
  %v102 = vunpack.c.l.b16 %v20
  %v103 = vunpack.c.h.b16 %v20
  %v104 = vunpack.c.l.b16 %v21
  %v105 = vunpack.c.h.b16 %v21
  %v106 = vunpack.c.l.b16 %v22
  %v107 = vunpack.c.h.b16 %v22
  %v108 = vunpack.c.l.b16 %v23
  %v109 = vunpack.c.h.b16 %v23
  %v110 = vunpack.c.l.b16 %v24
  %v111 = vunpack.c.h.b16 %v24
  %v112 = vunpack.c.l.b16 %v25
  %v113 = vunpack.c.h.b16 %v25
  %v114 = vunpack.c.l.b16 %v26
  %v115 = vunpack.c.h.b16 %v26
  %v116 = vunpack.c.l.b16 %v27
  %v117 = vunpack.c.h.b16 %v27
  %v118 = vunpack.c.l.b16 %v28
  %v119 = vunpack.c.h.b16 %v28
  %v120 = vunpack.c.l.b16 %v29
  %v121 = vunpack.c.h.b16 %v29
  %v122 = vunpack.c.l.b16 %v30
  %v123 = vunpack.c.h.b16 %v30
  %v124 = vunpack.c.l.b16 %v31
  %v125 = vunpack.c.h.b16 %v31
  %v126 = vunpack.c.l.b16 %v32
  %v127 = vunpack.c.h.b16 %v32
  %v128 = vpack.c.b16 %v104, %v96
  %v129 = vpack.c.b16 %v105, %v97
  %v130 = vpack.c.b16 %v106, %v98
  %v131 = vpack.c.b16 %v107, %v99
  %v132 = vpack.c.b16 %v108, %v100
  %v133 = vpack.c.b16 %v109, %v101
  %v134 = vpack.c.b16 %v110, %v102
  %v135 = vpack.c.b16 %v111, %v103
  %v136 = vpack.c.b16 %v120, %v112
  %v137 = vpack.c.b16 %v121, %v113
  %v138 = vpack.c.b16 %v122, %v114
  %v139 = vpack.c.b16 %v123, %v115
  %v140 = vpack.c.b16 %v124, %v116
  %v141 = vpack.c.b16 %v125, %v117
  %v142 = vpack.c.b16 %v126, %v118
  %v143 = vpack.c.b16 %v127, %v119
  %vm152 = vcmask 244736
  %v154 = vsel %vm152, %v79, 0
  %vm156 = vcmask 1046528
  %v158 = vsel %vm156, %v136, 0
  %v161 = vsel %vm156, %v137, 0
  %v164 = vsel %vm156, %v138, 0
  %v167 = vsel %vm156, %v139, 0
  %v170 = vsel %vm156, %v140, 0
  %v173 = vsel %vm156, %v141, 0
  %v176 = vsel %vm156, %v142, 0
  %v179 = vsel %vm156, %v143, 0
  %181 = vmatprep.subr.bf16.mxu0 %v129
  %182 = vmatpush1.bf16.msra.mxu0 %v128
  %183 = vmatprep.subr.bf16.mxu0 %v161
  %184 = vmatpush1.bf16.msra.mxu0 %v158
  %185 = vmatprep.subr.bf16.mxu0 0
  %186 = vmatpush1.bf16.msra.mxu0 0
  %187 = vmatprep.subr.bf16.mxu0 0
  %188 = vmatpush1.bf16.msra.mxu0 0
  %189 = vmatprep.subr.bf16.mxu0 0
  %190 = vmatpush1.bf16.msra.mxu0 0
  %191 = vmatprep.subr.bf16.mxu0 0
  %192 = vmatpush1.bf16.msra.mxu0 0
  %193 = vmatprep.subr.bf16.mxu0 0
  %194 = vmatpush1.bf16.msra.mxu0 0
  %195 = vmatprep.subr.bf16.mxu0 0
  %196 = vmatpush1.bf16.msra.mxu0 0
  %197 = vmatprep.subr.bf16.mxu0 0
  %198 = vmatpush1.bf16.msra.mxu0 0
  %199 = vmatprep.subr.bf16.mxu0 0
  %200 = vmatpush1.bf16.msra.mxu0 0
  %201 = vmatprep.subr.bf16.mxu0 0
  %202 = vmatpush1.bf16.msra.mxu0 0
  %203 = vmatprep.subr.bf16.mxu0 0
  %204 = vmatpush1.bf16.msra.mxu0 0
  %205 = vmatprep.subr.bf16.mxu0 0
  %206 = vmatpush1.bf16.msra.mxu0 0
  %207 = vmatprep.subr.bf16.mxu0 0
  %208 = vmatpush1.bf16.msra.mxu0 0
  %209 = vmatprep.subr.bf16.mxu0 0
  %210 = vmatpush1.bf16.msra.mxu0 0
  %211 = vmatprep.subr.bf16.mxu0 0
  %212 = vmatpush1.bf16.msra.mxu0 0
  %213 = vmatprep.mubr.bf16.mxu0 0
  %214 = vmatmul.mubr.bf16.gmra.mrb[0].mxu0 %v154
  %v215 = vpop.f32.mrb[0].mxu0
  %v216 = vadd.f32 %v38, %v215
  %v217 = vpop.f32.mrb[0].mxu0
  %v218 = vadd.f32 %v42, %v217
  %v219 = vpop.f32.mrb[0].mxu0
  %v220 = vadd.f32 %v38, %v219
  %v221 = vpop.f32.mrb[0].mxu0
  %v222 = vadd.f32 %v42, %v221
  %223 = vdwg.mxu0
  %224 = vmatprep.subr.bf16.mxu0 %v131
  %225 = vmatpush1.bf16.msra.mxu0 %v130
  %226 = vmatprep.subr.bf16.mxu0 %v167
  %227 = vmatpush1.bf16.msra.mxu0 %v164
  %228 = vmatprep.subr.bf16.mxu0 0
  %229 = vmatpush1.bf16.msra.mxu0 0
  %230 = vmatprep.subr.bf16.mxu0 0
  %231 = vmatpush1.bf16.msra.mxu0 0
  %232 = vmatprep.subr.bf16.mxu0 0
  %233 = vmatpush1.bf16.msra.mxu0 0
  %234 = vmatprep.subr.bf16.mxu0 0
  %235 = vmatpush1.bf16.msra.mxu0 0
  %236 = vmatprep.subr.bf16.mxu0 0
  %237 = vmatpush1.bf16.msra.mxu0 0
  %238 = vmatprep.subr.bf16.mxu0 0
  %239 = vmatpush1.bf16.msra.mxu0 0
  %240 = vmatprep.subr.bf16.mxu0 0
  %241 = vmatpush1.bf16.msra.mxu0 0
  %242 = vmatprep.subr.bf16.mxu0 0
  %243 = vmatpush1.bf16.msra.mxu0 0
  %244 = vmatprep.subr.bf16.mxu0 0
  %245 = vmatpush1.bf16.msra.mxu0 0
  %246 = vmatprep.subr.bf16.mxu0 0
  %247 = vmatpush1.bf16.msra.mxu0 0
  %248 = vmatprep.subr.bf16.mxu0 0
  %249 = vmatpush1.bf16.msra.mxu0 0
  %250 = vmatprep.subr.bf16.mxu0 0
  %251 = vmatpush1.bf16.msra.mxu0 0
  %252 = vmatprep.subr.bf16.mxu0 0
  %253 = vmatpush1.bf16.msra.mxu0 0
  %254 = vmatprep.subr.bf16.mxu0 0
  %255 = vmatpush1.bf16.msra.mxu0 0
  %256 = vmatprep.mubr.bf16.mxu0 0
  %257 = vmatmul.mubr.bf16.gmra.mrb[0].mxu0 %v154
  %v258 = vpop.f32.mrb[0].mxu0
  %v259 = vadd.f32 %v46, %v258
  %v260 = vpop.f32.mrb[0].mxu0
  %v261 = vadd.f32 %v50, %v260
  %v262 = vpop.f32.mrb[0].mxu0
  %v263 = vadd.f32 %v46, %v262
  %v264 = vpop.f32.mrb[0].mxu0
  %v265 = vadd.f32 %v50, %v264
  %266 = vdwg.mxu0
  %267 = vmatprep.subr.bf16.mxu0 %v133
  %268 = vmatpush1.bf16.msra.mxu0 %v132
  %269 = vmatprep.subr.bf16.mxu0 %v173
  %270 = vmatpush1.bf16.msra.mxu0 %v170
  %271 = vmatprep.subr.bf16.mxu0 0
  %272 = vmatpush1.bf16.msra.mxu0 0
  %273 = vmatprep.subr.bf16.mxu0 0
  %274 = vmatpush1.bf16.msra.mxu0 0
  %275 = vmatprep.subr.bf16.mxu0 0
  %276 = vmatpush1.bf16.msra.mxu0 0
  %277 = vmatprep.subr.bf16.mxu0 0
  %278 = vmatpush1.bf16.msra.mxu0 0
  %279 = vmatprep.subr.bf16.mxu0 0
  %280 = vmatpush1.bf16.msra.mxu0 0
  %281 = vmatprep.subr.bf16.mxu0 0
  %282 = vmatpush1.bf16.msra.mxu0 0
  %283 = vmatprep.subr.bf16.mxu0 0
  %284 = vmatpush1.bf16.msra.mxu0 0
  %285 = vmatprep.subr.bf16.mxu0 0
  %286 = vmatpush1.bf16.msra.mxu0 0
  %287 = vmatprep.subr.bf16.mxu0 0
  %288 = vmatpush1.bf16.msra.mxu0 0
  %289 = vmatprep.subr.bf16.mxu0 0
  %290 = vmatpush1.bf16.msra.mxu0 0
  %291 = vmatprep.subr.bf16.mxu0 0
  %292 = vmatpush1.bf16.msra.mxu0 0
  %293 = vmatprep.subr.bf16.mxu0 0
  %294 = vmatpush1.bf16.msra.mxu0 0
  %295 = vmatprep.subr.bf16.mxu0 0
  %296 = vmatpush1.bf16.msra.mxu0 0
  %297 = vmatprep.subr.bf16.mxu0 0
  %298 = vmatpush1.bf16.msra.mxu0 0
  %299 = vmatprep.mubr.bf16.mxu0 0
  %300 = vmatmul.mubr.bf16.gmra.mrb[0].mxu0 %v154
  %v301 = vpop.f32.mrb[0].mxu0
  %v302 = vadd.f32 %v54, %v301
  %v303 = vpop.f32.mrb[0].mxu0
  %v304 = vadd.f32 %v58, %v303
  %v305 = vpop.f32.mrb[0].mxu0
  %v306 = vadd.f32 %v54, %v305
  %v307 = vpop.f32.mrb[0].mxu0
  %v308 = vadd.f32 %v58, %v307
  %309 = vdwg.mxu0
  %310 = vmatprep.subr.bf16.mxu0 %v135
  %311 = vmatpush1.bf16.msra.mxu0 %v134
  %312 = vmatprep.subr.bf16.mxu0 %v179
  %313 = vmatpush1.bf16.msra.mxu0 %v176
  %314 = vmatprep.subr.bf16.mxu0 0
  %315 = vmatpush1.bf16.msra.mxu0 0
  %316 = vmatprep.subr.bf16.mxu0 0
  %317 = vmatpush1.bf16.msra.mxu0 0
  %318 = vmatprep.subr.bf16.mxu0 0
  %319 = vmatpush1.bf16.msra.mxu0 0
  %320 = vmatprep.subr.bf16.mxu0 0
  %321 = vmatpush1.bf16.msra.mxu0 0
  %322 = vmatprep.subr.bf16.mxu0 0
  %323 = vmatpush1.bf16.msra.mxu0 0
  %324 = vmatprep.subr.bf16.mxu0 0
  %325 = vmatpush1.bf16.msra.mxu0 0
  %326 = vmatprep.subr.bf16.mxu0 0
  %327 = vmatpush1.bf16.msra.mxu0 0
  %328 = vmatprep.subr.bf16.mxu0 0
  %329 = vmatpush1.bf16.msra.mxu0 0
  %330 = vmatprep.subr.bf16.mxu0 0
  %331 = vmatpush1.bf16.msra.mxu0 0
  %332 = vmatprep.subr.bf16.mxu0 0
  %333 = vmatpush1.bf16.msra.mxu0 0
  %334 = vmatprep.subr.bf16.mxu0 0
  %335 = vmatpush1.bf16.msra.mxu0 0
  %336 = vmatprep.subr.bf16.mxu0 0
  %337 = vmatpush1.bf16.msra.mxu0 0
  %338 = vmatprep.subr.bf16.mxu0 0
  %339 = vmatpush1.bf16.msra.mxu0 0
  %340 = vmatprep.subr.bf16.mxu0 0
  %341 = vmatpush1.bf16.msra.mxu0 0
  %342 = vmatprep.mubr.bf16.mxu0 0
  %343 = vmatmul.mubr.bf16.gmra.mrb[0].mxu0 %v154
  %v344 = vpop.f32.mrb[0].mxu0
  %v345 = vadd.f32 %v62, %v344
  %v346 = vpop.f32.mrb[0].mxu0
  %v347 = vadd.f32 %v66, %v346
  %v348 = vpop.f32.mrb[0].mxu0
  %v349 = vadd.f32 %v62, %v348
  %v350 = vpop.f32.mrb[0].mxu0
  %v351 = vadd.f32 %v66, %v350
  %352 = vdwg.mxu0
  %v353 = vpack.c.bf16 %v220, %v216
  %v354 = vpack.c.bf16 %v222, %v218
  %v355 = vpack.c.bf16 %v263, %v259
  %v356 = vpack.c.bf16 %v265, %v261
  %v357 = vpack.c.bf16 %v306, %v302
  %v358 = vpack.c.bf16 %v308, %v304
  %v359 = vpack.c.bf16 %v349, %v345
  %v360 = vpack.c.bf16 %v351, %v347
  %v369 = vunpack.c.l.b16 %v353
  %v370 = vunpack.c.l.b16 %v354
  %v371 = vunpack.c.l.b16 %v355
  %v372 = vunpack.c.l.b16 %v356
  %v373 = vunpack.c.l.b16 %v357
  %v374 = vunpack.c.l.b16 %v358
  %v375 = vunpack.c.l.b16 %v359
  %v376 = vunpack.c.l.b16 %v360
  %v377 = vunpack.c.h.b16 %v353
  %v378 = vunpack.c.h.b16 %v354
  %v379 = vunpack.c.h.b16 %v355
  %v380 = vunpack.c.h.b16 %v356
  %v381 = vunpack.c.h.b16 %v357
  %v382 = vunpack.c.h.b16 %v358
  %v383 = vunpack.c.h.b16 %v359
  %v384 = vunpack.c.h.b16 %v360
  %v385 = vpack.c.b16 %v370, %v369
  %v386 = vpack.c.b16 %v372, %v371
  %v387 = vpack.c.b16 %v374, %v373
  %v388 = vpack.c.b16 %v376, %v375
  %v389 = vpack.c.b16 %v378, %v377
  %v390 = vpack.c.b16 %v380, %v379
  %v391 = vpack.c.b16 %v382, %v381
  %v392 = vpack.c.b16 %v384, %v383
  %401 = vst [vmem:[%s3] sm:$0xff] %v385
  %402 = vst [vmem:[%s3 + $0x8] sm:$0xff] %v386
  %403 = vst [vmem:[%s3 + $0x10] sm:$0xff] %v387
  %404 = vst [vmem:[%s3 + $0x18] sm:$0xff] %v388
  %405 = vst [vmem:[%s3 + $0x20] sm:$0xff] %v389
  %406 = vst [vmem:[%s3 + $0x28] sm:$0xff] %v390
  %407 = vst [vmem:[%s3 + $0x30] sm:$0xff] %v391
  %408 = vst [vmem:[%s3 + $0x38] sm:$0xff] %v392
  // Predicated region
  $region14: #{_lambda_.17} parent=0 // pred_check
    _
  $region15: #{_lambda_.17} parent=0 // pred_check_branch
    %410 = sbr.rel (0) target = $region17
  $region16: #{_lambda_.17} parent=0 // pred_region
    _
  $region17: #{_lambda_.17} parent=0 // pred_fallthru
    _
  // Predicated region
  $region18: #{_lambda_.17} parent=0 // pred_check
    _
  $region19: #{_lambda_.17} parent=0 // pred_check_branch
    %412 = sbr.rel (0) target = $region21
  $region20: #{_lambda_.17} parent=0 // pred_region
    _
  $region21: #{_lambda_.17} parent=0 // pred_fallthru
    _

// kernel: custom-call.26
$region0: #{custom-call.26}
  %s0 = inlined_call_operand.vmem [shape: s32[7,2,5], index: 0, kind: output, shape index: {}]

// kernel: _lambda_.15
$region0: #{_lambda_.15}
  #allocation0 [shape = 'u32[]', space=smem, size = 0x4, offset = 0x4, fixed_abs, tag = 'smem constant byte address 0x4 - core index']
  #allocation1 [shape = 'u32[144,128]{1,0:T(1,128)}', space=vmem, size = 0x12000, scoped, tag = 'internal scratch']
  #allocation2 [shape = 'f32[2,128]{1,0:T(2,128)}', space=vmem, size = 0x400, scoped, tag = 'scratch operand']
  #allocation3 [shape = 'f32[2,128]{1,0:T(2,128)}', space=vmem, size = 0x400, scoped, tag = 'scratch operand']
  #allocation4 [shape = 'f32[2,128]{1,0:T(2,128)}', space=vmem, size = 0x400, scoped, tag = 'scratch operand']
  #allocation5 [shape = 'f32[2,128]{1,0:T(2,128)}', space=vmem, size = 0x400, scoped, tag = 'scratch operand']
  %s0 = inlined_call_operand.vmem [shape: bf16[8,2,1024], index: 0, kind: input, shape index: {}]
  %s1 = inlined_call_operand.vmem [shape: bf16[128,512], index: 1, kind: input, shape index: {}]
  %s2 = inlined_call_operand.vmem [shape: bf16[128,512], index: 2, kind: input, shape index: {}]
  %s3 = inlined_call_operand.vmem [shape: bf16[8,2,256], index: 3, kind: output, shape index: {}]
  %s4 = sld [smem:[#allocation0]]
  $region22: #{_lambda_.15} parent=0
    _
  %s6 = ssub.s32 1, %s4
  %s7 = scalar_select 0, %s6, %s4
  // Predicated region
  $region2: #{_lambda_.15} parent=0 // pred_check
    _
  $region3: #{_lambda_.15} parent=0 // pred_check_branch
    %9 = sbr.rel (0) target = $region5
  $region4: #{_lambda_.15} parent=0 // pred_region
    _
  $region5: #{_lambda_.15} parent=0 // pred_fallthru
    _
  // Predicated region
  $region6: #{_lambda_.15} parent=0 // pred_check
    _
  $region7: #{_lambda_.15} parent=0 // pred_check_branch
    %11 = sbr.rel (0) target = $region9
  $region8: #{_lambda_.15} parent=0 // pred_region
    _
  $region9: #{_lambda_.15} parent=0 // pred_fallthru
    _
  // Predicated region
  $region10: #{_lambda_.15} parent=0 // pred_check
    _
  $region11: #{_lambda_.15} parent=0 // pred_check_branch
    %13 = sbr.rel (0) target = $region13
  $region12: #{_lambda_.15} parent=0 // pred_region
    _
  $region13: #{_lambda_.15} parent=0 // pred_fallthru
    _
  %15 = vst [vmem:[#allocation2] sm:$0x3] 0.0
  %16 = vst [vmem:[#allocation3] sm:$0x3] 0.0
  %17 = vst [vmem:[#allocation4] sm:$0x3] 0.0
  %18 = vst [vmem:[#allocation5] sm:$0x3] 0.0
  %v19 = vld [vmem:[%s0] sm:$0xf]
  %v20 = vld [vmem:[#allocation2] sm:$0x3]
  %v21 = vld [vmem:[#allocation3] sm:$0x3]
  %v22 = vunpack.c.l.bf16 %v19
  %v23 = vpack.c.bf16 %v20, %v20
  %v24 = vld [vmem:[%s1] sm:$0xff]
  %v25 = vld [vmem:[%s1 + $0x8] sm:$0xff]
  %v26 = vld [vmem:[%s1 + $0x10] sm:$0xff]
  %v27 = vld [vmem:[%s1 + $0x18] sm:$0xff]
  %v28 = vld [vmem:[%s1 + $0x20] sm:$0xff]
  %v29 = vld [vmem:[%s1 + $0x28] sm:$0xff]
  %v30 = vld [vmem:[%s1 + $0x30] sm:$0xff]
  %v31 = vld [vmem:[%s1 + $0x38] sm:$0xff]
  %v32 = vld [vmem:[%s1 + $0x40] sm:$0xff]
  %v33 = vld [vmem:[%s1 + $0x48] sm:$0xff]
  %v34 = vld [vmem:[%s1 + $0x50] sm:$0xff]
  %v35 = vld [vmem:[%s1 + $0x58] sm:$0xff]
  %v36 = vld [vmem:[%s1 + $0x60] sm:$0xff]
  %v37 = vld [vmem:[%s1 + $0x68] sm:$0xff]
  %v38 = vld [vmem:[%s1 + $0x70] sm:$0xff]
  %v39 = vld [vmem:[%s1 + $0x78] sm:$0xff]
  %v40 = vld [vmem:[%s1 + $0x80] sm:$0xff]
  %v41 = vld [vmem:[%s1 + $0x88] sm:$0xff]
  %v42 = vld [vmem:[%s1 + $0x90] sm:$0xff]
  %v43 = vld [vmem:[%s1 + $0x98] sm:$0xff]
  %v44 = vld [vmem:[%s1 + $0xa0] sm:$0xff]
  %v45 = vld [vmem:[%s1 + $0xa8] sm:$0xff]
  %v46 = vld [vmem:[%s1 + $0xb0] sm:$0xff]
  %v47 = vld [vmem:[%s1 + $0xb8] sm:$0xff]
  %v48 = vld [vmem:[%s1 + $0xc0] sm:$0xff]
  %v49 = vld [vmem:[%s1 + $0xc8] sm:$0xff]
  %v50 = vld [vmem:[%s1 + $0xd0] sm:$0xff]
  %v51 = vld [vmem:[%s1 + $0xd8] sm:$0xff]
  %v52 = vld [vmem:[%s1 + $0xe0] sm:$0xff]
  %v53 = vld [vmem:[%s1 + $0xe8] sm:$0xff]
  %v54 = vld [vmem:[%s1 + $0xf0] sm:$0xff]
  %v55 = vld [vmem:[%s1 + $0xf8] sm:$0xff]
  %v88 = vunpack.c.l.b16 %v24
  %v89 = vunpack.c.h.b16 %v24
  %v90 = vunpack.c.l.b16 %v25
  %v91 = vunpack.c.h.b16 %v25
  %v92 = vunpack.c.l.b16 %v26
  %v93 = vunpack.c.h.b16 %v26
  %v94 = vunpack.c.l.b16 %v27
  %v95 = vunpack.c.h.b16 %v27
  %v96 = vunpack.c.l.b16 %v28
  %v97 = vunpack.c.h.b16 %v28
  %v98 = vunpack.c.l.b16 %v29
  %v99 = vunpack.c.h.b16 %v29
  %v100 = vunpack.c.l.b16 %v30
  %v101 = vunpack.c.h.b16 %v30
  %v102 = vunpack.c.l.b16 %v31
  %v103 = vunpack.c.h.b16 %v31
  %v104 = vunpack.c.l.b16 %v32
  %v105 = vunpack.c.h.b16 %v32
  %v106 = vunpack.c.l.b16 %v33
  %v107 = vunpack.c.h.b16 %v33
  %v108 = vunpack.c.l.b16 %v34
  %v109 = vunpack.c.h.b16 %v34
  %v110 = vunpack.c.l.b16 %v35
  %v111 = vunpack.c.h.b16 %v35
  %v112 = vunpack.c.l.b16 %v36
  %v113 = vunpack.c.h.b16 %v36
  %v114 = vunpack.c.l.b16 %v37
  %v115 = vunpack.c.h.b16 %v37
  %v116 = vunpack.c.l.b16 %v38
  %v117 = vunpack.c.h.b16 %v38
  %v118 = vunpack.c.l.b16 %v39
  %v119 = vunpack.c.h.b16 %v39
  %v120 = vunpack.c.l.b16 %v40
  %v121 = vunpack.c.h.b16 %v40
  %v122 = vunpack.c.l.b16 %v41
  %v123 = vunpack.c.h.b16 %v41
  %v124 = vunpack.c.l.b16 %v42
  %v125 = vunpack.c.h.b16 %v42
  %v126 = vunpack.c.l.b16 %v43
  %v127 = vunpack.c.h.b16 %v43
  %v128 = vunpack.c.l.b16 %v44
  %v129 = vunpack.c.h.b16 %v44
  %v130 = vunpack.c.l.b16 %v45
  %v131 = vunpack.c.h.b16 %v45
  %v132 = vunpack.c.l.b16 %v46
  %v133 = vunpack.c.h.b16 %v46
  %v134 = vunpack.c.l.b16 %v47
  %v135 = vunpack.c.h.b16 %v47
  %v136 = vunpack.c.l.b16 %v48
  %v137 = vunpack.c.h.b16 %v48
  %v138 = vunpack.c.l.b16 %v49
  %v139 = vunpack.c.h.b16 %v49
  %v140 = vunpack.c.l.b16 %v50
  %v141 = vunpack.c.h.b16 %v50
  %v142 = vunpack.c.l.b16 %v51
  %v143 = vunpack.c.h.b16 %v51
  %v144 = vunpack.c.l.b16 %v52
  %v145 = vunpack.c.h.b16 %v52
  %v146 = vunpack.c.l.b16 %v53
  %v147 = vunpack.c.h.b16 %v53
  %v148 = vunpack.c.l.b16 %v54
  %v149 = vunpack.c.h.b16 %v54
  %v150 = vunpack.c.l.b16 %v55
  %v151 = vunpack.c.h.b16 %v55
  %v152 = vpack.c.b16 %v92, %v88
  %v153 = vpack.c.b16 %v93, %v89
  %v154 = vpack.c.b16 %v94, %v90
  %v155 = vpack.c.b16 %v95, %v91
  %v156 = vpack.c.b16 %v100, %v96
  %v157 = vpack.c.b16 %v101, %v97
  %v158 = vpack.c.b16 %v102, %v98
  %v159 = vpack.c.b16 %v103, %v99
  %v160 = vpack.c.b16 %v108, %v104
  %v161 = vpack.c.b16 %v109, %v105
  %v162 = vpack.c.b16 %v110, %v106
  %v163 = vpack.c.b16 %v111, %v107
  %v164 = vpack.c.b16 %v116, %v112
  %v165 = vpack.c.b16 %v117, %v113
  %v166 = vpack.c.b16 %v118, %v114
  %v167 = vpack.c.b16 %v119, %v115
  %v168 = vpack.c.b16 %v124, %v120
  %v169 = vpack.c.b16 %v125, %v121
  %v170 = vpack.c.b16 %v126, %v122
  %v171 = vpack.c.b16 %v127, %v123
  %v172 = vpack.c.b16 %v132, %v128
  %v173 = vpack.c.b16 %v133, %v129
  %v174 = vpack.c.b16 %v134, %v130
  %v175 = vpack.c.b16 %v135, %v131
  %v176 = vpack.c.b16 %v140, %v136
  %v177 = vpack.c.b16 %v141, %v137
  %v178 = vpack.c.b16 %v142, %v138
  %v179 = vpack.c.b16 %v143, %v139
  %v180 = vpack.c.b16 %v148, %v144
  %v181 = vpack.c.b16 %v149, %v145
  %v182 = vpack.c.b16 %v150, %v146
  %v183 = vpack.c.b16 %v151, %v147
  %216 = vmatprep.subr.bf16.mxu0 %v153
  %217 = vmatpush1.bf16.msra.mxu0 %v152
  %218 = vmatprep.subr.bf16.mxu0 %v157
  %219 = vmatpush1.bf16.msra.mxu0 %v156
  %220 = vmatprep.subr.bf16.mxu0 %v161
  %221 = vmatpush1.bf16.msra.mxu0 %v160
  %222 = vmatprep.subr.bf16.mxu0 %v165
  %223 = vmatpush1.bf16.msra.mxu0 %v164
  %224 = vmatprep.subr.bf16.mxu0 %v169
  %225 = vmatpush1.bf16.msra.mxu0 %v168
  %226 = vmatprep.subr.bf16.mxu0 %v173
  %227 = vmatpush1.bf16.msra.mxu0 %v172
  %228 = vmatprep.subr.bf16.mxu0 %v177
  %229 = vmatpush1.bf16.msra.mxu0 %v176
  %230 = vmatprep.subr.bf16.mxu0 %v181
  %231 = vmatpush1.bf16.msra.mxu0 %v180
  %232 = vmatprep.subr.bf16.mxu0 0
  %233 = vmatpush1.bf16.msra.mxu0 0
  %234 = vmatprep.subr.bf16.mxu0 0
  %235 = vmatpush1.bf16.msra.mxu0 0
  %236 = vmatprep.subr.bf16.mxu0 0
  %237 = vmatpush1.bf16.msra.mxu0 0
  %238 = vmatprep.subr.bf16.mxu0 0
  %239 = vmatpush1.bf16.msra.mxu0 0
  %240 = vmatprep.subr.bf16.mxu0 0
  %241 = vmatpush1.bf16.msra.mxu0 0
  %242 = vmatprep.subr.bf16.mxu0 0
  %243 = vmatpush1.bf16.msra.mxu0 0
  %244 = vmatprep.subr.bf16.mxu0 0
  %245 = vmatpush1.bf16.msra.mxu0 0
  %246 = vmatprep.subr.bf16.mxu0 0
  %247 = vmatpush1.bf16.msra.mxu0 0
  %248 = vmatprep.mubr.bf16.mxu0 0
  %249 = vmatmul.mubr.bf16.gmra.mrb[0].mxu0 %v23
  %v250 = vpop.f32.mrb[0].mxu0
  %v251 = vadd.f32 0.0, %v250
  %v252 = vpop.f32.mrb[0].mxu0
  %v253 = vadd.f32 0.0, %v252
  %v254 = vpop.f32.mrb[0].mxu0
  %v255 = vpop.f32.mrb[0].mxu0
  %256 = vdwg.mxu0
  %257 = vmatprep.subr.bf16.mxu0 %v155
  %258 = vmatpush1.bf16.msra.mxu0 %v154
  %259 = vmatprep.subr.bf16.mxu0 %v159
  %260 = vmatpush1.bf16.msra.mxu0 %v158
  %261 = vmatprep.subr.bf16.mxu0 %v163
  %262 = vmatpush1.bf16.msra.mxu0 %v162
  %263 = vmatprep.subr.bf16.mxu0 %v167
  %264 = vmatpush1.bf16.msra.mxu0 %v166
  %265 = vmatprep.subr.bf16.mxu0 %v171
  %266 = vmatpush1.bf16.msra.mxu0 %v170
  %267 = vmatprep.subr.bf16.mxu0 %v175
  %268 = vmatpush1.bf16.msra.mxu0 %v174
  %269 = vmatprep.subr.bf16.mxu0 %v179
  %270 = vmatpush1.bf16.msra.mxu0 %v178
  %271 = vmatprep.subr.bf16.mxu0 %v183
  %272 = vmatpush1.bf16.msra.mxu0 %v182
  %273 = vmatprep.subr.bf16.mxu0 0
  %274 = vmatpush1.bf16.msra.mxu0 0
  %275 = vmatprep.subr.bf16.mxu0 0
  %276 = vmatpush1.bf16.msra.mxu0 0
  %277 = vmatprep.subr.bf16.mxu0 0
  %278 = vmatpush1.bf16.msra.mxu0 0
  %279 = vmatprep.subr.bf16.mxu0 0
  %280 = vmatpush1.bf16.msra.mxu0 0
  %281 = vmatprep.subr.bf16.mxu0 0
  %282 = vmatpush1.bf16.msra.mxu0 0
  %283 = vmatprep.subr.bf16.mxu0 0
  %284 = vmatpush1.bf16.msra.mxu0 0
  %285 = vmatprep.subr.bf16.mxu0 0
  %286 = vmatpush1.bf16.msra.mxu0 0
  %287 = vmatprep.subr.bf16.mxu0 0
  %288 = vmatpush1.bf16.msra.mxu0 0
  %289 = vmatprep.mubr.bf16.mxu0 0
  %290 = vmatmul.mubr.bf16.gmra.mrb[0].mxu0 %v23
  %v291 = vpop.f32.mrb[0].mxu0
  %v292 = vadd.f32 0.0, %v291
  %v293 = vpop.f32.mrb[0].mxu0
  %v294 = vadd.f32 0.0, %v293
  %v295 = vpop.f32.mrb[0].mxu0
  %v296 = vpop.f32.mrb[0].mxu0
  %297 = vdwg.mxu0
  %v302 = vcombine.low %v251, %v253
  %v303 = vcombine.low %v292, %v294
  %v305 = vunpack.c.l.s4 1983009808
  %v306 = vunpack.c.0.s8 %v305
  %v307 = vlaneseq
  %v308 = vshrl.u32 %v307, 7
  %v309 = vsub.s32 %v306, %v308
  %v310 = vrot.slane %v302, %v309
  %v312 = vunpack.c.l.s4 1983009808
  %v313 = vunpack.c.0.s8 %v312
  %v314 = vlaneseq
  %v315 = vshrl.u32 %v314, 7
  %v316 = vsub.s32 %v313, %v315
  %v317 = vrot.slane %v303, %v316
  %v318 = vcombine.low %v310, %v317
  %v320 = vadd.f32 %v22, %v318
  %v321 = vxor.u32 %v320, 2147483648
  %v322 = vmul.f32 %v321, 1.442695
  %v323 = vpow.pop %v322
  %v324 = vadd.f32 %v323, 1.0
  %v325 = vrcp.pop %v324
  %v326 = vmul.f32 1.0, %v325
  %v328 = vrot.slane %v320, 2
  %v330 = vxor.u32 %v328, 2147483648
  %v331 = vmul.f32 %v330, 1.442695
  %v332 = vpow.pop %v331
  %v333 = vadd.f32 %v332, 1.0
  %v334 = vrcp.pop %v333
  %v335 = vmul.f32 1.0, %v334
  %v336 = vrot.slane %v320, 4
  %v338 = vtanh.pop %v336
  %v339 = vrot.slane %v320, 6
  %v341 = vxor.u32 %v339, 2147483648
  %v342 = vmul.f32 %v341, 1.442695
  %v343 = vpow.pop %v342
  %v344 = vadd.f32 %v343, 1.0
  %v345 = vrcp.pop %v344
  %v346 = vmul.f32 1.0, %v345
  %v347 = vmul.f32 %v335, %v21
  %v348 = vmul.f32 %v326, %v338
  %v349 = vadd.f32 %v347, %v348
  %v350 = vtanh.pop %v349
  %v351 = vmul.f32 %v346, %v350
  %s352 = scalar_lea.vmem %s0, 56
  %v353 = vld [vmem:[%s352 + $0x4] sm:$0xf]
  %v354 = vld [vmem:[#allocation4] sm:$0x3]
  %v355 = vld [vmem:[#allocation5] sm:$0x3]
  %v356 = vunpack.c.l.bf16 %v353
  %v357 = vpack.c.bf16 %v354, %v354
  %v358 = vld [vmem:[%s2] sm:$0xff]
  %v359 = vld [vmem:[%s2 + $0x8] sm:$0xff]
  %v360 = vld [vmem:[%s2 + $0x10] sm:$0xff]
  %v361 = vld [vmem:[%s2 + $0x18] sm:$0xff]
  %v362 = vld [vmem:[%s2 + $0x20] sm:$0xff]
  %v363 = vld [vmem:[%s2 + $0x28] sm:$0xff]
  %v364 = vld [vmem:[%s2 + $0x30] sm:$0xff]
  %v365 = vld [vmem:[%s2 + $0x38] sm:$0xff]
  %v366 = vld [vmem:[%s2 + $0x40] sm:$0xff]
  %v367 = vld [vmem:[%s2 + $0x48] sm:$0xff]
  %v368 = vld [vmem:[%s2 + $0x50] sm:$0xff]
  %v369 = vld [vmem:[%s2 + $0x58] sm:$0xff]
  %v370 = vld [vmem:[%s2 + $0x60] sm:$0xff]
  %v371 = vld [vmem:[%s2 + $0x68] sm:$0xff]
  %v372 = vld [vmem:[%s2 + $0x70] sm:$0xff]
  %v373 = vld [vmem:[%s2 + $0x78] sm:$0xff]
  %v374 = vld [vmem:[%s2 + $0x80] sm:$0xff]
  %v375 = vld [vmem:[%s2 + $0x88] sm:$0xff]
  %v376 = vld [vmem:[%s2 + $0x90] sm:$0xff]
  %v377 = vld [vmem:[%s2 + $0x98] sm:$0xff]
  %v378 = vld [vmem:[%s2 + $0xa0] sm:$0xff]
  %v379 = vld [vmem:[%s2 + $0xa8] sm:$0xff]
  %v380 = vld [vmem:[%s2 + $0xb0] sm:$0xff]
  %v381 = vld [vmem:[%s2 + $0xb8] sm:$0xff]
  %v382 = vld [vmem:[%s2 + $0xc0] sm:$0xff]
  %v383 = vld [vmem:[%s2 + $0xc8] sm:$0xff]
  %v384 = vld [vmem:[%s2 + $0xd0] sm:$0xff]
  %v385 = vld [vmem:[%s2 + $0xd8] sm:$0xff]
  %v386 = vld [vmem:[%s2 + $0xe0] sm:$0xff]
  %v387 = vld [vmem:[%s2 + $0xe8] sm:$0xff]
  %v388 = vld [vmem:[%s2 + $0xf0] sm:$0xff]
  %v389 = vld [vmem:[%s2 + $0xf8] sm:$0xff]
  %v422 = vunpack.c.l.b16 %v358
  %v423 = vunpack.c.h.b16 %v358
  %v424 = vunpack.c.l.b16 %v359
  %v425 = vunpack.c.h.b16 %v359
  %v426 = vunpack.c.l.b16 %v360
  %v427 = vunpack.c.h.b16 %v360
  %v428 = vunpack.c.l.b16 %v361
  %v429 = vunpack.c.h.b16 %v361
  %v430 = vunpack.c.l.b16 %v362
  %v431 = vunpack.c.h.b16 %v362
  %v432 = vunpack.c.l.b16 %v363
  %v433 = vunpack.c.h.b16 %v363
  %v434 = vunpack.c.l.b16 %v364
  %v435 = vunpack.c.h.b16 %v364
  %v436 = vunpack.c.l.b16 %v365
  %v437 = vunpack.c.h.b16 %v365
  %v438 = vunpack.c.l.b16 %v366
  %v439 = vunpack.c.h.b16 %v366
  %v440 = vunpack.c.l.b16 %v367
  %v441 = vunpack.c.h.b16 %v367
  %v442 = vunpack.c.l.b16 %v368
  %v443 = vunpack.c.h.b16 %v368
  %v444 = vunpack.c.l.b16 %v369
  %v445 = vunpack.c.h.b16 %v369
  %v446 = vunpack.c.l.b16 %v370
  %v447 = vunpack.c.h.b16 %v370
  %v448 = vunpack.c.l.b16 %v371
  %v449 = vunpack.c.h.b16 %v371
  %v450 = vunpack.c.l.b16 %v372
  %v451 = vunpack.c.h.b16 %v372
  %v452 = vunpack.c.l.b16 %v373
  %v453 = vunpack.c.h.b16 %v373
  %v454 = vunpack.c.l.b16 %v374
  %v455 = vunpack.c.h.b16 %v374
  %v456 = vunpack.c.l.b16 %v375
  %v457 = vunpack.c.h.b16 %v375
  %v458 = vunpack.c.l.b16 %v376
  %v459 = vunpack.c.h.b16 %v376
  %v460 = vunpack.c.l.b16 %v377
  %v461 = vunpack.c.h.b16 %v377
  %v462 = vunpack.c.l.b16 %v378
  %v463 = vunpack.c.h.b16 %v378
  %v464 = vunpack.c.l.b16 %v379
  %v465 = vunpack.c.h.b16 %v379
  %v466 = vunpack.c.l.b16 %v380
  %v467 = vunpack.c.h.b16 %v380
  %v468 = vunpack.c.l.b16 %v381
  %v469 = vunpack.c.h.b16 %v381
  %v470 = vunpack.c.l.b16 %v382
  %v471 = vunpack.c.h.b16 %v382
  %v472 = vunpack.c.l.b16 %v383
  %v473 = vunpack.c.h.b16 %v383
  %v474 = vunpack.c.l.b16 %v384
  %v475 = vunpack.c.h.b16 %v384
  %v476 = vunpack.c.l.b16 %v385
  %v477 = vunpack.c.h.b16 %v385
  %v478 = vunpack.c.l.b16 %v386
  %v479 = vunpack.c.h.b16 %v386
  %v480 = vunpack.c.l.b16 %v387
  %v481 = vunpack.c.h.b16 %v387
  %v482 = vunpack.c.l.b16 %v388
  %v483 = vunpack.c.h.b16 %v388
  %v484 = vunpack.c.l.b16 %v389
  %v485 = vunpack.c.h.b16 %v389
  %v486 = vpack.c.b16 %v426, %v422
  %v487 = vpack.c.b16 %v427, %v423
  %v488 = vpack.c.b16 %v428, %v424
  %v489 = vpack.c.b16 %v429, %v425
  %v490 = vpack.c.b16 %v434, %v430
  %v491 = vpack.c.b16 %v435, %v431
  %v492 = vpack.c.b16 %v436, %v432
  %v493 = vpack.c.b16 %v437, %v433
  %v494 = vpack.c.b16 %v442, %v438
  %v495 = vpack.c.b16 %v443, %v439
  %v496 = vpack.c.b16 %v444, %v440
  %v497 = vpack.c.b16 %v445, %v441
  %v498 = vpack.c.b16 %v450, %v446
  %v499 = vpack.c.b16 %v451, %v447
  %v500 = vpack.c.b16 %v452, %v448
  %v501 = vpack.c.b16 %v453, %v449
  %v502 = vpack.c.b16 %v458, %v454
  %v503 = vpack.c.b16 %v459, %v455
  %v504 = vpack.c.b16 %v460, %v456
  %v505 = vpack.c.b16 %v461, %v457
  %v506 = vpack.c.b16 %v466, %v462
  %v507 = vpack.c.b16 %v467, %v463
  %v508 = vpack.c.b16 %v468, %v464
  %v509 = vpack.c.b16 %v469, %v465
  %v510 = vpack.c.b16 %v474, %v470
  %v511 = vpack.c.b16 %v475, %v471
  %v512 = vpack.c.b16 %v476, %v472
  %v513 = vpack.c.b16 %v477, %v473
  %v514 = vpack.c.b16 %v482, %v478
  %v515 = vpack.c.b16 %v483, %v479
  %v516 = vpack.c.b16 %v484, %v480
  %v517 = vpack.c.b16 %v485, %v481
  %550 = vmatprep.subr.bf16.mxu0 %v487
  %551 = vmatpush1.bf16.msra.mxu0 %v486
  %552 = vmatprep.subr.bf16.mxu0 %v491
  %553 = vmatpush1.bf16.msra.mxu0 %v490
  %554 = vmatprep.subr.bf16.mxu0 %v495
  %555 = vmatpush1.bf16.msra.mxu0 %v494
  %556 = vmatprep.subr.bf16.mxu0 %v499
  %557 = vmatpush1.bf16.msra.mxu0 %v498
  %558 = vmatprep.subr.bf16.mxu0 %v503
  %559 = vmatpush1.bf16.msra.mxu0 %v502
  %560 = vmatprep.subr.bf16.mxu0 %v507
  %561 = vmatpush1.bf16.msra.mxu0 %v506
  %562 = vmatprep.subr.bf16.mxu0 %v511
  %563 = vmatpush1.bf16.msra.mxu0 %v510
  %564 = vmatprep.subr.bf16.mxu0 %v515
  %565 = vmatpush1.bf16.msra.mxu0 %v514
  %566 = vmatprep.subr.bf16.mxu0 0
  %567 = vmatpush1.bf16.msra.mxu0 0
  %568 = vmatprep.subr.bf16.mxu0 0
  %569 = vmatpush1.bf16.msra.mxu0 0
  %570 = vmatprep.subr.bf16.mxu0 0
  %571 = vmatpush1.bf16.msra.mxu0 0
  %572 = vmatprep.subr.bf16.mxu0 0
  %573 = vmatpush1.bf16.msra.mxu0 0
  %574 = vmatprep.subr.bf16.mxu0 0
  %575 = vmatpush1.bf16.msra.mxu0 0
  %576 = vmatprep.subr.bf16.mxu0 0
  %577 = vmatpush1.bf16.msra.mxu0 0
  %578 = vmatprep.subr.bf16.mxu0 0
  %579 = vmatpush1.bf16.msra.mxu0 0
  %580 = vmatprep.subr.bf16.mxu0 0
  %581 = vmatpush1.bf16.msra.mxu0 0
  %582 = vmatprep.mubr.bf16.mxu0 0
  %583 = vmatmul.mubr.bf16.gmra.mrb[0].mxu0 %v357
  %v584 = vpop.f32.mrb[0].mxu0
  %v585 = vadd.f32 0.0, %v584
  %v586 = vpop.f32.mrb[0].mxu0
  %v587 = vadd.f32 0.0, %v586
  %v588 = vpop.f32.mrb[0].mxu0
  %v589 = vpop.f32.mrb[0].mxu0
  %590 = vdwg.mxu0
  %591 = vmatprep.subr.bf16.mxu0 %v489
  %592 = vmatpush1.bf16.msra.mxu0 %v488
  %593 = vmatprep.subr.bf16.mxu0 %v493
  %594 = vmatpush1.bf16.msra.mxu0 %v492
  %595 = vmatprep.subr.bf16.mxu0 %v497
  %596 = vmatpush1.bf16.msra.mxu0 %v496
  %597 = vmatprep.subr.bf16.mxu0 %v501
  %598 = vmatpush1.bf16.msra.mxu0 %v500
  %599 = vmatprep.subr.bf16.mxu0 %v505
  %600 = vmatpush1.bf16.msra.mxu0 %v504
  %601 = vmatprep.subr.bf16.mxu0 %v509
  %602 = vmatpush1.bf16.msra.mxu0 %v508
  %603 = vmatprep.subr.bf16.mxu0 %v513
  %604 = vmatpush1.bf16.msra.mxu0 %v512
  %605 = vmatprep.subr.bf16.mxu0 %v517
  %606 = vmatpush1.bf16.msra.mxu0 %v516
  %607 = vmatprep.subr.bf16.mxu0 0
  %608 = vmatpush1.bf16.msra.mxu0 0
  %609 = vmatprep.subr.bf16.mxu0 0
  %610 = vmatpush1.bf16.msra.mxu0 0
  %611 = vmatprep.subr.bf16.mxu0 0
  %612 = vmatpush1.bf16.msra.mxu0 0
  %613 = vmatprep.subr.bf16.mxu0 0
  %614 = vmatpush1.bf16.msra.mxu0 0
  %615 = vmatprep.subr.bf16.mxu0 0
  %616 = vmatpush1.bf16.msra.mxu0 0
  %617 = vmatprep.subr.bf16.mxu0 0
  %618 = vmatpush1.bf16.msra.mxu0 0
  %619 = vmatprep.subr.bf16.mxu0 0
  %620 = vmatpush1.bf16.msra.mxu0 0
  %621 = vmatprep.subr.bf16.mxu0 0
  %622 = vmatpush1.bf16.msra.mxu0 0
  %623 = vmatprep.mubr.bf16.mxu0 0
  %624 = vmatmul.mubr.bf16.gmra.mrb[0].mxu0 %v357
  %v625 = vpop.f32.mrb[0].mxu0
  %v626 = vadd.f32 0.0, %v625
  %v627 = vpop.f32.mrb[0].mxu0
  %v628 = vadd.f32 0.0, %v627
  %v629 = vpop.f32.mrb[0].mxu0
  %v630 = vpop.f32.mrb[0].mxu0
  %631 = vdwg.mxu0
  %v636 = vcombine.low %v585, %v587
  %v637 = vcombine.low %v626, %v628
  %v639 = vunpack.c.l.s4 1983009808
  %v640 = vunpack.c.0.s8 %v639
  %v641 = vlaneseq
  %v642 = vshrl.u32 %v641, 7
  %v643 = vsub.s32 %v640, %v642
  %v644 = vrot.slane %v636, %v643
  %v646 = vunpack.c.l.s4 1983009808
  %v647 = vunpack.c.0.s8 %v646
  %v648 = vlaneseq
  %v649 = vshrl.u32 %v648, 7
  %v650 = vsub.s32 %v647, %v649
  %v651 = vrot.slane %v637, %v650
  %v652 = vcombine.low %v644, %v651
  %v654 = vadd.f32 %v356, %v652
  %v655 = vxor.u32 %v654, 2147483648
  %v656 = vmul.f32 %v655, 1.442695
  %v657 = vpow.pop %v656
  %v658 = vadd.f32 %v657, 1.0
  %v659 = vrcp.pop %v658
  %v660 = vmul.f32 1.0, %v659
  %v662 = vrot.slane %v654, 2
  %v664 = vxor.u32 %v662, 2147483648
  %v665 = vmul.f32 %v664, 1.442695
  %v666 = vpow.pop %v665
  %v667 = vadd.f32 %v666, 1.0
  %v668 = vrcp.pop %v667
  %v669 = vmul.f32 1.0, %v668
  %v670 = vrot.slane %v654, 4
  %v672 = vtanh.pop %v670
  %v673 = vrot.slane %v654, 6
  %v675 = vxor.u32 %v673, 2147483648
  %v676 = vmul.f32 %v675, 1.442695
  %v677 = vpow.pop %v676
  %v678 = vadd.f32 %v677, 1.0
  %v679 = vrcp.pop %v678
  %v680 = vmul.f32 1.0, %v679
  %v681 = vmul.f32 %v669, %v355
  %v682 = vmul.f32 %v660, %v672
  %v683 = vadd.f32 %v681, %v682
  %v684 = vtanh.pop %v683
  %v685 = vmul.f32 %v680, %v684
  %686 = vst [vmem:[#allocation2] sm:$0x3] %v351
  %687 = vst [vmem:[#allocation3] sm:$0x3] %v349
  %688 = vst [vmem:[#allocation4] sm:$0x3] %v685
  %689 = vst [vmem:[#allocation5] sm:$0x3] %v683
  %v690 = vpack.c.bf16 %v351, %v351
  %691 = vst [vmem:[%s3] sm:$0x1] %v690
  %v692 = vpack.c.bf16 %v685, %v685
  %s693 = scalar_lea.vmem %s3, 14
  %694 = vst [vmem:[%s693 + $0x1] sm:$0x1] %v692
  %s695 = scalar_lea.vmem %s0, 8
  %v696 = vld [vmem:[%s695] sm:$0xf]
  %v697 = vld [vmem:[#allocation2] sm:$0x3]
  %v698 = vld [vmem:[#allocation3] sm:$0x3]
  %v699 = vunpack.c.l.bf16 %v696
  %v700 = vpack.c.bf16 %v697, %v697
  %v701 = vld [vmem:[%s1] sm:$0xff]
  %v702 = vld [vmem:[%s1 + $0x8] sm:$0xff]
  %v703 = vld [vmem:[%s1 + $0x10] sm:$0xff]
  %v704 = vld [vmem:[%s1 + $0x18] sm:$0xff]
  %v705 = vld [vmem:[%s1 + $0x20] sm:$0xff]
  %v706 = vld [vmem:[%s1 + $0x28] sm:$0xff]
  %v707 = vld [vmem:[%s1 + $0x30] sm:$0xff]
  %v708 = vld [vmem:[%s1 + $0x38] sm:$0xff]
  %v709 = vld [vmem:[%s1 + $0x40] sm:$0xff]
  %v710 = vld [vmem:[%s1 + $0x48] sm:$0xff]
  %v711 = vld [vmem:[%s1 + $0x50] sm:$0xff]
  %v712 = vld [vmem:[%s1 + $0x58] sm:$0xff]
  %v713 = vld [vmem:[%s1 + $0x60] sm:$0xff]
  %v714 = vld [vmem:[%s1 + $0x68] sm:$0xff]
  %v715 = vld [vmem:[%s1 + $0x70] sm:$0xff]
  %v716 = vld [vmem:[%s1 + $0x78] sm:$0xff]
  %v717 = vld [vmem:[%s1 + $0x80] sm:$0xff]
  %v718 = vld [vmem:[%s1 + $0x88] sm:$0xff]
  %v719 = vld [vmem:[%s1 + $0x90] sm:$0xff]
  %v720 = vld [vmem:[%s1 + $0x98] sm:$0xff]
  %v721 = vld [vmem:[%s1 + $0xa0] sm:$0xff]
  %v722 = vld [vmem:[%s1 + $0xa8] sm:$0xff]
  %v723 = vld [vmem:[%s1 + $0xb0] sm:$0xff]
  %v724 = vld [vmem:[%s1 + $0xb8] sm:$0xff]
  %v725 = vld [vmem:[%s1 + $0xc0] sm:$0xff]
  %v726 = vld [vmem:[%s1 + $0xc8] sm:$0xff]
  %v727 = vld [vmem:[%s1 + $0xd0] sm:$0xff]
  %v728 = vld [vmem:[%s1 + $0xd8] sm:$0xff]
  %v729 = vld [vmem:[%s1 + $0xe0] sm:$0xff]
  %v730 = vld [vmem:[%s1 + $0xe8] sm:$0xff]
  %v731 = vld [vmem:[%s1 + $0xf0] sm:$0xff]
  %v732 = vld [vmem:[%s1 + $0xf8] sm:$0xff]
  %v765 = vunpack.c.l.b16 %v701
  %v766 = vunpack.c.h.b16 %v701
  %v767 = vunpack.c.l.b16 %v702
  %v768 = vunpack.c.h.b16 %v702
  %v769 = vunpack.c.l.b16 %v703
  %v770 = vunpack.c.h.b16 %v703
  %v771 = vunpack.c.l.b16 %v704
  %v772 = vunpack.c.h.b16 %v704
  %v773 = vunpack.c.l.b16 %v705
  %v774 = vunpack.c.h.b16 %v705
  %v775 = vunpack.c.l.b16 %v706
  %v776 = vunpack.c.h.b16 %v706
  %v777 = vunpack.c.l.b16 %v707
  %v778 = vunpack.c.h.b16 %v707
  %v779 = vunpack.c.l.b16 %v708
  %v780 = vunpack.c.h.b16 %v708
  %v781 = vunpack.c.l.b16 %v709
  %v782 = vunpack.c.h.b16 %v709
  %v783 = vunpack.c.l.b16 %v710
  %v784 = vunpack.c.h.b16 %v710
  %v785 = vunpack.c.l.b16 %v711
  %v786 = vunpack.c.h.b16 %v711
  %v787 = vunpack.c.l.b16 %v712
  %v788 = vunpack.c.h.b16 %v712
  %v789 = vunpack.c.l.b16 %v713
  %v790 = vunpack.c.h.b16 %v713
  %v791 = vunpack.c.l.b16 %v714
  %v792 = vunpack.c.h.b16 %v714
  %v793 = vunpack.c.l.b16 %v715
  %v794 = vunpack.c.h.b16 %v715
  %v795 = vunpack.c.l.b16 %v716
  %v796 = vunpack.c.h.b16 %v716
  %v797 = vunpack.c.l.b16 %v717
  %v798 = vunpack.c.h.b16 %v717
  %v799 = vunpack.c.l.b16 %v718
  %v800 = vunpack.c.h.b16 %v718
  %v801 = vunpack.c.l.b16 %v719
  %v802 = vunpack.c.h.b16 %v719
  %v803 = vunpack.c.l.b16 %v720
  %v804 = vunpack.c.h.b16 %v720
  %v805 = vunpack.c.l.b16 %v721
  %v806 = vunpack.c.h.b16 %v721
  %v807 = vunpack.c.l.b16 %v722
  %v808 = vunpack.c.h.b16 %v722
  %v809 = vunpack.c.l.b16 %v723
  %v810 = vunpack.c.h.b16 %v723
  %v811 = vunpack.c.l.b16 %v724
  %v812 = vunpack.c.h.b16 %v724
  %v813 = vunpack.c.l.b16 %v725
  %v814 = vunpack.c.h.b16 %v725
  %v815 = vunpack.c.l.b16 %v726
  %v816 = vunpack.c.h.b16 %v726
  %v817 = vunpack.c.l.b16 %v727
  %v818 = vunpack.c.h.b16 %v727
  %v819 = vunpack.c.l.b16 %v728
  %v820 = vunpack.c.h.b16 %v728
  %v821 = vunpack.c.l.b16 %v729
  %v822 = vunpack.c.h.b16 %v729
  %v823 = vunpack.c.l.b16 %v730
  %v824 = vunpack.c.h.b16 %v730
  %v825 = vunpack.c.l.b16 %v731
  %v826 = vunpack.c.h.b16 %v731
  %v827 = vunpack.c.l.b16 %v732
  %v828 = vunpack.c.h.b16 %v732
  %v829 = vpack.c.b16 %v769, %v765
  %v830 = vpack.c.b16 %v770, %v766
  %v831 = vpack.c.b16 %v771, %v767
  %v832 = vpack.c.b16 %v772, %v768
  %v833 = vpack.c.b16 %v777, %v773
  %v834 = vpack.c.b16 %v778, %v774
  %v835 = vpack.c.b16 %v779, %v775
  %v836 = vpack.c.b16 %v780, %v776
  %v837 = vpack.c.b16 %v785, %v781
  %v838 = vpack.c.b16 %v786, %v782
  %v839 = vpack.c.b16 %v787, %v783
  %v840 = vpack.c.b16 %v788, %v784
  %v841 = vpack.c.b16 %v793, %v789
  %v842 = vpack.c.b16 %v794, %v790
  %v843 = vpack.c.b16 %v795, %v791
  %v844 = vpack.c.b16 %v796, %v792
  %v845 = vpack.c.b16 %v801, %v797
  %v846 = vpack.c.b16 %v802, %v798
  %v847 = vpack.c.b16 %v803, %v799
  %v848 = vpack.c.b16 %v804, %v800
  %v849 = vpack.c.b16 %v809, %v805
  %v850 = vpack.c.b16 %v810, %v806
  %v851 = vpack.c.b16 %v811, %v807
  %v852 = vpack.c.b16 %v812, %v808
  %v853 = vpack.c.b16 %v817, %v813
  %v854 = vpack.c.b16 %v818, %v814
  %v855 = vpack.c.b16 %v819, %v815
  %v856 = vpack.c.b16 %v820, %v816
  %v857 = vpack.c.b16 %v825, %v821
  %v858 = vpack.c.b16 %v826, %v822
  %v859 = vpack.c.b16 %v827, %v823
  %v860 = vpack.c.b16 %v828, %v824
  %893 = vmatprep.subr.bf16.mxu0 %v830
  %894 = vmatpush1.bf16.msra.mxu0 %v829
  %895 = vmatprep.subr.bf16.mxu0 %v834
  %896 = vmatpush1.bf16.msra.mxu0 %v833
  %897 = vmatprep.subr.bf16.mxu0 %v838
  %898 = vmatpush1.bf16.msra.mxu0 %v837
  %899 = vmatprep.subr.bf16.mxu0 %v842
  %900 = vmatpush1.bf16.msra.mxu0 %v841
  %901 = vmatprep.subr.bf16.mxu0 %v846
  %902 = vmatpush1.bf16.msra.mxu0 %v845
  %903 = vmatprep.subr.bf16.mxu0 %v850
  %904 = vmatpush1.bf16.msra.mxu0 %v849
  %905 = vmatprep.subr.bf16.mxu0 %v854
  %906 = vmatpush1.bf16.msra.mxu0 %v853
  %907 = vmatprep.subr.bf16.mxu0 %v858
  %908 = vmatpush1.bf16.msra.mxu0 %v857
  %909 = vmatprep.subr.bf16.mxu0 0
  %910 = vmatpush1.bf16.msra.mxu0 0
  %911 = vmatprep.subr.bf16.mxu0 0
  %912 = vmatpush1.bf16.msra.mxu0 0
  %913 = vmatprep.subr.bf16.mxu0 0
  %914 = vmatpush1.bf16.msra.mxu0 0
  %915 = vmatprep.subr.bf16.mxu0 0
  %916 = vmatpush1.bf16.msra.mxu0 0
  %917 = vmatprep.subr.bf16.mxu0 0
  %918 = vmatpush1.bf16.msra.mxu0 0
  %919 = vmatprep.subr.bf16.mxu0 0
  %920 = vmatpush1.bf16.msra.mxu0 0
  %921 = vmatprep.subr.bf16.mxu0 0
  %922 = vmatpush1.bf16.msra.mxu0 0
  %923 = vmatprep.subr.bf16.mxu0 0
  %924 = vmatpush1.bf16.msra.mxu0 0
  %925 = vmatprep.mubr.bf16.mxu0 0
  %926 = vmatmul.mubr.bf16.gmra.mrb[0].mxu0 %v700
  %v927 = vpop.f32.mrb[0].mxu0
  %v928 = vadd.f32 0.0, %v927
  %v929 = vpop.f32.mrb[0].mxu0
  %v930 = vadd.f32 0.0, %v929
  %v931 = vpop.f32.mrb[0].mxu0
  %v932 = vpop.f32.mrb[0].mxu0
  %933 = vdwg.mxu0
  %934 = vmatprep.subr.bf16.mxu0 %v832
  %935 = vmatpush1.bf16.msra.mxu0 %v831
  %936 = vmatprep.subr.bf16.mxu0 %v836
  %937 = vmatpush1.bf16.msra.mxu0 %v835
  %938 = vmatprep.subr.bf16.mxu0 %v840
  %939 = vmatpush1.bf16.msra.mxu0 %v839
  %940 = vmatprep.subr.bf16.mxu0 %v844
  %941 = vmatpush1.bf16.msra.mxu0 %v843
  %942 = vmatprep.subr.bf16.mxu0 %v848
  %943 = vmatpush1.bf16.msra.mxu0 %v847
  %944 = vmatprep.subr.bf16.mxu0 %v852
  %945 = vmatpush1.bf16.msra.mxu0 %v851
  %946 = vmatprep.subr.bf16.mxu0 %v856
  %947 = vmatpush1.bf16.msra.mxu0 %v855
  %948 = vmatprep.subr.bf16.mxu0 %v860
  %949 = vmatpush1.bf16.msra.mxu0 %v859
  %950 = vmatprep.subr.bf16.mxu0 0
  %951 = vmatpush1.bf16.msra.mxu0 0
  %952 = vmatprep.subr.bf16.mxu0 0
  %953 = vmatpush1.bf16.msra.mxu0 0
  %954 = vmatprep.subr.bf16.mxu0 0
  %955 = vmatpush1.bf16.msra.mxu0 0
  %956 = vmatprep.subr.bf16.mxu0 0
  %957 = vmatpush1.bf16.msra.mxu0 0
  %958 = vmatprep.subr.bf16.mxu0 0
  %959 = vmatpush1.bf16.msra.mxu0 0
  %960 = vmatprep.subr.bf16.mxu0 0
  %961 = vmatpush1.bf16.msra.mxu0 0
  %962 = vmatprep.subr.bf16.mxu0 0
  %963 = vmatpush1.bf16.msra.mxu0 0
  %964 = vmatprep.subr.bf16.mxu0 0
  %965 = vmatpush1.bf16.msra.mxu0 0
  %966 = vmatprep.mubr.bf16.mxu0 0
  %967 = vmatmul.mubr.bf16.gmra.mrb[0].mxu0 %v700
  %v968 = vpop.f32.mrb[0].mxu0
  %v969 = vadd.f32 0.0, %v968
  %v970 = vpop.f32.mrb[0].mxu0
  %v971 = vadd.f32 0.0, %v970
  %v972 = vpop.f32.mrb[0].mxu0
  %v973 = vpop.f32.mrb[0].mxu0
  %974 = vdwg.mxu0
  %v979 = vcombine.low %v928, %v930
  %v980 = vcombine.low %v969, %v971
  %v982 = vunpack.c.l.s4 1983009808
  %v983 = vunpack.c.0.s8 %v982
  %v984 = vlaneseq
  %v985 = vshrl.u32 %v984, 7
  %v986 = vsub.s32 %v983, %v985
  %v987 = vrot.slane %v979, %v986
  %v989 = vunpack.c.l.s4 1983009808
  %v990 = vunpack.c.0.s8 %v989
  %v991 = vlaneseq
  %v992 = vshrl.u32 %v991, 7
  %v993 = vsub.s32 %v990, %v992
  %v994 = vrot.slane %v980, %v993
  %v995 = vcombine.low %v987, %v994
  %v997 = vadd.f32 %v699, %v995
  %v998 = vxor.u32 %v997, 2147483648
  %v999 = vmul.f32 %v998, 1.442695
  %v1000 = vpow.pop %v999
  %v1001 = vadd.f32 %v1000, 1.0
  %v1002 = vrcp.pop %v1001
  %v1003 = vmul.f32 1.0, %v1002
  %v1005 = vrot.slane %v997, 2
  %v1007 = vxor.u32 %v1005, 2147483648
  %v1008 = vmul.f32 %v1007, 1.442695
  %v1009 = vpow.pop %v1008
  %v1010 = vadd.f32 %v1009, 1.0
  %v1011 = vrcp.pop %v1010
  %v1012 = vmul.f32 1.0, %v1011
  %v1013 = vrot.slane %v997, 4
  %v1015 = vtanh.pop %v1013
  %v1016 = vrot.slane %v997, 6
  %v1018 = vxor.u32 %v1016, 2147483648
  %v1019 = vmul.f32 %v1018, 1.442695
  %v1020 = vpow.pop %v1019
  %v1021 = vadd.f32 %v1020, 1.0
  %v1022 = vrcp.pop %v1021
  %v1023 = vmul.f32 1.0, %v1022
  %v1024 = vmul.f32 %v1012, %v698
  %v1025 = vmul.f32 %v1003, %v1015
  %v1026 = vadd.f32 %v1024, %v1025
  %v1027 = vtanh.pop %v1026
  %v1028 = vmul.f32 %v1023, %v1027
  %s1029 = scalar_lea.vmem %s0, 48
  %v1030 = vld [vmem:[%s1029 + $0x4] sm:$0xf]
  %v1031 = vld [vmem:[#allocation4] sm:$0x3]
  %v1032 = vld [vmem:[#allocation5] sm:$0x3]
  %v1033 = vunpack.c.l.bf16 %v1030
  %v1034 = vpack.c.bf16 %v1031, %v1031
  %v1035 = vld [vmem:[%s2] sm:$0xff]
  %v1036 = vld [vmem:[%s2 + $0x8] sm:$0xff]
  %v1037 = vld [vmem:[%s2 + $0x10] sm:$0xff]
  %v1038 = vld [vmem:[%s2 + $0x18] sm:$0xff]
  %v1039 = vld [vmem:[%s2 + $0x20] sm:$0xff]
  %v1040 = vld [vmem:[%s2 + $0x28] sm:$0xff]
  %v1041 = vld [vmem:[%s2 + $0x30] sm:$0xff]
  %v1042 = vld [vmem:[%s2 + $0x38] sm:$0xff]
  %v1043 = vld [vmem:[%s2 + $0x40] sm:$0xff]
  %v1044 = vld [vmem:[%s2 + $0x48] sm:$0xff]
  %v1045 = vld [vmem:[%s2 + $0x50] sm:$0xff]
  %v1046 = vld [vmem:[%s2 + $0x58] sm:$0xff]
  %v1047 = vld [vmem:[%s2 + $0x60] sm:$0xff]
  %v1048 = vld [vmem:[%s2 + $0x68] sm:$0xff]
  %v1049 = vld [vmem:[%s2 + $0x70] sm:$0xff]
  %v1050 = vld [vmem:[%s2 + $0x78] sm:$0xff]
  %v1051 = vld [vmem:[%s2 + $0x80] sm:$0xff]
  %v1052 = vld [vmem:[%s2 + $0x88] sm:$0xff]
  %v1053 = vld [vmem:[%s2 + $0x90] sm:$0xff]
  %v1054 = vld [vmem:[%s2 + $0x98] sm:$0xff]
  %v1055 = vld [vmem:[%s2 + $0xa0] sm:$0xff]
  %v1056 = vld [vmem:[%s2 + $0xa8] sm:$0xff]
  %v1057 = vld [vmem:[%s2 + $0xb0] sm:$0xff]
  %v1058 = vld [vmem:[%s2 + $0xb8] sm:$0xff]
  %v1059 = vld [vmem:[%s2 + $0xc0] sm:$0xff]
  %v1060 = vld [vmem:[%s2 + $0xc8] sm:$0xff]
  %v1061 = vld [vmem:[%s2 + $0xd0] sm:$0xff]
  %v1062 = vld [vmem:[%s2 + $0xd8] sm:$0xff]
  %v1063 = vld [vmem:[%s2 + $0xe0] sm:$0xff]
  %v1064 = vld [vmem:[%s2 + $0xe8] sm:$0xff]
  %v1065 = vld [vmem:[%s2 + $0xf0] sm:$0xff]
  %v1066 = vld [vmem:[%s2 + $0xf8] sm:$0xff]
  %v1099 = vunpack.c.l.b16 %v1035
  %v1100 = vunpack.c.h.b16 %v1035
  %v1101 = vunpack.c.l.b16 %v1036
  %v1102 = vunpack.c.h.b16 %v1036
  %v1103 = vunpack.c.l.b16 %v1037
  %v1104 = vunpack.c.h.b16 %v1037
  %v1105 = vunpack.c.l.b16 %v1038
  %v1106 = vunpack.c.h.b16 %v1038
  %v1107 = vunpack.c.l.b16 %v1039
  %v1108 = vunpack.c.h.b16 %v1039
  %v1109 = vunpack.c.l.b16 %v1040
  %v1110 = vunpack.c.h.b16 %v1040
  %v1111 = vunpack.c.l.b16 %v1041
  %v1112 = vunpack.c.h.b16 %v1041
  %v1113 = vunpack.c.l.b16 %v1042
  %v1114 = vunpack.c.h.b16 %v1042
  %v1115 = vunpack.c.l.b16 %v1043
  %v1116 = vunpack.c.h.b16 %v1043
  %v1117 = vunpack.c.l.b16 %v1044
  %v1118 = vunpack.c.h.b16 %v1044
  %v1119 = vunpack.c.l.b16 %v1045
  %v1120 = vunpack.c.h.b16 %v1045
  %v1121 = vunpack.c.l.b16 %v1046
  %v1122 = vunpack.c.h.b16 %v1046
  %v1123 = vunpack.c.l.b16 %v1047
  %v1124 = vunpack.c.h.b16 %v1047
  %v1125 = vunpack.c.l.b16 %v1048
  %v1126 = vunpack.c.h.b16 %v1048
  %v1127 = vunpack.c.l.b16 %v1049
  %v1128 = vunpack.c.h.b16 %v1049
  %v1129 = vunpack.c.l.b16 %v1050
  %v1130 = vunpack.c.h.b16 %v1050
  %v1131 = vunpack.c.l.b16 %v1051
  %v1132 = vunpack.c.h.b16 %v1051
  %v1133 = vunpack.c.l.b16 %v1052
  %v1134 = vunpack.c.h.b16 %v1052
  %v1135 = vunpack.c.l.b16 %v1053
  %v1136 = vunpack.c.h.b16 %v1053
  %v1137 = vunpack.c.l.b16 %v1054
  %v1138 = vunpack.c.h.b16 %v1054
  %v1139 = vunpack.c.l.b16 %v1055
  %v1140 = vunpack.c.h.b16 %v1055
  %v1141 = vunpack.c.l.b16 %v1056
  %v1142 = vunpack.c.h.b16 %v1056
  %v1143 = vunpack.c.l.b16 %v1057
  %v1144 = vunpack.c.h.b16 %v1057
  %v1145 = vunpack.c.l.b16 %v1058
  %v1146 = vunpack.c.h.b16 %v1058
  %v1147 = vunpack.c.l.b16 %v1059
  %v1148 = vunpack.c.h.b16 %v1059
  %v1149 = vunpack.c.l.b16 %v1060
  %v1150 = vunpack.c.h.b16 %v1060
  %v1151 = vunpack.c.l.b16 %v1061
  %v1152 = vunpack.c.h.b16 %v1061
  %v1153 = vunpack.c.l.b16 %v1062
  %v1154 = vunpack.c.h.b16 %v1062
  %v1155 = vunpack.c.l.b16 %v1063
  %v1156 = vunpack.c.h.b16 %v1063
  %v1157 = vunpack.c.l.b16 %v1064
  %v1158 = vunpack.c.h.b16 %v1064
  %v1159 = vunpack.c.l.b16 %v1065
  %v1160 = vunpack.c.h.b16 %v1065
  %v1161 = vunpack.c.l.b16 %v1066
  %v1162 = vunpack.c.h.b16 %v1066
  %v1163 = vpack.c.b16 %v1103, %v1099
  %v1164 = vpack.c.b16 %v1104, %v1100
  %v1165 = vpack.c.b16 %v1105, %v1101
  %v1166 = vpack.c.b16 %v1106, %v1102
  %v1167 = vpack.c.b16 %v1111, %v1107
  %v1168 = vpack.c.b16 %v1112, %v1108
  %v1169 = vpack.c.b16 %v1113, %v1109
  %v1170 = vpack.c.b16 %v1114, %v1110
  %v1171 = vpack.c.b16 %v1119, %v1115
  %v1172 = vpack.c.b16 %v1120, %v1116
  %v1173 = vpack.c.b16 %v1121, %v1117
  %v1174 = vpack.c.b16 %v1122, %v1118
  %v1175 = vpack.c.b16 %v1127, %v1123
  %v1176 = vpack.c.b16 %v1128, %v1124
  %v1177 = vpack.c.b16 %v1129, %v1125
  %v1178 = vpack.c.b16 %v1130, %v1126
  %v1179 = vpack.c.b16 %v1135, %v1131
  %v1180 = vpack.c.b16 %v1136, %v1132
  %v1181 = vpack.c.b16 %v1137, %v1133
  %v1182 = vpack.c.b16 %v1138, %v1134
  %v1183 = vpack.c.b16 %v1143, %v1139
  %v1184 = vpack.c.b16 %v1144, %v1140
  %v1185 = vpack.c.b16 %v1145, %v1141
  %v1186 = vpack.c.b16 %v1146, %v1142
  %v1187 = vpack.c.b16 %v1151, %v1147
  %v1188 = vpack.c.b16 %v1152, %v1148
  %v1189 = vpack.c.b16 %v1153, %v1149
  %v1190 = vpack.c.b16 %v1154, %v1150
  %v1191 = vpack.c.b16 %v1159, %v1155
  %v1192 = vpack.c.b16 %v1160, %v1156
  %v1193 = vpack.c.b16 %v1161, %v1157
  %v1194 = vpack.c.b16 %v1162, %v1158
  %1227 = vmatprep.subr.bf16.mxu0 %v1164
  %1228 = vmatpush1.bf16.msra.mxu0 %v1163
  %1229 = vmatprep.subr.bf16.mxu0 %v1168
  %1230 = vmatpush1.bf16.msra.mxu0 %v1167
  %1231 = vmatprep.subr.bf16.mxu0 %v1172
  %1232 = vmatpush1.bf16.msra.mxu0 %v1171
  %1233 = vmatprep.subr.bf16.mxu0 %v1176
  %1234 = vmatpush1.bf16.msra.mxu0 %v1175
  %1235 = vmatprep.subr.bf16.mxu0 %v1180
  %1236 = vmatpush1.bf16.msra.mxu0 %v1179
  %1237 = vmatprep.subr.bf16.mxu0 %v1184
  %1238 = vmatpush1.bf16.msra.mxu0 %v1183
  %1239 = vmatprep.subr.bf16.mxu0 %v1188
  %1240 = vmatpush1.bf16.msra.mxu0 %v1187
  %1241 = vmatprep.subr.bf16.mxu0 %v1192
  %1242 = vmatpush1.bf16.msra.mxu0 %v1191
  %1243 = vmatprep.subr.bf16.mxu0 0
  %1244 = vmatpush1.bf16.msra.mxu0 0
  %1245 = vmatprep.subr.bf16.mxu0 0
  %1246 = vmatpush1.bf16.msra.mxu0 0
  %1247 = vmatprep.subr.bf16.mxu0 0
  %1248 = vmatpush1.bf16.msra.mxu0 0
  %1249 = vmatprep.subr.bf16.mxu0 0
  %1250 = vmatpush1.bf16.msra.mxu0 0
  %1251 = vmatprep.subr.bf16.mxu0 0
  %1252 = vmatpush1.bf16.msra.mxu0 0
  %1253 = vmatprep.subr.bf16.mxu0 0
  %1254 = vmatpush1.bf16.msra.mxu0 0
  %1255 = vmatprep.subr.bf16.mxu0 0
  %1256 = vmatpush1.bf16.msra.mxu0 0
  %1257 = vmatprep.subr.bf16.mxu0 0
  %1258 = vmatpush1.bf16.msra.mxu0 0
  %1259 = vmatprep.mubr.bf16.mxu0 0
  %1260 = vmatmul.mubr.bf16.gmra.mrb[0].mxu0 %v1034
  %v1261 = vpop.f32.mrb[0].mxu0
  %v1262 = vadd.f32 0.0, %v1261
  %v1263 = vpop.f32.mrb[0].mxu0
  %v1264 = vadd.f32 0.0, %v1263
  %v1265 = vpop.f32.mrb[0].mxu0
  %v1266 = vpop.f32.mrb[0].mxu0
  %1267 = vdwg.mxu0
  %1268 = vmatprep.subr.bf16.mxu0 %v1166
  %1269 = vmatpush1.bf16.msra.mxu0 %v1165
  %1270 = vmatprep.subr.bf16.mxu0 %v1170
  %1271 = vmatpush1.bf16.msra.mxu0 %v1169
  %1272 = vmatprep.subr.bf16.mxu0 %v1174
  %1273 = vmatpush1.bf16.msra.mxu0 %v1173
  %1274 = vmatprep.subr.bf16.mxu0 %v1178
  %1275 = vmatpush1.bf16.msra.mxu0 %v1177
  %1276 = vmatprep.subr.bf16.mxu0 %v1182
  %1277 = vmatpush1.bf16.msra.mxu0 %v1181
  %1278 = vmatprep.subr.bf16.mxu0 %v1186
  %1279 = vmatpush1.bf16.msra.mxu0 %v1185
  %1280 = vmatprep.subr.bf16.mxu0 %v1190
  %1281 = vmatpush1.bf16.msra.mxu0 %v1189
  %1282 = vmatprep.subr.bf16.mxu0 %v1194
  %1283 = vmatpush1.bf16.msra.mxu0 %v1193
  %1284 = vmatprep.subr.bf16.mxu0 0
  %1285 = vmatpush1.bf16.msra.mxu0 0
  %1286 = vmatprep.subr.bf16.mxu0 0
  %1287 = vmatpush1.bf16.msra.mxu0 0
  %1288 = vmatprep.subr.bf16.mxu0 0
  %1289 = vmatpush1.bf16.msra.mxu0 0
  %1290 = vmatprep.subr.bf16.mxu0 0
  %1291 = vmatpush1.bf16.msra.mxu0 0
  %1292 = vmatprep.subr.bf16.mxu0 0
  %1293 = vmatpush1.bf16.msra.mxu0 0
  %1294 = vmatprep.subr.bf16.mxu0 0
  %1295 = vmatpush1.bf16.msra.mxu0 0
  %1296 = vmatprep.subr.bf16.mxu0 0
  %1297 = vmatpush1.bf16.msra.mxu0 0
  %1298 = vmatprep.subr.bf16.mxu0 0
  %1299 = vmatpush1.bf16.msra.mxu0 0
  %1300 = vmatprep.mubr.bf16.mxu0 0
  %1301 = vmatmul.mubr.bf16.gmra.mrb[0].mxu0 %v1034
  %v1302 = vpop.f32.mrb[0].mxu0
  %v1303 = vadd.f32 0.0, %v1302
  %v1304 = vpop.f32.mrb[0].mxu0
  %v1305 = vadd.f32 0.0, %v1304
  %v1306 = vpop.f32.mrb[0].mxu0
  %v1307 = vpop.f32.mrb[0].mxu0
  %1308 = vdwg.mxu0
  %v1313 = vcombine.low %v1262, %v1264
  %v1314 = vcombine.low %v1303, %v1305
  %v1316 = vunpack.c.l.s4 1983009808
  %v1317 = vunpack.c.0.s8 %v1316
  %v1318 = vlaneseq
  %v1319 = vshrl.u32 %v1318, 7
  %v1320 = vsub.s32 %v1317, %v1319
  %v1321 = vrot.slane %v1313, %v1320
  %v1323 = vunpack.c.l.s4 1983009808
  %v1324 = vunpack.c.0.s8 %v1323
  %v1325 = vlaneseq
  %v1326 = vshrl.u32 %v1325, 7
  %v1327 = vsub.s32 %v1324, %v1326
  %v1328 = vrot.slane %v1314, %v1327
  %v1329 = vcombine.low %v1321, %v1328
  %v1331 = vadd.f32 %v1033, %v1329
  %v1332 = vxor.u32 %v1331, 2147483648
  %v1333 = vmul.f32 %v1332, 1.442695
  %v1334 = vpow.pop %v1333
  %v1335 = vadd.f32 %v1334, 1.0
  %v1336 = vrcp.pop %v1335
  %v1337 = vmul.f32 1.0, %v1336
  %v1339 = vrot.slane %v1331, 2
  %v1341 = vxor.u32 %v1339, 2147483648
  %v1342 = vmul.f32 %v1341, 1.442695
  %v1343 = vpow.pop %v1342
  %v1344 = vadd.f32 %v1343, 1.0
  %v1345 = vrcp.pop %v1344
  %v1346 = vmul.f32 1.0, %v1345
  %v1347 = vrot.slane %v1331, 4
  %v1349 = vtanh.pop %v1347
  %v1350 = vrot.slane %v1331, 6
  %v1352 = vxor.u32 %v1350, 2147483648
  %v1353 = vmul.f32 %v1352, 1.442695
  %v1354 = vpow.pop %v1353
  %v1355 = vadd.f32 %v1354, 1.0
  %v1356 = vrcp.pop %v1355
  %v1357 = vmul.f32 1.0, %v1356
  %v1358 = vmul.f32 %v1346, %v1032
  %v1359 = vmul.f32 %v1337, %v1349
  %v1360 = vadd.f32 %v1358, %v1359
  %v1361 = vtanh.pop %v1360
  %v1362 = vmul.f32 %v1357, %v1361
  %1363 = vst [vmem:[#allocation2] sm:$0x3] %v1028
  %1364 = vst [vmem:[#allocation3] sm:$0x3] %v1026
  %1365 = vst [vmem:[#allocation4] sm:$0x3] %v1362
  %1366 = vst [vmem:[#allocation5] sm:$0x3] %v1360
  %v1367 = vpack.c.bf16 %v1028, %v1028
  %s1368 = scalar_lea.vmem %s3, 2
  %1369 = vst [vmem:[%s1368] sm:$0x1] %v1367
  %v1370 = vpack.c.bf16 %v1362, %v1362
  %s1371 = scalar_lea.vmem %s3, 12
  %1372 = vst [vmem:[%s1371 + $0x1] sm:$0x1] %v1370
  %s1373 = scalar_lea.vmem %s0, 16
  %v1374 = vld [vmem:[%s1373] sm:$0xf]
  %v1375 = vld [vmem:[#allocation2] sm:$0x3]
  %v1376 = vld [vmem:[#allocation3] sm:$0x3]
  %v1377 = vunpack.c.l.bf16 %v1374
  %v1378 = vpack.c.bf16 %v1375, %v1375
  %v1379 = vld [vmem:[%s1] sm:$0xff]
  %v1380 = vld [vmem:[%s1 + $0x8] sm:$0xff]
  %v1381 = vld [vmem:[%s1 + $0x10] sm:$0xff]
  %v1382 = vld [vmem:[%s1 + $0x18] sm:$0xff]
  %v1383 = vld [vmem:[%s1 + $0x20] sm:$0xff]
  %v1384 = vld [vmem:[%s1 + $0x28] sm:$0xff]
  %v1385 = vld [vmem:[%s1 + $0x30] sm:$0xff]
  %v1386 = vld [vmem:[%s1 + $0x38] sm:$0xff]
  %v1387 = vld [vmem:[%s1 + $0x40] sm:$0xff]
  %v1388 = vld [vmem:[%s1 + $0x48] sm:$0xff]
  %v1389 = vld [vmem:[%s1 + $0x50] sm:$0xff]
  %v1390 = vld [vmem:[%s1 + $0x58] sm:$0xff]
  %v1391 = vld [vmem:[%s1 + $0x60] sm:$0xff]
  %v1392 = vld [vmem:[%s1 + $0x68] sm:$0xff]
  %v1393 = vld [vmem:[%s1 + $0x70] sm:$0xff]
  %v1394 = vld [vmem:[%s1 + $0x78] sm:$0xff]
  %v1395 = vld [vmem:[%s1 + $0x80] sm:$0xff]
  %v1396 = vld [vmem:[%s1 + $0x88] sm:$0xff]
  %v1397 = vld [vmem:[%s1 + $0x90] sm:$0xff]
  %v1398 = vld [vmem:[%s1 + $0x98] sm:$0xff]
  %v1399 = vld [vmem:[%s1 + $0xa0] sm:$0xff]
  %v1400 = vld [vmem:[%s1 + $0xa8] sm:$0xff]
  %v1401 = vld [vmem:[%s1 + $0xb0] sm:$0xff]
  %v1402 = vld [vmem:[%s1 + $0xb8] sm:$0xff]
  %v1403 = vld [vmem:[%s1 + $0xc0] sm:$0xff]
  %v1404 = vld [vmem:[%s1 + $0xc8] sm:$0xff]
  %v1405 = vld [vmem:[%s1 + $0xd0] sm:$0xff]
  %v1406 = vld [vmem:[%s1 + $0xd8] sm:$0xff]
  %v1407 = vld [vmem:[%s1 + $0xe0] sm:$0xff]
  %v1408 = vld [vmem:[%s1 + $0xe8] sm:$0xff]
  %v1409 = vld [vmem:[%s1 + $0xf0] sm:$0xff]
  %v1410 = vld [vmem:[%s1 + $0xf8] sm:$0xff]
  %v1443 = vunpack.c.l.b16 %v1379
  %v1444 = vunpack.c.h.b16 %v1379
  %v1445 = vunpack.c.l.b16 %v1380
  %v1446 = vunpack.c.h.b16 %v1380
  %v1447 = vunpack.c.l.b16 %v1381
  %v1448 = vunpack.c.h.b16 %v1381
  %v1449 = vunpack.c.l.b16 %v1382
  %v1450 = vunpack.c.h.b16 %v1382
  %v1451 = vunpack.c.l.b16 %v1383
  %v1452 = vunpack.c.h.b16 %v1383
  %v1453 = vunpack.c.l.b16 %v1384
  %v1454 = vunpack.c.h.b16 %v1384
  %v1455 = vunpack.c.l.b16 %v1385
  %v1456 = vunpack.c.h.b16 %v1385
  %v1457 = vunpack.c.l.b16 %v1386
  %v1458 = vunpack.c.h.b16 %v1386
  %v1459 = vunpack.c.l.b16 %v1387
  %v1460 = vunpack.c.h.b16 %v1387
  %v1461 = vunpack.c.l.b16 %v1388
  %v1462 = vunpack.c.h.b16 %v1388
  %v1463 = vunpack.c.l.b16 %v1389
  %v1464 = vunpack.c.h.b16 %v1389
  %v1465 = vunpack.c.l.b16 %v1390
  %v1466 = vunpack.c.h.b16 %v1390
  %v1467 = vunpack.c.l.b16 %v1391
  %v1468 = vunpack.c.h.b16 %v1391
  %v1469 = vunpack.c.l.b16 %v1392
  %v1470 = vunpack.c.h.b16 %v1392
  %v1471 = vunpack.c.l.b16 %v1393
  %v1472 = vunpack.c.h.b16 %v1393
  %v1473 = vunpack.c.l.b16 %v1394
  %v1474 = vunpack.c.h.b16 %v1394
  %v1475 = vunpack.c.l.b16 %v1395
  %v1476 = vunpack.c.h.b16 %v1395
  %v1477 = vunpack.c.l.b16 %v1396
  %v1478 = vunpack.c.h.b16 %v1396
  %v1479 = vunpack.c.l.b16 %v1397
  %v1480 = vunpack.c.h.b16 %v1397
  %v1481 = vunpack.c.l.b16 %v1398
  %v1482 = vunpack.c.h.b16 %v1398
  %v1483 = vunpack.c.l.b16 %v1399
  %v1484 = vunpack.c.h.b16 %v1399
  %v1485 = vunpack.c.l.b16 %v1400
  %v1486 = vunpack.c.h.b16 %v1400
  %v1487 = vunpack.c.l.b16 %v1401
  %v1488 = vunpack.c.h.b16 %v1401
  %v1489 = vunpack.c.l.b16 %v1402
  %v1490 = vunpack.c.h.b16 %v1402
  %v1491 = vunpack.c.l.b16 %v1403
  %v1492 = vunpack.c.h.b16 %v1403
  %v1493 = vunpack.c.l.b16 %v1404
  %v1494 = vunpack.c.h.b16 %v1404
  %v1495 = vunpack.c.l.b16 %v1405
  %v1496 = vunpack.c.h.b16 %v1405
  %v1497 = vunpack.c.l.b16 %v1406
  %v1498 = vunpack.c.h.b16 %v1406
  %v1499 = vunpack.c.l.b16 %v1407
  %v1500 = vunpack.c.h.b16 %v1407
  %v1501 = vunpack.c.l.b16 %v1408
  %v1502 = vunpack.c.h.b16 %v1408
  %v1503 = vunpack.c.l.b16 %v1409
  %v1504 = vunpack.c.h.b16 %v1409
  %v1505 = vunpack.c.l.b16 %v1410
  %v1506 = vunpack.c.h.b16 %v1410
  %v1507 = vpack.c.b16 %v1447, %v1443
  %v1508 = vpack.c.b16 %v1448, %v1444
  %v1509 = vpack.c.b16 %v1449, %v1445
  %v1510 = vpack.c.b16 %v1450, %v1446
  %v1511 = vpack.c.b16 %v1455, %v1451
  %v1512 = vpack.c.b16 %v1456, %v1452
  %v1513 = vpack.c.b16 %v1457, %v1453
  %v1514 = vpack.c.b16 %v1458, %v1454
  %v1515 = vpack.c.b16 %v1463, %v1459
  %v1516 = vpack.c.b16 %v1464, %v1460
  %v1517 = vpack.c.b16 %v1465, %v1461
  %v1518 = vpack.c.b16 %v1466, %v1462
  %v1519 = vpack.c.b16 %v1471, %v1467
  %v1520 = vpack.c.b16 %v1472, %v1468
  %v1521 = vpack.c.b16 %v1473, %v1469
  %v1522 = vpack.c.b16 %v1474, %v1470
  %v1523 = vpack.c.b16 %v1479, %v1475
  %v1524 = vpack.c.b16 %v1480, %v1476
  %v1525 = vpack.c.b16 %v1481, %v1477
  %v1526 = vpack.c.b16 %v1482, %v1478
  %v1527 = vpack.c.b16 %v1487, %v1483
  %v1528 = vpack.c.b16 %v1488, %v1484
  %v1529 = vpack.c.b16 %v1489, %v1485
  %v1530 = vpack.c.b16 %v1490, %v1486
  %v1531 = vpack.c.b16 %v1495, %v1491
  %v1532 = vpack.c.b16 %v1496, %v1492
  %v1533 = vpack.c.b16 %v1497, %v1493
  %v1534 = vpack.c.b16 %v1498, %v1494
  %v1535 = vpack.c.b16 %v1503, %v1499
  %v1536 = vpack.c.b16 %v1504, %v1500
  %v1537 = vpack.c.b16 %v1505, %v1501
  %v1538 = vpack.c.b16 %v1506, %v1502
  %1571 = vmatprep.subr.bf16.mxu0 %v1508
  %1572 = vmatpush1.bf16.msra.mxu0 %v1507
  %1573 = vmatprep.subr.bf16.mxu0 %v1512
  %1574 = vmatpush1.bf16.msra.mxu0 %v1511
  %1575 = vmatprep.subr.bf16.mxu0 %v1516
  %1576 = vmatpush1.bf16.msra.mxu0 %v1515
  %1577 = vmatprep.subr.bf16.mxu0 %v1520
  %1578 = vmatpush1.bf16.msra.mxu0 %v1519
  %1579 = vmatprep.subr.bf16.mxu0 %v1524
  %1580 = vmatpush1.bf16.msra.mxu0 %v1523
  %1581 = vmatprep.subr.bf16.mxu0 %v1528
  %1582 = vmatpush1.bf16.msra.mxu0 %v1527
  %1583 = vmatprep.subr.bf16.mxu0 %v1532
  %1584 = vmatpush1.bf16.msra.mxu0 %v1531
  %1585 = vmatprep.subr.bf16.mxu0 %v1536
  %1586 = vmatpush1.bf16.msra.mxu0 %v1535
  %1587 = vmatprep.subr.bf16.mxu0 0
  %1588 = vmatpush1.bf16.msra.mxu0 0
  %1589 = vmatprep.subr.bf16.mxu0 0
  %1590 = vmatpush1.bf16.msra.mxu0 0
  %1591 = vmatprep.subr.bf16.mxu0 0
  %1592 = vmatpush1.bf16.msra.mxu0 0
  %1593 = vmatprep.subr.bf16.mxu0 0
  %1594 = vmatpush1.bf16.msra.mxu0 0
  %1595 = vmatprep.subr.bf16.mxu0 0
  %1596 = vmatpush1.bf16.msra.mxu0 0
  %1597 = vmatprep.subr.bf16.mxu0 0
  %1598 = vmatpush1.bf16.msra.mxu0 0
  %1599 = vmatprep.subr.bf16.mxu0 0
  %1600 = vmatpush1.bf16.msra.mxu0 0
  %1601 = vmatprep.subr.bf16.mxu0 0
  %1602 = vmatpush1.bf16.msra.mxu0 0
  %1603 = vmatprep.mubr.bf16.mxu0 0
  %1604 = vmatmul.mubr.bf16.gmra.mrb[0].mxu0 %v1378
  %v1605 = vpop.f32.mrb[0].mxu0
  %v1606 = vadd.f32 0.0, %v1605
  %v1607 = vpop.f32.mrb[0].mxu0
  %v1608 = vadd.f32 0.0, %v1607
  %v1609 = vpop.f32.mrb[0].mxu0
  %v1610 = vpop.f32.mrb[0].mxu0
  %1611 = vdwg.mxu0
  %1612 = vmatprep.subr.bf16.mxu0 %v1510
  %1613 = vmatpush1.bf16.msra.mxu0 %v1509
  %1614 = vmatprep.subr.bf16.mxu0 %v1514
  %1615 = vmatpush1.bf16.msra.mxu0 %v1513
  %1616 = vmatprep.subr.bf16.mxu0 %v1518
  %1617 = vmatpush1.bf16.msra.mxu0 %v1517
  %1618 = vmatprep.subr.bf16.mxu0 %v1522
  %1619 = vmatpush1.bf16.msra.mxu0 %v1521
  %1620 = vmatprep.subr.bf16.mxu0 %v1526
  %1621 = vmatpush1.bf16.msra.mxu0 %v1525
  %1622 = vmatprep.subr.bf16.mxu0 %v1530
  %1623 = vmatpush1.bf16.msra.mxu0 %v1529
  %1624 = vmatprep.subr.bf16.mxu0 %v1534
  %1625 = vmatpush1.bf16.msra.mxu0 %v1533
  %1626 = vmatprep.subr.bf16.mxu0 %v1538
  %1627 = vmatpush1.bf16.msra.mxu0 %v1537
  %1628 = vmatprep.subr.bf16.mxu0 0
  %1629 = vmatpush1.bf16.msra.mxu0 0
  %1630 = vmatprep.subr.bf16.mxu0 0
  %1631 = vmatpush1.bf16.msra.mxu0 0
  %1632 = vmatprep.subr.bf16.mxu0 0
  %1633 = vmatpush1.bf16.msra.mxu0 0
  %1634 = vmatprep.subr.bf16.mxu0 0
  %1635 = vmatpush1.bf16.msra.mxu0 0
  %1636 = vmatprep.subr.bf16.mxu0 0
  %1637 = vmatpush1.bf16.msra.mxu0 0
  %1638 = vmatprep.subr.bf16.mxu0 0
  %1639 = vmatpush1.bf16.msra.mxu0 0
  %1640 = vmatprep.subr.bf16.mxu0 0
  %1641 = vmatpush1.bf16.msra.mxu0 0
  %1642 = vmatprep.subr.bf16.mxu0 0
  %1643 = vmatpush1.bf16.msra.mxu0 0
  %1644 = vmatprep.mubr.bf16.mxu0 0
  %1645 = vmatmul.mubr.bf16.gmra.mrb[0].mxu0 %v1378
  %v1646 = vpop.f32.mrb[0].mxu0
  %v1647 = vadd.f32 0.0, %v1646
  %v1648 = vpop.f32.mrb[0].mxu0
  %v1649 = vadd.f32 0.0, %v1648
  %v1650 = vpop.f32.mrb[0].mxu0
  %v1651 = vpop.f32.mrb[0].mxu0
  %1652 = vdwg.mxu0
  %v1657 = vcombine.low %v1606, %v1608
  %v1658 = vcombine.low %v1647, %v1649
  %v1660 = vunpack.c.l.s4 1983009808
  %v1661 = vunpack.c.0.s8 %v1660
  %v1662 = vlaneseq
  %v1663 = vshrl.u32 %v1662, 7
  %v1664 = vsub.s32 %v1661, %v1663
  %v1665 = vrot.slane %v1657, %v1664
  %v1667 = vunpack.c.l.s4 1983009808
  %v1668 = vunpack.c.0.s8 %v1667
  %v1669 = vlaneseq
  %v1670 = vshrl.u32 %v1669, 7
  %v1671 = vsub.s32 %v1668, %v1670
  %v1672 = vrot.slane %v1658, %v1671
  %v1673 = vcombine.low %v1665, %v1672
  %v1675 = vadd.f32 %v1377, %v1673
  %v1676 = vxor.u32 %v1675, 2147483648
  %v1677 = vmul.f32 %v1676, 1.442695
  %v1678 = vpow.pop %v1677
  %v1679 = vadd.f32 %v1678, 1.0
  %v1680 = vrcp.pop %v1679
  %v1681 = vmul.f32 1.0, %v1680
  %v1683 = vrot.slane %v1675, 2
  %v1685 = vxor.u32 %v1683, 2147483648
  %v1686 = vmul.f32 %v1685, 1.442695
  %v1687 = vpow.pop %v1686
  %v1688 = vadd.f32 %v1687, 1.0
  %v1689 = vrcp.pop %v1688
  %v1690 = vmul.f32 1.0, %v1689
  %v1691 = vrot.slane %v1675, 4
  %v1693 = vtanh.pop %v1691
  %v1694 = vrot.slane %v1675, 6
  %v1696 = vxor.u32 %v1694, 2147483648
  %v1697 = vmul.f32 %v1696, 1.442695
  %v1698 = vpow.pop %v1697
  %v1699 = vadd.f32 %v1698, 1.0
  %v1700 = vrcp.pop %v1699
  %v1701 = vmul.f32 1.0, %v1700
  %v1702 = vmul.f32 %v1690, %v1376
  %v1703 = vmul.f32 %v1681, %v1693
  %v1704 = vadd.f32 %v1702, %v1703
  %v1705 = vtanh.pop %v1704
  %v1706 = vmul.f32 %v1701, %v1705
  %s1707 = scalar_lea.vmem %s0, 40
  %v1708 = vld [vmem:[%s1707 + $0x4] sm:$0xf]
  %v1709 = vld [vmem:[#allocation4] sm:$0x3]
  %v1710 = vld [vmem:[#allocation5] sm:$0x3]
  %v1711 = vunpack.c.l.bf16 %v1708
  %v1712 = vpack.c.bf16 %v1709, %v1709
  %v1713 = vld [vmem:[%s2] sm:$0xff]
  %v1714 = vld [vmem:[%s2 + $0x8] sm:$0xff]
  %v1715 = vld [vmem:[%s2 + $0x10] sm:$0xff]
  %v1716 = vld [vmem:[%s2 + $0x18] sm:$0xff]
  %v1717 = vld [vmem:[%s2 + $0x20] sm:$0xff]
  %v1718 = vld [vmem:[%s2 + $0x28] sm:$0xff]
  %v1719 = vld [vmem:[%s2 + $0x30] sm:$0xff]
  %v1720 = vld [vmem:[%s2 + $0x38] sm:$0xff]
  %v1721 = vld [vmem:[%s2 + $0x40] sm:$0xff]
  %v1722 = vld [vmem:[%s2 + $0x48] sm:$0xff]
  %v1723 = vld [vmem:[%s2 + $0x50] sm:$0xff]
  %v1724 = vld [vmem:[%s2 + $0x58] sm:$0xff]
  %v1725 = vld [vmem:[%s2 + $0x60] sm:$0xff]
  %v1726 = vld [vmem:[%s2 + $0x68] sm:$0xff]
  %v1727 = vld [vmem:[%s2 + $0x70] sm:$0xff]
  %v1728 = vld [vmem:[%s2 + $0x78] sm:$0xff]
  %v1729 = vld [vmem:[%s2 + $0x80] sm:$0xff]
  %v1730 = vld [vmem:[%s2 + $0x88] sm:$0xff]
  %v1731 = vld [vmem:[%s2 + $0x90] sm:$0xff]
  %v1732 = vld [vmem:[%s2 + $0x98] sm:$0xff]
  %v1733 = vld [vmem:[%s2 + $0xa0] sm:$0xff]
  %v1734 = vld [vmem:[%s2 + $0xa8] sm:$0xff]
  %v1735 = vld [vmem:[%s2 + $0xb0] sm:$0xff]
  %v1736 = vld [vmem:[%s2 + $0xb8] sm:$0xff]
  %v1737 = vld [vmem:[%s2 + $0xc0] sm:$0xff]
  %v1738 = vld [vmem:[%s2 + $0xc8] sm:$0xff]
  %v1739 = vld [vmem:[%s2 + $0xd0] sm:$0xff]
  %v1740 = vld [vmem:[%s2 + $0xd8] sm:$0xff]
  %v1741 = vld [vmem:[%s2 + $0xe0] sm:$0xff]
  %v1742 = vld [vmem:[%s2 + $0xe8] sm:$0xff]
  %v1743 = vld [vmem:[%s2 + $0xf0] sm:$0xff]
  %v1744 = vld [vmem:[%s2 + $0xf8] sm:$0xff]
  %v1777 = vunpack.c.l.b16 %v1713
  %v1778 = vunpack.c.h.b16 %v1713
  %v1779 = vunpack.c.l.b16 %v1714
  %v1780 = vunpack.c.h.b16 %v1714
  %v1781 = vunpack.c.l.b16 %v1715
  %v1782 = vunpack.c.h.b16 %v1715
  %v1783 = vunpack.c.l.b16 %v1716
  %v1784 = vunpack.c.h.b16 %v1716
  %v1785 = vunpack.c.l.b16 %v1717
  %v1786 = vunpack.c.h.b16 %v1717
  %v1787 = vunpack.c.l.b16 %v1718
  %v1788 = vunpack.c.h.b16 %v1718
  %v1789 = vunpack.c.l.b16 %v1719
  %v1790 = vunpack.c.h.b16 %v1719
  %v1791 = vunpack.c.l.b16 %v1720
  %v1792 = vunpack.c.h.b16 %v1720
  %v1793 = vunpack.c.l.b16 %v1721
  %v1794 = vunpack.c.h.b16 %v1721
  %v1795 = vunpack.c.l.b16 %v1722
  %v1796 = vunpack.c.h.b16 %v1722
  %v1797 = vunpack.c.l.b16 %v1723
  %v1798 = vunpack.c.h.b16 %v1723
  %v1799 = vunpack.c.l.b16 %v1724
  %v1800 = vunpack.c.h.b16 %v1724
  %v1801 = vunpack.c.l.b16 %v1725
  %v1802 = vunpack.c.h.b16 %v1725
  %v1803 = vunpack.c.l.b16 %v1726
  %v1804 = vunpack.c.h.b16 %v1726
  %v1805 = vunpack.c.l.b16 %v1727
  %v1806 = vunpack.c.h.b16 %v1727
  %v1807 = vunpack.c.l.b16 %v1728
  %v1808 = vunpack.c.h.b16 %v1728
  %v1809 = vunpack.c.l.b16 %v1729
  %v1810 = vunpack.c.h.b16 %v1729
  %v1811 = vunpack.c.l.b16 %v1730
  %v1812 = vunpack.c.h.b16 %v1730
  %v1813 = vunpack.c.l.b16 %v1731
  %v1814 = vunpack.c.h.b16 %v1731
  %v1815 = vunpack.c.l.b16 %v1732
  %v1816 = vunpack.c.h.b16 %v1732
  %v1817 = vunpack.c.l.b16 %v1733
  %v1818 = vunpack.c.h.b16 %v1733
  %v1819 = vunpack.c.l.b16 %v1734
  %v1820 = vunpack.c.h.b16 %v1734
  %v1821 = vunpack.c.l.b16 %v1735
  %v1822 = vunpack.c.h.b16 %v1735
  %v1823 = vunpack.c.l.b16 %v1736
  %v1824 = vunpack.c.h.b16 %v1736
  %v1825 = vunpack.c.l.b16 %v1737
  %v1826 = vunpack.c.h.b16 %v1737
  %v1827 = vunpack.c.l.b16 %v1738
  %v1828 = vunpack.c.h.b16 %v1738
  %v1829 = vunpack.c.l.b16 %v1739
  %v1830 = vunpack.c.h.b16 %v1739
  %v1831 = vunpack.c.l.b16 %v1740
  %v1832 = vunpack.c.h.b16 %v1740
  %v1833 = vunpack.c.l.b16 %v1741
  %v1834 = vunpack.c.h.b16 %v1741
  %v1835 = vunpack.c.l.b16 %v1742
  %v1836 = vunpack.c.h.b16 %v1742
  %v1837 = vunpack.c.l.b16 %v1743
  %v1838 = vunpack.c.h.b16 %v1743
  %v1839 = vunpack.c.l.b16 %v1744
  %v1840 = vunpack.c.h.b16 %v1744
  %v1841 = vpack.c.b16 %v1781, %v1777
  %v1842 = vpack.c.b16 %v1782, %v1778
  %v1843 = vpack.c.b16 %v1783, %v1779
  %v1844 = vpack.c.b16 %v1784, %v1780
  %v1845 = vpack.c.b16 %v1789, %v1785
  %v1846 = vpack.c.b16 %v1790, %v1786
  %v1847 = vpack.c.b16 %v1791, %v1787
  %v1848 = vpack.c.b16 %v1792, %v1788
  %v1849 = vpack.c.b16 %v1797, %v1793
  %v1850 = vpack.c.b16 %v1798, %v1794
  %v1851 = vpack.c.b16 %v1799, %v1795
  %v1852 = vpack.c.b16 %v1800, %v1796
  %v1853 = vpack.c.b16 %v1805, %v1801
  %v1854 = vpack.c.b16 %v1806, %v1802
  %v1855 = vpack.c.b16 %v1807, %v1803
  %v1856 = vpack.c.b16 %v1808, %v1804
  %v1857 = vpack.c.b16 %v1813, %v1809
  %v1858 = vpack.c.b16 %v1814, %v1810
  %v1859 = vpack.c.b16 %v1815, %v1811
  %v1860 = vpack.c.b16 %v1816, %v1812
  %v1861 = vpack.c.b16 %v1821, %v1817
  %v1862 = vpack.c.b16 %v1822, %v1818
  %v1863 = vpack.c.b16 %v1823, %v1819
  %v1864 = vpack.c.b16 %v1824, %v1820
  %v1865 = vpack.c.b16 %v1829, %v1825
  %v1866 = vpack.c.b16 %v1830, %v1826
  %v1867 = vpack.c.b16 %v1831, %v1827
  %v1868 = vpack.c.b16 %v1832, %v1828
  %v1869 = vpack.c.b16 %v1837, %v1833
  %v1870 = vpack.c.b16 %v1838, %v1834
  %v1871 = vpack.c.b16 %v1839, %v1835
  %v1872 = vpack.c.b16 %v1840, %v1836
  %1905 = vmatprep.subr.bf16.mxu0 %v1842
  %1906 = vmatpush1.bf16.msra.mxu0 %v1841
  %1907 = vmatprep.subr.bf16.mxu0 %v1846
  %1908 = vmatpush1.bf16.msra.mxu0 %v1845
  %1909 = vmatprep.subr.bf16.mxu0 %v1850
  %1910 = vmatpush1.bf16.msra.mxu0 %v1849
  %1911 = vmatprep.subr.bf16.mxu0 %v1854
  %1912 = vmatpush1.bf16.msra.mxu0 %v1853
  %1913 = vmatprep.subr.bf16.mxu0 %v1858
  %1914 = vmatpush1.bf16.msra.mxu0 %v1857
  %1915 = vmatprep.subr.bf16.mxu0 %v1862
  %1916 = vmatpush1.bf16.msra.mxu0 %v1861
  %1917 = vmatprep.subr.bf16.mxu0 %v1866
  %1918 = vmatpush1.bf16.msra.mxu0 %v1865
  %1919 = vmatprep.subr.bf16.mxu0 %v1870
  %1920 = vmatpush1.bf16.msra.mxu0 %v1869
  %1921 = vmatprep.subr.bf16.mxu0 0
  %1922 = vmatpush1.bf16.msra.mxu0 0
  %1923 = vmatprep.subr.bf16.mxu0 0
  %1924 = vmatpush1.bf16.msra.mxu0 0
  %1925 = vmatprep.subr.bf16.mxu0 0
  %1926 = vmatpush1.bf16.msra.mxu0 0
  %1927 = vmatprep.subr.bf16.mxu0 0
  %1928 = vmatpush1.bf16.msra.mxu0 0
  %1929 = vmatprep.subr.bf16.mxu0 0
  %1930 = vmatpush1.bf16.msra.mxu0 0
  %1931 = vmatprep.subr.bf16.mxu0 0
  %1932 = vmatpush1.bf16.msra.mxu0 0
  %1933 = vmatprep.subr.bf16.mxu0 0
  %1934 = vmatpush1.bf16.msra.mxu0 0
  %1935 = vmatprep.subr.bf16.mxu0 0
  %1936 = vmatpush1.bf16.msra.mxu0 0
  %1937 = vmatprep.mubr.bf16.mxu0 0
  %1938 = vmatmul.mubr.bf16.gmra.mrb[0].mxu0 %v1712
  %v1939 = vpop.f32.mrb[0].mxu0
  %v1940 = vadd.f32 0.0, %v1939
  %v1941 = vpop.f32.mrb[0].mxu0
  %v1942 = vadd.f32 0.0, %v1941
  %v1943 = vpop.f32.mrb[0].mxu0
  %v1944 = vpop.f32.mrb[0].mxu0
  %1945 = vdwg.mxu0
  %1946 = vmatprep.subr.bf16.mxu0 %v1844
  %1947 = vmatpush1.bf16.msra.mxu0 %v1843
  %1948 = vmatprep.subr.bf16.mxu0 %v1848
  %1949 = vmatpush1.bf16.msra.mxu0 %v1847
  %1950 = vmatprep.subr.bf16.mxu0 %v1852
  %1951 = vmatpush1.bf16.msra.mxu0 %v1851
  %1952 = vmatprep.subr.bf16.mxu0 %v1856
  %1953 = vmatpush1.bf16.msra.mxu0 %v1855
  %1954 = vmatprep.subr.bf16.mxu0 %v1860
  %1955 = vmatpush1.bf16.msra.mxu0 %v1859
  %1956 = vmatprep.subr.bf16.mxu0 %v1864
  %1957 = vmatpush1.bf16.msra.mxu0 %v1863
  %1958 = vmatprep.subr.bf16.mxu0 %v1868
  %1959 = vmatpush1.bf16.msra.mxu0 %v1867
  %1960 = vmatprep.subr.bf16.mxu0 %v1872
  %1961 = vmatpush1.bf16.msra.mxu0 %v1871
  %1962 = vmatprep.subr.bf16.mxu0 0
  %1963 = vmatpush1.bf16.msra.mxu0 0
  %1964 = vmatprep.subr.bf16.mxu0 0
  %1965 = vmatpush1.bf16.msra.mxu0 0
  %1966 = vmatprep.subr.bf16.mxu0 0
  %1967 = vmatpush1.bf16.msra.mxu0 0
  %1968 = vmatprep.subr.bf16.mxu0 0
  %1969 = vmatpush1.bf16.msra.mxu0 0
  %1970 = vmatprep.subr.bf16.mxu0 0
  %1971 = vmatpush1.bf16.msra.mxu0 0
  %1972 = vmatprep.subr.bf16.mxu0 0
  %1973 = vmatpush1.bf16.msra.mxu0 0
  %1974 = vmatprep.subr.bf16.mxu0 0
  %1975 = vmatpush1.bf16.msra.mxu0 0
  %1976 = vmatprep.subr.bf16.mxu0 0
  %1977 = vmatpush1.bf16.msra.mxu0 0
  %1978 = vmatprep.mubr.bf16.mxu0 0
  %1979 = vmatmul.mubr.bf16.gmra.mrb[0].mxu0 %v1712
  %v1980 = vpop.f32.mrb[0].mxu0
  %v1981 = vadd.f32 0.0, %v1980
  %v1982 = vpop.f32.mrb[0].mxu0
  %v1983 = vadd.f32 0.0, %v1982
  %v1984 = vpop.f32.mrb[0].mxu0
  %v1985 = vpop.f32.mrb[0].mxu0
  %1986 = vdwg.mxu0
  %v1991 = vcombine.low %v1940, %v1942
  %v1992 = vcombine.low %v1981, %v1983
  %v1994 = vunpack.c.l.s4 1983009808
  %v1995 = vunpack.c.0.s8 %v1994
  %v1996 = vlaneseq
  %v1997 = vshrl.u32 %v1996, 7
  %v1998 = vsub.s32 %v1995, %v1997
  %v1999 = vrot.slane %v1991, %v1998
  %v2001 = vunpack.c.l.s4 1983009808
  %v2002 = vunpack.c.0.s8 %v2001
  %v2003 = vlaneseq
  %v2004 = vshrl.u32 %v2003, 7
  %v2005 = vsub.s32 %v2002, %v2004
  %v2006 = vrot.slane %v1992, %v2005
  %v2007 = vcombine.low %v1999, %v2006
  %v2009 = vadd.f32 %v1711, %v2007
  %v2010 = vxor.u32 %v2009, 2147483648
  %v2011 = vmul.f32 %v2010, 1.442695
  %v2012 = vpow.pop %v2011
  %v2013 = vadd.f32 %v2012, 1.0
  %v2014 = vrcp.pop %v2013
  %v2015 = vmul.f32 1.0, %v2014
  %v2017 = vrot.slane %v2009, 2
  %v2019 = vxor.u32 %v2017, 2147483648
  %v2020 = vmul.f32 %v2019, 1.442695
  %v2021 = vpow.pop %v2020
  %v2022 = vadd.f32 %v2021, 1.0
  %v2023 = vrcp.pop %v2022
  %v2024 = vmul.f32 1.0, %v2023
  %v2025 = vrot.slane %v2009, 4
  %v2027 = vtanh.pop %v2025
  %v2028 = vrot.slane %v2009, 6
  %v2030 = vxor.u32 %v2028, 2147483648
  %v2031 = vmul.f32 %v2030, 1.442695
  %v2032 = vpow.pop %v2031
  %v2033 = vadd.f32 %v2032, 1.0
  %v2034 = vrcp.pop %v2033
  %v2035 = vmul.f32 1.0, %v2034
  %v2036 = vmul.f32 %v2024, %v1710
  %v2037 = vmul.f32 %v2015, %v2027
  %v2038 = vadd.f32 %v2036, %v2037
  %v2039 = vtanh.pop %v2038
  %v2040 = vmul.f32 %v2035, %v2039
  %2041 = vst [vmem:[#allocation2] sm:$0x3] %v1706
  %2042 = vst [vmem:[#allocation3] sm:$0x3] %v1704
  %2043 = vst [vmem:[#allocation4] sm:$0x3] %v2040
  %2044 = vst [vmem:[#allocation5] sm:$0x3] %v2038
  %v2045 = vpack.c.bf16 %v1706, %v1706
  %s2046 = scalar_lea.vmem %s3, 4
  %2047 = vst [vmem:[%s2046] sm:$0x1] %v2045
  %v2048 = vpack.c.bf16 %v2040, %v2040
  %s2049 = scalar_lea.vmem %s3, 10
  %2050 = vst [vmem:[%s2049 + $0x1] sm:$0x1] %v2048
  %s2051 = scalar_lea.vmem %s0, 24
  %v2052 = vld [vmem:[%s2051] sm:$0xf]
  %v2053 = vld [vmem:[#allocation2] sm:$0x3]
  %v2054 = vld [vmem:[#allocation3] sm:$0x3]
  %v2055 = vunpack.c.l.bf16 %v2052
  %v2056 = vpack.c.bf16 %v2053, %v2053
  %v2057 = vld [vmem:[%s1] sm:$0xff]
  %v2058 = vld [vmem:[%s1 + $0x8] sm:$0xff]
  %v2059 = vld [vmem:[%s1 + $0x10] sm:$0xff]
  %v2060 = vld [vmem:[%s1 + $0x18] sm:$0xff]
  %v2061 = vld [vmem:[%s1 + $0x20] sm:$0xff]
  %v2062 = vld [vmem:[%s1 + $0x28] sm:$0xff]
  %v2063 = vld [vmem:[%s1 + $0x30] sm:$0xff]
  %v2064 = vld [vmem:[%s1 + $0x38] sm:$0xff]
  %v2065 = vld [vmem:[%s1 + $0x40] sm:$0xff]
  %v2066 = vld [vmem:[%s1 + $0x48] sm:$0xff]
  %v2067 = vld [vmem:[%s1 + $0x50] sm:$0xff]
  %v2068 = vld [vmem:[%s1 + $0x58] sm:$0xff]
  %v2069 = vld [vmem:[%s1 + $0x60] sm:$0xff]
  %v2070 = vld [vmem:[%s1 + $0x68] sm:$0xff]
  %v2071 = vld [vmem:[%s1 + $0x70] sm:$0xff]
  %v2072 = vld [vmem:[%s1 + $0x78] sm:$0xff]
  %v2073 = vld [vmem:[%s1 + $0x80] sm:$0xff]
  %v2074 = vld [vmem:[%s1 + $0x88] sm:$0xff]
  %v2075 = vld [vmem:[%s1 + $0x90] sm:$0xff]
  %v2076 = vld [vmem:[%s1 + $0x98] sm:$0xff]
  %v2077 = vld [vmem:[%s1 + $0xa0] sm:$0xff]
  %v2078 = vld [vmem:[%s1 + $0xa8] sm:$0xff]
  %v2079 = vld [vmem:[%s1 + $0xb0] sm:$0xff]
  %v2080 = vld [vmem:[%s1 + $0xb8] sm:$0xff]
  %v2081 = vld [vmem:[%s1 + $0xc0] sm:$0xff]
  %v2082 = vld [vmem:[%s1 + $0xc8] sm:$0xff]
  %v2083 = vld [vmem:[%s1 + $0xd0] sm:$0xff]
  %v2084 = vld [vmem:[%s1 + $0xd8] sm:$0xff]
  %v2085 = vld [vmem:[%s1 + $0xe0] sm:$0xff]
  %v2086 = vld [vmem:[%s1 + $0xe8] sm:$0xff]
  %v2087 = vld [vmem:[%s1 + $0xf0] sm:$0xff]
  %v2088 = vld [vmem:[%s1 + $0xf8] sm:$0xff]
  %v2121 = vunpack.c.l.b16 %v2057
  %v2122 = vunpack.c.h.b16 %v2057
  %v2123 = vunpack.c.l.b16 %v2058
  %v2124 = vunpack.c.h.b16 %v2058
  %v2125 = vunpack.c.l.b16 %v2059
  %v2126 = vunpack.c.h.b16 %v2059
  %v2127 = vunpack.c.l.b16 %v2060
  %v2128 = vunpack.c.h.b16 %v2060
  %v2129 = vunpack.c.l.b16 %v2061
  %v2130 = vunpack.c.h.b16 %v2061
  %v2131 = vunpack.c.l.b16 %v2062
  %v2132 = vunpack.c.h.b16 %v2062
  %v2133 = vunpack.c.l.b16 %v2063
  %v2134 = vunpack.c.h.b16 %v2063
  %v2135 = vunpack.c.l.b16 %v2064
  %v2136 = vunpack.c.h.b16 %v2064
  %v2137 = vunpack.c.l.b16 %v2065
  %v2138 = vunpack.c.h.b16 %v2065
  %v2139 = vunpack.c.l.b16 %v2066
  %v2140 = vunpack.c.h.b16 %v2066
  %v2141 = vunpack.c.l.b16 %v2067
  %v2142 = vunpack.c.h.b16 %v2067
  %v2143 = vunpack.c.l.b16 %v2068
  %v2144 = vunpack.c.h.b16 %v2068
  %v2145 = vunpack.c.l.b16 %v2069
  %v2146 = vunpack.c.h.b16 %v2069
  %v2147 = vunpack.c.l.b16 %v2070
  %v2148 = vunpack.c.h.b16 %v2070
  %v2149 = vunpack.c.l.b16 %v2071
  %v2150 = vunpack.c.h.b16 %v2071
  %v2151 = vunpack.c.l.b16 %v2072
  %v2152 = vunpack.c.h.b16 %v2072
  %v2153 = vunpack.c.l.b16 %v2073
  %v2154 = vunpack.c.h.b16 %v2073
  %v2155 = vunpack.c.l.b16 %v2074
  %v2156 = vunpack.c.h.b16 %v2074
  %v2157 = vunpack.c.l.b16 %v2075
  %v2158 = vunpack.c.h.b16 %v2075
  %v2159 = vunpack.c.l.b16 %v2076
  %v2160 = vunpack.c.h.b16 %v2076
  %v2161 = vunpack.c.l.b16 %v2077
  %v2162 = vunpack.c.h.b16 %v2077
  %v2163 = vunpack.c.l.b16 %v2078
  %v2164 = vunpack.c.h.b16 %v2078
  %v2165 = vunpack.c.l.b16 %v2079
  %v2166 = vunpack.c.h.b16 %v2079
  %v2167 = vunpack.c.l.b16 %v2080
  %v2168 = vunpack.c.h.b16 %v2080
  %v2169 = vunpack.c.l.b16 %v2081
  %v2170 = vunpack.c.h.b16 %v2081
  %v2171 = vunpack.c.l.b16 %v2082
  %v2172 = vunpack.c.h.b16 %v2082
  %v2173 = vunpack.c.l.b16 %v2083
  %v2174 = vunpack.c.h.b16 %v2083
  %v2175 = vunpack.c.l.b16 %v2084
  %v2176 = vunpack.c.h.b16 %v2084
  %v2177 = vunpack.c.l.b16 %v2085
  %v2178 = vunpack.c.h.b16 %v2085
  %v2179 = vunpack.c.l.b16 %v2086
  %v2180 = vunpack.c.h.b16 %v2086
  %v2181 = vunpack.c.l.b16 %v2087
  %v2182 = vunpack.c.h.b16 %v2087
  %v2183 = vunpack.c.l.b16 %v2088
  %v2184 = vunpack.c.h.b16 %v2088
  %v2185 = vpack.c.b16 %v2125, %v2121
  %v2186 = vpack.c.b16 %v2126, %v2122
  %v2187 = vpack.c.b16 %v2127, %v2123
  %v2188 = vpack.c.b16 %v2128, %v2124
  %v2189 = vpack.c.b16 %v2133, %v2129
  %v2190 = vpack.c.b16 %v2134, %v2130
  %v2191 = vpack.c.b16 %v2135, %v2131
  %v2192 = vpack.c.b16 %v2136, %v2132
  %v2193 = vpack.c.b16 %v2141, %v2137
  %v2194 = vpack.c.b16 %v2142, %v2138
  %v2195 = vpack.c.b16 %v2143, %v2139
  %v2196 = vpack.c.b16 %v2144, %v2140
  %v2197 = vpack.c.b16 %v2149, %v2145
  %v2198 = vpack.c.b16 %v2150, %v2146
  %v2199 = vpack.c.b16 %v2151, %v2147
  %v2200 = vpack.c.b16 %v2152, %v2148
  %v2201 = vpack.c.b16 %v2157, %v2153
  %v2202 = vpack.c.b16 %v2158, %v2154
  %v2203 = vpack.c.b16 %v2159, %v2155
  %v2204 = vpack.c.b16 %v2160, %v2156
  %v2205 = vpack.c.b16 %v2165, %v2161
  %v2206 = vpack.c.b16 %v2166, %v2162
  %v2207 = vpack.c.b16 %v2167, %v2163
  %v2208 = vpack.c.b16 %v2168, %v2164
  %v2209 = vpack.c.b16 %v2173, %v2169
  %v2210 = vpack.c.b16 %v2174, %v2170
  %v2211 = vpack.c.b16 %v2175, %v2171
  %v2212 = vpack.c.b16 %v2176, %v2172
  %v2213 = vpack.c.b16 %v2181, %v2177
  %v2214 = vpack.c.b16 %v2182, %v2178
  %v2215 = vpack.c.b16 %v2183, %v2179
  %v2216 = vpack.c.b16 %v2184, %v2180
  %2249 = vmatprep.subr.bf16.mxu0 %v2186
  %2250 = vmatpush1.bf16.msra.mxu0 %v2185
  %2251 = vmatprep.subr.bf16.mxu0 %v2190
  %2252 = vmatpush1.bf16.msra.mxu0 %v2189
  %2253 = vmatprep.subr.bf16.mxu0 %v2194
  %2254 = vmatpush1.bf16.msra.mxu0 %v2193
  %2255 = vmatprep.subr.bf16.mxu0 %v2198
  %2256 = vmatpush1.bf16.msra.mxu0 %v2197
  %2257 = vmatprep.subr.bf16.mxu0 %v2202
  %2258 = vmatpush1.bf16.msra.mxu0 %v2201
  %2259 = vmatprep.subr.bf16.mxu0 %v2206
  %2260 = vmatpush1.bf16.msra.mxu0 %v2205
  %2261 = vmatprep.subr.bf16.mxu0 %v2210
  %2262 = vmatpush1.bf16.msra.mxu0 %v2209
  %2263 = vmatprep.subr.bf16.mxu0 %v2214
  %2264 = vmatpush1.bf16.msra.mxu0 %v2213
  %2265 = vmatprep.subr.bf16.mxu0 0
  %2266 = vmatpush1.bf16.msra.mxu0 0
  %2267 = vmatprep.subr.bf16.mxu0 0
  %2268 = vmatpush1.bf16.msra.mxu0 0
  %2269 = vmatprep.subr.bf16.mxu0 0
  %2270 = vmatpush1.bf16.msra.mxu0 0
  %2271 = vmatprep.subr.bf16.mxu0 0
  %2272 = vmatpush1.bf16.msra.mxu0 0
  %2273 = vmatprep.subr.bf16.mxu0 0
  %2274 = vmatpush1.bf16.msra.mxu0 0
  %2275 = vmatprep.subr.bf16.mxu0 0
  %2276 = vmatpush1.bf16.msra.mxu0 0
  %2277 = vmatprep.subr.bf16.mxu0 0
  %2278 = vmatpush1.bf16.msra.mxu0 0
  %2279 = vmatprep.subr.bf16.mxu0 0
  %2280 = vmatpush1.bf16.msra.mxu0 0
  %2281 = vmatprep.mubr.bf16.mxu0 0
  %2282 = vmatmul.mubr.bf16.gmra.mrb[0].mxu0 %v2056
  %v2283 = vpop.f32.mrb[0].mxu0
  %v2284 = vadd.f32 0.0, %v2283
  %v2285 = vpop.f32.mrb[0].mxu0
  %v2286 = vadd.f32 0.0, %v2285
  %v2287 = vpop.f32.mrb[0].mxu0
  %v2288 = vpop.f32.mrb[0].mxu0
  %2289 = vdwg.mxu0
  %2290 = vmatprep.subr.bf16.mxu0 %v2188
  %2291 = vmatpush1.bf16.msra.mxu0 %v2187
  %2292 = vmatprep.subr.bf16.mxu0 %v2192
  %2293 = vmatpush1.bf16.msra.mxu0 %v2191
  %2294 = vmatprep.subr.bf16.mxu0 %v2196
  %2295 = vmatpush1.bf16.msra.mxu0 %v2195
  %2296 = vmatprep.subr.bf16.mxu0 %v2200
  %2297 = vmatpush1.bf16.msra.mxu0 %v2199
  %2298 = vmatprep.subr.bf16.mxu0 %v2204
  %2299 = vmatpush1.bf16.msra.mxu0 %v2203
  %2300 = vmatprep.subr.bf16.mxu0 %v2208
  %2301 = vmatpush1.bf16.msra.mxu0 %v2207
  %2302 = vmatprep.subr.bf16.mxu0 %v2212
  %2303 = vmatpush1.bf16.msra.mxu0 %v2211
  %2304 = vmatprep.subr.bf16.mxu0 %v2216
  %2305 = vmatpush1.bf16.msra.mxu0 %v2215
  %2306 = vmatprep.subr.bf16.mxu0 0
  %2307 = vmatpush1.bf16.msra.mxu0 0
  %2308 = vmatprep.subr.bf16.mxu0 0
  %2309 = vmatpush1.bf16.msra.mxu0 0
  %2310 = vmatprep.subr.bf16.mxu0 0
  %2311 = vmatpush1.bf16.msra.mxu0 0
  %2312 = vmatprep.subr.bf16.mxu0 0
  %2313 = vmatpush1.bf16.msra.mxu0 0
  %2314 = vmatprep.subr.bf16.mxu0 0
  %2315 = vmatpush1.bf16.msra.mxu0 0
  %2316 = vmatprep.subr.bf16.mxu0 0
  %2317 = vmatpush1.bf16.msra.mxu0 0
  %2318 = vmatprep.subr.bf16.mxu0 0
  %2319 = vmatpush1.bf16.msra.mxu0 0
  %2320 = vmatprep.subr.bf16.mxu0 0
  %2321 = vmatpush1.bf16.msra.mxu0 0
  %2322 = vmatprep.mubr.bf16.mxu0 0
  %2323 = vmatmul.mubr.bf16.gmra.mrb[0].mxu0 %v2056
  %v2324 = vpop.f32.mrb[0].mxu0
  %v2325 = vadd.f32 0.0, %v2324
  %v2326 = vpop.f32.mrb[0].mxu0
  %v2327 = vadd.f32 0.0, %v2326
  %v2328 = vpop.f32.mrb[0].mxu0
  %v2329 = vpop.f32.mrb[0].mxu0
  %2330 = vdwg.mxu0
  %v2335 = vcombine.low %v2284, %v2286
  %v2336 = vcombine.low %v2325, %v2327
  %v2338 = vunpack.c.l.s4 1983009808
  %v2339 = vunpack.c.0.s8 %v2338
  %v2340 = vlaneseq
  %v2341 = vshrl.u32 %v2340, 7
  %v2342 = vsub.s32 %v2339, %v2341
  %v2343 = vrot.slane %v2335, %v2342
  %v2345 = vunpack.c.l.s4 1983009808
  %v2346 = vunpack.c.0.s8 %v2345
  %v2347 = vlaneseq
  %v2348 = vshrl.u32 %v2347, 7
  %v2349 = vsub.s32 %v2346, %v2348
  %v2350 = vrot.slane %v2336, %v2349
  %v2351 = vcombine.low %v2343, %v2350
  %v2353 = vadd.f32 %v2055, %v2351
  %v2354 = vxor.u32 %v2353, 2147483648
  %v2355 = vmul.f32 %v2354, 1.442695
  %v2356 = vpow.pop %v2355
  %v2357 = vadd.f32 %v2356, 1.0
  %v2358 = vrcp.pop %v2357
  %v2359 = vmul.f32 1.0, %v2358
  %v2361 = vrot.slane %v2353, 2
  %v2363 = vxor.u32 %v2361, 2147483648
  %v2364 = vmul.f32 %v2363, 1.442695
  %v2365 = vpow.pop %v2364
  %v2366 = vadd.f32 %v2365, 1.0
  %v2367 = vrcp.pop %v2366
  %v2368 = vmul.f32 1.0, %v2367
  %v2369 = vrot.slane %v2353, 4
  %v2371 = vtanh.pop %v2369
  %v2372 = vrot.slane %v2353, 6
  %v2374 = vxor.u32 %v2372, 2147483648
  %v2375 = vmul.f32 %v2374, 1.442695
  %v2376 = vpow.pop %v2375
  %v2377 = vadd.f32 %v2376, 1.0
  %v2378 = vrcp.pop %v2377
  %v2379 = vmul.f32 1.0, %v2378
  %v2380 = vmul.f32 %v2368, %v2054
  %v2381 = vmul.f32 %v2359, %v2371
  %v2382 = vadd.f32 %v2380, %v2381
  %v2383 = vtanh.pop %v2382
  %v2384 = vmul.f32 %v2379, %v2383
  %s2385 = scalar_lea.vmem %s0, 32
  %v2386 = vld [vmem:[%s2385 + $0x4] sm:$0xf]
  %v2387 = vld [vmem:[#allocation4] sm:$0x3]
  %v2388 = vld [vmem:[#allocation5] sm:$0x3]
  %v2389 = vunpack.c.l.bf16 %v2386
  %v2390 = vpack.c.bf16 %v2387, %v2387
  %v2391 = vld [vmem:[%s2] sm:$0xff]
  %v2392 = vld [vmem:[%s2 + $0x8] sm:$0xff]
  %v2393 = vld [vmem:[%s2 + $0x10] sm:$0xff]
  %v2394 = vld [vmem:[%s2 + $0x18] sm:$0xff]
  %v2395 = vld [vmem:[%s2 + $0x20] sm:$0xff]
  %v2396 = vld [vmem:[%s2 + $0x28] sm:$0xff]
  %v2397 = vld [vmem:[%s2 + $0x30] sm:$0xff]
  %v2398 = vld [vmem:[%s2 + $0x38] sm:$0xff]
  %v2399 = vld [vmem:[%s2 + $0x40] sm:$0xff]
  %v2400 = vld [vmem:[%s2 + $0x48] sm:$0xff]
  %v2401 = vld [vmem:[%s2 + $0x50] sm:$0xff]
  %v2402 = vld [vmem:[%s2 + $0x58] sm:$0xff]
  %v2403 = vld [vmem:[%s2 + $0x60] sm:$0xff]
  %v2404 = vld [vmem:[%s2 + $0x68] sm:$0xff]
  %v2405 = vld [vmem:[%s2 + $0x70] sm:$0xff]
  %v2406 = vld [vmem:[%s2 + $0x78] sm:$0xff]
  %v2407 = vld [vmem:[%s2 + $0x80] sm:$0xff]
  %v2408 = vld [vmem:[%s2 + $0x88] sm:$0xff]
  %v2409 = vld [vmem:[%s2 + $0x90] sm:$0xff]
  %v2410 = vld [vmem:[%s2 + $0x98] sm:$0xff]
  %v2411 = vld [vmem:[%s2 + $0xa0] sm:$0xff]
  %v2412 = vld [vmem:[%s2 + $0xa8] sm:$0xff]
  %v2413 = vld [vmem:[%s2 + $0xb0] sm:$0xff]
  %v2414 = vld [vmem:[%s2 + $0xb8] sm:$0xff]
  %v2415 = vld [vmem:[%s2 + $0xc0] sm:$0xff]
  %v2416 = vld [vmem:[%s2 + $0xc8] sm:$0xff]
  %v2417 = vld [vmem:[%s2 + $0xd0] sm:$0xff]
  %v2418 = vld [vmem:[%s2 + $0xd8] sm:$0xff]
  %v2419 = vld [vmem:[%s2 + $0xe0] sm:$0xff]
  %v2420 = vld [vmem:[%s2 + $0xe8] sm:$0xff]
  %v2421 = vld [vmem:[%s2 + $0xf0] sm:$0xff]
  %v2422 = vld [vmem:[%s2 + $0xf8] sm:$0xff]
  %v2455 = vunpack.c.l.b16 %v2391
  %v2456 = vunpack.c.h.b16 %v2391
  %v2457 = vunpack.c.l.b16 %v2392
  %v2458 = vunpack.c.h.b16 %v2392
  %v2459 = vunpack.c.l.b16 %v2393
  %v2460 = vunpack.c.h.b16 %v2393
  %v2461 = vunpack.c.l.b16 %v2394
  %v2462 = vunpack.c.h.b16 %v2394
  %v2463 = vunpack.c.l.b16 %v2395
  %v2464 = vunpack.c.h.b16 %v2395
  %v2465 = vunpack.c.l.b16 %v2396
  %v2466 = vunpack.c.h.b16 %v2396
  %v2467 = vunpack.c.l.b16 %v2397
  %v2468 = vunpack.c.h.b16 %v2397
  %v2469 = vunpack.c.l.b16 %v2398
  %v2470 = vunpack.c.h.b16 %v2398
  %v2471 = vunpack.c.l.b16 %v2399
  %v2472 = vunpack.c.h.b16 %v2399
  %v2473 = vunpack.c.l.b16 %v2400
  %v2474 = vunpack.c.h.b16 %v2400
  %v2475 = vunpack.c.l.b16 %v2401
  %v2476 = vunpack.c.h.b16 %v2401
  %v2477 = vunpack.c.l.b16 %v2402
  %v2478 = vunpack.c.h.b16 %v2402
  %v2479 = vunpack.c.l.b16 %v2403
  %v2480 = vunpack.c.h.b16 %v2403
  %v2481 = vunpack.c.l.b16 %v2404
  %v2482 = vunpack.c.h.b16 %v2404
  %v2483 = vunpack.c.l.b16 %v2405
  %v2484 = vunpack.c.h.b16 %v2405
  %v2485 = vunpack.c.l.b16 %v2406
  %v2486 = vunpack.c.h.b16 %v2406
  %v2487 = vunpack.c.l.b16 %v2407
  %v2488 = vunpack.c.h.b16 %v2407
  %v2489 = vunpack.c.l.b16 %v2408
  %v2490 = vunpack.c.h.b16 %v2408
  %v2491 = vunpack.c.l.b16 %v2409
  %v2492 = vunpack.c.h.b16 %v2409
  %v2493 = vunpack.c.l.b16 %v2410
  %v2494 = vunpack.c.h.b16 %v2410
  %v2495 = vunpack.c.l.b16 %v2411
  %v2496 = vunpack.c.h.b16 %v2411
  %v2497 = vunpack.c.l.b16 %v2412
  %v2498 = vunpack.c.h.b16 %v2412
  %v2499 = vunpack.c.l.b16 %v2413
  %v2500 = vunpack.c.h.b16 %v2413
  %v2501 = vunpack.c.l.b16 %v2414
  %v2502 = vunpack.c.h.b16 %v2414
  %v2503 = vunpack.c.l.b16 %v2415
  %v2504 = vunpack.c.h.b16 %v2415
  %v2505 = vunpack.c.l.b16 %v2416
  %v2506 = vunpack.c.h.b16 %v2416
  %v2507 = vunpack.c.l.b16 %v2417
  %v2508 = vunpack.c.h.b16 %v2417
  %v2509 = vunpack.c.l.b16 %v2418
  %v2510 = vunpack.c.h.b16 %v2418
  %v2511 = vunpack.c.l.b16 %v2419
  %v2512 = vunpack.c.h.b16 %v2419
  %v2513 = vunpack.c.l.b16 %v2420
  %v2514 = vunpack.c.h.b16 %v2420
  %v2515 = vunpack.c.l.b16 %v2421
  %v2516 = vunpack.c.h.b16 %v2421
  %v2517 = vunpack.c.l.b16 %v2422
  %v2518 = vunpack.c.h.b16 %v2422
  %v2519 = vpack.c.b16 %v2459, %v2455
  %v2520 = vpack.c.b16 %v2460, %v2456
  %v2521 = vpack.c.b16 %v2461, %v2457
  %v2522 = vpack.c.b16 %v2462, %v2458
  %v2523 = vpack.c.b16 %v2467, %v2463
  %v2524 = vpack.c.b16 %v2468, %v2464
  %v2525 = vpack.c.b16 %v2469, %v2465
  %v2526 = vpack.c.b16 %v2470, %v2466
  %v2527 = vpack.c.b16 %v2475, %v2471
  %v2528 = vpack.c.b16 %v2476, %v2472
  %v2529 = vpack.c.b16 %v2477, %v2473
  %v2530 = vpack.c.b16 %v2478, %v2474
  %v2531 = vpack.c.b16 %v2483, %v2479
  %v2532 = vpack.c.b16 %v2484, %v2480
  %v2533 = vpack.c.b16 %v2485, %v2481
  %v2534 = vpack.c.b16 %v2486, %v2482
  %v2535 = vpack.c.b16 %v2491, %v2487
  %v2536 = vpack.c.b16 %v2492, %v2488
  %v2537 = vpack.c.b16 %v2493, %v2489
  %v2538 = vpack.c.b16 %v2494, %v2490
  %v2539 = vpack.c.b16 %v2499, %v2495
  %v2540 = vpack.c.b16 %v2500, %v2496
  %v2541 = vpack.c.b16 %v2501, %v2497
  %v2542 = vpack.c.b16 %v2502, %v2498
  %v2543 = vpack.c.b16 %v2507, %v2503
  %v2544 = vpack.c.b16 %v2508, %v2504
  %v2545 = vpack.c.b16 %v2509, %v2505
  %v2546 = vpack.c.b16 %v2510, %v2506
  %v2547 = vpack.c.b16 %v2515, %v2511
  %v2548 = vpack.c.b16 %v2516, %v2512
  %v2549 = vpack.c.b16 %v2517, %v2513
  %v2550 = vpack.c.b16 %v2518, %v2514
  %2583 = vmatprep.subr.bf16.mxu0 %v2520
  %2584 = vmatpush1.bf16.msra.mxu0 %v2519
  %2585 = vmatprep.subr.bf16.mxu0 %v2524
  %2586 = vmatpush1.bf16.msra.mxu0 %v2523
  %2587 = vmatprep.subr.bf16.mxu0 %v2528
  %2588 = vmatpush1.bf16.msra.mxu0 %v2527
  %2589 = vmatprep.subr.bf16.mxu0 %v2532
  %2590 = vmatpush1.bf16.msra.mxu0 %v2531
  %2591 = vmatprep.subr.bf16.mxu0 %v2536
  %2592 = vmatpush1.bf16.msra.mxu0 %v2535
  %2593 = vmatprep.subr.bf16.mxu0 %v2540
  %2594 = vmatpush1.bf16.msra.mxu0 %v2539
  %2595 = vmatprep.subr.bf16.mxu0 %v2544
  %2596 = vmatpush1.bf16.msra.mxu0 %v2543
  %2597 = vmatprep.subr.bf16.mxu0 %v2548
  %2598 = vmatpush1.bf16.msra.mxu0 %v2547
  %2599 = vmatprep.subr.bf16.mxu0 0
  %2600 = vmatpush1.bf16.msra.mxu0 0
  %2601 = vmatprep.subr.bf16.mxu0 0
  %2602 = vmatpush1.bf16.msra.mxu0 0
  %2603 = vmatprep.subr.bf16.mxu0 0
  %2604 = vmatpush1.bf16.msra.mxu0 0
  %2605 = vmatprep.subr.bf16.mxu0 0
  %2606 = vmatpush1.bf16.msra.mxu0 0
  %2607 = vmatprep.subr.bf16.mxu0 0
  %2608 = vmatpush1.bf16.msra.mxu0 0
  %2609 = vmatprep.subr.bf16.mxu0 0
  %2610 = vmatpush1.bf16.msra.mxu0 0
  %2611 = vmatprep.subr.bf16.mxu0 0
  %2612 = vmatpush1.bf16.msra.mxu0 0
  %2613 = vmatprep.subr.bf16.mxu0 0
  %2614 = vmatpush1.bf16.msra.mxu0 0
  %2615 = vmatprep.mubr.bf16.mxu0 0
  %2616 = vmatmul.mubr.bf16.gmra.mrb[0].mxu0 %v2390
  %v2617 = vpop.f32.mrb[0].mxu0
  %v2618 = vadd.f32 0.0, %v2617
  %v2619 = vpop.f32.mrb[0].mxu0
  %v2620 = vadd.f32 0.0, %v2619
  %v2621 = vpop.f32.mrb[0].mxu0
  %v2622 = vpop.f32.mrb[0].mxu0
  %2623 = vdwg.mxu0
  %2624 = vmatprep.subr.bf16.mxu0 %v2522
  %2625 = vmatpush1.bf16.msra.mxu0 %v2521
  %2626 = vmatprep.subr.bf16.mxu0 %v2526
  %2627 = vmatpush1.bf16.msra.mxu0 %v2525
  %2628 = vmatprep.subr.bf16.mxu0 %v2530
  %2629 = vmatpush1.bf16.msra.mxu0 %v2529
  %2630 = vmatprep.subr.bf16.mxu0 %v2534
  %2631 = vmatpush1.bf16.msra.mxu0 %v2533
  %2632 = vmatprep.subr.bf16.mxu0 %v2538
  %2633 = vmatpush1.bf16.msra.mxu0 %v2537
  %2634 = vmatprep.subr.bf16.mxu0 %v2542
  %2635 = vmatpush1.bf16.msra.mxu0 %v2541
  %2636 = vmatprep.subr.bf16.mxu0 %v2546
  %2637 = vmatpush1.bf16.msra.mxu0 %v2545
  %2638 = vmatprep.subr.bf16.mxu0 %v2550
  %2639 = vmatpush1.bf16.msra.mxu0 %v2549
  %2640 = vmatprep.subr.bf16.mxu0 0
  %2641 = vmatpush1.bf16.msra.mxu0 0
  %2642 = vmatprep.subr.bf16.mxu0 0
  %2643 = vmatpush1.bf16.msra.mxu0 0
  %2644 = vmatprep.subr.bf16.mxu0 0
  %2645 = vmatpush1.bf16.msra.mxu0 0
  %2646 = vmatprep.subr.bf16.mxu0 0
  %2647 = vmatpush1.bf16.msra.mxu0 0
  %2648 = vmatprep.subr.bf16.mxu0 0
  %2649 = vmatpush1.bf16.msra.mxu0 0
  %2650 = vmatprep.subr.bf16.mxu0 0
  %2651 = vmatpush1.bf16.msra.mxu0 0
  %2652 = vmatprep.subr.bf16.mxu0 0
  %2653 = vmatpush1.bf16.msra.mxu0 0
  %2654 = vmatprep.subr.bf16.mxu0 0
  %2655 = vmatpush1.bf16.msra.mxu0 0
  %2656 = vmatprep.mubr.bf16.mxu0 0
  %2657 = vmatmul.mubr.bf16.gmra.mrb[0].mxu0 %v2390
  %v2658 = vpop.f32.mrb[0].mxu0
  %v2659 = vadd.f32 0.0, %v2658
  %v2660 = vpop.f32.mrb[0].mxu0
  %v2661 = vadd.f32 0.0, %v2660
  %v2662 = vpop.f32.mrb[0].mxu0
  %v2663 = vpop.f32.mrb[0].mxu0
  %2664 = vdwg.mxu0
  %v2669 = vcombine.low %v2618, %v2620
  %v2670 = vcombine.low %v2659, %v2661
  %v2672 = vunpack.c.l.s4 1983009808
  %v2673 = vunpack.c.0.s8 %v2672
  %v2674 = vlaneseq
  %v2675 = vshrl.u32 %v2674, 7
  %v2676 = vsub.s32 %v2673, %v2675
  %v2677 = vrot.slane %v2669, %v2676
  %v2679 = vunpack.c.l.s4 1983009808
  %v2680 = vunpack.c.0.s8 %v2679
  %v2681 = vlaneseq
  %v2682 = vshrl.u32 %v2681, 7
  %v2683 = vsub.s32 %v2680, %v2682
  %v2684 = vrot.slane %v2670, %v2683
  %v2685 = vcombine.low %v2677, %v2684
  %v2687 = vadd.f32 %v2389, %v2685
  %v2688 = vxor.u32 %v2687, 2147483648
  %v2689 = vmul.f32 %v2688, 1.442695
  %v2690 = vpow.pop %v2689
  %v2691 = vadd.f32 %v2690, 1.0
  %v2692 = vrcp.pop %v2691
  %v2693 = vmul.f32 1.0, %v2692
  %v2695 = vrot.slane %v2687, 2
  %v2697 = vxor.u32 %v2695, 2147483648
  %v2698 = vmul.f32 %v2697, 1.442695
  %v2699 = vpow.pop %v2698
  %v2700 = vadd.f32 %v2699, 1.0
  %v2701 = vrcp.pop %v2700
  %v2702 = vmul.f32 1.0, %v2701
  %v2703 = vrot.slane %v2687, 4
  %v2705 = vtanh.pop %v2703
  %v2706 = vrot.slane %v2687, 6
  %v2708 = vxor.u32 %v2706, 2147483648
  %v2709 = vmul.f32 %v2708, 1.442695
  %v2710 = vpow.pop %v2709
  %v2711 = vadd.f32 %v2710, 1.0
  %v2712 = vrcp.pop %v2711
  %v2713 = vmul.f32 1.0, %v2712
  %v2714 = vmul.f32 %v2702, %v2388
  %v2715 = vmul.f32 %v2693, %v2705
  %v2716 = vadd.f32 %v2714, %v2715
  %v2717 = vtanh.pop %v2716
  %v2718 = vmul.f32 %v2713, %v2717
  %2719 = vst [vmem:[#allocation2] sm:$0x3] %v2384
  %2720 = vst [vmem:[#allocation3] sm:$0x3] %v2382
  %2721 = vst [vmem:[#allocation4] sm:$0x3] %v2718
  %2722 = vst [vmem:[#allocation5] sm:$0x3] %v2716
  %v2723 = vpack.c.bf16 %v2384, %v2384
  %s2724 = scalar_lea.vmem %s3, 6
  %2725 = vst [vmem:[%s2724] sm:$0x1] %v2723
  %v2726 = vpack.c.bf16 %v2718, %v2718
  %s2727 = scalar_lea.vmem %s3, 8
  %2728 = vst [vmem:[%s2727 + $0x1] sm:$0x1] %v2726
  %v2729 = vld [vmem:[%s2385] sm:$0xf]
  %v2730 = vld [vmem:[#allocation2] sm:$0x3]
  %v2731 = vld [vmem:[#allocation3] sm:$0x3]
  %v2732 = vunpack.c.l.bf16 %v2729
  %v2733 = vpack.c.bf16 %v2730, %v2730
  %v2734 = vld [vmem:[%s1] sm:$0xff]
  %v2735 = vld [vmem:[%s1 + $0x8] sm:$0xff]
  %v2736 = vld [vmem:[%s1 + $0x10] sm:$0xff]
  %v2737 = vld [vmem:[%s1 + $0x18] sm:$0xff]
  %v2738 = vld [vmem:[%s1 + $0x20] sm:$0xff]
  %v2739 = vld [vmem:[%s1 + $0x28] sm:$0xff]
  %v2740 = vld [vmem:[%s1 + $0x30] sm:$0xff]
  %v2741 = vld [vmem:[%s1 + $0x38] sm:$0xff]
  %v2742 = vld [vmem:[%s1 + $0x40] sm:$0xff]
  %v2743 = vld [vmem:[%s1 + $0x48] sm:$0xff]
  %v2744 = vld [vmem:[%s1 + $0x50] sm:$0xff]
  %v2745 = vld [vmem:[%s1 + $0x58] sm:$0xff]
  %v2746 = vld [vmem:[%s1 + $0x60] sm:$0xff]
  %v2747 = vld [vmem:[%s1 + $0x68] sm:$0xff]
  %v2748 = vld [vmem:[%s1 + $0x70] sm:$0xff]
  %v2749 = vld [vmem:[%s1 + $0x78] sm:$0xff]
  %v2750 = vld [vmem:[%s1 + $0x80] sm:$0xff]
  %v2751 = vld [vmem:[%s1 + $0x88] sm:$0xff]
  %v2752 = vld [vmem:[%s1 + $0x90] sm:$0xff]
  %v2753 = vld [vmem:[%s1 + $0x98] sm:$0xff]
  %v2754 = vld [vmem:[%s1 + $0xa0] sm:$0xff]
  %v2755 = vld [vmem:[%s1 + $0xa8] sm:$0xff]
  %v2756 = vld [vmem:[%s1 + $0xb0] sm:$0xff]
  %v2757 = vld [vmem:[%s1 + $0xb8] sm:$0xff]
  %v2758 = vld [vmem:[%s1 + $0xc0] sm:$0xff]
  %v2759 = vld [vmem:[%s1 + $0xc8] sm:$0xff]
  %v2760 = vld [vmem:[%s1 + $0xd0] sm:$0xff]
  %v2761 = vld [vmem:[%s1 + $0xd8] sm:$0xff]
  %v2762 = vld [vmem:[%s1 + $0xe0] sm:$0xff]
  %v2763 = vld [vmem:[%s1 + $0xe8] sm:$0xff]
  %v2764 = vld [vmem:[%s1 + $0xf0] sm:$0xff]
  %v2765 = vld [vmem:[%s1 + $0xf8] sm:$0xff]
  %v2798 = vunpack.c.l.b16 %v2734
  %v2799 = vunpack.c.h.b16 %v2734
  %v2800 = vunpack.c.l.b16 %v2735
  %v2801 = vunpack.c.h.b16 %v2735
  %v2802 = vunpack.c.l.b16 %v2736
  %v2803 = vunpack.c.h.b16 %v2736
  %v2804 = vunpack.c.l.b16 %v2737
  %v2805 = vunpack.c.h.b16 %v2737
  %v2806 = vunpack.c.l.b16 %v2738
  %v2807 = vunpack.c.h.b16 %v2738
  %v2808 = vunpack.c.l.b16 %v2739
  %v2809 = vunpack.c.h.b16 %v2739
  %v2810 = vunpack.c.l.b16 %v2740
  %v2811 = vunpack.c.h.b16 %v2740
  %v2812 = vunpack.c.l.b16 %v2741
  %v2813 = vunpack.c.h.b16 %v2741
  %v2814 = vunpack.c.l.b16 %v2742
  %v2815 = vunpack.c.h.b16 %v2742
  %v2816 = vunpack.c.l.b16 %v2743
  %v2817 = vunpack.c.h.b16 %v2743
  %v2818 = vunpack.c.l.b16 %v2744
  %v2819 = vunpack.c.h.b16 %v2744
  %v2820 = vunpack.c.l.b16 %v2745
  %v2821 = vunpack.c.h.b16 %v2745
  %v2822 = vunpack.c.l.b16 %v2746
  %v2823 = vunpack.c.h.b16 %v2746
  %v2824 = vunpack.c.l.b16 %v2747
  %v2825 = vunpack.c.h.b16 %v2747
  %v2826 = vunpack.c.l.b16 %v2748
  %v2827 = vunpack.c.h.b16 %v2748
  %v2828 = vunpack.c.l.b16 %v2749
  %v2829 = vunpack.c.h.b16 %v2749
  %v2830 = vunpack.c.l.b16 %v2750
  %v2831 = vunpack.c.h.b16 %v2750
  %v2832 = vunpack.c.l.b16 %v2751
  %v2833 = vunpack.c.h.b16 %v2751
  %v2834 = vunpack.c.l.b16 %v2752
  %v2835 = vunpack.c.h.b16 %v2752
  %v2836 = vunpack.c.l.b16 %v2753
  %v2837 = vunpack.c.h.b16 %v2753
  %v2838 = vunpack.c.l.b16 %v2754
  %v2839 = vunpack.c.h.b16 %v2754
  %v2840 = vunpack.c.l.b16 %v2755
  %v2841 = vunpack.c.h.b16 %v2755
  %v2842 = vunpack.c.l.b16 %v2756
  %v2843 = vunpack.c.h.b16 %v2756
  %v2844 = vunpack.c.l.b16 %v2757
  %v2845 = vunpack.c.h.b16 %v2757
  %v2846 = vunpack.c.l.b16 %v2758
  %v2847 = vunpack.c.h.b16 %v2758
  %v2848 = vunpack.c.l.b16 %v2759
  %v2849 = vunpack.c.h.b16 %v2759
  %v2850 = vunpack.c.l.b16 %v2760
  %v2851 = vunpack.c.h.b16 %v2760
  %v2852 = vunpack.c.l.b16 %v2761
  %v2853 = vunpack.c.h.b16 %v2761
  %v2854 = vunpack.c.l.b16 %v2762
  %v2855 = vunpack.c.h.b16 %v2762
  %v2856 = vunpack.c.l.b16 %v2763
  %v2857 = vunpack.c.h.b16 %v2763
  %v2858 = vunpack.c.l.b16 %v2764
  %v2859 = vunpack.c.h.b16 %v2764
  %v2860 = vunpack.c.l.b16 %v2765
  %v2861 = vunpack.c.h.b16 %v2765
  %v2862 = vpack.c.b16 %v2802, %v2798
  %v2863 = vpack.c.b16 %v2803, %v2799
  %v2864 = vpack.c.b16 %v2804, %v2800
  %v2865 = vpack.c.b16 %v2805, %v2801
  %v2866 = vpack.c.b16 %v2810, %v2806
  %v2867 = vpack.c.b16 %v2811, %v2807
  %v2868 = vpack.c.b16 %v2812, %v2808
  %v2869 = vpack.c.b16 %v2813, %v2809
  %v2870 = vpack.c.b16 %v2818, %v2814
  %v2871 = vpack.c.b16 %v2819, %v2815
  %v2872 = vpack.c.b16 %v2820, %v2816
  %v2873 = vpack.c.b16 %v2821, %v2817
  %v2874 = vpack.c.b16 %v2826, %v2822
  %v2875 = vpack.c.b16 %v2827, %v2823
  %v2876 = vpack.c.b16 %v2828, %v2824
  %v2877 = vpack.c.b16 %v2829, %v2825
  %v2878 = vpack.c.b16 %v2834, %v2830
  %v2879 = vpack.c.b16 %v2835, %v2831
  %v2880 = vpack.c.b16 %v2836, %v2832
  %v2881 = vpack.c.b16 %v2837, %v2833
  %v2882 = vpack.c.b16 %v2842, %v2838
  %v2883 = vpack.c.b16 %v2843, %v2839
  %v2884 = vpack.c.b16 %v2844, %v2840
  %v2885 = vpack.c.b16 %v2845, %v2841
  %v2886 = vpack.c.b16 %v2850, %v2846
  %v2887 = vpack.c.b16 %v2851, %v2847
  %v2888 = vpack.c.b16 %v2852, %v2848
  %v2889 = vpack.c.b16 %v2853, %v2849
  %v2890 = vpack.c.b16 %v2858, %v2854
  %v2891 = vpack.c.b16 %v2859, %v2855
  %v2892 = vpack.c.b16 %v2860, %v2856
  %v2893 = vpack.c.b16 %v2861, %v2857
  %2926 = vmatprep.subr.bf16.mxu0 %v2863
  %2927 = vmatpush1.bf16.msra.mxu0 %v2862
  %2928 = vmatprep.subr.bf16.mxu0 %v2867
  %2929 = vmatpush1.bf16.msra.mxu0 %v2866
  %2930 = vmatprep.subr.bf16.mxu0 %v2871
  %2931 = vmatpush1.bf16.msra.mxu0 %v2870
  %2932 = vmatprep.subr.bf16.mxu0 %v2875
  %2933 = vmatpush1.bf16.msra.mxu0 %v2874
  %2934 = vmatprep.subr.bf16.mxu0 %v2879
  %2935 = vmatpush1.bf16.msra.mxu0 %v2878
  %2936 = vmatprep.subr.bf16.mxu0 %v2883
  %2937 = vmatpush1.bf16.msra.mxu0 %v2882
  %2938 = vmatprep.subr.bf16.mxu0 %v2887
  %2939 = vmatpush1.bf16.msra.mxu0 %v2886
  %2940 = vmatprep.subr.bf16.mxu0 %v2891
  %2941 = vmatpush1.bf16.msra.mxu0 %v2890
  %2942 = vmatprep.subr.bf16.mxu0 0
  %2943 = vmatpush1.bf16.msra.mxu0 0
  %2944 = vmatprep.subr.bf16.mxu0 0
  %2945 = vmatpush1.bf16.msra.mxu0 0
  %2946 = vmatprep.subr.bf16.mxu0 0
  %2947 = vmatpush1.bf16.msra.mxu0 0
  %2948 = vmatprep.subr.bf16.mxu0 0
  %2949 = vmatpush1.bf16.msra.mxu0 0
  %2950 = vmatprep.subr.bf16.mxu0 0
  %2951 = vmatpush1.bf16.msra.mxu0 0
  %2952 = vmatprep.subr.bf16.mxu0 0
  %2953 = vmatpush1.bf16.msra.mxu0 0
  %2954 = vmatprep.subr.bf16.mxu0 0
  %2955 = vmatpush1.bf16.msra.mxu0 0
  %2956 = vmatprep.subr.bf16.mxu0 0
  %2957 = vmatpush1.bf16.msra.mxu0 0
  %2958 = vmatprep.mubr.bf16.mxu0 0
  %2959 = vmatmul.mubr.bf16.gmra.mrb[0].mxu0 %v2733
  %v2960 = vpop.f32.mrb[0].mxu0
  %v2961 = vadd.f32 0.0, %v2960
  %v2962 = vpop.f32.mrb[0].mxu0
  %v2963 = vadd.f32 0.0, %v2962
  %v2964 = vpop.f32.mrb[0].mxu0
  %v2965 = vpop.f32.mrb[0].mxu0
  %2966 = vdwg.mxu0
  %2967 = vmatprep.subr.bf16.mxu0 %v2865
  %2968 = vmatpush1.bf16.msra.mxu0 %v2864
  %2969 = vmatprep.subr.bf16.mxu0 %v2869
  %2970 = vmatpush1.bf16.msra.mxu0 %v2868
  %2971 = vmatprep.subr.bf16.mxu0 %v2873
  %2972 = vmatpush1.bf16.msra.mxu0 %v2872
  %2973 = vmatprep.subr.bf16.mxu0 %v2877
  %2974 = vmatpush1.bf16.msra.mxu0 %v2876
  %2975 = vmatprep.subr.bf16.mxu0 %v2881
  %2976 = vmatpush1.bf16.msra.mxu0 %v2880
  %2977 = vmatprep.subr.bf16.mxu0 %v2885
  %2978 = vmatpush1.bf16.msra.mxu0 %v2884
  %2979 = vmatprep.subr.bf16.mxu0 %v2889
  %2980 = vmatpush1.bf16.msra.mxu0 %v2888
  %2981 = vmatprep.subr.bf16.mxu0 %v2893
  %2982 = vmatpush1.bf16.msra.mxu0 %v2892
  %2983 = vmatprep.subr.bf16.mxu0 0
  %2984 = vmatpush1.bf16.msra.mxu0 0
  %2985 = vmatprep.subr.bf16.mxu0 0
  %2986 = vmatpush1.bf16.msra.mxu0 0
  %2987 = vmatprep.subr.bf16.mxu0 0
  %2988 = vmatpush1.bf16.msra.mxu0 0
  %2989 = vmatprep.subr.bf16.mxu0 0
  %2990 = vmatpush1.bf16.msra.mxu0 0
  %2991 = vmatprep.subr.bf16.mxu0 0
  %2992 = vmatpush1.bf16.msra.mxu0 0
  %2993 = vmatprep.subr.bf16.mxu0 0
  %2994 = vmatpush1.bf16.msra.mxu0 0
  %2995 = vmatprep.subr.bf16.mxu0 0
  %2996 = vmatpush1.bf16.msra.mxu0 0
  %2997 = vmatprep.subr.bf16.mxu0 0
  %2998 = vmatpush1.bf16.msra.mxu0 0
  %2999 = vmatprep.mubr.bf16.mxu0 0
  %3000 = vmatmul.mubr.bf16.gmra.mrb[0].mxu0 %v2733
  %v3001 = vpop.f32.mrb[0].mxu0
  %v3002 = vadd.f32 0.0, %v3001
  %v3003 = vpop.f32.mrb[0].mxu0
  %v3004 = vadd.f32 0.0, %v3003
  %v3005 = vpop.f32.mrb[0].mxu0
  %v3006 = vpop.f32.mrb[0].mxu0
  %3007 = vdwg.mxu0
  %v3012 = vcombine.low %v2961, %v2963
  %v3013 = vcombine.low %v3002, %v3004
  %v3015 = vunpack.c.l.s4 1983009808
  %v3016 = vunpack.c.0.s8 %v3015
  %v3017 = vlaneseq
  %v3018 = vshrl.u32 %v3017, 7
  %v3019 = vsub.s32 %v3016, %v3018
  %v3020 = vrot.slane %v3012, %v3019
  %v3022 = vunpack.c.l.s4 1983009808
  %v3023 = vunpack.c.0.s8 %v3022
  %v3024 = vlaneseq
  %v3025 = vshrl.u32 %v3024, 7
  %v3026 = vsub.s32 %v3023, %v3025
  %v3027 = vrot.slane %v3013, %v3026
  %v3028 = vcombine.low %v3020, %v3027
  %v3030 = vadd.f32 %v2732, %v3028
  %v3031 = vxor.u32 %v3030, 2147483648
  %v3032 = vmul.f32 %v3031, 1.442695
  %v3033 = vpow.pop %v3032
  %v3034 = vadd.f32 %v3033, 1.0
  %v3035 = vrcp.pop %v3034
  %v3036 = vmul.f32 1.0, %v3035
  %v3038 = vrot.slane %v3030, 2
  %v3040 = vxor.u32 %v3038, 2147483648
  %v3041 = vmul.f32 %v3040, 1.442695
  %v3042 = vpow.pop %v3041
  %v3043 = vadd.f32 %v3042, 1.0
  %v3044 = vrcp.pop %v3043
  %v3045 = vmul.f32 1.0, %v3044
  %v3046 = vrot.slane %v3030, 4
  %v3048 = vtanh.pop %v3046
  %v3049 = vrot.slane %v3030, 6
  %v3051 = vxor.u32 %v3049, 2147483648
  %v3052 = vmul.f32 %v3051, 1.442695
  %v3053 = vpow.pop %v3052
  %v3054 = vadd.f32 %v3053, 1.0
  %v3055 = vrcp.pop %v3054
  %v3056 = vmul.f32 1.0, %v3055
  %v3057 = vmul.f32 %v3045, %v2731
  %v3058 = vmul.f32 %v3036, %v3048
  %v3059 = vadd.f32 %v3057, %v3058
  %v3060 = vtanh.pop %v3059
  %v3061 = vmul.f32 %v3056, %v3060
  %v3062 = vld [vmem:[%s2051 + $0x4] sm:$0xf]
  %v3063 = vld [vmem:[#allocation4] sm:$0x3]
  %v3064 = vld [vmem:[#allocation5] sm:$0x3]
  %v3065 = vunpack.c.l.bf16 %v3062
  %v3066 = vpack.c.bf16 %v3063, %v3063
  %v3067 = vld [vmem:[%s2] sm:$0xff]
  %v3068 = vld [vmem:[%s2 + $0x8] sm:$0xff]
  %v3069 = vld [vmem:[%s2 + $0x10] sm:$0xff]
  %v3070 = vld [vmem:[%s2 + $0x18] sm:$0xff]
  %v3071 = vld [vmem:[%s2 + $0x20] sm:$0xff]
  %v3072 = vld [vmem:[%s2 + $0x28] sm:$0xff]
  %v3073 = vld [vmem:[%s2 + $0x30] sm:$0xff]
  %v3074 = vld [vmem:[%s2 + $0x38] sm:$0xff]
  %v3075 = vld [vmem:[%s2 + $0x40] sm:$0xff]
  %v3076 = vld [vmem:[%s2 + $0x48] sm:$0xff]
  %v3077 = vld [vmem:[%s2 + $0x50] sm:$0xff]
  %v3078 = vld [vmem:[%s2 + $0x58] sm:$0xff]
  %v3079 = vld [vmem:[%s2 + $0x60] sm:$0xff]
  %v3080 = vld [vmem:[%s2 + $0x68] sm:$0xff]
  %v3081 = vld [vmem:[%s2 + $0x70] sm:$0xff]
  %v3082 = vld [vmem:[%s2 + $0x78] sm:$0xff]
  %v3083 = vld [vmem:[%s2 + $0x80] sm:$0xff]
  %v3084 = vld [vmem:[%s2 + $0x88] sm:$0xff]
  %v3085 = vld [vmem:[%s2 + $0x90] sm:$0xff]
  %v3086 = vld [vmem:[%s2 + $0x98] sm:$0xff]
  %v3087 = vld [vmem:[%s2 + $0xa0] sm:$0xff]
  %v3088 = vld [vmem:[%s2 + $0xa8] sm:$0xff]
  %v3089 = vld [vmem:[%s2 + $0xb0] sm:$0xff]
  %v3090 = vld [vmem:[%s2 + $0xb8] sm:$0xff]
  %v3091 = vld [vmem:[%s2 + $0xc0] sm:$0xff]
  %v3092 = vld [vmem:[%s2 + $0xc8] sm:$0xff]
  %v3093 = vld [vmem:[%s2 + $0xd0] sm:$0xff]
  %v3094 = vld [vmem:[%s2 + $0xd8] sm:$0xff]
  %v3095 = vld [vmem:[%s2 + $0xe0] sm:$0xff]
  %v3096 = vld [vmem:[%s2 + $0xe8] sm:$0xff]
  %v3097 = vld [vmem:[%s2 + $0xf0] sm:$0xff]
  %v3098 = vld [vmem:[%s2 + $0xf8] sm:$0xff]
  %v3131 = vunpack.c.l.b16 %v3067
  %v3132 = vunpack.c.h.b16 %v3067
  %v3133 = vunpack.c.l.b16 %v3068
  %v3134 = vunpack.c.h.b16 %v3068
  %v3135 = vunpack.c.l.b16 %v3069
  %v3136 = vunpack.c.h.b16 %v3069
  %v3137 = vunpack.c.l.b16 %v3070
  %v3138 = vunpack.c.h.b16 %v3070
  %v3139 = vunpack.c.l.b16 %v3071
  %v3140 = vunpack.c.h.b16 %v3071
  %v3141 = vunpack.c.l.b16 %v3072
  %v3142 = vunpack.c.h.b16 %v3072
  %v3143 = vunpack.c.l.b16 %v3073
  %v3144 = vunpack.c.h.b16 %v3073
  %v3145 = vunpack.c.l.b16 %v3074
  %v3146 = vunpack.c.h.b16 %v3074
  %v3147 = vunpack.c.l.b16 %v3075
  %v3148 = vunpack.c.h.b16 %v3075
  %v3149 = vunpack.c.l.b16 %v3076
  %v3150 = vunpack.c.h.b16 %v3076
  %v3151 = vunpack.c.l.b16 %v3077
  %v3152 = vunpack.c.h.b16 %v3077
  %v3153 = vunpack.c.l.b16 %v3078
  %v3154 = vunpack.c.h.b16 %v3078
  %v3155 = vunpack.c.l.b16 %v3079
  %v3156 = vunpack.c.h.b16 %v3079
  %v3157 = vunpack.c.l.b16 %v3080
  %v3158 = vunpack.c.h.b16 %v3080
  %v3159 = vunpack.c.l.b16 %v3081
  %v3160 = vunpack.c.h.b16 %v3081
  %v3161 = vunpack.c.l.b16 %v3082
  %v3162 = vunpack.c.h.b16 %v3082
  %v3163 = vunpack.c.l.b16 %v3083
  %v3164 = vunpack.c.h.b16 %v3083
  %v3165 = vunpack.c.l.b16 %v3084
  %v3166 = vunpack.c.h.b16 %v3084
  %v3167 = vunpack.c.l.b16 %v3085
  %v3168 = vunpack.c.h.b16 %v3085
  %v3169 = vunpack.c.l.b16 %v3086
  %v3170 = vunpack.c.h.b16 %v3086
  %v3171 = vunpack.c.l.b16 %v3087
  %v3172 = vunpack.c.h.b16 %v3087
  %v3173 = vunpack.c.l.b16 %v3088
  %v3174 = vunpack.c.h.b16 %v3088
  %v3175 = vunpack.c.l.b16 %v3089
  %v3176 = vunpack.c.h.b16 %v3089
  %v3177 = vunpack.c.l.b16 %v3090
  %v3178 = vunpack.c.h.b16 %v3090
  %v3179 = vunpack.c.l.b16 %v3091
  %v3180 = vunpack.c.h.b16 %v3091
  %v3181 = vunpack.c.l.b16 %v3092
  %v3182 = vunpack.c.h.b16 %v3092
  %v3183 = vunpack.c.l.b16 %v3093
  %v3184 = vunpack.c.h.b16 %v3093
  %v3185 = vunpack.c.l.b16 %v3094
  %v3186 = vunpack.c.h.b16 %v3094
  %v3187 = vunpack.c.l.b16 %v3095
  %v3188 = vunpack.c.h.b16 %v3095
  %v3189 = vunpack.c.l.b16 %v3096
  %v3190 = vunpack.c.h.b16 %v3096
  %v3191 = vunpack.c.l.b16 %v3097
  %v3192 = vunpack.c.h.b16 %v3097
  %v3193 = vunpack.c.l.b16 %v3098
  %v3194 = vunpack.c.h.b16 %v3098
  %v3195 = vpack.c.b16 %v3135, %v3131
  %v3196 = vpack.c.b16 %v3136, %v3132
  %v3197 = vpack.c.b16 %v3137, %v3133
  %v3198 = vpack.c.b16 %v3138, %v3134
  %v3199 = vpack.c.b16 %v3143, %v3139
  %v3200 = vpack.c.b16 %v3144, %v3140
  %v3201 = vpack.c.b16 %v3145, %v3141
  %v3202 = vpack.c.b16 %v3146, %v3142
  %v3203 = vpack.c.b16 %v3151, %v3147
  %v3204 = vpack.c.b16 %v3152, %v3148
  %v3205 = vpack.c.b16 %v3153, %v3149
  %v3206 = vpack.c.b16 %v3154, %v3150
  %v3207 = vpack.c.b16 %v3159, %v3155
  %v3208 = vpack.c.b16 %v3160, %v3156
  %v3209 = vpack.c.b16 %v3161, %v3157
  %v3210 = vpack.c.b16 %v3162, %v3158
  %v3211 = vpack.c.b16 %v3167, %v3163
  %v3212 = vpack.c.b16 %v3168, %v3164
  %v3213 = vpack.c.b16 %v3169, %v3165
  %v3214 = vpack.c.b16 %v3170, %v3166
  %v3215 = vpack.c.b16 %v3175, %v3171
  %v3216 = vpack.c.b16 %v3176, %v3172
  %v3217 = vpack.c.b16 %v3177, %v3173
  %v3218 = vpack.c.b16 %v3178, %v3174
  %v3219 = vpack.c.b16 %v3183, %v3179
  %v3220 = vpack.c.b16 %v3184, %v3180
  %v3221 = vpack.c.b16 %v3185, %v3181
  %v3222 = vpack.c.b16 %v3186, %v3182
  %v3223 = vpack.c.b16 %v3191, %v3187
  %v3224 = vpack.c.b16 %v3192, %v3188
  %v3225 = vpack.c.b16 %v3193, %v3189
  %v3226 = vpack.c.b16 %v3194, %v3190
  %3259 = vmatprep.subr.bf16.mxu0 %v3196
  %3260 = vmatpush1.bf16.msra.mxu0 %v3195
  %3261 = vmatprep.subr.bf16.mxu0 %v3200
  %3262 = vmatpush1.bf16.msra.mxu0 %v3199
  %3263 = vmatprep.subr.bf16.mxu0 %v3204
  %3264 = vmatpush1.bf16.msra.mxu0 %v3203
  %3265 = vmatprep.subr.bf16.mxu0 %v3208
  %3266 = vmatpush1.bf16.msra.mxu0 %v3207
  %3267 = vmatprep.subr.bf16.mxu0 %v3212
  %3268 = vmatpush1.bf16.msra.mxu0 %v3211
  %3269 = vmatprep.subr.bf16.mxu0 %v3216
  %3270 = vmatpush1.bf16.msra.mxu0 %v3215
  %3271 = vmatprep.subr.bf16.mxu0 %v3220
  %3272 = vmatpush1.bf16.msra.mxu0 %v3219
  %3273 = vmatprep.subr.bf16.mxu0 %v3224
  %3274 = vmatpush1.bf16.msra.mxu0 %v3223
  %3275 = vmatprep.subr.bf16.mxu0 0
  %3276 = vmatpush1.bf16.msra.mxu0 0
  %3277 = vmatprep.subr.bf16.mxu0 0
  %3278 = vmatpush1.bf16.msra.mxu0 0
  %3279 = vmatprep.subr.bf16.mxu0 0
  %3280 = vmatpush1.bf16.msra.mxu0 0
  %3281 = vmatprep.subr.bf16.mxu0 0
  %3282 = vmatpush1.bf16.msra.mxu0 0
  %3283 = vmatprep.subr.bf16.mxu0 0
  %3284 = vmatpush1.bf16.msra.mxu0 0
  %3285 = vmatprep.subr.bf16.mxu0 0
  %3286 = vmatpush1.bf16.msra.mxu0 0
  %3287 = vmatprep.subr.bf16.mxu0 0
  %3288 = vmatpush1.bf16.msra.mxu0 0
  %3289 = vmatprep.subr.bf16.mxu0 0
  %3290 = vmatpush1.bf16.msra.mxu0 0
  %3291 = vmatprep.mubr.bf16.mxu0 0
  %3292 = vmatmul.mubr.bf16.gmra.mrb[0].mxu0 %v3066
  %v3293 = vpop.f32.mrb[0].mxu0
  %v3294 = vadd.f32 0.0, %v3293
  %v3295 = vpop.f32.mrb[0].mxu0
  %v3296 = vadd.f32 0.0, %v3295
  %v3297 = vpop.f32.mrb[0].mxu0
  %v3298 = vpop.f32.mrb[0].mxu0
  %3299 = vdwg.mxu0
  %3300 = vmatprep.subr.bf16.mxu0 %v3198
  %3301 = vmatpush1.bf16.msra.mxu0 %v3197
  %3302 = vmatprep.subr.bf16.mxu0 %v3202
  %3303 = vmatpush1.bf16.msra.mxu0 %v3201
  %3304 = vmatprep.subr.bf16.mxu0 %v3206
  %3305 = vmatpush1.bf16.msra.mxu0 %v3205
  %3306 = vmatprep.subr.bf16.mxu0 %v3210
  %3307 = vmatpush1.bf16.msra.mxu0 %v3209
  %3308 = vmatprep.subr.bf16.mxu0 %v3214
  %3309 = vmatpush1.bf16.msra.mxu0 %v3213
  %3310 = vmatprep.subr.bf16.mxu0 %v3218
  %3311 = vmatpush1.bf16.msra.mxu0 %v3217
  %3312 = vmatprep.subr.bf16.mxu0 %v3222
  %3313 = vmatpush1.bf16.msra.mxu0 %v3221
  %3314 = vmatprep.subr.bf16.mxu0 %v3226
  %3315 = vmatpush1.bf16.msra.mxu0 %v3225
  %3316 = vmatprep.subr.bf16.mxu0 0
  %3317 = vmatpush1.bf16.msra.mxu0 0
  %3318 = vmatprep.subr.bf16.mxu0 0
  %3319 = vmatpush1.bf16.msra.mxu0 0
  %3320 = vmatprep.subr.bf16.mxu0 0
  %3321 = vmatpush1.bf16.msra.mxu0 0
  %3322 = vmatprep.subr.bf16.mxu0 0
  %3323 = vmatpush1.bf16.msra.mxu0 0
  %3324 = vmatprep.subr.bf16.mxu0 0
  %3325 = vmatpush1.bf16.msra.mxu0 0
  %3326 = vmatprep.subr.bf16.mxu0 0
  %3327 = vmatpush1.bf16.msra.mxu0 0
  %3328 = vmatprep.subr.bf16.mxu0 0
  %3329 = vmatpush1.bf16.msra.mxu0 0
  %3330 = vmatprep.subr.bf16.mxu0 0
  %3331 = vmatpush1.bf16.msra.mxu0 0
  %3332 = vmatprep.mubr.bf16.mxu0 0
  %3333 = vmatmul.mubr.bf16.gmra.mrb[0].mxu0 %v3066
  %v3334 = vpop.f32.mrb[0].mxu0
  %v3335 = vadd.f32 0.0, %v3334
  %v3336 = vpop.f32.mrb[0].mxu0
  %v3337 = vadd.f32 0.0, %v3336
  %v3338 = vpop.f32.mrb[0].mxu0
  %v3339 = vpop.f32.mrb[0].mxu0
  %3340 = vdwg.mxu0
  %v3345 = vcombine.low %v3294, %v3296
  %v3346 = vcombine.low %v3335, %v3337
  %v3348 = vunpack.c.l.s4 1983009808
  %v3349 = vunpack.c.0.s8 %v3348
  %v3350 = vlaneseq
  %v3351 = vshrl.u32 %v3350, 7
  %v3352 = vsub.s32 %v3349, %v3351
  %v3353 = vrot.slane %v3345, %v3352
  %v3355 = vunpack.c.l.s4 1983009808
  %v3356 = vunpack.c.0.s8 %v3355
  %v3357 = vlaneseq
  %v3358 = vshrl.u32 %v3357, 7
  %v3359 = vsub.s32 %v3356, %v3358
  %v3360 = vrot.slane %v3346, %v3359
  %v3361 = vcombine.low %v3353, %v3360
  %v3363 = vadd.f32 %v3065, %v3361
  %v3364 = vxor.u32 %v3363, 2147483648
  %v3365 = vmul.f32 %v3364, 1.442695
  %v3366 = vpow.pop %v3365
  %v3367 = vadd.f32 %v3366, 1.0
  %v3368 = vrcp.pop %v3367
  %v3369 = vmul.f32 1.0, %v3368
  %v3371 = vrot.slane %v3363, 2
  %v3373 = vxor.u32 %v3371, 2147483648
  %v3374 = vmul.f32 %v3373, 1.442695
  %v3375 = vpow.pop %v3374
  %v3376 = vadd.f32 %v3375, 1.0
  %v3377 = vrcp.pop %v3376
  %v3378 = vmul.f32 1.0, %v3377
  %v3379 = vrot.slane %v3363, 4
  %v3381 = vtanh.pop %v3379
  %v3382 = vrot.slane %v3363, 6
  %v3384 = vxor.u32 %v3382, 2147483648
  %v3385 = vmul.f32 %v3384, 1.442695
  %v3386 = vpow.pop %v3385
  %v3387 = vadd.f32 %v3386, 1.0
  %v3388 = vrcp.pop %v3387
  %v3389 = vmul.f32 1.0, %v3388
  %v3390 = vmul.f32 %v3378, %v3064
  %v3391 = vmul.f32 %v3369, %v3381
  %v3392 = vadd.f32 %v3390, %v3391
  %v3393 = vtanh.pop %v3392
  %v3394 = vmul.f32 %v3389, %v3393
  %3395 = vst [vmem:[#allocation2] sm:$0x3] %v3061
  %3396 = vst [vmem:[#allocation3] sm:$0x3] %v3059
  %3397 = vst [vmem:[#allocation4] sm:$0x3] %v3394
  %3398 = vst [vmem:[#allocation5] sm:$0x3] %v3392
  %v3399 = vpack.c.bf16 %v3061, %v3061
  %3400 = vst [vmem:[%s2727] sm:$0x1] %v3399
  %v3401 = vpack.c.bf16 %v3394, %v3394
  %3402 = vst [vmem:[%s2724 + $0x1] sm:$0x1] %v3401
  %v3403 = vld [vmem:[%s1707] sm:$0xf]
  %v3404 = vld [vmem:[#allocation2] sm:$0x3]
  %v3405 = vld [vmem:[#allocation3] sm:$0x3]
  %v3406 = vunpack.c.l.bf16 %v3403
  %v3407 = vpack.c.bf16 %v3404, %v3404
  %v3408 = vld [vmem:[%s1] sm:$0xff]
  %v3409 = vld [vmem:[%s1 + $0x8] sm:$0xff]
  %v3410 = vld [vmem:[%s1 + $0x10] sm:$0xff]
  %v3411 = vld [vmem:[%s1 + $0x18] sm:$0xff]
  %v3412 = vld [vmem:[%s1 + $0x20] sm:$0xff]
  %v3413 = vld [vmem:[%s1 + $0x28] sm:$0xff]
  %v3414 = vld [vmem:[%s1 + $0x30] sm:$0xff]
  %v3415 = vld [vmem:[%s1 + $0x38] sm:$0xff]
  %v3416 = vld [vmem:[%s1 + $0x40] sm:$0xff]
  %v3417 = vld [vmem:[%s1 + $0x48] sm:$0xff]
  %v3418 = vld [vmem:[%s1 + $0x50] sm:$0xff]
  %v3419 = vld [vmem:[%s1 + $0x58] sm:$0xff]
  %v3420 = vld [vmem:[%s1 + $0x60] sm:$0xff]
  %v3421 = vld [vmem:[%s1 + $0x68] sm:$0xff]
  %v3422 = vld [vmem:[%s1 + $0x70] sm:$0xff]
  %v3423 = vld [vmem:[%s1 + $0x78] sm:$0xff]
  %v3424 = vld [vmem:[%s1 + $0x80] sm:$0xff]
  %v3425 = vld [vmem:[%s1 + $0x88] sm:$0xff]
  %v3426 = vld [vmem:[%s1 + $0x90] sm:$0xff]
  %v3427 = vld [vmem:[%s1 + $0x98] sm:$0xff]
  %v3428 = vld [vmem:[%s1 + $0xa0] sm:$0xff]
  %v3429 = vld [vmem:[%s1 + $0xa8] sm:$0xff]
  %v3430 = vld [vmem:[%s1 + $0xb0] sm:$0xff]
  %v3431 = vld [vmem:[%s1 + $0xb8] sm:$0xff]
  %v3432 = vld [vmem:[%s1 + $0xc0] sm:$0xff]
  %v3433 = vld [vmem:[%s1 + $0xc8] sm:$0xff]
  %v3434 = vld [vmem:[%s1 + $0xd0] sm:$0xff]
  %v3435 = vld [vmem:[%s1 + $0xd8] sm:$0xff]
  %v3436 = vld [vmem:[%s1 + $0xe0] sm:$0xff]
  %v3437 = vld [vmem:[%s1 + $0xe8] sm:$0xff]
  %v3438 = vld [vmem:[%s1 + $0xf0] sm:$0xff]
  %v3439 = vld [vmem:[%s1 + $0xf8] sm:$0xff]
  %v3472 = vunpack.c.l.b16 %v3408
  %v3473 = vunpack.c.h.b16 %v3408
  %v3474 = vunpack.c.l.b16 %v3409
  %v3475 = vunpack.c.h.b16 %v3409
  %v3476 = vunpack.c.l.b16 %v3410
  %v3477 = vunpack.c.h.b16 %v3410
  %v3478 = vunpack.c.l.b16 %v3411
  %v3479 = vunpack.c.h.b16 %v3411
  %v3480 = vunpack.c.l.b16 %v3412
  %v3481 = vunpack.c.h.b16 %v3412
  %v3482 = vunpack.c.l.b16 %v3413
  %v3483 = vunpack.c.h.b16 %v3413
  %v3484 = vunpack.c.l.b16 %v3414
  %v3485 = vunpack.c.h.b16 %v3414
  %v3486 = vunpack.c.l.b16 %v3415
  %v3487 = vunpack.c.h.b16 %v3415
  %v3488 = vunpack.c.l.b16 %v3416
  %v3489 = vunpack.c.h.b16 %v3416
  %v3490 = vunpack.c.l.b16 %v3417
  %v3491 = vunpack.c.h.b16 %v3417
  %v3492 = vunpack.c.l.b16 %v3418
  %v3493 = vunpack.c.h.b16 %v3418
  %v3494 = vunpack.c.l.b16 %v3419
  %v3495 = vunpack.c.h.b16 %v3419
  %v3496 = vunpack.c.l.b16 %v3420
  %v3497 = vunpack.c.h.b16 %v3420
  %v3498 = vunpack.c.l.b16 %v3421
  %v3499 = vunpack.c.h.b16 %v3421
  %v3500 = vunpack.c.l.b16 %v3422
  %v3501 = vunpack.c.h.b16 %v3422
  %v3502 = vunpack.c.l.b16 %v3423
  %v3503 = vunpack.c.h.b16 %v3423
  %v3504 = vunpack.c.l.b16 %v3424
  %v3505 = vunpack.c.h.b16 %v3424
  %v3506 = vunpack.c.l.b16 %v3425
  %v3507 = vunpack.c.h.b16 %v3425
  %v3508 = vunpack.c.l.b16 %v3426
  %v3509 = vunpack.c.h.b16 %v3426
  %v3510 = vunpack.c.l.b16 %v3427
  %v3511 = vunpack.c.h.b16 %v3427
  %v3512 = vunpack.c.l.b16 %v3428
  %v3513 = vunpack.c.h.b16 %v3428
  %v3514 = vunpack.c.l.b16 %v3429
  %v3515 = vunpack.c.h.b16 %v3429
  %v3516 = vunpack.c.l.b16 %v3430
  %v3517 = vunpack.c.h.b16 %v3430
  %v3518 = vunpack.c.l.b16 %v3431
  %v3519 = vunpack.c.h.b16 %v3431
  %v3520 = vunpack.c.l.b16 %v3432
  %v3521 = vunpack.c.h.b16 %v3432
  %v3522 = vunpack.c.l.b16 %v3433
  %v3523 = vunpack.c.h.b16 %v3433
  %v3524 = vunpack.c.l.b16 %v3434
  %v3525 = vunpack.c.h.b16 %v3434
  %v3526 = vunpack.c.l.b16 %v3435
  %v3527 = vunpack.c.h.b16 %v3435
  %v3528 = vunpack.c.l.b16 %v3436
  %v3529 = vunpack.c.h.b16 %v3436
  %v3530 = vunpack.c.l.b16 %v3437
  %v3531 = vunpack.c.h.b16 %v3437
  %v3532 = vunpack.c.l.b16 %v3438
  %v3533 = vunpack.c.h.b16 %v3438
  %v3534 = vunpack.c.l.b16 %v3439
  %v3535 = vunpack.c.h.b16 %v3439
  %v3536 = vpack.c.b16 %v3476, %v3472
  %v3537 = vpack.c.b16 %v3477, %v3473
  %v3538 = vpack.c.b16 %v3478, %v3474
  %v3539 = vpack.c.b16 %v3479, %v3475
  %v3540 = vpack.c.b16 %v3484, %v3480
  %v3541 = vpack.c.b16 %v3485, %v3481
  %v3542 = vpack.c.b16 %v3486, %v3482
  %v3543 = vpack.c.b16 %v3487, %v3483
  %v3544 = vpack.c.b16 %v3492, %v3488
  %v3545 = vpack.c.b16 %v3493, %v3489
  %v3546 = vpack.c.b16 %v3494, %v3490
  %v3547 = vpack.c.b16 %v3495, %v3491
  %v3548 = vpack.c.b16 %v3500, %v3496
  %v3549 = vpack.c.b16 %v3501, %v3497
  %v3550 = vpack.c.b16 %v3502, %v3498
  %v3551 = vpack.c.b16 %v3503, %v3499
  %v3552 = vpack.c.b16 %v3508, %v3504
  %v3553 = vpack.c.b16 %v3509, %v3505
  %v3554 = vpack.c.b16 %v3510, %v3506
  %v3555 = vpack.c.b16 %v3511, %v3507
  %v3556 = vpack.c.b16 %v3516, %v3512
  %v3557 = vpack.c.b16 %v3517, %v3513
  %v3558 = vpack.c.b16 %v3518, %v3514
  %v3559 = vpack.c.b16 %v3519, %v3515
  %v3560 = vpack.c.b16 %v3524, %v3520
  %v3561 = vpack.c.b16 %v3525, %v3521
  %v3562 = vpack.c.b16 %v3526, %v3522
  %v3563 = vpack.c.b16 %v3527, %v3523
  %v3564 = vpack.c.b16 %v3532, %v3528
  %v3565 = vpack.c.b16 %v3533, %v3529
  %v3566 = vpack.c.b16 %v3534, %v3530
  %v3567 = vpack.c.b16 %v3535, %v3531
  %3600 = vmatprep.subr.bf16.mxu0 %v3537
  %3601 = vmatpush1.bf16.msra.mxu0 %v3536
  %3602 = vmatprep.subr.bf16.mxu0 %v3541
  %3603 = vmatpush1.bf16.msra.mxu0 %v3540
  %3604 = vmatprep.subr.bf16.mxu0 %v3545
  %3605 = vmatpush1.bf16.msra.mxu0 %v3544
  %3606 = vmatprep.subr.bf16.mxu0 %v3549
  %3607 = vmatpush1.bf16.msra.mxu0 %v3548
  %3608 = vmatprep.subr.bf16.mxu0 %v3553
  %3609 = vmatpush1.bf16.msra.mxu0 %v3552
  %3610 = vmatprep.subr.bf16.mxu0 %v3557
  %3611 = vmatpush1.bf16.msra.mxu0 %v3556
  %3612 = vmatprep.subr.bf16.mxu0 %v3561
  %3613 = vmatpush1.bf16.msra.mxu0 %v3560
  %3614 = vmatprep.subr.bf16.mxu0 %v3565
  %3615 = vmatpush1.bf16.msra.mxu0 %v3564
  %3616 = vmatprep.subr.bf16.mxu0 0
  %3617 = vmatpush1.bf16.msra.mxu0 0
  %3618 = vmatprep.subr.bf16.mxu0 0
  %3619 = vmatpush1.bf16.msra.mxu0 0
  %3620 = vmatprep.subr.bf16.mxu0 0
  %3621 = vmatpush1.bf16.msra.mxu0 0
  %3622 = vmatprep.subr.bf16.mxu0 0
  %3623 = vmatpush1.bf16.msra.mxu0 0
  %3624 = vmatprep.subr.bf16.mxu0 0
  %3625 = vmatpush1.bf16.msra.mxu0 0
  %3626 = vmatprep.subr.bf16.mxu0 0
  %3627 = vmatpush1.bf16.msra.mxu0 0
  %3628 = vmatprep.subr.bf16.mxu0 0
  %3629 = vmatpush1.bf16.msra.mxu0 0
  %3630 = vmatprep.subr.bf16.mxu0 0
  %3631 = vmatpush1.bf16.msra.mxu0 0
  %3632 = vmatprep.mubr.bf16.mxu0 0
  %3633 = vmatmul.mubr.bf16.gmra.mrb[0].mxu0 %v3407
  %v3634 = vpop.f32.mrb[0].mxu0
  %v3635 = vadd.f32 0.0, %v3634
  %v3636 = vpop.f32.mrb[0].mxu0
  %v3637 = vadd.f32 0.0, %v3636
  %v3638 = vpop.f32.mrb[0].mxu0
  %v3639 = vpop.f32.mrb[0].mxu0
  %3640 = vdwg.mxu0
  %3641 = vmatprep.subr.bf16.mxu0 %v3539
  %3642 = vmatpush1.bf16.msra.mxu0 %v3538
  %3643 = vmatprep.subr.bf16.mxu0 %v3543
  %3644 = vmatpush1.bf16.msra.mxu0 %v3542
  %3645 = vmatprep.subr.bf16.mxu0 %v3547
  %3646 = vmatpush1.bf16.msra.mxu0 %v3546
  %3647 = vmatprep.subr.bf16.mxu0 %v3551
  %3648 = vmatpush1.bf16.msra.mxu0 %v3550
  %3649 = vmatprep.subr.bf16.mxu0 %v3555
  %3650 = vmatpush1.bf16.msra.mxu0 %v3554
  %3651 = vmatprep.subr.bf16.mxu0 %v3559
  %3652 = vmatpush1.bf16.msra.mxu0 %v3558
  %3653 = vmatprep.subr.bf16.mxu0 %v3563
  %3654 = vmatpush1.bf16.msra.mxu0 %v3562
  %3655 = vmatprep.subr.bf16.mxu0 %v3567
  %3656 = vmatpush1.bf16.msra.mxu0 %v3566
  %3657 = vmatprep.subr.bf16.mxu0 0
  %3658 = vmatpush1.bf16.msra.mxu0 0
  %3659 = vmatprep.subr.bf16.mxu0 0
  %3660 = vmatpush1.bf16.msra.mxu0 0
  %3661 = vmatprep.subr.bf16.mxu0 0
  %3662 = vmatpush1.bf16.msra.mxu0 0
  %3663 = vmatprep.subr.bf16.mxu0 0
  %3664 = vmatpush1.bf16.msra.mxu0 0
  %3665 = vmatprep.subr.bf16.mxu0 0
  %3666 = vmatpush1.bf16.msra.mxu0 0
  %3667 = vmatprep.subr.bf16.mxu0 0
  %3668 = vmatpush1.bf16.msra.mxu0 0
  %3669 = vmatprep.subr.bf16.mxu0 0
  %3670 = vmatpush1.bf16.msra.mxu0 0
  %3671 = vmatprep.subr.bf16.mxu0 0
  %3672 = vmatpush1.bf16.msra.mxu0 0
  %3673 = vmatprep.mubr.bf16.mxu0 0
  %3674 = vmatmul.mubr.bf16.gmra.mrb[0].mxu0 %v3407
  %v3675 = vpop.f32.mrb[0].mxu0
  %v3676 = vadd.f32 0.0, %v3675
  %v3677 = vpop.f32.mrb[0].mxu0
  %v3678 = vadd.f32 0.0, %v3677
  %v3679 = vpop.f32.mrb[0].mxu0
  %v3680 = vpop.f32.mrb[0].mxu0
  %3681 = vdwg.mxu0
  %v3686 = vcombine.low %v3635, %v3637
  %v3687 = vcombine.low %v3676, %v3678
  %v3689 = vunpack.c.l.s4 1983009808
  %v3690 = vunpack.c.0.s8 %v3689
  %v3691 = vlaneseq
  %v3692 = vshrl.u32 %v3691, 7
  %v3693 = vsub.s32 %v3690, %v3692
  %v3694 = vrot.slane %v3686, %v3693
  %v3696 = vunpack.c.l.s4 1983009808
  %v3697 = vunpack.c.0.s8 %v3696
  %v3698 = vlaneseq
  %v3699 = vshrl.u32 %v3698, 7
  %v3700 = vsub.s32 %v3697, %v3699
  %v3701 = vrot.slane %v3687, %v3700
  %v3702 = vcombine.low %v3694, %v3701
  %v3704 = vadd.f32 %v3406, %v3702
  %v3705 = vxor.u32 %v3704, 2147483648
  %v3706 = vmul.f32 %v3705, 1.442695
  %v3707 = vpow.pop %v3706
  %v3708 = vadd.f32 %v3707, 1.0
  %v3709 = vrcp.pop %v3708
  %v3710 = vmul.f32 1.0, %v3709
  %v3712 = vrot.slane %v3704, 2
  %v3714 = vxor.u32 %v3712, 2147483648
  %v3715 = vmul.f32 %v3714, 1.442695
  %v3716 = vpow.pop %v3715
  %v3717 = vadd.f32 %v3716, 1.0
  %v3718 = vrcp.pop %v3717
  %v3719 = vmul.f32 1.0, %v3718
  %v3720 = vrot.slane %v3704, 4
  %v3722 = vtanh.pop %v3720
  %v3723 = vrot.slane %v3704, 6
  %v3725 = vxor.u32 %v3723, 2147483648
  %v3726 = vmul.f32 %v3725, 1.442695
  %v3727 = vpow.pop %v3726
  %v3728 = vadd.f32 %v3727, 1.0
  %v3729 = vrcp.pop %v3728
  %v3730 = vmul.f32 1.0, %v3729
  %v3731 = vmul.f32 %v3719, %v3405
  %v3732 = vmul.f32 %v3710, %v3722
  %v3733 = vadd.f32 %v3731, %v3732
  %v3734 = vtanh.pop %v3733
  %v3735 = vmul.f32 %v3730, %v3734
  %v3736 = vld [vmem:[%s1373 + $0x4] sm:$0xf]
  %v3737 = vld [vmem:[#allocation4] sm:$0x3]
  %v3738 = vld [vmem:[#allocation5] sm:$0x3]
  %v3739 = vunpack.c.l.bf16 %v3736
  %v3740 = vpack.c.bf16 %v3737, %v3737
  %v3741 = vld [vmem:[%s2] sm:$0xff]
  %v3742 = vld [vmem:[%s2 + $0x8] sm:$0xff]
  %v3743 = vld [vmem:[%s2 + $0x10] sm:$0xff]
  %v3744 = vld [vmem:[%s2 + $0x18] sm:$0xff]
  %v3745 = vld [vmem:[%s2 + $0x20] sm:$0xff]
  %v3746 = vld [vmem:[%s2 + $0x28] sm:$0xff]
  %v3747 = vld [vmem:[%s2 + $0x30] sm:$0xff]
  %v3748 = vld [vmem:[%s2 + $0x38] sm:$0xff]
  %v3749 = vld [vmem:[%s2 + $0x40] sm:$0xff]
  %v3750 = vld [vmem:[%s2 + $0x48] sm:$0xff]
  %v3751 = vld [vmem:[%s2 + $0x50] sm:$0xff]
  %v3752 = vld [vmem:[%s2 + $0x58] sm:$0xff]
  %v3753 = vld [vmem:[%s2 + $0x60] sm:$0xff]
  %v3754 = vld [vmem:[%s2 + $0x68] sm:$0xff]
  %v3755 = vld [vmem:[%s2 + $0x70] sm:$0xff]
  %v3756 = vld [vmem:[%s2 + $0x78] sm:$0xff]
  %v3757 = vld [vmem:[%s2 + $0x80] sm:$0xff]
  %v3758 = vld [vmem:[%s2 + $0x88] sm:$0xff]
  %v3759 = vld [vmem:[%s2 + $0x90] sm:$0xff]
  %v3760 = vld [vmem:[%s2 + $0x98] sm:$0xff]
  %v3761 = vld [vmem:[%s2 + $0xa0] sm:$0xff]
  %v3762 = vld [vmem:[%s2 + $0xa8] sm:$0xff]
  %v3763 = vld [vmem:[%s2 + $0xb0] sm:$0xff]
  %v3764 = vld [vmem:[%s2 + $0xb8] sm:$0xff]
  %v3765 = vld [vmem:[%s2 + $0xc0] sm:$0xff]
  %v3766 = vld [vmem:[%s2 + $0xc8] sm:$0xff]
  %v3767 = vld [vmem:[%s2 + $0xd0] sm:$0xff]
  %v3768 = vld [vmem:[%s2 + $0xd8] sm:$0xff]
  %v3769 = vld [vmem:[%s2 + $0xe0] sm:$0xff]
  %v3770 = vld [vmem:[%s2 + $0xe8] sm:$0xff]
  %v3771 = vld [vmem:[%s2 + $0xf0] sm:$0xff]
  %v3772 = vld [vmem:[%s2 + $0xf8] sm:$0xff]
  %v3805 = vunpack.c.l.b16 %v3741
  %v3806 = vunpack.c.h.b16 %v3741
  %v3807 = vunpack.c.l.b16 %v3742
  %v3808 = vunpack.c.h.b16 %v3742
  %v3809 = vunpack.c.l.b16 %v3743
  %v3810 = vunpack.c.h.b16 %v3743
  %v3811 = vunpack.c.l.b16 %v3744
  %v3812 = vunpack.c.h.b16 %v3744
  %v3813 = vunpack.c.l.b16 %v3745
  %v3814 = vunpack.c.h.b16 %v3745
  %v3815 = vunpack.c.l.b16 %v3746
  %v3816 = vunpack.c.h.b16 %v3746
  %v3817 = vunpack.c.l.b16 %v3747
  %v3818 = vunpack.c.h.b16 %v3747
  %v3819 = vunpack.c.l.b16 %v3748
  %v3820 = vunpack.c.h.b16 %v3748
  %v3821 = vunpack.c.l.b16 %v3749
  %v3822 = vunpack.c.h.b16 %v3749
  %v3823 = vunpack.c.l.b16 %v3750
  %v3824 = vunpack.c.h.b16 %v3750
  %v3825 = vunpack.c.l.b16 %v3751
  %v3826 = vunpack.c.h.b16 %v3751
  %v3827 = vunpack.c.l.b16 %v3752
  %v3828 = vunpack.c.h.b16 %v3752
  %v3829 = vunpack.c.l.b16 %v3753
  %v3830 = vunpack.c.h.b16 %v3753
  %v3831 = vunpack.c.l.b16 %v3754
  %v3832 = vunpack.c.h.b16 %v3754
  %v3833 = vunpack.c.l.b16 %v3755
  %v3834 = vunpack.c.h.b16 %v3755
  %v3835 = vunpack.c.l.b16 %v3756
  %v3836 = vunpack.c.h.b16 %v3756
  %v3837 = vunpack.c.l.b16 %v3757
  %v3838 = vunpack.c.h.b16 %v3757
  %v3839 = vunpack.c.l.b16 %v3758
  %v3840 = vunpack.c.h.b16 %v3758
  %v3841 = vunpack.c.l.b16 %v3759
  %v3842 = vunpack.c.h.b16 %v3759
  %v3843 = vunpack.c.l.b16 %v3760
  %v3844 = vunpack.c.h.b16 %v3760
  %v3845 = vunpack.c.l.b16 %v3761
  %v3846 = vunpack.c.h.b16 %v3761
  %v3847 = vunpack.c.l.b16 %v3762
  %v3848 = vunpack.c.h.b16 %v3762
  %v3849 = vunpack.c.l.b16 %v3763
  %v3850 = vunpack.c.h.b16 %v3763
  %v3851 = vunpack.c.l.b16 %v3764
  %v3852 = vunpack.c.h.b16 %v3764
  %v3853 = vunpack.c.l.b16 %v3765
  %v3854 = vunpack.c.h.b16 %v3765
  %v3855 = vunpack.c.l.b16 %v3766
  %v3856 = vunpack.c.h.b16 %v3766
  %v3857 = vunpack.c.l.b16 %v3767
  %v3858 = vunpack.c.h.b16 %v3767
  %v3859 = vunpack.c.l.b16 %v3768
  %v3860 = vunpack.c.h.b16 %v3768
  %v3861 = vunpack.c.l.b16 %v3769
  %v3862 = vunpack.c.h.b16 %v3769
  %v3863 = vunpack.c.l.b16 %v3770
  %v3864 = vunpack.c.h.b16 %v3770
  %v3865 = vunpack.c.l.b16 %v3771
  %v3866 = vunpack.c.h.b16 %v3771
  %v3867 = vunpack.c.l.b16 %v3772
  %v3868 = vunpack.c.h.b16 %v3772
  %v3869 = vpack.c.b16 %v3809, %v3805
  %v3870 = vpack.c.b16 %v3810, %v3806
  %v3871 = vpack.c.b16 %v3811, %v3807
  %v3872 = vpack.c.b16 %v3812, %v3808
  %v3873 = vpack.c.b16 %v3817, %v3813
  %v3874 = vpack.c.b16 %v3818, %v3814
  %v3875 = vpack.c.b16 %v3819, %v3815
  %v3876 = vpack.c.b16 %v3820, %v3816
  %v3877 = vpack.c.b16 %v3825, %v3821
  %v3878 = vpack.c.b16 %v3826, %v3822
  %v3879 = vpack.c.b16 %v3827, %v3823
  %v3880 = vpack.c.b16 %v3828, %v3824
  %v3881 = vpack.c.b16 %v3833, %v3829
  %v3882 = vpack.c.b16 %v3834, %v3830
  %v3883 = vpack.c.b16 %v3835, %v3831
  %v3884 = vpack.c.b16 %v3836, %v3832
  %v3885 = vpack.c.b16 %v3841, %v3837
  %v3886 = vpack.c.b16 %v3842, %v3838
  %v3887 = vpack.c.b16 %v3843, %v3839
  %v3888 = vpack.c.b16 %v3844, %v3840
  %v3889 = vpack.c.b16 %v3849, %v3845
  %v3890 = vpack.c.b16 %v3850, %v3846
  %v3891 = vpack.c.b16 %v3851, %v3847
  %v3892 = vpack.c.b16 %v3852, %v3848
  %v3893 = vpack.c.b16 %v3857, %v3853
  %v3894 = vpack.c.b16 %v3858, %v3854
  %v3895 = vpack.c.b16 %v3859, %v3855
  %v3896 = vpack.c.b16 %v3860, %v3856
  %v3897 = vpack.c.b16 %v3865, %v3861
  %v3898 = vpack.c.b16 %v3866, %v3862
  %v3899 = vpack.c.b16 %v3867, %v3863
  %v3900 = vpack.c.b16 %v3868, %v3864
  %3933 = vmatprep.subr.bf16.mxu0 %v3870
  %3934 = vmatpush1.bf16.msra.mxu0 %v3869
  %3935 = vmatprep.subr.bf16.mxu0 %v3874
  %3936 = vmatpush1.bf16.msra.mxu0 %v3873
  %3937 = vmatprep.subr.bf16.mxu0 %v3878
  %3938 = vmatpush1.bf16.msra.mxu0 %v3877
  %3939 = vmatprep.subr.bf16.mxu0 %v3882
  %3940 = vmatpush1.bf16.msra.mxu0 %v3881
  %3941 = vmatprep.subr.bf16.mxu0 %v3886
  %3942 = vmatpush1.bf16.msra.mxu0 %v3885
  %3943 = vmatprep.subr.bf16.mxu0 %v3890
  %3944 = vmatpush1.bf16.msra.mxu0 %v3889
  %3945 = vmatprep.subr.bf16.mxu0 %v3894
  %3946 = vmatpush1.bf16.msra.mxu0 %v3893
  %3947 = vmatprep.subr.bf16.mxu0 %v3898
  %3948 = vmatpush1.bf16.msra.mxu0 %v3897
  %3949 = vmatprep.subr.bf16.mxu0 0
  %3950 = vmatpush1.bf16.msra.mxu0 0
  %3951 = vmatprep.subr.bf16.mxu0 0
  %3952 = vmatpush1.bf16.msra.mxu0 0
  %3953 = vmatprep.subr.bf16.mxu0 0
  %3954 = vmatpush1.bf16.msra.mxu0 0
  %3955 = vmatprep.subr.bf16.mxu0 0
  %3956 = vmatpush1.bf16.msra.mxu0 0
  %3957 = vmatprep.subr.bf16.mxu0 0
  %3958 = vmatpush1.bf16.msra.mxu0 0
  %3959 = vmatprep.subr.bf16.mxu0 0
  %3960 = vmatpush1.bf16.msra.mxu0 0
  %3961 = vmatprep.subr.bf16.mxu0 0
  %3962 = vmatpush1.bf16.msra.mxu0 0
  %3963 = vmatprep.subr.bf16.mxu0 0
  %3964 = vmatpush1.bf16.msra.mxu0 0
  %3965 = vmatprep.mubr.bf16.mxu0 0
  %3966 = vmatmul.mubr.bf16.gmra.mrb[0].mxu0 %v3740
  %v3967 = vpop.f32.mrb[0].mxu0
  %v3968 = vadd.f32 0.0, %v3967
  %v3969 = vpop.f32.mrb[0].mxu0
  %v3970 = vadd.f32 0.0, %v3969
  %v3971 = vpop.f32.mrb[0].mxu0
  %v3972 = vpop.f32.mrb[0].mxu0
  %3973 = vdwg.mxu0
  %3974 = vmatprep.subr.bf16.mxu0 %v3872
  %3975 = vmatpush1.bf16.msra.mxu0 %v3871
  %3976 = vmatprep.subr.bf16.mxu0 %v3876
  %3977 = vmatpush1.bf16.msra.mxu0 %v3875
  %3978 = vmatprep.subr.bf16.mxu0 %v3880
  %3979 = vmatpush1.bf16.msra.mxu0 %v3879
  %3980 = vmatprep.subr.bf16.mxu0 %v3884
  %3981 = vmatpush1.bf16.msra.mxu0 %v3883
  %3982 = vmatprep.subr.bf16.mxu0 %v3888
  %3983 = vmatpush1.bf16.msra.mxu0 %v3887
  %3984 = vmatprep.subr.bf16.mxu0 %v3892
  %3985 = vmatpush1.bf16.msra.mxu0 %v3891
  %3986 = vmatprep.subr.bf16.mxu0 %v3896
  %3987 = vmatpush1.bf16.msra.mxu0 %v3895
  %3988 = vmatprep.subr.bf16.mxu0 %v3900
  %3989 = vmatpush1.bf16.msra.mxu0 %v3899
  %3990 = vmatprep.subr.bf16.mxu0 0
  %3991 = vmatpush1.bf16.msra.mxu0 0
  %3992 = vmatprep.subr.bf16.mxu0 0
  %3993 = vmatpush1.bf16.msra.mxu0 0
  %3994 = vmatprep.subr.bf16.mxu0 0
  %3995 = vmatpush1.bf16.msra.mxu0 0
  %3996 = vmatprep.subr.bf16.mxu0 0
  %3997 = vmatpush1.bf16.msra.mxu0 0
  %3998 = vmatprep.subr.bf16.mxu0 0
  %3999 = vmatpush1.bf16.msra.mxu0 0
  %4000 = vmatprep.subr.bf16.mxu0 0
  %4001 = vmatpush1.bf16.msra.mxu0 0
  %4002 = vmatprep.subr.bf16.mxu0 0
  %4003 = vmatpush1.bf16.msra.mxu0 0
  %4004 = vmatprep.subr.bf16.mxu0 0
  %4005 = vmatpush1.bf16.msra.mxu0 0
  %4006 = vmatprep.mubr.bf16.mxu0 0
  %4007 = vmatmul.mubr.bf16.gmra.mrb[0].mxu0 %v3740
  %v4008 = vpop.f32.mrb[0].mxu0
  %v4009 = vadd.f32 0.0, %v4008
  %v4010 = vpop.f32.mrb[0].mxu0
  %v4011 = vadd.f32 0.0, %v4010
  %v4012 = vpop.f32.mrb[0].mxu0
  %v4013 = vpop.f32.mrb[0].mxu0
  %4014 = vdwg.mxu0
  %v4019 = vcombine.low %v3968, %v3970
  %v4020 = vcombine.low %v4009, %v4011
  %v4022 = vunpack.c.l.s4 1983009808
  %v4023 = vunpack.c.0.s8 %v4022
  %v4024 = vlaneseq
  %v4025 = vshrl.u32 %v4024, 7
  %v4026 = vsub.s32 %v4023, %v4025
  %v4027 = vrot.slane %v4019, %v4026
  %v4029 = vunpack.c.l.s4 1983009808
  %v4030 = vunpack.c.0.s8 %v4029
  %v4031 = vlaneseq
  %v4032 = vshrl.u32 %v4031, 7
  %v4033 = vsub.s32 %v4030, %v4032
  %v4034 = vrot.slane %v4020, %v4033
  %v4035 = vcombine.low %v4027, %v4034
  %v4037 = vadd.f32 %v3739, %v4035
  %v4038 = vxor.u32 %v4037, 2147483648
  %v4039 = vmul.f32 %v4038, 1.442695
  %v4040 = vpow.pop %v4039
  %v4041 = vadd.f32 %v4040, 1.0
  %v4042 = vrcp.pop %v4041
  %v4043 = vmul.f32 1.0, %v4042
  %v4045 = vrot.slane %v4037, 2
  %v4047 = vxor.u32 %v4045, 2147483648
  %v4048 = vmul.f32 %v4047, 1.442695
  %v4049 = vpow.pop %v4048
  %v4050 = vadd.f32 %v4049, 1.0
  %v4051 = vrcp.pop %v4050
  %v4052 = vmul.f32 1.0, %v4051
  %v4053 = vrot.slane %v4037, 4
  %v4055 = vtanh.pop %v4053
  %v4056 = vrot.slane %v4037, 6
  %v4058 = vxor.u32 %v4056, 2147483648
  %v4059 = vmul.f32 %v4058, 1.442695
  %v4060 = vpow.pop %v4059
  %v4061 = vadd.f32 %v4060, 1.0
  %v4062 = vrcp.pop %v4061
  %v4063 = vmul.f32 1.0, %v4062
  %v4064 = vmul.f32 %v4052, %v3738
  %v4065 = vmul.f32 %v4043, %v4055
  %v4066 = vadd.f32 %v4064, %v4065
  %v4067 = vtanh.pop %v4066
  %v4068 = vmul.f32 %v4063, %v4067
  %4069 = vst [vmem:[#allocation2] sm:$0x3] %v3735
  %4070 = vst [vmem:[#allocation3] sm:$0x3] %v3733
  %4071 = vst [vmem:[#allocation4] sm:$0x3] %v4068
  %4072 = vst [vmem:[#allocation5] sm:$0x3] %v4066
  %v4073 = vpack.c.bf16 %v3735, %v3735
  %4074 = vst [vmem:[%s2049] sm:$0x1] %v4073
  %v4075 = vpack.c.bf16 %v4068, %v4068
  %4076 = vst [vmem:[%s2046 + $0x1] sm:$0x1] %v4075
  %v4077 = vld [vmem:[%s1029] sm:$0xf]
  %v4078 = vld [vmem:[#allocation2] sm:$0x3]
  %v4079 = vld [vmem:[#allocation3] sm:$0x3]
  %v4080 = vunpack.c.l.bf16 %v4077
  %v4081 = vpack.c.bf16 %v4078, %v4078
  %v4082 = vld [vmem:[%s1] sm:$0xff]
  %v4083 = vld [vmem:[%s1 + $0x8] sm:$0xff]
  %v4084 = vld [vmem:[%s1 + $0x10] sm:$0xff]
  %v4085 = vld [vmem:[%s1 + $0x18] sm:$0xff]
  %v4086 = vld [vmem:[%s1 + $0x20] sm:$0xff]
  %v4087 = vld [vmem:[%s1 + $0x28] sm:$0xff]
  %v4088 = vld [vmem:[%s1 + $0x30] sm:$0xff]
  %v4089 = vld [vmem:[%s1 + $0x38] sm:$0xff]
  %v4090 = vld [vmem:[%s1 + $0x40] sm:$0xff]
  %v4091 = vld [vmem:[%s1 + $0x48] sm:$0xff]
  %v4092 = vld [vmem:[%s1 + $0x50] sm:$0xff]
  %v4093 = vld [vmem:[%s1 + $0x58] sm:$0xff]
  %v4094 = vld [vmem:[%s1 + $0x60] sm:$0xff]
  %v4095 = vld [vmem:[%s1 + $0x68] sm:$0xff]
  %v4096 = vld [vmem:[%s1 + $0x70] sm:$0xff]
  %v4097 = vld [vmem:[%s1 + $0x78] sm:$0xff]
  %v4098 = vld [vmem:[%s1 + $0x80] sm:$0xff]
  %v4099 = vld [vmem:[%s1 + $0x88] sm:$0xff]
  %v4100 = vld [vmem:[%s1 + $0x90] sm:$0xff]
  %v4101 = vld [vmem:[%s1 + $0x98] sm:$0xff]
  %v4102 = vld [vmem:[%s1 + $0xa0] sm:$0xff]
  %v4103 = vld [vmem:[%s1 + $0xa8] sm:$0xff]
  %v4104 = vld [vmem:[%s1 + $0xb0] sm:$0xff]
  %v4105 = vld [vmem:[%s1 + $0xb8] sm:$0xff]
  %v4106 = vld [vmem:[%s1 + $0xc0] sm:$0xff]
  %v4107 = vld [vmem:[%s1 + $0xc8] sm:$0xff]
  %v4108 = vld [vmem:[%s1 + $0xd0] sm:$0xff]
  %v4109 = vld [vmem:[%s1 + $0xd8] sm:$0xff]
  %v4110 = vld [vmem:[%s1 + $0xe0] sm:$0xff]
  %v4111 = vld [vmem:[%s1 + $0xe8] sm:$0xff]
  %v4112 = vld [vmem:[%s1 + $0xf0] sm:$0xff]
  %v4113 = vld [vmem:[%s1 + $0xf8] sm:$0xff]
  %v4146 = vunpack.c.l.b16 %v4082
  %v4147 = vunpack.c.h.b16 %v4082
  %v4148 = vunpack.c.l.b16 %v4083
  %v4149 = vunpack.c.h.b16 %v4083
  %v4150 = vunpack.c.l.b16 %v4084
  %v4151 = vunpack.c.h.b16 %v4084
  %v4152 = vunpack.c.l.b16 %v4085
  %v4153 = vunpack.c.h.b16 %v4085
  %v4154 = vunpack.c.l.b16 %v4086
  %v4155 = vunpack.c.h.b16 %v4086
  %v4156 = vunpack.c.l.b16 %v4087
  %v4157 = vunpack.c.h.b16 %v4087
  %v4158 = vunpack.c.l.b16 %v4088
  %v4159 = vunpack.c.h.b16 %v4088
  %v4160 = vunpack.c.l.b16 %v4089
  %v4161 = vunpack.c.h.b16 %v4089
  %v4162 = vunpack.c.l.b16 %v4090
  %v4163 = vunpack.c.h.b16 %v4090
  %v4164 = vunpack.c.l.b16 %v4091
  %v4165 = vunpack.c.h.b16 %v4091
  %v4166 = vunpack.c.l.b16 %v4092
  %v4167 = vunpack.c.h.b16 %v4092
  %v4168 = vunpack.c.l.b16 %v4093
  %v4169 = vunpack.c.h.b16 %v4093
  %v4170 = vunpack.c.l.b16 %v4094
  %v4171 = vunpack.c.h.b16 %v4094
  %v4172 = vunpack.c.l.b16 %v4095
  %v4173 = vunpack.c.h.b16 %v4095
  %v4174 = vunpack.c.l.b16 %v4096
  %v4175 = vunpack.c.h.b16 %v4096
  %v4176 = vunpack.c.l.b16 %v4097
  %v4177 = vunpack.c.h.b16 %v4097
  %v4178 = vunpack.c.l.b16 %v4098
  %v4179 = vunpack.c.h.b16 %v4098
  %v4180 = vunpack.c.l.b16 %v4099
  %v4181 = vunpack.c.h.b16 %v4099
  %v4182 = vunpack.c.l.b16 %v4100
  %v4183 = vunpack.c.h.b16 %v4100
  %v4184 = vunpack.c.l.b16 %v4101
  %v4185 = vunpack.c.h.b16 %v4101
  %v4186 = vunpack.c.l.b16 %v4102
  %v4187 = vunpack.c.h.b16 %v4102
  %v4188 = vunpack.c.l.b16 %v4103
  %v4189 = vunpack.c.h.b16 %v4103
  %v4190 = vunpack.c.l.b16 %v4104
  %v4191 = vunpack.c.h.b16 %v4104
  %v4192 = vunpack.c.l.b16 %v4105
  %v4193 = vunpack.c.h.b16 %v4105
  %v4194 = vunpack.c.l.b16 %v4106
  %v4195 = vunpack.c.h.b16 %v4106
  %v4196 = vunpack.c.l.b16 %v4107
  %v4197 = vunpack.c.h.b16 %v4107
  %v4198 = vunpack.c.l.b16 %v4108
  %v4199 = vunpack.c.h.b16 %v4108
  %v4200 = vunpack.c.l.b16 %v4109
  %v4201 = vunpack.c.h.b16 %v4109
  %v4202 = vunpack.c.l.b16 %v4110
  %v4203 = vunpack.c.h.b16 %v4110
  %v4204 = vunpack.c.l.b16 %v4111
  %v4205 = vunpack.c.h.b16 %v4111
  %v4206 = vunpack.c.l.b16 %v4112
  %v4207 = vunpack.c.h.b16 %v4112
  %v4208 = vunpack.c.l.b16 %v4113
  %v4209 = vunpack.c.h.b16 %v4113
  %v4210 = vpack.c.b16 %v4150, %v4146
  %v4211 = vpack.c.b16 %v4151, %v4147
  %v4212 = vpack.c.b16 %v4152, %v4148
  %v4213 = vpack.c.b16 %v4153, %v4149
  %v4214 = vpack.c.b16 %v4158, %v4154
  %v4215 = vpack.c.b16 %v4159, %v4155
  %v4216 = vpack.c.b16 %v4160, %v4156
  %v4217 = vpack.c.b16 %v4161, %v4157
  %v4218 = vpack.c.b16 %v4166, %v4162
  %v4219 = vpack.c.b16 %v4167, %v4163
  %v4220 = vpack.c.b16 %v4168, %v4164
  %v4221 = vpack.c.b16 %v4169, %v4165
  %v4222 = vpack.c.b16 %v4174, %v4170
  %v4223 = vpack.c.b16 %v4175, %v4171
  %v4224 = vpack.c.b16 %v4176, %v4172
  %v4225 = vpack.c.b16 %v4177, %v4173
  %v4226 = vpack.c.b16 %v4182, %v4178
  %v4227 = vpack.c.b16 %v4183, %v4179
  %v4228 = vpack.c.b16 %v4184, %v4180
  %v4229 = vpack.c.b16 %v4185, %v4181
  %v4230 = vpack.c.b16 %v4190, %v4186
  %v4231 = vpack.c.b16 %v4191, %v4187
  %v4232 = vpack.c.b16 %v4192, %v4188
  %v4233 = vpack.c.b16 %v4193, %v4189
  %v4234 = vpack.c.b16 %v4198, %v4194
  %v4235 = vpack.c.b16 %v4199, %v4195
  %v4236 = vpack.c.b16 %v4200, %v4196
  %v4237 = vpack.c.b16 %v4201, %v4197
  %v4238 = vpack.c.b16 %v4206, %v4202
  %v4239 = vpack.c.b16 %v4207, %v4203
  %v4240 = vpack.c.b16 %v4208, %v4204
  %v4241 = vpack.c.b16 %v4209, %v4205
  %4274 = vmatprep.subr.bf16.mxu0 %v4211
  %4275 = vmatpush1.bf16.msra.mxu0 %v4210
  %4276 = vmatprep.subr.bf16.mxu0 %v4215
  %4277 = vmatpush1.bf16.msra.mxu0 %v4214
  %4278 = vmatprep.subr.bf16.mxu0 %v4219
  %4279 = vmatpush1.bf16.msra.mxu0 %v4218
  %4280 = vmatprep.subr.bf16.mxu0 %v4223
  %4281 = vmatpush1.bf16.msra.mxu0 %v4222
  %4282 = vmatprep.subr.bf16.mxu0 %v4227
  %4283 = vmatpush1.bf16.msra.mxu0 %v4226
  %4284 = vmatprep.subr.bf16.mxu0 %v4231
  %4285 = vmatpush1.bf16.msra.mxu0 %v4230
  %4286 = vmatprep.subr.bf16.mxu0 %v4235
  %4287 = vmatpush1.bf16.msra.mxu0 %v4234
  %4288 = vmatprep.subr.bf16.mxu0 %v4239
  %4289 = vmatpush1.bf16.msra.mxu0 %v4238
  %4290 = vmatprep.subr.bf16.mxu0 0
  %4291 = vmatpush1.bf16.msra.mxu0 0
  %4292 = vmatprep.subr.bf16.mxu0 0
  %4293 = vmatpush1.bf16.msra.mxu0 0
  %4294 = vmatprep.subr.bf16.mxu0 0
  %4295 = vmatpush1.bf16.msra.mxu0 0
  %4296 = vmatprep.subr.bf16.mxu0 0
  %4297 = vmatpush1.bf16.msra.mxu0 0
  %4298 = vmatprep.subr.bf16.mxu0 0
  %4299 = vmatpush1.bf16.msra.mxu0 0
  %4300 = vmatprep.subr.bf16.mxu0 0
  %4301 = vmatpush1.bf16.msra.mxu0 0
  %4302 = vmatprep.subr.bf16.mxu0 0
  %4303 = vmatpush1.bf16.msra.mxu0 0
  %4304 = vmatprep.subr.bf16.mxu0 0
  %4305 = vmatpush1.bf16.msra.mxu0 0
  %4306 = vmatprep.mubr.bf16.mxu0 0
  %4307 = vmatmul.mubr.bf16.gmra.mrb[0].mxu0 %v4081
  %v4308 = vpop.f32.mrb[0].mxu0
  %v4309 = vadd.f32 0.0, %v4308
  %v4310 = vpop.f32.mrb[0].mxu0
  %v4311 = vadd.f32 0.0, %v4310
  %v4312 = vpop.f32.mrb[0].mxu0
  %v4313 = vpop.f32.mrb[0].mxu0
  %4314 = vdwg.mxu0
  %4315 = vmatprep.subr.bf16.mxu0 %v4213
  %4316 = vmatpush1.bf16.msra.mxu0 %v4212
  %4317 = vmatprep.subr.bf16.mxu0 %v4217
  %4318 = vmatpush1.bf16.msra.mxu0 %v4216
  %4319 = vmatprep.subr.bf16.mxu0 %v4221
  %4320 = vmatpush1.bf16.msra.mxu0 %v4220
  %4321 = vmatprep.subr.bf16.mxu0 %v4225
  %4322 = vmatpush1.bf16.msra.mxu0 %v4224
  %4323 = vmatprep.subr.bf16.mxu0 %v4229
  %4324 = vmatpush1.bf16.msra.mxu0 %v4228
  %4325 = vmatprep.subr.bf16.mxu0 %v4233
  %4326 = vmatpush1.bf16.msra.mxu0 %v4232
  %4327 = vmatprep.subr.bf16.mxu0 %v4237
  %4328 = vmatpush1.bf16.msra.mxu0 %v4236
  %4329 = vmatprep.subr.bf16.mxu0 %v4241
  %4330 = vmatpush1.bf16.msra.mxu0 %v4240
  %4331 = vmatprep.subr.bf16.mxu0 0
  %4332 = vmatpush1.bf16.msra.mxu0 0
  %4333 = vmatprep.subr.bf16.mxu0 0
  %4334 = vmatpush1.bf16.msra.mxu0 0
  %4335 = vmatprep.subr.bf16.mxu0 0
  %4336 = vmatpush1.bf16.msra.mxu0 0
  %4337 = vmatprep.subr.bf16.mxu0 0
  %4338 = vmatpush1.bf16.msra.mxu0 0
  %4339 = vmatprep.subr.bf16.mxu0 0
  %4340 = vmatpush1.bf16.msra.mxu0 0
  %4341 = vmatprep.subr.bf16.mxu0 0
  %4342 = vmatpush1.bf16.msra.mxu0 0
  %4343 = vmatprep.subr.bf16.mxu0 0
  %4344 = vmatpush1.bf16.msra.mxu0 0
  %4345 = vmatprep.subr.bf16.mxu0 0
  %4346 = vmatpush1.bf16.msra.mxu0 0
  %4347 = vmatprep.mubr.bf16.mxu0 0
  %4348 = vmatmul.mubr.bf16.gmra.mrb[0].mxu0 %v4081
  %v4349 = vpop.f32.mrb[0].mxu0
  %v4350 = vadd.f32 0.0, %v4349
  %v4351 = vpop.f32.mrb[0].mxu0
  %v4352 = vadd.f32 0.0, %v4351
  %v4353 = vpop.f32.mrb[0].mxu0
  %v4354 = vpop.f32.mrb[0].mxu0
  %4355 = vdwg.mxu0
  %v4360 = vcombine.low %v4309, %v4311
  %v4361 = vcombine.low %v4350, %v4352
  %v4363 = vunpack.c.l.s4 1983009808
  %v4364 = vunpack.c.0.s8 %v4363
  %v4365 = vlaneseq
  %v4366 = vshrl.u32 %v4365, 7
  %v4367 = vsub.s32 %v4364, %v4366
  %v4368 = vrot.slane %v4360, %v4367
  %v4370 = vunpack.c.l.s4 1983009808
  %v4371 = vunpack.c.0.s8 %v4370
  %v4372 = vlaneseq
  %v4373 = vshrl.u32 %v4372, 7
  %v4374 = vsub.s32 %v4371, %v4373
  %v4375 = vrot.slane %v4361, %v4374
  %v4376 = vcombine.low %v4368, %v4375
  %v4378 = vadd.f32 %v4080, %v4376
  %v4379 = vxor.u32 %v4378, 2147483648
  %v4380 = vmul.f32 %v4379, 1.442695
  %v4381 = vpow.pop %v4380
  %v4382 = vadd.f32 %v4381, 1.0
  %v4383 = vrcp.pop %v4382
  %v4384 = vmul.f32 1.0, %v4383
  %v4386 = vrot.slane %v4378, 2
  %v4388 = vxor.u32 %v4386, 2147483648
  %v4389 = vmul.f32 %v4388, 1.442695
  %v4390 = vpow.pop %v4389
  %v4391 = vadd.f32 %v4390, 1.0
  %v4392 = vrcp.pop %v4391
  %v4393 = vmul.f32 1.0, %v4392
  %v4394 = vrot.slane %v4378, 4
  %v4396 = vtanh.pop %v4394
  %v4397 = vrot.slane %v4378, 6
  %v4399 = vxor.u32 %v4397, 2147483648
  %v4400 = vmul.f32 %v4399, 1.442695
  %v4401 = vpow.pop %v4400
  %v4402 = vadd.f32 %v4401, 1.0
  %v4403 = vrcp.pop %v4402
  %v4404 = vmul.f32 1.0, %v4403
  %v4405 = vmul.f32 %v4393, %v4079
  %v4406 = vmul.f32 %v4384, %v4396
  %v4407 = vadd.f32 %v4405, %v4406
  %v4408 = vtanh.pop %v4407
  %v4409 = vmul.f32 %v4404, %v4408
  %v4410 = vld [vmem:[%s695 + $0x4] sm:$0xf]
  %v4411 = vld [vmem:[#allocation4] sm:$0x3]
  %v4412 = vld [vmem:[#allocation5] sm:$0x3]
  %v4413 = vunpack.c.l.bf16 %v4410
  %v4414 = vpack.c.bf16 %v4411, %v4411
  %v4415 = vld [vmem:[%s2] sm:$0xff]
  %v4416 = vld [vmem:[%s2 + $0x8] sm:$0xff]
  %v4417 = vld [vmem:[%s2 + $0x10] sm:$0xff]
  %v4418 = vld [vmem:[%s2 + $0x18] sm:$0xff]
  %v4419 = vld [vmem:[%s2 + $0x20] sm:$0xff]
  %v4420 = vld [vmem:[%s2 + $0x28] sm:$0xff]
  %v4421 = vld [vmem:[%s2 + $0x30] sm:$0xff]
  %v4422 = vld [vmem:[%s2 + $0x38] sm:$0xff]
  %v4423 = vld [vmem:[%s2 + $0x40] sm:$0xff]
  %v4424 = vld [vmem:[%s2 + $0x48] sm:$0xff]
  %v4425 = vld [vmem:[%s2 + $0x50] sm:$0xff]
  %v4426 = vld [vmem:[%s2 + $0x58] sm:$0xff]
  %v4427 = vld [vmem:[%s2 + $0x60] sm:$0xff]
  %v4428 = vld [vmem:[%s2 + $0x68] sm:$0xff]
  %v4429 = vld [vmem:[%s2 + $0x70] sm:$0xff]
  %v4430 = vld [vmem:[%s2 + $0x78] sm:$0xff]
  %v4431 = vld [vmem:[%s2 + $0x80] sm:$0xff]
  %v4432 = vld [vmem:[%s2 + $0x88] sm:$0xff]
  %v4433 = vld [vmem:[%s2 + $0x90] sm:$0xff]
  %v4434 = vld [vmem:[%s2 + $0x98] sm:$0xff]
  %v4435 = vld [vmem:[%s2 + $0xa0] sm:$0xff]
  %v4436 = vld [vmem:[%s2 + $0xa8] sm:$0xff]
  %v4437 = vld [vmem:[%s2 + $0xb0] sm:$0xff]
  %v4438 = vld [vmem:[%s2 + $0xb8] sm:$0xff]
  %v4439 = vld [vmem:[%s2 + $0xc0] sm:$0xff]
  %v4440 = vld [vmem:[%s2 + $0xc8] sm:$0xff]
  %v4441 = vld [vmem:[%s2 + $0xd0] sm:$0xff]
  %v4442 = vld [vmem:[%s2 + $0xd8] sm:$0xff]
  %v4443 = vld [vmem:[%s2 + $0xe0] sm:$0xff]
  %v4444 = vld [vmem:[%s2 + $0xe8] sm:$0xff]
  %v4445 = vld [vmem:[%s2 + $0xf0] sm:$0xff]
  %v4446 = vld [vmem:[%s2 + $0xf8] sm:$0xff]
  %v4479 = vunpack.c.l.b16 %v4415
  %v4480 = vunpack.c.h.b16 %v4415
  %v4481 = vunpack.c.l.b16 %v4416
  %v4482 = vunpack.c.h.b16 %v4416
  %v4483 = vunpack.c.l.b16 %v4417
  %v4484 = vunpack.c.h.b16 %v4417
  %v4485 = vunpack.c.l.b16 %v4418
  %v4486 = vunpack.c.h.b16 %v4418
  %v4487 = vunpack.c.l.b16 %v4419
  %v4488 = vunpack.c.h.b16 %v4419
  %v4489 = vunpack.c.l.b16 %v4420
  %v4490 = vunpack.c.h.b16 %v4420
  %v4491 = vunpack.c.l.b16 %v4421
  %v4492 = vunpack.c.h.b16 %v4421
  %v4493 = vunpack.c.l.b16 %v4422
  %v4494 = vunpack.c.h.b16 %v4422
  %v4495 = vunpack.c.l.b16 %v4423
  %v4496 = vunpack.c.h.b16 %v4423
  %v4497 = vunpack.c.l.b16 %v4424
  %v4498 = vunpack.c.h.b16 %v4424
  %v4499 = vunpack.c.l.b16 %v4425
  %v4500 = vunpack.c.h.b16 %v4425
  %v4501 = vunpack.c.l.b16 %v4426
  %v4502 = vunpack.c.h.b16 %v4426
  %v4503 = vunpack.c.l.b16 %v4427
  %v4504 = vunpack.c.h.b16 %v4427
  %v4505 = vunpack.c.l.b16 %v4428
  %v4506 = vunpack.c.h.b16 %v4428
  %v4507 = vunpack.c.l.b16 %v4429
  %v4508 = vunpack.c.h.b16 %v4429
  %v4509 = vunpack.c.l.b16 %v4430
  %v4510 = vunpack.c.h.b16 %v4430
  %v4511 = vunpack.c.l.b16 %v4431
  %v4512 = vunpack.c.h.b16 %v4431
  %v4513 = vunpack.c.l.b16 %v4432
  %v4514 = vunpack.c.h.b16 %v4432
  %v4515 = vunpack.c.l.b16 %v4433
  %v4516 = vunpack.c.h.b16 %v4433
  %v4517 = vunpack.c.l.b16 %v4434
  %v4518 = vunpack.c.h.b16 %v4434
  %v4519 = vunpack.c.l.b16 %v4435
  %v4520 = vunpack.c.h.b16 %v4435
  %v4521 = vunpack.c.l.b16 %v4436
  %v4522 = vunpack.c.h.b16 %v4436
  %v4523 = vunpack.c.l.b16 %v4437
  %v4524 = vunpack.c.h.b16 %v4437
  %v4525 = vunpack.c.l.b16 %v4438
  %v4526 = vunpack.c.h.b16 %v4438
  %v4527 = vunpack.c.l.b16 %v4439
  %v4528 = vunpack.c.h.b16 %v4439
  %v4529 = vunpack.c.l.b16 %v4440
  %v4530 = vunpack.c.h.b16 %v4440
  %v4531 = vunpack.c.l.b16 %v4441
  %v4532 = vunpack.c.h.b16 %v4441
  %v4533 = vunpack.c.l.b16 %v4442
  %v4534 = vunpack.c.h.b16 %v4442
  %v4535 = vunpack.c.l.b16 %v4443
  %v4536 = vunpack.c.h.b16 %v4443
  %v4537 = vunpack.c.l.b16 %v4444
  %v4538 = vunpack.c.h.b16 %v4444
  %v4539 = vunpack.c.l.b16 %v4445
  %v4540 = vunpack.c.h.b16 %v4445
  %v4541 = vunpack.c.l.b16 %v4446
  %v4542 = vunpack.c.h.b16 %v4446
  %v4543 = vpack.c.b16 %v4483, %v4479
  %v4544 = vpack.c.b16 %v4484, %v4480
  %v4545 = vpack.c.b16 %v4485, %v4481
  %v4546 = vpack.c.b16 %v4486, %v4482
  %v4547 = vpack.c.b16 %v4491, %v4487
  %v4548 = vpack.c.b16 %v4492, %v4488
  %v4549 = vpack.c.b16 %v4493, %v4489
  %v4550 = vpack.c.b16 %v4494, %v4490
  %v4551 = vpack.c.b16 %v4499, %v4495
  %v4552 = vpack.c.b16 %v4500, %v4496
  %v4553 = vpack.c.b16 %v4501, %v4497
  %v4554 = vpack.c.b16 %v4502, %v4498
  %v4555 = vpack.c.b16 %v4507, %v4503
  %v4556 = vpack.c.b16 %v4508, %v4504
  %v4557 = vpack.c.b16 %v4509, %v4505
  %v4558 = vpack.c.b16 %v4510, %v4506
  %v4559 = vpack.c.b16 %v4515, %v4511
  %v4560 = vpack.c.b16 %v4516, %v4512
  %v4561 = vpack.c.b16 %v4517, %v4513
  %v4562 = vpack.c.b16 %v4518, %v4514
  %v4563 = vpack.c.b16 %v4523, %v4519
  %v4564 = vpack.c.b16 %v4524, %v4520
  %v4565 = vpack.c.b16 %v4525, %v4521
  %v4566 = vpack.c.b16 %v4526, %v4522
  %v4567 = vpack.c.b16 %v4531, %v4527
  %v4568 = vpack.c.b16 %v4532, %v4528
  %v4569 = vpack.c.b16 %v4533, %v4529
  %v4570 = vpack.c.b16 %v4534, %v4530
  %v4571 = vpack.c.b16 %v4539, %v4535
  %v4572 = vpack.c.b16 %v4540, %v4536
  %v4573 = vpack.c.b16 %v4541, %v4537
  %v4574 = vpack.c.b16 %v4542, %v4538
  %4607 = vmatprep.subr.bf16.mxu0 %v4544
  %4608 = vmatpush1.bf16.msra.mxu0 %v4543
  %4609 = vmatprep.subr.bf16.mxu0 %v4548
  %4610 = vmatpush1.bf16.msra.mxu0 %v4547
  %4611 = vmatprep.subr.bf16.mxu0 %v4552
  %4612 = vmatpush1.bf16.msra.mxu0 %v4551
  %4613 = vmatprep.subr.bf16.mxu0 %v4556
  %4614 = vmatpush1.bf16.msra.mxu0 %v4555
  %4615 = vmatprep.subr.bf16.mxu0 %v4560
  %4616 = vmatpush1.bf16.msra.mxu0 %v4559
  %4617 = vmatprep.subr.bf16.mxu0 %v4564
  %4618 = vmatpush1.bf16.msra.mxu0 %v4563
  %4619 = vmatprep.subr.bf16.mxu0 %v4568
  %4620 = vmatpush1.bf16.msra.mxu0 %v4567
  %4621 = vmatprep.subr.bf16.mxu0 %v4572
  %4622 = vmatpush1.bf16.msra.mxu0 %v4571
  %4623 = vmatprep.subr.bf16.mxu0 0
  %4624 = vmatpush1.bf16.msra.mxu0 0
  %4625 = vmatprep.subr.bf16.mxu0 0
  %4626 = vmatpush1.bf16.msra.mxu0 0
  %4627 = vmatprep.subr.bf16.mxu0 0
  %4628 = vmatpush1.bf16.msra.mxu0 0
  %4629 = vmatprep.subr.bf16.mxu0 0
  %4630 = vmatpush1.bf16.msra.mxu0 0
  %4631 = vmatprep.subr.bf16.mxu0 0
  %4632 = vmatpush1.bf16.msra.mxu0 0
  %4633 = vmatprep.subr.bf16.mxu0 0
  %4634 = vmatpush1.bf16.msra.mxu0 0
  %4635 = vmatprep.subr.bf16.mxu0 0
  %4636 = vmatpush1.bf16.msra.mxu0 0
  %4637 = vmatprep.subr.bf16.mxu0 0
  %4638 = vmatpush1.bf16.msra.mxu0 0
  %4639 = vmatprep.mubr.bf16.mxu0 0
  %4640 = vmatmul.mubr.bf16.gmra.mrb[0].mxu0 %v4414
  %v4641 = vpop.f32.mrb[0].mxu0
  %v4642 = vadd.f32 0.0, %v4641
  %v4643 = vpop.f32.mrb[0].mxu0
  %v4644 = vadd.f32 0.0, %v4643
  %v4645 = vpop.f32.mrb[0].mxu0
  %v4646 = vpop.f32.mrb[0].mxu0
  %4647 = vdwg.mxu0
  %4648 = vmatprep.subr.bf16.mxu0 %v4546
  %4649 = vmatpush1.bf16.msra.mxu0 %v4545
  %4650 = vmatprep.subr.bf16.mxu0 %v4550
  %4651 = vmatpush1.bf16.msra.mxu0 %v4549
  %4652 = vmatprep.subr.bf16.mxu0 %v4554
  %4653 = vmatpush1.bf16.msra.mxu0 %v4553
  %4654 = vmatprep.subr.bf16.mxu0 %v4558
  %4655 = vmatpush1.bf16.msra.mxu0 %v4557
  %4656 = vmatprep.subr.bf16.mxu0 %v4562
  %4657 = vmatpush1.bf16.msra.mxu0 %v4561
  %4658 = vmatprep.subr.bf16.mxu0 %v4566
  %4659 = vmatpush1.bf16.msra.mxu0 %v4565
  %4660 = vmatprep.subr.bf16.mxu0 %v4570
  %4661 = vmatpush1.bf16.msra.mxu0 %v4569
  %4662 = vmatprep.subr.bf16.mxu0 %v4574
  %4663 = vmatpush1.bf16.msra.mxu0 %v4573
  %4664 = vmatprep.subr.bf16.mxu0 0
  %4665 = vmatpush1.bf16.msra.mxu0 0
  %4666 = vmatprep.subr.bf16.mxu0 0
  %4667 = vmatpush1.bf16.msra.mxu0 0
  %4668 = vmatprep.subr.bf16.mxu0 0
  %4669 = vmatpush1.bf16.msra.mxu0 0
  %4670 = vmatprep.subr.bf16.mxu0 0
  %4671 = vmatpush1.bf16.msra.mxu0 0
  %4672 = vmatprep.subr.bf16.mxu0 0
  %4673 = vmatpush1.bf16.msra.mxu0 0
  %4674 = vmatprep.subr.bf16.mxu0 0
  %4675 = vmatpush1.bf16.msra.mxu0 0
  %4676 = vmatprep.subr.bf16.mxu0 0
  %4677 = vmatpush1.bf16.msra.mxu0 0
  %4678 = vmatprep.subr.bf16.mxu0 0
  %4679 = vmatpush1.bf16.msra.mxu0 0
  %4680 = vmatprep.mubr.bf16.mxu0 0
  %4681 = vmatmul.mubr.bf16.gmra.mrb[0].mxu0 %v4414
  %v4682 = vpop.f32.mrb[0].mxu0
  %v4683 = vadd.f32 0.0, %v4682
  %v4684 = vpop.f32.mrb[0].mxu0
  %v4685 = vadd.f32 0.0, %v4684
  %v4686 = vpop.f32.mrb[0].mxu0
  %v4687 = vpop.f32.mrb[0].mxu0
  %4688 = vdwg.mxu0
  %v4693 = vcombine.low %v4642, %v4644
  %v4694 = vcombine.low %v4683, %v4685
  %v4696 = vunpack.c.l.s4 1983009808
  %v4697 = vunpack.c.0.s8 %v4696
  %v4698 = vlaneseq
  %v4699 = vshrl.u32 %v4698, 7
  %v4700 = vsub.s32 %v4697, %v4699
  %v4701 = vrot.slane %v4693, %v4700
  %v4703 = vunpack.c.l.s4 1983009808
  %v4704 = vunpack.c.0.s8 %v4703
  %v4705 = vlaneseq
  %v4706 = vshrl.u32 %v4705, 7
  %v4707 = vsub.s32 %v4704, %v4706
  %v4708 = vrot.slane %v4694, %v4707
  %v4709 = vcombine.low %v4701, %v4708
  %v4711 = vadd.f32 %v4413, %v4709
  %v4712 = vxor.u32 %v4711, 2147483648
  %v4713 = vmul.f32 %v4712, 1.442695
  %v4714 = vpow.pop %v4713
  %v4715 = vadd.f32 %v4714, 1.0
  %v4716 = vrcp.pop %v4715
  %v4717 = vmul.f32 1.0, %v4716
  %v4719 = vrot.slane %v4711, 2
  %v4721 = vxor.u32 %v4719, 2147483648
  %v4722 = vmul.f32 %v4721, 1.442695
  %v4723 = vpow.pop %v4722
  %v4724 = vadd.f32 %v4723, 1.0
  %v4725 = vrcp.pop %v4724
  %v4726 = vmul.f32 1.0, %v4725
  %v4727 = vrot.slane %v4711, 4
  %v4729 = vtanh.pop %v4727
  %v4730 = vrot.slane %v4711, 6
  %v4732 = vxor.u32 %v4730, 2147483648
  %v4733 = vmul.f32 %v4732, 1.442695
  %v4734 = vpow.pop %v4733
  %v4735 = vadd.f32 %v4734, 1.0
  %v4736 = vrcp.pop %v4735
  %v4737 = vmul.f32 1.0, %v4736
  %v4738 = vmul.f32 %v4726, %v4412
  %v4739 = vmul.f32 %v4717, %v4729
  %v4740 = vadd.f32 %v4738, %v4739
  %v4741 = vtanh.pop %v4740
  %v4742 = vmul.f32 %v4737, %v4741
  %4743 = vst [vmem:[#allocation2] sm:$0x3] %v4409
  %4744 = vst [vmem:[#allocation3] sm:$0x3] %v4407
  %4745 = vst [vmem:[#allocation4] sm:$0x3] %v4742
  %4746 = vst [vmem:[#allocation5] sm:$0x3] %v4740
  %v4747 = vpack.c.bf16 %v4409, %v4409
  %4748 = vst [vmem:[%s1371] sm:$0x1] %v4747
  %v4749 = vpack.c.bf16 %v4742, %v4742
  %4750 = vst [vmem:[%s1368 + $0x1] sm:$0x1] %v4749
  %v4751 = vld [vmem:[%s352] sm:$0xf]
  %v4752 = vld [vmem:[#allocation2] sm:$0x3]
  %v4753 = vld [vmem:[#allocation3] sm:$0x3]
  %v4754 = vunpack.c.l.bf16 %v4751
  %v4755 = vpack.c.bf16 %v4752, %v4752
  %v4756 = vld [vmem:[%s1] sm:$0xff]
  %v4757 = vld [vmem:[%s1 + $0x8] sm:$0xff]
  %v4758 = vld [vmem:[%s1 + $0x10] sm:$0xff]
  %v4759 = vld [vmem:[%s1 + $0x18] sm:$0xff]
  %v4760 = vld [vmem:[%s1 + $0x20] sm:$0xff]
  %v4761 = vld [vmem:[%s1 + $0x28] sm:$0xff]
  %v4762 = vld [vmem:[%s1 + $0x30] sm:$0xff]
  %v4763 = vld [vmem:[%s1 + $0x38] sm:$0xff]
  %v4764 = vld [vmem:[%s1 + $0x40] sm:$0xff]
  %v4765 = vld [vmem:[%s1 + $0x48] sm:$0xff]
  %v4766 = vld [vmem:[%s1 + $0x50] sm:$0xff]
  %v4767 = vld [vmem:[%s1 + $0x58] sm:$0xff]
  %v4768 = vld [vmem:[%s1 + $0x60] sm:$0xff]
  %v4769 = vld [vmem:[%s1 + $0x68] sm:$0xff]
  %v4770 = vld [vmem:[%s1 + $0x70] sm:$0xff]
  %v4771 = vld [vmem:[%s1 + $0x78] sm:$0xff]
  %v4772 = vld [vmem:[%s1 + $0x80] sm:$0xff]
  %v4773 = vld [vmem:[%s1 + $0x88] sm:$0xff]
  %v4774 = vld [vmem:[%s1 + $0x90] sm:$0xff]
  %v4775 = vld [vmem:[%s1 + $0x98] sm:$0xff]
  %v4776 = vld [vmem:[%s1 + $0xa0] sm:$0xff]
  %v4777 = vld [vmem:[%s1 + $0xa8] sm:$0xff]
  %v4778 = vld [vmem:[%s1 + $0xb0] sm:$0xff]
  %v4779 = vld [vmem:[%s1 + $0xb8] sm:$0xff]
  %v4780 = vld [vmem:[%s1 + $0xc0] sm:$0xff]
  %v4781 = vld [vmem:[%s1 + $0xc8] sm:$0xff]
  %v4782 = vld [vmem:[%s1 + $0xd0] sm:$0xff]
  %v4783 = vld [vmem:[%s1 + $0xd8] sm:$0xff]
  %v4784 = vld [vmem:[%s1 + $0xe0] sm:$0xff]
  %v4785 = vld [vmem:[%s1 + $0xe8] sm:$0xff]
  %v4786 = vld [vmem:[%s1 + $0xf0] sm:$0xff]
  %v4787 = vld [vmem:[%s1 + $0xf8] sm:$0xff]
  %v4820 = vunpack.c.l.b16 %v4756
  %v4821 = vunpack.c.h.b16 %v4756
  %v4822 = vunpack.c.l.b16 %v4757
  %v4823 = vunpack.c.h.b16 %v4757
  %v4824 = vunpack.c.l.b16 %v4758
  %v4825 = vunpack.c.h.b16 %v4758
  %v4826 = vunpack.c.l.b16 %v4759
  %v4827 = vunpack.c.h.b16 %v4759
  %v4828 = vunpack.c.l.b16 %v4760
  %v4829 = vunpack.c.h.b16 %v4760
  %v4830 = vunpack.c.l.b16 %v4761
  %v4831 = vunpack.c.h.b16 %v4761
  %v4832 = vunpack.c.l.b16 %v4762
  %v4833 = vunpack.c.h.b16 %v4762
  %v4834 = vunpack.c.l.b16 %v4763
  %v4835 = vunpack.c.h.b16 %v4763
  %v4836 = vunpack.c.l.b16 %v4764
  %v4837 = vunpack.c.h.b16 %v4764
  %v4838 = vunpack.c.l.b16 %v4765
  %v4839 = vunpack.c.h.b16 %v4765
  %v4840 = vunpack.c.l.b16 %v4766
  %v4841 = vunpack.c.h.b16 %v4766
  %v4842 = vunpack.c.l.b16 %v4767
  %v4843 = vunpack.c.h.b16 %v4767
  %v4844 = vunpack.c.l.b16 %v4768
  %v4845 = vunpack.c.h.b16 %v4768
  %v4846 = vunpack.c.l.b16 %v4769
  %v4847 = vunpack.c.h.b16 %v4769
  %v4848 = vunpack.c.l.b16 %v4770
  %v4849 = vunpack.c.h.b16 %v4770
  %v4850 = vunpack.c.l.b16 %v4771
  %v4851 = vunpack.c.h.b16 %v4771
  %v4852 = vunpack.c.l.b16 %v4772
  %v4853 = vunpack.c.h.b16 %v4772
  %v4854 = vunpack.c.l.b16 %v4773
  %v4855 = vunpack.c.h.b16 %v4773
  %v4856 = vunpack.c.l.b16 %v4774
  %v4857 = vunpack.c.h.b16 %v4774
  %v4858 = vunpack.c.l.b16 %v4775
  %v4859 = vunpack.c.h.b16 %v4775
  %v4860 = vunpack.c.l.b16 %v4776
  %v4861 = vunpack.c.h.b16 %v4776
  %v4862 = vunpack.c.l.b16 %v4777
  %v4863 = vunpack.c.h.b16 %v4777
  %v4864 = vunpack.c.l.b16 %v4778
  %v4865 = vunpack.c.h.b16 %v4778
  %v4866 = vunpack.c.l.b16 %v4779
  %v4867 = vunpack.c.h.b16 %v4779
  %v4868 = vunpack.c.l.b16 %v4780
  %v4869 = vunpack.c.h.b16 %v4780
  %v4870 = vunpack.c.l.b16 %v4781
  %v4871 = vunpack.c.h.b16 %v4781
  %v4872 = vunpack.c.l.b16 %v4782
  %v4873 = vunpack.c.h.b16 %v4782
  %v4874 = vunpack.c.l.b16 %v4783
  %v4875 = vunpack.c.h.b16 %v4783
  %v4876 = vunpack.c.l.b16 %v4784
  %v4877 = vunpack.c.h.b16 %v4784
  %v4878 = vunpack.c.l.b16 %v4785
  %v4879 = vunpack.c.h.b16 %v4785
  %v4880 = vunpack.c.l.b16 %v4786
  %v4881 = vunpack.c.h.b16 %v4786
  %v4882 = vunpack.c.l.b16 %v4787
  %v4883 = vunpack.c.h.b16 %v4787
  %v4884 = vpack.c.b16 %v4824, %v4820
  %v4885 = vpack.c.b16 %v4825, %v4821
  %v4886 = vpack.c.b16 %v4826, %v4822
  %v4887 = vpack.c.b16 %v4827, %v4823
  %v4888 = vpack.c.b16 %v4832, %v4828
  %v4889 = vpack.c.b16 %v4833, %v4829
  %v4890 = vpack.c.b16 %v4834, %v4830
  %v4891 = vpack.c.b16 %v4835, %v4831
  %v4892 = vpack.c.b16 %v4840, %v4836
  %v4893 = vpack.c.b16 %v4841, %v4837
  %v4894 = vpack.c.b16 %v4842, %v4838
  %v4895 = vpack.c.b16 %v4843, %v4839
  %v4896 = vpack.c.b16 %v4848, %v4844
  %v4897 = vpack.c.b16 %v4849, %v4845
  %v4898 = vpack.c.b16 %v4850, %v4846
  %v4899 = vpack.c.b16 %v4851, %v4847
  %v4900 = vpack.c.b16 %v4856, %v4852
  %v4901 = vpack.c.b16 %v4857, %v4853
  %v4902 = vpack.c.b16 %v4858, %v4854
  %v4903 = vpack.c.b16 %v4859, %v4855
  %v4904 = vpack.c.b16 %v4864, %v4860
  %v4905 = vpack.c.b16 %v4865, %v4861
  %v4906 = vpack.c.b16 %v4866, %v4862
  %v4907 = vpack.c.b16 %v4867, %v4863
  %v4908 = vpack.c.b16 %v4872, %v4868
  %v4909 = vpack.c.b16 %v4873, %v4869
  %v4910 = vpack.c.b16 %v4874, %v4870
  %v4911 = vpack.c.b16 %v4875, %v4871
  %v4912 = vpack.c.b16 %v4880, %v4876
  %v4913 = vpack.c.b16 %v4881, %v4877
  %v4914 = vpack.c.b16 %v4882, %v4878
  %v4915 = vpack.c.b16 %v4883, %v4879
  %4948 = vmatprep.subr.bf16.mxu0 %v4885
  %4949 = vmatpush1.bf16.msra.mxu0 %v4884
  %4950 = vmatprep.subr.bf16.mxu0 %v4889
  %4951 = vmatpush1.bf16.msra.mxu0 %v4888
  %4952 = vmatprep.subr.bf16.mxu0 %v4893
  %4953 = vmatpush1.bf16.msra.mxu0 %v4892
  %4954 = vmatprep.subr.bf16.mxu0 %v4897
  %4955 = vmatpush1.bf16.msra.mxu0 %v4896
  %4956 = vmatprep.subr.bf16.mxu0 %v4901
  %4957 = vmatpush1.bf16.msra.mxu0 %v4900
  %4958 = vmatprep.subr.bf16.mxu0 %v4905
  %4959 = vmatpush1.bf16.msra.mxu0 %v4904
  %4960 = vmatprep.subr.bf16.mxu0 %v4909
  %4961 = vmatpush1.bf16.msra.mxu0 %v4908
  %4962 = vmatprep.subr.bf16.mxu0 %v4913
  %4963 = vmatpush1.bf16.msra.mxu0 %v4912
  %4964 = vmatprep.subr.bf16.mxu0 0
  %4965 = vmatpush1.bf16.msra.mxu0 0
  %4966 = vmatprep.subr.bf16.mxu0 0
  %4967 = vmatpush1.bf16.msra.mxu0 0
  %4968 = vmatprep.subr.bf16.mxu0 0
  %4969 = vmatpush1.bf16.msra.mxu0 0
  %4970 = vmatprep.subr.bf16.mxu0 0
  %4971 = vmatpush1.bf16.msra.mxu0 0
  %4972 = vmatprep.subr.bf16.mxu0 0
  %4973 = vmatpush1.bf16.msra.mxu0 0
  %4974 = vmatprep.subr.bf16.mxu0 0
  %4975 = vmatpush1.bf16.msra.mxu0 0
  %4976 = vmatprep.subr.bf16.mxu0 0
  %4977 = vmatpush1.bf16.msra.mxu0 0
  %4978 = vmatprep.subr.bf16.mxu0 0
  %4979 = vmatpush1.bf16.msra.mxu0 0
  %4980 = vmatprep.mubr.bf16.mxu0 0
  %4981 = vmatmul.mubr.bf16.gmra.mrb[0].mxu0 %v4755
  %v4982 = vpop.f32.mrb[0].mxu0
  %v4983 = vadd.f32 0.0, %v4982
  %v4984 = vpop.f32.mrb[0].mxu0
  %v4985 = vadd.f32 0.0, %v4984
  %v4986 = vpop.f32.mrb[0].mxu0
  %v4987 = vpop.f32.mrb[0].mxu0
  %4988 = vdwg.mxu0
  %4989 = vmatprep.subr.bf16.mxu0 %v4887
  %4990 = vmatpush1.bf16.msra.mxu0 %v4886
  %4991 = vmatprep.subr.bf16.mxu0 %v4891
  %4992 = vmatpush1.bf16.msra.mxu0 %v4890
  %4993 = vmatprep.subr.bf16.mxu0 %v4895
  %4994 = vmatpush1.bf16.msra.mxu0 %v4894
  %4995 = vmatprep.subr.bf16.mxu0 %v4899
  %4996 = vmatpush1.bf16.msra.mxu0 %v4898
  %4997 = vmatprep.subr.bf16.mxu0 %v4903
  %4998 = vmatpush1.bf16.msra.mxu0 %v4902
  %4999 = vmatprep.subr.bf16.mxu0 %v4907
  %5000 = vmatpush1.bf16.msra.mxu0 %v4906
  %5001 = vmatprep.subr.bf16.mxu0 %v4911
  %5002 = vmatpush1.bf16.msra.mxu0 %v4910
  %5003 = vmatprep.subr.bf16.mxu0 %v4915
  %5004 = vmatpush1.bf16.msra.mxu0 %v4914
  %5005 = vmatprep.subr.bf16.mxu0 0
  %5006 = vmatpush1.bf16.msra.mxu0 0
  %5007 = vmatprep.subr.bf16.mxu0 0
  %5008 = vmatpush1.bf16.msra.mxu0 0
  %5009 = vmatprep.subr.bf16.mxu0 0
  %5010 = vmatpush1.bf16.msra.mxu0 0
  %5011 = vmatprep.subr.bf16.mxu0 0
  %5012 = vmatpush1.bf16.msra.mxu0 0
  %5013 = vmatprep.subr.bf16.mxu0 0
  %5014 = vmatpush1.bf16.msra.mxu0 0
  %5015 = vmatprep.subr.bf16.mxu0 0
  %5016 = vmatpush1.bf16.msra.mxu0 0
  %5017 = vmatprep.subr.bf16.mxu0 0
  %5018 = vmatpush1.bf16.msra.mxu0 0
  %5019 = vmatprep.subr.bf16.mxu0 0
  %5020 = vmatpush1.bf16.msra.mxu0 0
  %5021 = vmatprep.mubr.bf16.mxu0 0
  %5022 = vmatmul.mubr.bf16.gmra.mrb[0].mxu0 %v4755
  %v5023 = vpop.f32.mrb[0].mxu0
  %v5024 = vadd.f32 0.0, %v5023
  %v5025 = vpop.f32.mrb[0].mxu0
  %v5026 = vadd.f32 0.0, %v5025
  %v5027 = vpop.f32.mrb[0].mxu0
  %v5028 = vpop.f32.mrb[0].mxu0
  %5029 = vdwg.mxu0
  %v5034 = vcombine.low %v4983, %v4985
  %v5035 = vcombine.low %v5024, %v5026
  %v5037 = vunpack.c.l.s4 1983009808
  %v5038 = vunpack.c.0.s8 %v5037
  %v5039 = vlaneseq
  %v5040 = vshrl.u32 %v5039, 7
  %v5041 = vsub.s32 %v5038, %v5040
  %v5042 = vrot.slane %v5034, %v5041
  %v5044 = vunpack.c.l.s4 1983009808
  %v5045 = vunpack.c.0.s8 %v5044
  %v5046 = vlaneseq
  %v5047 = vshrl.u32 %v5046, 7
  %v5048 = vsub.s32 %v5045, %v5047
  %v5049 = vrot.slane %v5035, %v5048
  %v5050 = vcombine.low %v5042, %v5049
  %v5052 = vadd.f32 %v4754, %v5050
  %v5053 = vxor.u32 %v5052, 2147483648
  %v5054 = vmul.f32 %v5053, 1.442695
  %v5055 = vpow.pop %v5054
  %v5056 = vadd.f32 %v5055, 1.0
  %v5057 = vrcp.pop %v5056
  %v5058 = vmul.f32 1.0, %v5057
  %v5060 = vrot.slane %v5052, 2
  %v5062 = vxor.u32 %v5060, 2147483648
  %v5063 = vmul.f32 %v5062, 1.442695
  %v5064 = vpow.pop %v5063
  %v5065 = vadd.f32 %v5064, 1.0
  %v5066 = vrcp.pop %v5065
  %v5067 = vmul.f32 1.0, %v5066
  %v5068 = vrot.slane %v5052, 4
  %v5070 = vtanh.pop %v5068
  %v5071 = vrot.slane %v5052, 6
  %v5073 = vxor.u32 %v5071, 2147483648
  %v5074 = vmul.f32 %v5073, 1.442695
  %v5075 = vpow.pop %v5074
  %v5076 = vadd.f32 %v5075, 1.0
  %v5077 = vrcp.pop %v5076
  %v5078 = vmul.f32 1.0, %v5077
  %v5079 = vmul.f32 %v5067, %v4753
  %v5080 = vmul.f32 %v5058, %v5070
  %v5081 = vadd.f32 %v5079, %v5080
  %v5082 = vtanh.pop %v5081
  %v5083 = vmul.f32 %v5078, %v5082
  %v5084 = vld [vmem:[%s0 + $0x4] sm:$0xf]
  %v5085 = vld [vmem:[#allocation4] sm:$0x3]
  %v5086 = vld [vmem:[#allocation5] sm:$0x3]
  %v5087 = vunpack.c.l.bf16 %v5084
  %v5088 = vpack.c.bf16 %v5085, %v5085
  %v5089 = vld [vmem:[%s2] sm:$0xff]
  %v5090 = vld [vmem:[%s2 + $0x8] sm:$0xff]
  %v5091 = vld [vmem:[%s2 + $0x10] sm:$0xff]
  %v5092 = vld [vmem:[%s2 + $0x18] sm:$0xff]
  %v5093 = vld [vmem:[%s2 + $0x20] sm:$0xff]
  %v5094 = vld [vmem:[%s2 + $0x28] sm:$0xff]
  %v5095 = vld [vmem:[%s2 + $0x30] sm:$0xff]
  %v5096 = vld [vmem:[%s2 + $0x38] sm:$0xff]
  %v5097 = vld [vmem:[%s2 + $0x40] sm:$0xff]
  %v5098 = vld [vmem:[%s2 + $0x48] sm:$0xff]
  %v5099 = vld [vmem:[%s2 + $0x50] sm:$0xff]
  %v5100 = vld [vmem:[%s2 + $0x58] sm:$0xff]
  %v5101 = vld [vmem:[%s2 + $0x60] sm:$0xff]
  %v5102 = vld [vmem:[%s2 + $0x68] sm:$0xff]
  %v5103 = vld [vmem:[%s2 + $0x70] sm:$0xff]
  %v5104 = vld [vmem:[%s2 + $0x78] sm:$0xff]
  %v5105 = vld [vmem:[%s2 + $0x80] sm:$0xff]
  %v5106 = vld [vmem:[%s2 + $0x88] sm:$0xff]
  %v5107 = vld [vmem:[%s2 + $0x90] sm:$0xff]
  %v5108 = vld [vmem:[%s2 + $0x98] sm:$0xff]
  %v5109 = vld [vmem:[%s2 + $0xa0] sm:$0xff]
  %v5110 = vld [vmem:[%s2 + $0xa8] sm:$0xff]
  %v5111 = vld [vmem:[%s2 + $0xb0] sm:$0xff]
  %v5112 = vld [vmem:[%s2 + $0xb8] sm:$0xff]
  %v5113 = vld [vmem:[%s2 + $0xc0] sm:$0xff]
  %v5114 = vld [vmem:[%s2 + $0xc8] sm:$0xff]
  %v5115 = vld [vmem:[%s2 + $0xd0] sm:$0xff]
  %v5116 = vld [vmem:[%s2 + $0xd8] sm:$0xff]
  %v5117 = vld [vmem:[%s2 + $0xe0] sm:$0xff]
  %v5118 = vld [vmem:[%s2 + $0xe8] sm:$0xff]
  %v5119 = vld [vmem:[%s2 + $0xf0] sm:$0xff]
  %v5120 = vld [vmem:[%s2 + $0xf8] sm:$0xff]
  %v5153 = vunpack.c.l.b16 %v5089
  %v5154 = vunpack.c.h.b16 %v5089
  %v5155 = vunpack.c.l.b16 %v5090
  %v5156 = vunpack.c.h.b16 %v5090
  %v5157 = vunpack.c.l.b16 %v5091
  %v5158 = vunpack.c.h.b16 %v5091
  %v5159 = vunpack.c.l.b16 %v5092
  %v5160 = vunpack.c.h.b16 %v5092
  %v5161 = vunpack.c.l.b16 %v5093
  %v5162 = vunpack.c.h.b16 %v5093
  %v5163 = vunpack.c.l.b16 %v5094
  %v5164 = vunpack.c.h.b16 %v5094
  %v5165 = vunpack.c.l.b16 %v5095
  %v5166 = vunpack.c.h.b16 %v5095
  %v5167 = vunpack.c.l.b16 %v5096
  %v5168 = vunpack.c.h.b16 %v5096
  %v5169 = vunpack.c.l.b16 %v5097
  %v5170 = vunpack.c.h.b16 %v5097
  %v5171 = vunpack.c.l.b16 %v5098
  %v5172 = vunpack.c.h.b16 %v5098
  %v5173 = vunpack.c.l.b16 %v5099
  %v5174 = vunpack.c.h.b16 %v5099
  %v5175 = vunpack.c.l.b16 %v5100
  %v5176 = vunpack.c.h.b16 %v5100
  %v5177 = vunpack.c.l.b16 %v5101
  %v5178 = vunpack.c.h.b16 %v5101
  %v5179 = vunpack.c.l.b16 %v5102
  %v5180 = vunpack.c.h.b16 %v5102
  %v5181 = vunpack.c.l.b16 %v5103
  %v5182 = vunpack.c.h.b16 %v5103
  %v5183 = vunpack.c.l.b16 %v5104
  %v5184 = vunpack.c.h.b16 %v5104
  %v5185 = vunpack.c.l.b16 %v5105
  %v5186 = vunpack.c.h.b16 %v5105
  %v5187 = vunpack.c.l.b16 %v5106
  %v5188 = vunpack.c.h.b16 %v5106
  %v5189 = vunpack.c.l.b16 %v5107
  %v5190 = vunpack.c.h.b16 %v5107
  %v5191 = vunpack.c.l.b16 %v5108
  %v5192 = vunpack.c.h.b16 %v5108
  %v5193 = vunpack.c.l.b16 %v5109
  %v5194 = vunpack.c.h.b16 %v5109
  %v5195 = vunpack.c.l.b16 %v5110
  %v5196 = vunpack.c.h.b16 %v5110
  %v5197 = vunpack.c.l.b16 %v5111
  %v5198 = vunpack.c.h.b16 %v5111
  %v5199 = vunpack.c.l.b16 %v5112
  %v5200 = vunpack.c.h.b16 %v5112
  %v5201 = vunpack.c.l.b16 %v5113
  %v5202 = vunpack.c.h.b16 %v5113
  %v5203 = vunpack.c.l.b16 %v5114
  %v5204 = vunpack.c.h.b16 %v5114
  %v5205 = vunpack.c.l.b16 %v5115
  %v5206 = vunpack.c.h.b16 %v5115
  %v5207 = vunpack.c.l.b16 %v5116
  %v5208 = vunpack.c.h.b16 %v5116
  %v5209 = vunpack.c.l.b16 %v5117
  %v5210 = vunpack.c.h.b16 %v5117
  %v5211 = vunpack.c.l.b16 %v5118
  %v5212 = vunpack.c.h.b16 %v5118
  %v5213 = vunpack.c.l.b16 %v5119
  %v5214 = vunpack.c.h.b16 %v5119
  %v5215 = vunpack.c.l.b16 %v5120
  %v5216 = vunpack.c.h.b16 %v5120
  %v5217 = vpack.c.b16 %v5157, %v5153
  %v5218 = vpack.c.b16 %v5158, %v5154
  %v5219 = vpack.c.b16 %v5159, %v5155
  %v5220 = vpack.c.b16 %v5160, %v5156
  %v5221 = vpack.c.b16 %v5165, %v5161
  %v5222 = vpack.c.b16 %v5166, %v5162
  %v5223 = vpack.c.b16 %v5167, %v5163
  %v5224 = vpack.c.b16 %v5168, %v5164
  %v5225 = vpack.c.b16 %v5173, %v5169
  %v5226 = vpack.c.b16 %v5174, %v5170
  %v5227 = vpack.c.b16 %v5175, %v5171
  %v5228 = vpack.c.b16 %v5176, %v5172
  %v5229 = vpack.c.b16 %v5181, %v5177
  %v5230 = vpack.c.b16 %v5182, %v5178
  %v5231 = vpack.c.b16 %v5183, %v5179
  %v5232 = vpack.c.b16 %v5184, %v5180
  %v5233 = vpack.c.b16 %v5189, %v5185
  %v5234 = vpack.c.b16 %v5190, %v5186
  %v5235 = vpack.c.b16 %v5191, %v5187
  %v5236 = vpack.c.b16 %v5192, %v5188
  %v5237 = vpack.c.b16 %v5197, %v5193
  %v5238 = vpack.c.b16 %v5198, %v5194
  %v5239 = vpack.c.b16 %v5199, %v5195
  %v5240 = vpack.c.b16 %v5200, %v5196
  %v5241 = vpack.c.b16 %v5205, %v5201
  %v5242 = vpack.c.b16 %v5206, %v5202
  %v5243 = vpack.c.b16 %v5207, %v5203
  %v5244 = vpack.c.b16 %v5208, %v5204
  %v5245 = vpack.c.b16 %v5213, %v5209
  %v5246 = vpack.c.b16 %v5214, %v5210
  %v5247 = vpack.c.b16 %v5215, %v5211
  %v5248 = vpack.c.b16 %v5216, %v5212
  %5281 = vmatprep.subr.bf16.mxu0 %v5218
  %5282 = vmatpush1.bf16.msra.mxu0 %v5217
  %5283 = vmatprep.subr.bf16.mxu0 %v5222
  %5284 = vmatpush1.bf16.msra.mxu0 %v5221
  %5285 = vmatprep.subr.bf16.mxu0 %v5226
  %5286 = vmatpush1.bf16.msra.mxu0 %v5225
  %5287 = vmatprep.subr.bf16.mxu0 %v5230
  %5288 = vmatpush1.bf16.msra.mxu0 %v5229
  %5289 = vmatprep.subr.bf16.mxu0 %v5234
  %5290 = vmatpush1.bf16.msra.mxu0 %v5233
  %5291 = vmatprep.subr.bf16.mxu0 %v5238
  %5292 = vmatpush1.bf16.msra.mxu0 %v5237
  %5293 = vmatprep.subr.bf16.mxu0 %v5242
  %5294 = vmatpush1.bf16.msra.mxu0 %v5241
  %5295 = vmatprep.subr.bf16.mxu0 %v5246
  %5296 = vmatpush1.bf16.msra.mxu0 %v5245
  %5297 = vmatprep.subr.bf16.mxu0 0
  %5298 = vmatpush1.bf16.msra.mxu0 0
  %5299 = vmatprep.subr.bf16.mxu0 0
  %5300 = vmatpush1.bf16.msra.mxu0 0
  %5301 = vmatprep.subr.bf16.mxu0 0
  %5302 = vmatpush1.bf16.msra.mxu0 0
  %5303 = vmatprep.subr.bf16.mxu0 0
  %5304 = vmatpush1.bf16.msra.mxu0 0
  %5305 = vmatprep.subr.bf16.mxu0 0
  %5306 = vmatpush1.bf16.msra.mxu0 0
  %5307 = vmatprep.subr.bf16.mxu0 0
  %5308 = vmatpush1.bf16.msra.mxu0 0
  %5309 = vmatprep.subr.bf16.mxu0 0
  %5310 = vmatpush1.bf16.msra.mxu0 0
  %5311 = vmatprep.subr.bf16.mxu0 0
  %5312 = vmatpush1.bf16.msra.mxu0 0
  %5313 = vmatprep.mubr.bf16.mxu0 0
  %5314 = vmatmul.mubr.bf16.gmra.mrb[0].mxu0 %v5088
  %v5315 = vpop.f32.mrb[0].mxu0
  %v5316 = vadd.f32 0.0, %v5315
  %v5317 = vpop.f32.mrb[0].mxu0
  %v5318 = vadd.f32 0.0, %v5317
  %v5319 = vpop.f32.mrb[0].mxu0
  %v5320 = vpop.f32.mrb[0].mxu0
  %5321 = vdwg.mxu0
  %5322 = vmatprep.subr.bf16.mxu0 %v5220
  %5323 = vmatpush1.bf16.msra.mxu0 %v5219
  %5324 = vmatprep.subr.bf16.mxu0 %v5224
  %5325 = vmatpush1.bf16.msra.mxu0 %v5223
  %5326 = vmatprep.subr.bf16.mxu0 %v5228
  %5327 = vmatpush1.bf16.msra.mxu0 %v5227
  %5328 = vmatprep.subr.bf16.mxu0 %v5232
  %5329 = vmatpush1.bf16.msra.mxu0 %v5231
  %5330 = vmatprep.subr.bf16.mxu0 %v5236
  %5331 = vmatpush1.bf16.msra.mxu0 %v5235
  %5332 = vmatprep.subr.bf16.mxu0 %v5240
  %5333 = vmatpush1.bf16.msra.mxu0 %v5239
  %5334 = vmatprep.subr.bf16.mxu0 %v5244
  %5335 = vmatpush1.bf16.msra.mxu0 %v5243
  %5336 = vmatprep.subr.bf16.mxu0 %v5248
  %5337 = vmatpush1.bf16.msra.mxu0 %v5247
  %5338 = vmatprep.subr.bf16.mxu0 0
  %5339 = vmatpush1.bf16.msra.mxu0 0
  %5340 = vmatprep.subr.bf16.mxu0 0
  %5341 = vmatpush1.bf16.msra.mxu0 0
  %5342 = vmatprep.subr.bf16.mxu0 0
  %5343 = vmatpush1.bf16.msra.mxu0 0
  %5344 = vmatprep.subr.bf16.mxu0 0
  %5345 = vmatpush1.bf16.msra.mxu0 0
  %5346 = vmatprep.subr.bf16.mxu0 0
  %5347 = vmatpush1.bf16.msra.mxu0 0
  %5348 = vmatprep.subr.bf16.mxu0 0
  %5349 = vmatpush1.bf16.msra.mxu0 0
  %5350 = vmatprep.subr.bf16.mxu0 0
  %5351 = vmatpush1.bf16.msra.mxu0 0
  %5352 = vmatprep.subr.bf16.mxu0 0
  %5353 = vmatpush1.bf16.msra.mxu0 0
  %5354 = vmatprep.mubr.bf16.mxu0 0
  %5355 = vmatmul.mubr.bf16.gmra.mrb[0].mxu0 %v5088
  %v5356 = vpop.f32.mrb[0].mxu0
  %v5357 = vadd.f32 0.0, %v5356
  %v5358 = vpop.f32.mrb[0].mxu0
  %v5359 = vadd.f32 0.0, %v5358
  %v5360 = vpop.f32.mrb[0].mxu0
  %v5361 = vpop.f32.mrb[0].mxu0
  %5362 = vdwg.mxu0
  %v5367 = vcombine.low %v5316, %v5318
  %v5368 = vcombine.low %v5357, %v5359
  %v5370 = vunpack.c.l.s4 1983009808
  %v5371 = vunpack.c.0.s8 %v5370
  %v5372 = vlaneseq
  %v5373 = vshrl.u32 %v5372, 7
  %v5374 = vsub.s32 %v5371, %v5373
  %v5375 = vrot.slane %v5367, %v5374
  %v5377 = vunpack.c.l.s4 1983009808
  %v5378 = vunpack.c.0.s8 %v5377
  %v5379 = vlaneseq
  %v5380 = vshrl.u32 %v5379, 7
  %v5381 = vsub.s32 %v5378, %v5380
  %v5382 = vrot.slane %v5368, %v5381
  %v5383 = vcombine.low %v5375, %v5382
  %v5385 = vadd.f32 %v5087, %v5383
  %v5386 = vxor.u32 %v5385, 2147483648
  %v5387 = vmul.f32 %v5386, 1.442695
  %v5388 = vpow.pop %v5387
  %v5389 = vadd.f32 %v5388, 1.0
  %v5390 = vrcp.pop %v5389
  %v5391 = vmul.f32 1.0, %v5390
  %v5393 = vrot.slane %v5385, 2
  %v5395 = vxor.u32 %v5393, 2147483648
  %v5396 = vmul.f32 %v5395, 1.442695
  %v5397 = vpow.pop %v5396
  %v5398 = vadd.f32 %v5397, 1.0
  %v5399 = vrcp.pop %v5398
  %v5400 = vmul.f32 1.0, %v5399
  %v5401 = vrot.slane %v5385, 4
  %v5403 = vtanh.pop %v5401
  %v5404 = vrot.slane %v5385, 6
  %v5406 = vxor.u32 %v5404, 2147483648
  %v5407 = vmul.f32 %v5406, 1.442695
  %v5408 = vpow.pop %v5407
  %v5409 = vadd.f32 %v5408, 1.0
  %v5410 = vrcp.pop %v5409
  %v5411 = vmul.f32 1.0, %v5410
  %v5412 = vmul.f32 %v5400, %v5086
  %v5413 = vmul.f32 %v5391, %v5403
  %v5414 = vadd.f32 %v5412, %v5413
  %v5415 = vtanh.pop %v5414
  %v5416 = vmul.f32 %v5411, %v5415
  %5417 = vst [vmem:[#allocation2] sm:$0x3] %v5083
  %5418 = vst [vmem:[#allocation3] sm:$0x3] %v5081
  %5419 = vst [vmem:[#allocation4] sm:$0x3] %v5416
  %5420 = vst [vmem:[#allocation5] sm:$0x3] %v5414
  %v5421 = vpack.c.bf16 %v5083, %v5083
  %5422 = vst [vmem:[%s693] sm:$0x1] %v5421
  %v5423 = vpack.c.bf16 %v5416, %v5416
  %5424 = vst [vmem:[%s3 + $0x1] sm:$0x1] %v5423
  // Predicated region
  $region14: #{_lambda_.15} parent=0 // pred_check
    _
  $region15: #{_lambda_.15} parent=0 // pred_check_branch
    %5426 = sbr.rel (0) target = $region17
  $region16: #{_lambda_.15} parent=0 // pred_region
    _
  $region17: #{_lambda_.15} parent=0 // pred_fallthru
    _
  // Predicated region
  $region18: #{_lambda_.15} parent=0 // pred_check
    _
  $region19: #{_lambda_.15} parent=0 // pred_check_branch
    %5428 = sbr.rel (0) target = $region21
  $region20: #{_lambda_.15} parent=0 // pred_region
    _
  $region21: #{_lambda_.15} parent=0 // pred_fallthru
    _

</llo_original>
